<compile_context>
chip_gen: v7x
topology: tpu7x:2x2x1
jax: 0.10.0
libtpu: 0.0.40
codegen_flags: <defaults>
</compile_context>

<pallas_src>
import jax
import jax.numpy as jnp
from jax import lax
from jax.experimental import pallas as pl
from jax.experimental.pallas import tpu as pltpu

B       = 2      # batch
T_TEXT  = 8      # text sequence length (multiple of 8; positions < 38)
S_AV    = 80     # audio / visual sequence length (fixed by nn.Linear(80, 80))
H       = 768    # hidden size (fixed by the module)
OUT     = 1      # TODO(synk): My_ClassificationHead is undefined upstream; stand-in Linear(768, 1)
VOCAB   = 100
A_FEAT  = 16     # raw audio feature dim (synthetic)
V_FEAT  = 32     # raw visual feature dim (synthetic)


# ----------------------------- Pallas kernel --------------------------------

def dpam_kernel(
    text_ref, aud_ref, vis_ref, pose_ref, alphas_ref,
    affine1_ref, affine2_ref,
    w_fuse_hbm, b_fuse_ref,
    w_agg1_hbm, b_agg1_ref, w_agg2_ref,
    w_cls_ref,
    out_ref,
    fuse_buf, agg1_buf, dma_sem,
):
    # Kick off the late-use weight DMAs immediately so they overlap with the
    # attention-branch compute below (fuse: ~2.25 MB, agg1: ~1.1 MB, both bf16).
    cp_fuse = pltpu.make_async_copy(w_fuse_hbm, fuse_buf, dma_sem.at[0])
    cp_agg1 = pltpu.make_async_copy(w_agg1_hbm, agg1_buf, dma_sem.at[1])
    cp_fuse.start()
    cp_agg1.start()

    text = text_ref[...]          # [B, T, H] f32
    aud  = aud_ref[...]           # [B, T, H] f32 (only first T_TEXT rows were DMA'd)
    vis  = vis_ref[...]           # [B, T, H] f32
    pose = pose_ref[...]          # [B, T, H] f32
    bsz, tt, hh = text.shape

    def branch(mod, affine_ref, alpha):
        # Projection through the 768x768 affine: bf16 operands, f32 accumulation.
        proj = jnp.dot(mod.reshape(bsz * tt, hh).astype(jnp.bfloat16), affine_ref[...],
                       preferred_element_type=jnp.float32).reshape(bsz, tt, hh)
        # Batched scores / softmax / context: single MXU launch per dot.
        scores = lax.dot_general(proj, text, (((2,), (2,)), ((0,), (0,))),
                                 preferred_element_type=jnp.float32)          # [B, T, T]
        scores = scores - jnp.max(scores, axis=-1, keepdims=True)
        e = jnp.exp(scores)
        attn = e / jnp.sum(e, axis=-1, keepdims=True)
        ctx = lax.dot_general(attn, text, (((2,), (1,)), ((0,), (0,))),
                              preferred_element_type=jnp.float32)             # [B, T, H]
        return text + alpha[..., None] * ctx                                  # [B, T, H]

    hat = branch(aud, affine1_ref, alphas_ref[0])                             # [B, T, H]
    hvt = branch(vis, affine2_ref, alphas_ref[1])                             # [B, T, H]

    # fused = 0.5*(hat @ W_at^T + b_at + hvt @ W_vt^T + b_vt)
    #       = 0.5*([hat | hvt] @ [W_at^T ; W_vt^T] + (b_at + b_vt))  -> single MXU launch
    hcat = jnp.concatenate([hat, hvt], axis=-1).reshape(bsz * tt, 2 * hh).astype(jnp.bfloat16)
    cp_fuse.wait()                                                            # weight landed?
    fused = 0.5 * (jnp.dot(hcat, fuse_buf[...],
                           preferred_element_type=jnp.float32) + b_fuse_ref[...])   # [B*T, H]
    # bert_drop (Dropout 0.2): identity at inference time

    # positional aggregation: softmax over the sequence axis of agg_2(sigmoid(agg_1(pos_emb)))
    cp_agg1.wait()
    seq_w = jax.nn.sigmoid(
        jnp.dot(pose.reshape(bsz * tt, hh).astype(jnp.bfloat16), agg1_buf[...],
                preferred_element_type=jnp.float32) + b_agg1_ref[...])        # [B*T, H]
    seq_w = seq_w.reshape(bsz, tt, hh)
    # agg_2 is a 768->1 Linear: VPU multiply + lane reduce beats an N=1 MXU call.
    # agg_2's scalar bias is dropped: softmax over the sequence axis is shift-invariant.
    sc = jnp.sum(seq_w * w_agg2_ref[...], axis=-1, keepdims=True)             # [B, T, 1]
    sc = sc - jnp.max(sc, axis=1, keepdims=True)
    ew = jnp.exp(sc)
    alph = ew / jnp.sum(ew, axis=1, keepdims=True)                            # [B, T, 1]
    text_pos = jnp.sum(alph * fused.reshape(bsz, tt, hh), axis=1, keepdims=True)    # [B, 1, H]

    # classifier head (768 -> 1): multiply + lane reduce; scalar bias folded on host
    logits = jnp.sum(text_pos * w_cls_ref[...], axis=-1, keepdims=True)       # [B, 1, 1]
    out_ref[...] = logits


# ----------------------------- wrapper ---------------------------------------

def _whole_spec(shape):
    nd = len(shape)
    return pl.BlockSpec(shape, lambda i, nd=nd: (0,) * nd)


def pack_weights(p):
    """One-time repacking of all kernel weights (bf16 casts, transposes, fusions).

    Called once at model setup; per-forward calls only read these pre-packed
    device arrays (no per-call transpose/concat/cast XLA ops, no extra HBM traffic).
    """
    bf16 = jnp.bfloat16
    packed = {
        'affine1': p['affine1'].astype(bf16),                                 # [H, H]
        'affine2': p['affine2'].astype(bf16),                                 # [H, H]
        'w_fuse': jnp.concatenate([p['w_at'].T, p['w_vt'].T], axis=0).astype(bf16),  # [2H, H]
        'b_fuse': (p['b_at'] + p['b_vt']).reshape(1, H),
        'w_agg1': p['w_agg1'].T.astype(bf16),                                 # [H, H]
        'b_agg1': p['b_agg1'].reshape(1, H),
        'w_agg2': p['w_agg2'].reshape(1, H),
        'w_cls': p['w_cls'].reshape(OUT, H),
        'b_cls': p['b_cls'].reshape(1, OUT),
        # alpha-gate path (tiny 80x80 Linears, evaluated in the jitted wrapper)
        'w_aa1_t': p['w_aa1'].T, 'b_aa1': p['b_aa1'],
        'w_aa2_t': p['w_aa2'].T, 'b_aa2': p['b_aa2'],
        'w_av1_t': p['w_av1'].T, 'b_av1': p['b_av1'],
        'w_av2_t': p['w_av2'].T, 'b_av2': p['b_av2'],
    }
    return jax.tree.map(jnp.asarray, packed)


@jax.jit
def dpam_forward(text, audio, vis, pose, packed):
    bsz = text.shape[0]

    # Alpha gates from the first feature channel of each (full-length) modality.
    # Row form, lane-dense; fuses into one tiny XLA op ahead of the kernel.
    a_col = audio[:, :, 0]                                                    # [B, 80]
    v_col = vis[:, :, 0]                                                      # [B, 80]
    alpha_a = jnp.tanh(a_col @ packed['w_aa1_t'] + packed['b_aa1']) @ packed['w_aa2_t'] + packed['b_aa2']
    alpha_v = jnp.tanh(v_col @ packed['w_av1_t'] + packed['b_av1']) @ packed['w_av2_t'] + packed['b_av2']
    alphas = jnp.stack([alpha_a[:, :T_TEXT], alpha_v[:, :T_TEXT]], axis=0)    # [2, B, T]

    out = pl.pallas_call(
        dpam_kernel,
        out_shape=jax.ShapeDtypeStruct((bsz, 1, OUT), jnp.float32),
        grid_spec=pltpu.PrefetchScalarGridSpec(
            num_scalar_prefetch=0,
            grid=(1,),                     # single invocation: weights read from HBM once
            in_specs=[
                _whole_spec((bsz, T_TEXT, H)),                                # text
                pl.BlockSpec((bsz, T_TEXT, H), lambda i: (0, 0, 0)),          # audio: first T rows only
                pl.BlockSpec((bsz, T_TEXT, H), lambda i: (0, 0, 0)),          # vis:   first T rows only
                _whole_spec((bsz, T_TEXT, H)),                                # pose
                _whole_spec((2, bsz, T_TEXT)),                                # alpha gates
                _whole_spec((H, H)),                                          # affine1 (bf16)
                _whole_spec((H, H)),                                          # affine2 (bf16)
                pl.BlockSpec(memory_space=pl.ANY),                            # w_fuse -> manual DMA
                _whole_spec((1, H)),                                          # b_fuse
                pl.BlockSpec(memory_space=pl.ANY),                            # w_agg1 -> manual DMA
                _whole_spec((1, H)),                                          # b_agg1
                _whole_spec((1, H)),                                          # w_agg2
                _whole_spec((OUT, H)),                                        # w_cls
            ],
            out_specs=pl.BlockSpec((bsz, 1, OUT), lambda i: (0, 0, 0)),
            scratch_shapes=[
                pltpu.VMEM((2 * H, H), jnp.bfloat16),                         # fuse weight landing buf
                pltpu.VMEM((H, H), jnp.bfloat16),                             # agg_1 weight landing buf
                pltpu.SemaphoreType.DMA((2,)),
            ],
        ),
        compiler_params=pltpu.CompilerParams(
            dimension_semantics=("arbitrary",),
            vmem_limit_bytes=32 * 1024 * 1024,   # ~8 MB live; safe on v5e/v6e/v7x (64 MiB)
        ),
    )(text, audio, vis, pose, alphas,
      packed['affine1'], packed['affine2'],
      packed['w_fuse'], packed['b_fuse'],
      packed['w_agg1'], packed['b_agg1'], packed['w_agg2'],
      packed['w_cls'])

    # classifier scalar bias folded on the host (fuses into the surrounding jit)
    return out[:, 0, :] + packed['b_cls'][0]                                   # [B, OUT]


# ----------------------------- plain-JAX glue -------------------------------

def make_params(key):
    def nrm(k, shape, scale=0.02):
        return jax.random.normal(k, shape, dtype=jnp.float32) * scale
    ks = jax.random.split(key, 26)
    p = {}
    p['affine1'] = nrm(ks[0], (H, H))
    p['affine2'] = nrm(ks[1], (H, H))
    p['w_aa1'] = nrm(ks[2], (S_AV, S_AV)); p['b_aa1'] = nrm(ks[3], (S_AV,))
    p['w_aa2'] = nrm(ks[4], (S_AV, S_AV)); p['b_aa2'] = nrm(ks[5], (S_AV,))
    p['w_av1'] = nrm(ks[6], (S_AV, S_AV)); p['b_av1'] = nrm(ks[7], (S_AV,))
    p['w_av2'] = nrm(ks[8], (S_AV, S_AV)); p['b_av2'] = nrm(ks[9], (S_AV,))
    p['w_at'] = nrm(ks[10], (H, H)); p['b_at'] = nrm(ks[11], (H,))
    p['w_vt'] = nrm(ks[12], (H, H)); p['b_vt'] = nrm(ks[13], (H,))
    p['w_agg1'] = nrm(ks[14], (H, H)); p['b_agg1'] = nrm(ks[15], (H,))
    p['w_agg2'] = nrm(ks[16], (1, H)); p['b_agg2'] = nrm(ks[17], (1,))
    p['w_cls'] = nrm(ks[18], (OUT, H)); p['b_cls'] = nrm(ks[19], (OUT,))
    p['pos_table'] = nrm(ks[20], (38, H)).at[0].set(0.0)       # padding_idx=0
    p['tok_table'] = nrm(ks[21], (VOCAB, H))
    p['w_gru_a'] = nrm(ks[22], (A_FEAT, H)); p['b_gru_a'] = nrm(ks[23], (H,))
    p['w_gru_v'] = nrm(ks[24], (V_FEAT, H)); p['b_gru_v'] = nrm(ks[25], (H,))
    return p


def encoders(audio_embed, vis_embed, input_ids, attention_mask, pos, p):
    # TODO(synk): LanguageEmbeddingLayer wraps a pretrained BERT; stand-in is a
    # deterministic token-embedding lookup masked by attention_mask.
    text_embedding = p['tok_table'][input_ids] * attention_mask[..., None]           # [B, T, H]
    # TODO(synk): GRU_aucdio / GRU_visual are undefined recurrent encoders;
    # stand-in is a per-timestep tanh(Linear) projection to 768.
    a = jnp.squeeze(audio_embed, axis=1)                                             # [B, 80, A_FEAT]
    v = jnp.squeeze(vis_embed, axis=1)                                               # [B, 80, V_FEAT]
    audio_embedding = jnp.tanh(a @ p['w_gru_a'] + p['b_gru_a'])                      # [B, 80, H]
    vis_embedding = jnp.tanh(v @ p['w_gru_v'] + p['b_gru_v'])                        # [B, 80, H]
    pos_embedding = p['pos_table'][pos]                                              # [B, T, H]
    return text_embedding, audio_embedding, vis_embedding, pos_embedding


def ref_forward(text, audio, vis, pose, p):
    def attn(mod, affine):
        s = jnp.einsum('bsh,hk,btk->bst', mod, affine, text)
        return jnp.einsum('bst,bth->bsh', jax.nn.softmax(s, axis=-1), text)
    acu = attn(audio, p['affine1'])
    alpha_a = jnp.tanh(audio[:, :, 0] @ p['w_aa1'].T + p['b_aa1']) @ p['w_aa2'].T + p['b_aa2']
    hat = text + alpha_a[:, :T_TEXT, None] * acu[:, :T_TEXT, :]
    vist = attn(vis, p['affine2'])
    alpha_v = jnp.tanh(vis[:, :, 0] @ p['w_av1'].T + p['b_av1']) @ p['w_av2'].T + p['b_av2']
    hvt = text + alpha_v[:, :T_TEXT, None] * vist[:, :T_TEXT, :]
    fused = 0.5 * (hat @ p['w_at'].T + p['b_at'] + hvt @ p['w_vt'].T + p['b_vt'])
    seq_w = jax.nn.sigmoid(pose @ p['w_agg1'].T + p['b_agg1'])
    alph = jax.nn.softmax(seq_w @ p['w_agg2'].T + p['b_agg2'], axis=1)               # [B, T, 1]
    text_pos = jnp.einsum('bt,bth->bh', alph[..., 0], fused)
    return text_pos @ p['w_cls'].T + p['b_cls']


if __name__ == "__main__":
    key = jax.random.PRNGKey(0)
    kp, k1, k2, k3, k4 = jax.random.split(key, 5)
    params = make_params(kp)
    packed = pack_weights(params)        # one-time weight repacking (not per forward)

    audio_embed = jax.random.normal(k1, (B, 1, S_AV, A_FEAT), dtype=jnp.float32)
    vis_embed   = jax.random.normal(k2, (B, 1, S_AV, V_FEAT), dtype=jnp.float32)
    input_ids   = jax.random.randint(k3, (B, T_TEXT), 0, VOCAB, dtype=jnp.int32)
    attention_mask = jnp.ones((B, T_TEXT), dtype=jnp.float32)
    pos = jax.random.randint(k4, (B, T_TEXT), 1, 38, dtype=jnp.int32)

    text, audio, vis, pose = encoders(audio_embed, vis_embed, input_ids,
                                      attention_mask, pos, params)

    logits = dpam_forward(text, audio, vis, pose, packed)
    jax.block_until_ready(logits)

    ref = ref_forward(text, audio, vis, pose, params)
    assert logits.shape == (B, OUT)
    assert jnp.allclose(logits, ref, atol=5e-3, rtol=5e-3), (logits, ref)
    print("KERNEL_OK")
</pallas_src>

<mosaic_0001>
module attributes {stable_mosaic.version = 11 : i64} {
  func.func @dpam_kernel(%arg0: i32, %arg1: memref<2x8x768xf32, #tpu.memory_space<vmem>>, %arg2: memref<2x8x768xf32, #tpu.memory_space<vmem>>, %arg3: memref<2x8x768xf32, #tpu.memory_space<vmem>>, %arg4: memref<2x8x768xf32, #tpu.memory_space<vmem>>, %arg5: memref<2x2x8xf32, #tpu.memory_space<vmem>>, %arg6: memref<768x768xbf16, #tpu.memory_space<vmem>>, %arg7: memref<768x768xbf16, #tpu.memory_space<vmem>>, %arg8: memref<1536x768xbf16, #tpu.memory_space<any>>, %arg9: memref<1x768xf32, #tpu.memory_space<vmem>>, %arg10: memref<768x768xbf16, #tpu.memory_space<any>>, %arg11: memref<1x768xf32, #tpu.memory_space<vmem>>, %arg12: memref<1x768xf32, #tpu.memory_space<vmem>>, %arg13: memref<1x768xf32, #tpu.memory_space<vmem>>, %arg14: memref<2x1x1xf32, #tpu.memory_space<vmem>>, %arg15: memref<1536x768xbf16, #tpu.memory_space<vmem>>, %arg16: memref<768x768xbf16, #tpu.memory_space<vmem>>, %arg17: memref<2x!tpu.dma_semaphore, #tpu.memory_space<semaphore_mem>>) attributes {dimension_semantics = [#tpu.dimension_semantics<arbitrary>], iteration_bounds = array<i64: 1>, scalar_prefetch = 0 : i64, scratch_operands = 3 : i64, tpu.core_type = #tpu.core_type<tc>, window_params = [{pipeline_mode = #tpu.pipeline_mode<synchronous>, transform_indices = @transform_0, window_bounds = array<i64: 2, 8, 768>}, {transform_indices = @transform_1, window_bounds = array<i64: 2, 8, 768>}, {transform_indices = @transform_2, window_bounds = array<i64: 2, 8, 768>}, {pipeline_mode = #tpu.pipeline_mode<synchronous>, transform_indices = @transform_3, window_bounds = array<i64: 2, 8, 768>}, {pipeline_mode = #tpu.pipeline_mode<synchronous>, transform_indices = @transform_4, window_bounds = array<i64: 2, 2, 8>}, {pipeline_mode = #tpu.pipeline_mode<synchronous>, transform_indices = @transform_5, window_bounds = array<i64: 768, 768>}, {pipeline_mode = #tpu.pipeline_mode<synchronous>, transform_indices = @transform_6, window_bounds = array<i64: 768, 768>}, {}, {pipeline_mode = #tpu.pipeline_mode<synchronous>, transform_indices = @transform_8, window_bounds = array<i64: 1, 768>}, {}, {pipeline_mode = #tpu.pipeline_mode<synchronous>, transform_indices = @transform_10, window_bounds = array<i64: 1, 768>}, {pipeline_mode = #tpu.pipeline_mode<synchronous>, transform_indices = @transform_11, window_bounds = array<i64: 1, 768>}, {pipeline_mode = #tpu.pipeline_mode<synchronous>, transform_indices = @transform_12, window_bounds = array<i64: 1, 768>}, {pipeline_mode = #tpu.pipeline_mode<synchronous>, transform_indices = @transform_13, window_bounds = array<i64: 2, 1, 1>}]} {
    %c0_i32 = arith.constant 0 : i32
    %0 = tpu.memref_slice %arg17[%c0_i32] : memref<2x!tpu.dma_semaphore, #tpu.memory_space<semaphore_mem>> -> memref<1x!tpu.dma_semaphore, #tpu.memory_space<semaphore_mem>>
    %1 = tpu.memref_squeeze %0 : memref<1x!tpu.dma_semaphore, #tpu.memory_space<semaphore_mem>> -> memref<!tpu.dma_semaphore, #tpu.memory_space<semaphore_mem>>
    tpu.enqueue_dma source(%arg8 : memref<1536x768xbf16, #tpu.memory_space<any>>) target(%arg15 : memref<1536x768xbf16, #tpu.memory_space<vmem>>) target_semaphore(%1 : memref<!tpu.dma_semaphore, #tpu.memory_space<semaphore_mem>>)
    %c1_i32 = arith.constant 1 : i32
    %2 = tpu.memref_slice %arg17[%c1_i32] : memref<2x!tpu.dma_semaphore, #tpu.memory_space<semaphore_mem>> -> memref<1x!tpu.dma_semaphore, #tpu.memory_space<semaphore_mem>>
    %3 = tpu.memref_squeeze %2 : memref<1x!tpu.dma_semaphore, #tpu.memory_space<semaphore_mem>> -> memref<!tpu.dma_semaphore, #tpu.memory_space<semaphore_mem>>
    tpu.enqueue_dma source(%arg10 : memref<768x768xbf16, #tpu.memory_space<any>>) target(%arg16 : memref<768x768xbf16, #tpu.memory_space<vmem>>) target_semaphore(%3 : memref<!tpu.dma_semaphore, #tpu.memory_space<semaphore_mem>>)
    %c0 = arith.constant 0 : index
    %c0_0 = arith.constant 0 : index
    %c0_1 = arith.constant 0 : index
    %4 = vector.load %arg1[%c0, %c0_0, %c0_1] : memref<2x8x768xf32, #tpu.memory_space<vmem>>, vector<2x8x768xf32>
    %c0_2 = arith.constant 0 : index
    %c0_3 = arith.constant 0 : index
    %c0_4 = arith.constant 0 : index
    %5 = vector.load %arg2[%c0_2, %c0_3, %c0_4] : memref<2x8x768xf32, #tpu.memory_space<vmem>>, vector<2x8x768xf32>
    %c0_5 = arith.constant 0 : index
    %c0_6 = arith.constant 0 : index
    %c0_7 = arith.constant 0 : index
    %6 = vector.load %arg3[%c0_5, %c0_6, %c0_7] : memref<2x8x768xf32, #tpu.memory_space<vmem>>, vector<2x8x768xf32>
    %c0_8 = arith.constant 0 : index
    %c0_9 = arith.constant 0 : index
    %c0_10 = arith.constant 0 : index
    %7 = vector.load %arg4[%c0_8, %c0_9, %c0_10] : memref<2x8x768xf32, #tpu.memory_space<vmem>>, vector<2x8x768xf32>
    %c0_11 = arith.constant 0 : index
    %c0_12 = arith.constant 0 : index
    %c0_13 = arith.constant 0 : index
    %8 = vector.load %arg5[%c0_11, %c0_12, %c0_13] : memref<2x2x8xf32, #tpu.memory_space<vmem>>, vector<1x2x8xf32>
    %9 = vector.shape_cast %8 : vector<1x2x8xf32> to vector<2x8xf32>
    %10 = vector.shape_cast %5 : vector<2x8x768xf32> to vector<16x768xf32>
    %11 = arith.truncf %10 : vector<16x768xf32> to vector<16x768xbf16>
    %c0_14 = arith.constant 0 : index
    %c0_15 = arith.constant 0 : index
    %12 = vector.load %arg6[%c0_14, %c0_15] : memref<768x768xbf16, #tpu.memory_space<vmem>>, vector<768x768xbf16>
    %cst = arith.constant dense<0.000000e+00> : vector<16x768xf32>
    %13 = tpu.matmul %11, %12, %cst {dimension_numbers = #tpu.dot_dimension_numbers<[1], [0], [0], [1], [0, 0, 1, 1], [], []>} : vector<16x768xbf16>, vector<768x768xbf16>, vector<16x768xf32> -> vector<16x768xf32>
    %14 = vector.shape_cast %13 : vector<16x768xf32> to vector<2x8x768xf32>
    %cst_16 = arith.constant dense<0.000000e+00> : vector<2x8x8xf32>
    %15 = tpu.matmul %14, %4, %cst_16 {dimension_numbers = #tpu.dot_dimension_numbers<[2], [2], [1], [1], [0, 0, 0, 1, 1, 1], [0], [0]>} : vector<2x8x768xf32>, vector<2x8x768xf32>, vector<2x8x8xf32> -> vector<2x8x8xf32>
    %cst_17 = arith.constant dense<0xFF800000> : vector<2x8xf32>
    %16 = vector.multi_reduction <maximumf>, %15, %cst_17 [2] : vector<2x8x8xf32> to vector<2x8xf32>
    %17 = vector.shape_cast %16 : vector<2x8xf32> to vector<2x8x1xf32>
    %18 = vector.broadcast %17 : vector<2x8x1xf32> to vector<2x8x8xf32>
    %19 = arith.subf %15, %18 : vector<2x8x8xf32>
    %20 = math.exp %19 : vector<2x8x8xf32>
    %cst_18 = arith.constant dense<0.000000e+00> : vector<2x8xf32>
    %21 = vector.multi_reduction <add>, %20, %cst_18 [2] : vector<2x8x8xf32> to vector<2x8xf32>
    %22 = vector.shape_cast %21 : vector<2x8xf32> to vector<2x8x1xf32>
    %23 = vector.broadcast %22 : vector<2x8x1xf32> to vector<2x8x8xf32>
    %24 = arith.divf %20, %23 : vector<2x8x8xf32>
    %cst_19 = arith.constant dense<0.000000e+00> : vector<2x8x768xf32>
    %25 = tpu.matmul %24, %4, %cst_19 {dimension_numbers = #tpu.dot_dimension_numbers<[2], [1], [1], [2], [0, 0, 0, 1, 1, 2], [0], [0]>} : vector<2x8x8xf32>, vector<2x8x768xf32>, vector<2x8x768xf32> -> vector<2x8x768xf32>
    %26 = vector.shape_cast %9 : vector<2x8xf32> to vector<2x8x1xf32>
    %27 = vector.broadcast %26 : vector<2x8x1xf32> to vector<2x8x768xf32>
    %28 = arith.mulf %27, %25 : vector<2x8x768xf32>
    %29 = arith.addf %4, %28 : vector<2x8x768xf32>
    %c1 = arith.constant 1 : index
    %c0_20 = arith.constant 0 : index
    %c0_21 = arith.constant 0 : index
    %30 = vector.load %arg5[%c1, %c0_20, %c0_21] : memref<2x2x8xf32, #tpu.memory_space<vmem>>, vector<1x2x8xf32>
    %31 = vector.shape_cast %30 : vector<1x2x8xf32> to vector<2x8xf32>
    %32 = vector.shape_cast %6 : vector<2x8x768xf32> to vector<16x768xf32>
    %33 = arith.truncf %32 : vector<16x768xf32> to vector<16x768xbf16>
    %c0_22 = arith.constant 0 : index
    %c0_23 = arith.constant 0 : index
    %34 = vector.load %arg7[%c0_22, %c0_23] : memref<768x768xbf16, #tpu.memory_space<vmem>>, vector<768x768xbf16>
    %cst_24 = arith.constant dense<0.000000e+00> : vector<16x768xf32>
    %35 = tpu.matmul %33, %34, %cst_24 {dimension_numbers = #tpu.dot_dimension_numbers<[1], [0], [0], [1], [0, 0, 1, 1], [], []>} : vector<16x768xbf16>, vector<768x768xbf16>, vector<16x768xf32> -> vector<16x768xf32>
    %36 = vector.shape_cast %35 : vector<16x768xf32> to vector<2x8x768xf32>
    %cst_25 = arith.constant dense<0.000000e+00> : vector<2x8x8xf32>
    %37 = tpu.matmul %36, %4, %cst_25 {dimension_numbers = #tpu.dot_dimension_numbers<[2], [2], [1], [1], [0, 0, 0, 1, 1, 1], [0], [0]>} : vector<2x8x768xf32>, vector<2x8x768xf32>, vector<2x8x8xf32> -> vector<2x8x8xf32>
    %cst_26 = arith.constant dense<0xFF800000> : vector<2x8xf32>
    %38 = vector.multi_reduction <maximumf>, %37, %cst_26 [2] : vector<2x8x8xf32> to vector<2x8xf32>
    %39 = vector.shape_cast %38 : vector<2x8xf32> to vector<2x8x1xf32>
    %40 = vector.broadcast %39 : vector<2x8x1xf32> to vector<2x8x8xf32>
    %41 = arith.subf %37, %40 : vector<2x8x8xf32>
    %42 = math.exp %41 : vector<2x8x8xf32>
    %cst_27 = arith.constant dense<0.000000e+00> : vector<2x8xf32>
    %43 = vector.multi_reduction <add>, %42, %cst_27 [2] : vector<2x8x8xf32> to vector<2x8xf32>
    %44 = vector.shape_cast %43 : vector<2x8xf32> to vector<2x8x1xf32>
    %45 = vector.broadcast %44 : vector<2x8x1xf32> to vector<2x8x8xf32>
    %46 = arith.divf %42, %45 : vector<2x8x8xf32>
    %cst_28 = arith.constant dense<0.000000e+00> : vector<2x8x768xf32>
    %47 = tpu.matmul %46, %4, %cst_28 {dimension_numbers = #tpu.dot_dimension_numbers<[2], [1], [1], [2], [0, 0, 0, 1, 1, 2], [0], [0]>} : vector<2x8x8xf32>, vector<2x8x768xf32>, vector<2x8x768xf32> -> vector<2x8x768xf32>
    %48 = vector.shape_cast %31 : vector<2x8xf32> to vector<2x8x1xf32>
    %49 = vector.broadcast %48 : vector<2x8x1xf32> to vector<2x8x768xf32>
    %50 = arith.mulf %49, %47 : vector<2x8x768xf32>
    %51 = arith.addf %4, %50 : vector<2x8x768xf32>
    %52 = tpu.concatenate %29, %51 in 2 : vector<2x8x768xf32>, vector<2x8x768xf32> -> vector<2x8x1536xf32>
    %53 = vector.shape_cast %52 : vector<2x8x1536xf32> to vector<16x1536xf32>
    %54 = arith.truncf %53 : vector<16x1536xf32> to vector<16x1536xbf16>
    %c0_i32_29 = arith.constant 0 : i32
    %55 = tpu.memref_slice %arg17[%c0_i32_29] : memref<2x!tpu.dma_semaphore, #tpu.memory_space<semaphore_mem>> -> memref<1x!tpu.dma_semaphore, #tpu.memory_space<semaphore_mem>>
    %56 = tpu.memref_squeeze %55 : memref<1x!tpu.dma_semaphore, #tpu.memory_space<semaphore_mem>> -> memref<!tpu.dma_semaphore, #tpu.memory_space<semaphore_mem>>
    tpu.wait_dma2 semaphore(%56 : memref<!tpu.dma_semaphore, #tpu.memory_space<semaphore_mem>>) src(%arg8 : memref<1536x768xbf16, #tpu.memory_space<any>>) dst(%arg15 : memref<1536x768xbf16, #tpu.memory_space<vmem>>)
    %c0_30 = arith.constant 0 : index
    %c0_31 = arith.constant 0 : index
    %57 = vector.load %arg15[%c0_30, %c0_31] : memref<1536x768xbf16, #tpu.memory_space<vmem>>, vector<1536x768xbf16>
    %cst_32 = arith.constant dense<0.000000e+00> : vector<16x768xf32>
    %58 = tpu.matmul %54, %57, %cst_32 {dimension_numbers = #tpu.dot_dimension_numbers<[1], [0], [0], [1], [0, 0, 1, 1], [], []>} : vector<16x1536xbf16>, vector<1536x768xbf16>, vector<16x768xf32> -> vector<16x768xf32>
    %c0_33 = arith.constant 0 : index
    %c0_34 = arith.constant 0 : index
    %59 = vector.load %arg9[%c0_33, %c0_34] : memref<1x768xf32, #tpu.memory_space<vmem>>, vector<1x768xf32>
    %60 = vector.broadcast %59 : vector<1x768xf32> to vector<16x768xf32>
    %61 = arith.addf %58, %60 : vector<16x768xf32>
    %cst_35 = arith.constant 5.000000e-01 : f32
    %62 = vector.broadcast %cst_35 : f32 to vector<16x768xf32>
    %63 = arith.mulf %62, %61 : vector<16x768xf32>
    %c1_i32_36 = arith.constant 1 : i32
    %64 = tpu.memref_slice %arg17[%c1_i32_36] : memref<2x!tpu.dma_semaphore, #tpu.memory_space<semaphore_mem>> -> memref<1x!tpu.dma_semaphore, #tpu.memory_space<semaphore_mem>>
    %65 = tpu.memref_squeeze %64 : memref<1x!tpu.dma_semaphore, #tpu.memory_space<semaphore_mem>> -> memref<!tpu.dma_semaphore, #tpu.memory_space<semaphore_mem>>
    tpu.wait_dma2 semaphore(%65 : memref<!tpu.dma_semaphore, #tpu.memory_space<semaphore_mem>>) src(%arg10 : memref<768x768xbf16, #tpu.memory_space<any>>) dst(%arg16 : memref<768x768xbf16, #tpu.memory_space<vmem>>)
    %66 = vector.shape_cast %7 : vector<2x8x768xf32> to vector<16x768xf32>
    %67 = arith.truncf %66 : vector<16x768xf32> to vector<16x768xbf16>
    %c0_37 = arith.constant 0 : index
    %c0_38 = arith.constant 0 : index
    %68 = vector.load %arg16[%c0_37, %c0_38] : memref<768x768xbf16, #tpu.memory_space<vmem>>, vector<768x768xbf16>
    %cst_39 = arith.constant dense<0.000000e+00> : vector<16x768xf32>
    %69 = tpu.matmul %67, %68, %cst_39 {dimension_numbers = #tpu.dot_dimension_numbers<[1], [0], [0], [1], [0, 0, 1, 1], [], []>} : vector<16x768xbf16>, vector<768x768xbf16>, vector<16x768xf32> -> vector<16x768xf32>
    %c0_40 = arith.constant 0 : index
    %c0_41 = arith.constant 0 : index
    %70 = vector.load %arg11[%c0_40, %c0_41] : memref<1x768xf32, #tpu.memory_space<vmem>>, vector<1x768xf32>
    %71 = vector.broadcast %70 : vector<1x768xf32> to vector<16x768xf32>
    %72 = arith.addf %69, %71 : vector<16x768xf32>
    %73 = arith.negf %72 : vector<16x768xf32>
    %74 = math.exp %73 : vector<16x768xf32>
    %cst_42 = arith.constant 1.000000e+00 : f32
    %75 = vector.broadcast %cst_42 : f32 to vector<16x768xf32>
    %76 = arith.addf %75, %74 : vector<16x768xf32>
    %77 = arith.divf %75, %76 : vector<16x768xf32>
    %78 = vector.shape_cast %77 : vector<16x768xf32> to vector<2x8x768xf32>
    %c0_43 = arith.constant 0 : index
    %c0_44 = arith.constant 0 : index
    %79 = vector.load %arg12[%c0_43, %c0_44] : memref<1x768xf32, #tpu.memory_space<vmem>>, vector<1x768xf32>
    %80 = vector.shape_cast %79 : vector<1x768xf32> to vector<1x1x768xf32>
    %81 = vector.broadcast %80 : vector<1x1x768xf32> to vector<2x8x768xf32>
    %82 = arith.mulf %78, %81 : vector<2x8x768xf32>
    %cst_45 = arith.constant dense<0.000000e+00> : vector<2x8xf32>
    %83 = vector.multi_reduction <add>, %82, %cst_45 [2] : vector<2x8x768xf32> to vector<2x8xf32>
    %84 = vector.shape_cast %83 : vector<2x8xf32> to vector<2x8x1xf32>
    %cst_46 = arith.constant dense<0xFF800000> : vector<2x1xf32>
    %85 = vector.multi_reduction <maximumf>, %84, %cst_46 [1] : vector<2x8x1xf32> to vector<2x1xf32>
    %86 = vector.shape_cast %85 : vector<2x1xf32> to vector<2x1x1xf32>
    %87 = vector.broadcast %86 : vector<2x1x1xf32> to vector<2x8x1xf32>
    %88 = arith.subf %84, %87 : vector<2x8x1xf32>
    %89 = math.exp %88 : vector<2x8x1xf32>
    %cst_47 = arith.constant dense<0.000000e+00> : vector<2x1xf32>
    %90 = vector.multi_reduction <add>, %89, %cst_47 [1] : vector<2x8x1xf32> to vector<2x1xf32>
    %91 = vector.shape_cast %90 : vector<2x1xf32> to vector<2x1x1xf32>
    %92 = vector.broadcast %91 : vector<2x1x1xf32> to vector<2x8x1xf32>
    %93 = arith.divf %89, %92 : vector<2x8x1xf32>
    %94 = vector.shape_cast %63 : vector<16x768xf32> to vector<2x8x768xf32>
    %95 = vector.broadcast %93 : vector<2x8x1xf32> to vector<2x8x768xf32>
    %96 = arith.mulf %95, %94 : vector<2x8x768xf32>
    %cst_48 = arith.constant dense<0.000000e+00> : vector<2x768xf32>
    %97 = vector.multi_reduction <add>, %96, %cst_48 [1] : vector<2x8x768xf32> to vector<2x768xf32>
    %98 = vector.shape_cast %97 : vector<2x768xf32> to vector<2x1x768xf32>
    %c0_49 = arith.constant 0 : index
    %c0_50 = arith.constant 0 : index
    %99 = vector.load %arg13[%c0_49, %c0_50] : memref<1x768xf32, #tpu.memory_space<vmem>>, vector<1x768xf32>
    %100 = vector.shape_cast %99 : vector<1x768xf32> to vector<1x1x768xf32>
    %101 = vector.broadcast %100 : vector<1x1x768xf32> to vector<2x1x768xf32>
    %102 = arith.mulf %98, %101 : vector<2x1x768xf32>
    %cst_51 = arith.constant dense<0.000000e+00> : vector<2x1xf32>
    %103 = vector.multi_reduction <add>, %102, %cst_51 [2] : vector<2x1x768xf32> to vector<2x1xf32>
    %104 = vector.shape_cast %103 : vector<2x1xf32> to vector<2x1x1xf32>
    %c0_52 = arith.constant 0 : index
    %c0_53 = arith.constant 0 : index
    %c0_54 = arith.constant 0 : index
    %105 = vector.load %arg14[%c0_52, %c0_53, %c0_54] : memref<2x1x1xf32, #tpu.memory_space<vmem>>, vector<2x1x1xf32>
    tpu.vector_store %arg14[%c0_52, %c0_53, %c0_54], %104 {strides = array<i32>} : memref<2x1x1xf32, #tpu.memory_space<vmem>>, vector<2x1x1xf32>,
    return
  }
  func.func @transform_0(%arg0: i32) -> (i32, i32, i32) {
    %c0_i32 = arith.constant 0 : i32
    %c0_i32_0 = arith.constant 0 : i32
    %c0_i32_1 = arith.constant 0 : i32
    %c0_i32_2 = arith.constant 0 : i32
    return %c0_i32, %c0_i32_0, %c0_i32_1 : i32, i32, i32
  }
  func.func @transform_1(%arg0: i32) -> (i32, i32, i32) {
    %c0_i32 = arith.constant 0 : i32
    %c0_i32_0 = arith.constant 0 : i32
    %c0_i32_1 = arith.constant 0 : i32
    %c0_i32_2 = arith.constant 0 : i32
    return %c0_i32, %c0_i32_0, %c0_i32_1 : i32, i32, i32
  }
  func.func @transform_2(%arg0: i32) -> (i32, i32, i32) {
    %c0_i32 = arith.constant 0 : i32
    %c0_i32_0 = arith.constant 0 : i32
    %c0_i32_1 = arith.constant 0 : i32
    %c0_i32_2 = arith.constant 0 : i32
    return %c0_i32, %c0_i32_0, %c0_i32_1 : i32, i32, i32
  }
  func.func @transform_3(%arg0: i32) -> (i32, i32, i32) {
    %c0_i32 = arith.constant 0 : i32
    %c0_i32_0 = arith.constant 0 : i32
    %c0_i32_1 = arith.constant 0 : i32
    %c0_i32_2 = arith.constant 0 : i32
    return %c0_i32, %c0_i32_0, %c0_i32_1 : i32, i32, i32
  }
  func.func @transform_4(%arg0: i32) -> (i32, i32, i32) {
    %c0_i32 = arith.constant 0 : i32
    %c0_i32_0 = arith.constant 0 : i32
    %c0_i32_1 = arith.constant 0 : i32
    %c0_i32_2 = arith.constant 0 : i32
    return %c0_i32, %c0_i32_0, %c0_i32_1 : i32, i32, i32
  }
  func.func @transform_5(%arg0: i32) -> (i32, i32) {
    %c0_i32 = arith.constant 0 : i32
    %c0_i32_0 = arith.constant 0 : i32
    %c0_i32_1 = arith.constant 0 : i32
    return %c0_i32, %c0_i32_0 : i32, i32
  }
  func.func @transform_6(%arg0: i32) -> (i32, i32) {
    %c0_i32 = arith.constant 0 : i32
    %c0_i32_0 = arith.constant 0 : i32
    %c0_i32_1 = arith.constant 0 : i32
    return %c0_i32, %c0_i32_0 : i32, i32
  }
  func.func @transform_8(%arg0: i32) -> (i32, i32) {
    %c0_i32 = arith.constant 0 : i32
    %c0_i32_0 = arith.constant 0 : i32
    %c0_i32_1 = arith.constant 0 : i32
    return %c0_i32, %c0_i32_0 : i32, i32
  }
  func.func @transform_10(%arg0: i32) -> (i32, i32) {
    %c0_i32 = arith.constant 0 : i32
    %c0_i32_0 = arith.constant 0 : i32
    %c0_i32_1 = arith.constant 0 : i32
    return %c0_i32, %c0_i32_0 : i32, i32
  }
  func.func @transform_11(%arg0: i32) -> (i32, i32) {
    %c0_i32 = arith.constant 0 : i32
    %c0_i32_0 = arith.constant 0 : i32
    %c0_i32_1 = arith.constant 0 : i32
    return %c0_i32, %c0_i32_0 : i32, i32
  }
  func.func @transform_12(%arg0: i32) -> (i32, i32) {
    %c0_i32 = arith.constant 0 : i32
    %c0_i32_0 = arith.constant 0 : i32
    %c0_i32_1 = arith.constant 0 : i32
    return %c0_i32, %c0_i32_0 : i32, i32
  }
  func.func @transform_13(%arg0: i32) -> (i32, i32, i32) {
    %c0_i32 = arith.constant 0 : i32
    %c0_i32_0 = arith.constant 0 : i32
    %c0_i32_1 = arith.constant 0 : i32
    %c0_i32_2 = arith.constant 0 : i32
    return %c0_i32, %c0_i32_0, %c0_i32_1 : i32, i32, i32
  }
}

</mosaic_0001>

<llo_original>
// kernel: dpam_forward.1
$region0: #{dpam_forward.1}
  #allocation0 [shape = 'u32[]', space=smem, size = 0x4, offset = 0x4, fixed_abs, tag = 'smem constant byte address 0x4 - core index']
  #allocation1 [shape = 'u32[144,128]{1,0:T(1,128)}', space=vmem, size = 0x12000, scoped, tag = 'internal scratch']
  #allocation2 [shape = 'bf16[1536,768]{1,0:T(16,128)(2,1)}', space=vmem, size = 0x240000, scoped, tag = 'scratch operand']
  #allocation3 [shape = 'bf16[768,768]{1,0:T(16,128)(2,1)}', space=vmem, size = 0x120000, scoped, tag = 'scratch operand']
  #allocation4 [shape = 's32[2]{0}', space=sflag, size = 0x8, scoped, tag = 'scratch operand']
  #allocation21 [shape = 's32[]', space=sflag, size = 0x4, offset = 0, fixed_abs, tag = 'sflag constant byte address 0x0 - dummy sync flag']
  #allocation23 [shape = 's32[]', space=sflag, size = 0x4, offset = 0, fixed_abs, tag = 'sflag constant byte address 0x0 - dummy sync flag']
  %s0 = inlined_call_operand.hbm [shape: f32[2,8,768], index: 0, kind: input, shape index: {}]
  %s1 = inlined_call_operand.hbm [shape: f32[2,80,768], index: 1, kind: input, shape index: {}]
  %s2 = inlined_call_operand.hbm [shape: f32[2,80,768], index: 2, kind: input, shape index: {}]
  %s3 = inlined_call_operand.hbm [shape: f32[2,8,768], index: 3, kind: input, shape index: {}]
  %s4 = inlined_call_operand.vmem [shape: f32[2,2,8], index: 4, kind: input, shape index: {}]
  %s5 = inlined_call_operand.hbm [shape: bf16[768,768], index: 5, kind: input, shape index: {}]
  %s6 = inlined_call_operand.hbm [shape: bf16[768,768], index: 6, kind: input, shape index: {}]
  %s7 = inlined_call_operand.hbm [shape: bf16[1536,768], index: 7, kind: input, shape index: {}]
  %s8 = inlined_call_operand.hbm [shape: f32[1,768], index: 8, kind: input, shape index: {}]
  %s9 = inlined_call_operand.hbm [shape: bf16[768,768], index: 9, kind: input, shape index: {}]
  %s10 = inlined_call_operand.hbm [shape: f32[1,768], index: 10, kind: input, shape index: {}]
  %s11 = inlined_call_operand.hbm [shape: f32[1,768], index: 11, kind: input, shape index: {}]
  %s12 = inlined_call_operand.hbm [shape: f32[1,768], index: 12, kind: input, shape index: {}]
  %s13 = inlined_call_operand.vmem [shape: f32[2,1,1], index: 13, kind: output, shape index: {}]
  %s14 = sld [smem:[#allocation0]]
  $region94: #{dpam_forward.1} parent=0
    _
  %s16 = ssub.s32 1, %s14
  %s17 = scalar_select 0, %s16, %s14
  $region1: #{dpam_forward.1} parent=0
    #allocation5 [shape = 'u8[49152]{0}', space=vmem, size = 0xc000, scoped, tag = 'input window, operand 0, single buffered']
    #allocation6 [shape = 's32[1]{0}', space=sflag, size = 0x4, scoped, tag = 'scoped memory for dpam_forward.1']
    #allocation7 [shape = 'u8[49152]{0}', space=vmem, size = 0xc000, scoped, tag = 'input window, operand 1, single buffered']
    #allocation8 [shape = 's32[1]{0}', space=sflag, size = 0x4, scoped, tag = 'scoped memory for dpam_forward.1']
    #allocation9 [shape = 'u8[49152]{0}', space=vmem, size = 0xc000, scoped, tag = 'input window, operand 2, single buffered']
    #allocation10 [shape = 'u8[49152]{0}', space=vmem, size = 0xc000, scoped, tag = 'input window, operand 3, single buffered']
    #allocation11 [shape = 's32[1]{0}', space=sflag, size = 0x4, scoped, tag = 'scoped memory for dpam_forward.1']
    #allocation12 [shape = 'u8[1179648]{0}', space=vmem, size = 0x120000, scoped, tag = 'input window, operand 5, single buffered']
    #allocation13 [shape = 'u8[1179648]{0}', space=vmem, size = 0x120000, scoped, tag = 'input window, operand 6, single buffered']
    #allocation14 [shape = 's32[1]{0}', space=sflag, size = 0x4, scoped, tag = 'scoped memory for dpam_forward.1']
    #allocation15 [shape = 'u8[3072]{0}', space=vmem, size = 0xc00, scoped, tag = 'input window, operand 8, single buffered']
    #allocation16 [shape = 'u8[3072]{0}', space=vmem, size = 0xc00, scoped, tag = 'input window, operand 10, single buffered']
    #allocation17 [shape = 's32[1]{0}', space=sflag, size = 0x4, scoped, tag = 'scoped memory for dpam_forward.1']
    #allocation18 [shape = 'u8[3072]{0}', space=vmem, size = 0xc00, scoped, tag = 'input window, operand 11, single buffered']
    #allocation19 [shape = 'u8[3072]{0}', space=vmem, size = 0xc00, scoped, tag = 'input window, operand 12, single buffered']
    #allocation20 [shape = 's32[1]{0}', space=sflag, size = 0x4, scoped, tag = 'scoped memory for dpam_forward.1']
    #allocation22 [shape = 'u32[9]{0}', space=smem, size = 0x24, scoped, tag = 'DMA stride descriptor']
    #allocation24 [shape = 'u32[9]{0}', space=smem, size = 0x24, scoped, tag = 'DMA stride descriptor']
    %18 = vsyncpa [#allocation6], 0
    %19 = vsyncpa [#allocation8], 0
    %20 = vsyncpa [#allocation11], 0
    %21 = vsyncpa [#allocation14], 0
    %22 = vsyncpa [#allocation17], 0
    %23 = vsyncpa [#allocation20], 0
    // Predicated region
    $region2: #{dpam_forward.1} parent=1 // pred_check
      _
    $region3: #{dpam_forward.1} parent=1 // pred_check_branch
      %25 = sbr.rel (0) target = $region5
    $region4: #{dpam_forward.1} parent=1 // pred_region
      %s27 = ssub.s32 1536, 1536
      %28 = vsyncadd [#allocation6], %s27
      %s29 = sshll.u32 [#allocation5], 4
      %s30 = int_to_ptr.vmem [resolvable:$true] %s29
      %35 = dma.hbm_to_vmem [thread:$0]  %s0, 1536, %s30, [#allocation6], 768, 768, 48
    $region5: #{dpam_forward.1} parent=1 // pred_fallthru
      _
    // Predicated region
    $region6: #{dpam_forward.1} parent=1 // pred_check
      _
    $region7: #{dpam_forward.1} parent=1 // pred_check_branch
      %37 = sbr.rel (0) target = $region9
    $region8: #{dpam_forward.1} parent=1 // pred_region
      %s39 = ssub.s32 1536, 1536
      %40 = vsyncadd [#allocation8], %s39
      %s41 = sshll.u32 [#allocation7], 4
      %s42 = int_to_ptr.vmem [resolvable:$true] %s41
      %47 = dma.hbm_to_vmem [thread:$0]  %s1, 1536, %s42, [#allocation8], 7680, 768, 48
    $region9: #{dpam_forward.1} parent=1 // pred_fallthru
      _
    // Predicated region
    $region10: #{dpam_forward.1} parent=1 // pred_check
      _
    $region11: #{dpam_forward.1} parent=1 // pred_check_branch
      %49 = sbr.rel (0) target = $region13
    $region12: #{dpam_forward.1} parent=1 // pred_region
      %s51 = ssub.s32 1536, 1536
      %52 = vsyncadd [#allocation8], %s51
      %s53 = sshll.u32 [#allocation9], 4
      %s54 = int_to_ptr.vmem [resolvable:$true] %s53
      %59 = dma.hbm_to_vmem [thread:$0]  %s2, 1536, %s54, [#allocation8], 7680, 768, 48
    $region13: #{dpam_forward.1} parent=1 // pred_fallthru
      _
    // Predicated region
    $region14: #{dpam_forward.1} parent=1 // pred_check
      _
    $region15: #{dpam_forward.1} parent=1 // pred_check_branch
      %61 = sbr.rel (0) target = $region17
    $region16: #{dpam_forward.1} parent=1 // pred_region
      %s63 = ssub.s32 1536, 1536
      %64 = vsyncadd [#allocation11], %s63
      %s65 = sshll.u32 [#allocation10], 4
      %s66 = int_to_ptr.vmem [resolvable:$true] %s65
      %71 = dma.hbm_to_vmem [thread:$0]  %s3, 1536, %s66, [#allocation11], 768, 768, 48
    $region17: #{dpam_forward.1} parent=1 // pred_fallthru
      _
    // Predicated region
    $region18: #{dpam_forward.1} parent=1 // pred_check
      _
    $region19: #{dpam_forward.1} parent=1 // pred_check_branch
      %73 = sbr.rel (0) target = $region21
    $region20: #{dpam_forward.1} parent=1 // pred_region
      _
    $region21: #{dpam_forward.1} parent=1 // pred_fallthru
      _
    // Predicated region
    $region22: #{dpam_forward.1} parent=1 // pred_check
      _
    $region23: #{dpam_forward.1} parent=1 // pred_check_branch
      %75 = sbr.rel (0) target = $region25
    $region24: #{dpam_forward.1} parent=1 // pred_region
      %s77 = ssub.s32 36864, 36864
      %78 = vsyncadd [#allocation11], %s77
      %s79 = sshll.u32 [#allocation12], 4
      %s80 = int_to_ptr.vmem [resolvable:$true] %s79
      %85 = dma.hbm_to_vmem [thread:$0]  %s5, 36864, %s80, [#allocation11], 384, 384, 24
    $region25: #{dpam_forward.1} parent=1 // pred_fallthru
      _
    // Predicated region
    $region26: #{dpam_forward.1} parent=1 // pred_check
      _
    $region27: #{dpam_forward.1} parent=1 // pred_check_branch
      %87 = sbr.rel (0) target = $region29
    $region28: #{dpam_forward.1} parent=1 // pred_region
      %s89 = ssub.s32 36864, 36864
      %90 = vsyncadd [#allocation14], %s89
      %s91 = sshll.u32 [#allocation13], 4
      %s92 = int_to_ptr.vmem [resolvable:$true] %s91
      %97 = dma.hbm_to_vmem [thread:$0]  %s6, 36864, %s92, [#allocation14], 384, 384, 24
    $region29: #{dpam_forward.1} parent=1 // pred_fallthru
      _
    // Predicated region
    $region30: #{dpam_forward.1} parent=1 // pred_check
      _
    $region31: #{dpam_forward.1} parent=1 // pred_check_branch
      %99 = sbr.rel (0) target = $region33
    $region32: #{dpam_forward.1} parent=1 // pred_region
      %s101 = ssub.s32 96, 96
      %102 = vsyncadd [#allocation14], %s101
      %s104 = sshll.u32 [#allocation15], 4
      %s105 = int_to_ptr.vmem [resolvable:$true] %s104
      %107 = dma.hbm_to_vmem [thread:$0]  %s8, 96, %s105, [#allocation14]
    $region33: #{dpam_forward.1} parent=1 // pred_fallthru
      _
    // Predicated region
    $region34: #{dpam_forward.1} parent=1 // pred_check
      _
    $region35: #{dpam_forward.1} parent=1 // pred_check_branch
      %109 = sbr.rel (0) target = $region37
    $region36: #{dpam_forward.1} parent=1 // pred_region
      %s111 = ssub.s32 96, 96
      %112 = vsyncadd [#allocation17], %s111
      %s114 = sshll.u32 [#allocation16], 4
      %s115 = int_to_ptr.vmem [resolvable:$true] %s114
      %117 = dma.hbm_to_vmem [thread:$0]  %s10, 96, %s115, [#allocation17]
    $region37: #{dpam_forward.1} parent=1 // pred_fallthru
      _
    // Predicated region
    $region38: #{dpam_forward.1} parent=1 // pred_check
      _
    $region39: #{dpam_forward.1} parent=1 // pred_check_branch
      %119 = sbr.rel (0) target = $region41
    $region40: #{dpam_forward.1} parent=1 // pred_region
      %s121 = ssub.s32 96, 96
      %122 = vsyncadd [#allocation17], %s121
      %s124 = sshll.u32 [#allocation18], 4
      %s125 = int_to_ptr.vmem [resolvable:$true] %s124
      %127 = dma.hbm_to_vmem [thread:$0]  %s11, 96, %s125, [#allocation17]
    $region41: #{dpam_forward.1} parent=1 // pred_fallthru
      _
    // Predicated region
    $region42: #{dpam_forward.1} parent=1 // pred_check
      _
    $region43: #{dpam_forward.1} parent=1 // pred_check_branch
      %129 = sbr.rel (0) target = $region45
    $region44: #{dpam_forward.1} parent=1 // pred_region
      %s131 = ssub.s32 96, 96
      %132 = vsyncadd [#allocation20], %s131
      %s134 = sshll.u32 [#allocation19], 4
      %s135 = int_to_ptr.vmem [resolvable:$true] %s134
      %137 = dma.hbm_to_vmem [thread:$0]  %s12, 96, %s135, [#allocation20]
    $region45: #{dpam_forward.1} parent=1 // pred_fallthru
      _
    // Predicated region
    $region46: #{dpam_forward.1} parent=1 // pred_check
      _
    $region47: #{dpam_forward.1} parent=1 // pred_check_branch
      %139 = sbr.rel (0) target = $region49
    $region48: #{dpam_forward.1} parent=1 // pred_region
      %140 = dma.done [#allocation6], 1536
    $region49: #{dpam_forward.1} parent=1 // pred_fallthru
      _
    // Predicated region
    $region50: #{dpam_forward.1} parent=1 // pred_check
      _
    $region51: #{dpam_forward.1} parent=1 // pred_check_branch
      %142 = sbr.rel (0) target = $region53
    $region52: #{dpam_forward.1} parent=1 // pred_region
      %143 = dma.done [#allocation8], 1536
    $region53: #{dpam_forward.1} parent=1 // pred_fallthru
      _
    // Predicated region
    $region54: #{dpam_forward.1} parent=1 // pred_check
      _
    $region55: #{dpam_forward.1} parent=1 // pred_check_branch
      %145 = sbr.rel (0) target = $region57
    $region56: #{dpam_forward.1} parent=1 // pred_region
      %146 = dma.done [#allocation8], 1536
    $region57: #{dpam_forward.1} parent=1 // pred_fallthru
      _
    // Predicated region
    $region58: #{dpam_forward.1} parent=1 // pred_check
      _
    $region59: #{dpam_forward.1} parent=1 // pred_check_branch
      %148 = sbr.rel (0) target = $region61
    $region60: #{dpam_forward.1} parent=1 // pred_region
      %149 = dma.done [#allocation11], 1536
    $region61: #{dpam_forward.1} parent=1 // pred_fallthru
      _
    // Predicated region
    $region62: #{dpam_forward.1} parent=1 // pred_check
      _
    $region63: #{dpam_forward.1} parent=1 // pred_check_branch
      %151 = sbr.rel (0) target = $region65
    $region64: #{dpam_forward.1} parent=1 // pred_region
      %152 = dma.done [#allocation11], 36864
    $region65: #{dpam_forward.1} parent=1 // pred_fallthru
      _
    // Predicated region
    $region66: #{dpam_forward.1} parent=1 // pred_check
      _
    $region67: #{dpam_forward.1} parent=1 // pred_check_branch
      %154 = sbr.rel (0) target = $region69
    $region68: #{dpam_forward.1} parent=1 // pred_region
      %155 = dma.done [#allocation14], 36864
    $region69: #{dpam_forward.1} parent=1 // pred_fallthru
      _
    // Predicated region
    $region70: #{dpam_forward.1} parent=1 // pred_check
      _
    $region71: #{dpam_forward.1} parent=1 // pred_check_branch
      %157 = sbr.rel (0) target = $region73
    $region72: #{dpam_forward.1} parent=1 // pred_region
      %158 = dma.done [#allocation14], 96
    $region73: #{dpam_forward.1} parent=1 // pred_fallthru
      _
    // Predicated region
    $region74: #{dpam_forward.1} parent=1 // pred_check
      _
    $region75: #{dpam_forward.1} parent=1 // pred_check_branch
      %160 = sbr.rel (0) target = $region77
    $region76: #{dpam_forward.1} parent=1 // pred_region
      %161 = dma.done [#allocation17], 96
    $region77: #{dpam_forward.1} parent=1 // pred_fallthru
      _
    // Predicated region
    $region78: #{dpam_forward.1} parent=1 // pred_check
      _
    $region79: #{dpam_forward.1} parent=1 // pred_check_branch
      %163 = sbr.rel (0) target = $region81
    $region80: #{dpam_forward.1} parent=1 // pred_region
      %164 = dma.done [#allocation17], 96
    $region81: #{dpam_forward.1} parent=1 // pred_fallthru
      _
    // Predicated region
    $region82: #{dpam_forward.1} parent=1 // pred_check
      _
    $region83: #{dpam_forward.1} parent=1 // pred_check_branch
      %166 = sbr.rel (0) target = $region85
    $region84: #{dpam_forward.1} parent=1 // pred_region
      %167 = dma.done [#allocation20], 96
    $region85: #{dpam_forward.1} parent=1 // pred_fallthru
      _
    %s169 = sshll.u32 1, 14
    %s170 = sxor.u32 4294967295, %s169
    %s172 = sld [smem:[#allocation0]]
    %s173 = sadd.s32 2, %s172
    %s175 = sshll.u32 7, 26
    %s176 = sxor.u32 4294967295, %s175
    %s177 = sand.u32 0, %s176
    %s178 = sshll.u32 %s173, 26
    %s179 = sor.u32 %s177, %s178
    %s180 = sshll.u32 [#allocation2], 4
    %s181 = int_to_ptr.vmem [resolvable:$true] %s180
    %184 = sst [smem:[#allocation22]] 768
    %s185 = scalar_lea.smem [#allocation22], 1
    %186 = sst [smem:[%s185]] 768
    %s187 = scalar_lea.smem [#allocation22], 2
    %188 = sst [smem:[%s187]] 6
    %s189 = scalar_lea.smem [#allocation22], 3
    %190 = sst [smem:[%s189]] 64
    %s191 = scalar_lea.smem [#allocation22], 4
    %192 = sst [smem:[%s191]] 128
    %s193 = scalar_lea.smem [#allocation22], 5
    %194 = sst [smem:[%s193]] 2
    %s195 = scalar_lea.smem [#allocation22], 6
    %196 = sst [smem:[%s195]] 384
    %s197 = scalar_lea.smem [#allocation22], 7
    %198 = sst [smem:[%s197]] 64
    %s199 = scalar_lea.smem [#allocation22], 8
    %200 = sst [smem:[%s199]] 4
    %202 = dma.general %s7, 73728, %s181, [#allocation4], [#allocation21], [#allocation22], %s179, 0
    %s203 = scalar_lea.sflag [#allocation4], 1
    %s205 = sshll.u32 1, 14
    %s206 = sxor.u32 4294967295, %s205
    %s208 = sadd.s32 2, %s172
    %s210 = sshll.u32 7, 26
    %s211 = sxor.u32 4294967295, %s210
    %s212 = sand.u32 0, %s211
    %s213 = sshll.u32 %s208, 26
    %s214 = sor.u32 %s212, %s213
    %s215 = sshll.u32 [#allocation3], 4
    %s216 = int_to_ptr.vmem [resolvable:$true] %s215
    %219 = sst [smem:[#allocation24]] 768
    %s220 = scalar_lea.smem [#allocation24], 1
    %221 = sst [smem:[%s220]] 768
    %s222 = scalar_lea.smem [#allocation24], 2
    %223 = sst [smem:[%s222]] 6
    %s224 = scalar_lea.smem [#allocation24], 3
    %225 = sst [smem:[%s224]] 64
    %s226 = scalar_lea.smem [#allocation24], 4
    %227 = sst [smem:[%s226]] 128
    %s228 = scalar_lea.smem [#allocation24], 5
    %229 = sst [smem:[%s228]] 2
    %s230 = scalar_lea.smem [#allocation24], 6
    %231 = sst [smem:[%s230]] 384
    %s232 = scalar_lea.smem [#allocation24], 7
    %233 = sst [smem:[%s232]] 64
    %s234 = scalar_lea.smem [#allocation24], 8
    %235 = sst [smem:[%s234]] 4
    %237 = dma.general %s9, 36864, %s216, %s203, [#allocation23], [#allocation24], %s214, 0
    %v238 = vld [vmem:[#allocation5] sm:$0xff]
    %v239 = vld [vmem:[#allocation5 + $0x8] sm:$0xff]
    %v240 = vld [vmem:[#allocation5 + $0x10] sm:$0xff]
    %v241 = vld [vmem:[#allocation5 + $0x18] sm:$0xff]
    %v242 = vld [vmem:[#allocation5 + $0x20] sm:$0xff]
    %v243 = vld [vmem:[#allocation5 + $0x28] sm:$0xff]
    %v244 = vld [vmem:[#allocation5 + $0x30] sm:$0xff]
    %v245 = vld [vmem:[#allocation5 + $0x38] sm:$0xff]
    %v246 = vld [vmem:[#allocation5 + $0x40] sm:$0xff]
    %v247 = vld [vmem:[#allocation5 + $0x48] sm:$0xff]
    %v248 = vld [vmem:[#allocation5 + $0x50] sm:$0xff]
    %v249 = vld [vmem:[#allocation5 + $0x58] sm:$0xff]
    %v250 = vld [vmem:[#allocation7] sm:$0xff]
    %v251 = vld [vmem:[#allocation7 + $0x8] sm:$0xff]
    %v252 = vld [vmem:[#allocation7 + $0x10] sm:$0xff]
    %v253 = vld [vmem:[#allocation7 + $0x18] sm:$0xff]
    %v254 = vld [vmem:[#allocation7 + $0x20] sm:$0xff]
    %v255 = vld [vmem:[#allocation7 + $0x28] sm:$0xff]
    %v256 = vld [vmem:[#allocation7 + $0x30] sm:$0xff]
    %v257 = vld [vmem:[#allocation7 + $0x38] sm:$0xff]
    %v258 = vld [vmem:[#allocation7 + $0x40] sm:$0xff]
    %v259 = vld [vmem:[#allocation7 + $0x48] sm:$0xff]
    %v260 = vld [vmem:[#allocation7 + $0x50] sm:$0xff]
    %v261 = vld [vmem:[#allocation7 + $0x58] sm:$0xff]
    %v262 = vld [vmem:[#allocation9] sm:$0xff]
    %v263 = vld [vmem:[#allocation9 + $0x8] sm:$0xff]
    %v264 = vld [vmem:[#allocation9 + $0x10] sm:$0xff]
    %v265 = vld [vmem:[#allocation9 + $0x18] sm:$0xff]
    %v266 = vld [vmem:[#allocation9 + $0x20] sm:$0xff]
    %v267 = vld [vmem:[#allocation9 + $0x28] sm:$0xff]
    %v268 = vld [vmem:[#allocation9 + $0x30] sm:$0xff]
    %v269 = vld [vmem:[#allocation9 + $0x38] sm:$0xff]
    %v270 = vld [vmem:[#allocation9 + $0x40] sm:$0xff]
    %v271 = vld [vmem:[#allocation9 + $0x48] sm:$0xff]
    %v272 = vld [vmem:[#allocation9 + $0x50] sm:$0xff]
    %v273 = vld [vmem:[#allocation9 + $0x58] sm:$0xff]
    %v274 = vld [vmem:[#allocation10] sm:$0xff]
    %v275 = vld [vmem:[#allocation10 + $0x8] sm:$0xff]
    %v276 = vld [vmem:[#allocation10 + $0x10] sm:$0xff]
    %v277 = vld [vmem:[#allocation10 + $0x18] sm:$0xff]
    %v278 = vld [vmem:[#allocation10 + $0x20] sm:$0xff]
    %v279 = vld [vmem:[#allocation10 + $0x28] sm:$0xff]
    %v280 = vld [vmem:[#allocation10 + $0x30] sm:$0xff]
    %v281 = vld [vmem:[#allocation10 + $0x38] sm:$0xff]
    %v282 = vld [vmem:[#allocation10 + $0x40] sm:$0xff]
    %v283 = vld [vmem:[#allocation10 + $0x48] sm:$0xff]
    %v284 = vld [vmem:[#allocation10 + $0x50] sm:$0xff]
    %v285 = vld [vmem:[#allocation10 + $0x58] sm:$0xff]
    %v286 = vld [vmem:[%s4] sm:$0x3]
    %v287 = vpack.c.bf16 %v256, %v250
    %v288 = vpack.c.bf16 %v257, %v251
    %v289 = vpack.c.bf16 %v258, %v252
    %v290 = vpack.c.bf16 %v259, %v253
    %v291 = vpack.c.bf16 %v260, %v254
    %v292 = vpack.c.bf16 %v261, %v255
    %v293 = vld [vmem:[#allocation12] sm:$0xff]
    %v294 = vld [vmem:[#allocation12 + $0x8] sm:$0xff]
    %v295 = vld [vmem:[#allocation12 + $0x10] sm:$0xff]
    %v296 = vld [vmem:[#allocation12 + $0x18] sm:$0xff]
    %v297 = vld [vmem:[#allocation12 + $0x20] sm:$0xff]
    %v298 = vld [vmem:[#allocation12 + $0x28] sm:$0xff]
    %v299 = vld [vmem:[#allocation12 + $0x30] sm:$0xff]
    %v300 = vld [vmem:[#allocation12 + $0x38] sm:$0xff]
    %v301 = vld [vmem:[#allocation12 + $0x40] sm:$0xff]
    %v302 = vld [vmem:[#allocation12 + $0x48] sm:$0xff]
    %v303 = vld [vmem:[#allocation12 + $0x50] sm:$0xff]
    %v304 = vld [vmem:[#allocation12 + $0x58] sm:$0xff]
    %v305 = vld [vmem:[#allocation12 + $0x60] sm:$0xff]
    %v306 = vld [vmem:[#allocation12 + $0x68] sm:$0xff]
    %v307 = vld [vmem:[#allocation12 + $0x70] sm:$0xff]
    %v308 = vld [vmem:[#allocation12 + $0x78] sm:$0xff]
    %v309 = vld [vmem:[#allocation12 + $0x80] sm:$0xff]
    %v310 = vld [vmem:[#allocation12 + $0x88] sm:$0xff]
    %v311 = vld [vmem:[#allocation12 + $0x90] sm:$0xff]
    %v312 = vld [vmem:[#allocation12 + $0x98] sm:$0xff]
    %v313 = vld [vmem:[#allocation12 + $0xa0] sm:$0xff]
    %v314 = vld [vmem:[#allocation12 + $0xa8] sm:$0xff]
    %v315 = vld [vmem:[#allocation12 + $0xb0] sm:$0xff]
    %v316 = vld [vmem:[#allocation12 + $0xb8] sm:$0xff]
    %v317 = vld [vmem:[#allocation12 + $0xc0] sm:$0xff]
    %v318 = vld [vmem:[#allocation12 + $0xc8] sm:$0xff]
    %v319 = vld [vmem:[#allocation12 + $0xd0] sm:$0xff]
    %v320 = vld [vmem:[#allocation12 + $0xd8] sm:$0xff]
    %v321 = vld [vmem:[#allocation12 + $0xe0] sm:$0xff]
    %v322 = vld [vmem:[#allocation12 + $0xe8] sm:$0xff]
    %v323 = vld [vmem:[#allocation12 + $0xf0] sm:$0xff]
    %v324 = vld [vmem:[#allocation12 + $0xf8] sm:$0xff]
    %v325 = vld [vmem:[#allocation12 + $0x100] sm:$0xff]
    %v326 = vld [vmem:[#allocation12 + $0x108] sm:$0xff]
    %v327 = vld [vmem:[#allocation12 + $0x110] sm:$0xff]
    %v328 = vld [vmem:[#allocation12 + $0x118] sm:$0xff]
    %v329 = vld [vmem:[#allocation12 + $0x120] sm:$0xff]
    %v330 = vld [vmem:[#allocation12 + $0x128] sm:$0xff]
    %v331 = vld [vmem:[#allocation12 + $0x130] sm:$0xff]
    %v332 = vld [vmem:[#allocation12 + $0x138] sm:$0xff]
    %v333 = vld [vmem:[#allocation12 + $0x140] sm:$0xff]
    %v334 = vld [vmem:[#allocation12 + $0x148] sm:$0xff]
    %v335 = vld [vmem:[#allocation12 + $0x150] sm:$0xff]
    %v336 = vld [vmem:[#allocation12 + $0x158] sm:$0xff]
    %v337 = vld [vmem:[#allocation12 + $0x160] sm:$0xff]
    %v338 = vld [vmem:[#allocation12 + $0x168] sm:$0xff]
    %v339 = vld [vmem:[#allocation12 + $0x170] sm:$0xff]
    %v340 = vld [vmem:[#allocation12 + $0x178] sm:$0xff]
    %v341 = vld [vmem:[#allocation12 + $0x180] sm:$0xff]
    %v342 = vld [vmem:[#allocation12 + $0x188] sm:$0xff]
    %v343 = vld [vmem:[#allocation12 + $0x190] sm:$0xff]
    %v344 = vld [vmem:[#allocation12 + $0x198] sm:$0xff]
    %v345 = vld [vmem:[#allocation12 + $0x1a0] sm:$0xff]
    %v346 = vld [vmem:[#allocation12 + $0x1a8] sm:$0xff]
    %v347 = vld [vmem:[#allocation12 + $0x1b0] sm:$0xff]
    %v348 = vld [vmem:[#allocation12 + $0x1b8] sm:$0xff]
    %v349 = vld [vmem:[#allocation12 + $0x1c0] sm:$0xff]
    %v350 = vld [vmem:[#allocation12 + $0x1c8] sm:$0xff]
    %v351 = vld [vmem:[#allocation12 + $0x1d0] sm:$0xff]
    %v352 = vld [vmem:[#allocation12 + $0x1d8] sm:$0xff]
    %v353 = vld [vmem:[#allocation12 + $0x1e0] sm:$0xff]
    %v354 = vld [vmem:[#allocation12 + $0x1e8] sm:$0xff]
    %v355 = vld [vmem:[#allocation12 + $0x1f0] sm:$0xff]
    %v356 = vld [vmem:[#allocation12 + $0x1f8] sm:$0xff]
    %v357 = vld [vmem:[#allocation12 + $0x200] sm:$0xff]
    %v358 = vld [vmem:[#allocation12 + $0x208] sm:$0xff]
    %v359 = vld [vmem:[#allocation12 + $0x210] sm:$0xff]
    %v360 = vld [vmem:[#allocation12 + $0x218] sm:$0xff]
    %v361 = vld [vmem:[#allocation12 + $0x220] sm:$0xff]
    %v362 = vld [vmem:[#allocation12 + $0x228] sm:$0xff]
    %v363 = vld [vmem:[#allocation12 + $0x230] sm:$0xff]
    %v364 = vld [vmem:[#allocation12 + $0x238] sm:$0xff]
    %v365 = vld [vmem:[#allocation12 + $0x240] sm:$0xff]
    %v366 = vld [vmem:[#allocation12 + $0x248] sm:$0xff]
    %v367 = vld [vmem:[#allocation12 + $0x250] sm:$0xff]
    %v368 = vld [vmem:[#allocation12 + $0x258] sm:$0xff]
    %v369 = vld [vmem:[#allocation12 + $0x260] sm:$0xff]
    %v370 = vld [vmem:[#allocation12 + $0x268] sm:$0xff]
    %v371 = vld [vmem:[#allocation12 + $0x270] sm:$0xff]
    %v372 = vld [vmem:[#allocation12 + $0x278] sm:$0xff]
    %v373 = vld [vmem:[#allocation12 + $0x280] sm:$0xff]
    %v374 = vld [vmem:[#allocation12 + $0x288] sm:$0xff]
    %v375 = vld [vmem:[#allocation12 + $0x290] sm:$0xff]
    %v376 = vld [vmem:[#allocation12 + $0x298] sm:$0xff]
    %v377 = vld [vmem:[#allocation12 + $0x2a0] sm:$0xff]
    %v378 = vld [vmem:[#allocation12 + $0x2a8] sm:$0xff]
    %v379 = vld [vmem:[#allocation12 + $0x2b0] sm:$0xff]
    %v380 = vld [vmem:[#allocation12 + $0x2b8] sm:$0xff]
    %v381 = vld [vmem:[#allocation12 + $0x2c0] sm:$0xff]
    %v382 = vld [vmem:[#allocation12 + $0x2c8] sm:$0xff]
    %v383 = vld [vmem:[#allocation12 + $0x2d0] sm:$0xff]
    %v384 = vld [vmem:[#allocation12 + $0x2d8] sm:$0xff]
    %v385 = vld [vmem:[#allocation12 + $0x2e0] sm:$0xff]
    %v386 = vld [vmem:[#allocation12 + $0x2e8] sm:$0xff]
    %v387 = vld [vmem:[#allocation12 + $0x2f0] sm:$0xff]
    %v388 = vld [vmem:[#allocation12 + $0x2f8] sm:$0xff]
    %v389 = vld [vmem:[#allocation12 + $0x300] sm:$0xff]
    %v390 = vld [vmem:[#allocation12 + $0x308] sm:$0xff]
    %v391 = vld [vmem:[#allocation12 + $0x310] sm:$0xff]
    %v392 = vld [vmem:[#allocation12 + $0x318] sm:$0xff]
    %v393 = vld [vmem:[#allocation12 + $0x320] sm:$0xff]
    %v394 = vld [vmem:[#allocation12 + $0x328] sm:$0xff]
    %v395 = vld [vmem:[#allocation12 + $0x330] sm:$0xff]
    %v396 = vld [vmem:[#allocation12 + $0x338] sm:$0xff]
    %v397 = vld [vmem:[#allocation12 + $0x340] sm:$0xff]
    %v398 = vld [vmem:[#allocation12 + $0x348] sm:$0xff]
    %v399 = vld [vmem:[#allocation12 + $0x350] sm:$0xff]
    %v400 = vld [vmem:[#allocation12 + $0x358] sm:$0xff]
    %v401 = vld [vmem:[#allocation12 + $0x360] sm:$0xff]
    %v402 = vld [vmem:[#allocation12 + $0x368] sm:$0xff]
    %v403 = vld [vmem:[#allocation12 + $0x370] sm:$0xff]
    %v404 = vld [vmem:[#allocation12 + $0x378] sm:$0xff]
    %v405 = vld [vmem:[#allocation12 + $0x380] sm:$0xff]
    %v406 = vld [vmem:[#allocation12 + $0x388] sm:$0xff]
    %v407 = vld [vmem:[#allocation12 + $0x390] sm:$0xff]
    %v408 = vld [vmem:[#allocation12 + $0x398] sm:$0xff]
    %v409 = vld [vmem:[#allocation12 + $0x3a0] sm:$0xff]
    %v410 = vld [vmem:[#allocation12 + $0x3a8] sm:$0xff]
    %v411 = vld [vmem:[#allocation12 + $0x3b0] sm:$0xff]
    %v412 = vld [vmem:[#allocation12 + $0x3b8] sm:$0xff]
    %v413 = vld [vmem:[#allocation12 + $0x3c0] sm:$0xff]
    %v414 = vld [vmem:[#allocation12 + $0x3c8] sm:$0xff]
    %v415 = vld [vmem:[#allocation12 + $0x3d0] sm:$0xff]
    %v416 = vld [vmem:[#allocation12 + $0x3d8] sm:$0xff]
    %v417 = vld [vmem:[#allocation12 + $0x3e0] sm:$0xff]
    %v418 = vld [vmem:[#allocation12 + $0x3e8] sm:$0xff]
    %v419 = vld [vmem:[#allocation12 + $0x3f0] sm:$0xff]
    %v420 = vld [vmem:[#allocation12 + $0x3f8] sm:$0xff]
    %v421 = vld [vmem:[#allocation12 + $0x400] sm:$0xff]
    %v422 = vld [vmem:[#allocation12 + $0x408] sm:$0xff]
    %v423 = vld [vmem:[#allocation12 + $0x410] sm:$0xff]
    %v424 = vld [vmem:[#allocation12 + $0x418] sm:$0xff]
    %v425 = vld [vmem:[#allocation12 + $0x420] sm:$0xff]
    %v426 = vld [vmem:[#allocation12 + $0x428] sm:$0xff]
    %v427 = vld [vmem:[#allocation12 + $0x430] sm:$0xff]
    %v428 = vld [vmem:[#allocation12 + $0x438] sm:$0xff]
    %v429 = vld [vmem:[#allocation12 + $0x440] sm:$0xff]
    %v430 = vld [vmem:[#allocation12 + $0x448] sm:$0xff]
    %v431 = vld [vmem:[#allocation12 + $0x450] sm:$0xff]
    %v432 = vld [vmem:[#allocation12 + $0x458] sm:$0xff]
    %v433 = vld [vmem:[#allocation12 + $0x460] sm:$0xff]
    %v434 = vld [vmem:[#allocation12 + $0x468] sm:$0xff]
    %v435 = vld [vmem:[#allocation12 + $0x470] sm:$0xff]
    %v436 = vld [vmem:[#allocation12 + $0x478] sm:$0xff]
    %v437 = vld [vmem:[#allocation12 + $0x480] sm:$0xff]
    %v438 = vld [vmem:[#allocation12 + $0x488] sm:$0xff]
    %v439 = vld [vmem:[#allocation12 + $0x490] sm:$0xff]
    %v440 = vld [vmem:[#allocation12 + $0x498] sm:$0xff]
    %v441 = vld [vmem:[#allocation12 + $0x4a0] sm:$0xff]
    %v442 = vld [vmem:[#allocation12 + $0x4a8] sm:$0xff]
    %v443 = vld [vmem:[#allocation12 + $0x4b0] sm:$0xff]
    %v444 = vld [vmem:[#allocation12 + $0x4b8] sm:$0xff]
    %v445 = vld [vmem:[#allocation12 + $0x4c0] sm:$0xff]
    %v446 = vld [vmem:[#allocation12 + $0x4c8] sm:$0xff]
    %v447 = vld [vmem:[#allocation12 + $0x4d0] sm:$0xff]
    %v448 = vld [vmem:[#allocation12 + $0x4d8] sm:$0xff]
    %v449 = vld [vmem:[#allocation12 + $0x4e0] sm:$0xff]
    %v450 = vld [vmem:[#allocation12 + $0x4e8] sm:$0xff]
    %v451 = vld [vmem:[#allocation12 + $0x4f0] sm:$0xff]
    %v452 = vld [vmem:[#allocation12 + $0x4f8] sm:$0xff]
    %v453 = vld [vmem:[#allocation12 + $0x500] sm:$0xff]
    %v454 = vld [vmem:[#allocation12 + $0x508] sm:$0xff]
    %v455 = vld [vmem:[#allocation12 + $0x510] sm:$0xff]
    %v456 = vld [vmem:[#allocation12 + $0x518] sm:$0xff]
    %v457 = vld [vmem:[#allocation12 + $0x520] sm:$0xff]
    %v458 = vld [vmem:[#allocation12 + $0x528] sm:$0xff]
    %v459 = vld [vmem:[#allocation12 + $0x530] sm:$0xff]
    %v460 = vld [vmem:[#allocation12 + $0x538] sm:$0xff]
    %v461 = vld [vmem:[#allocation12 + $0x540] sm:$0xff]
    %v462 = vld [vmem:[#allocation12 + $0x548] sm:$0xff]
    %v463 = vld [vmem:[#allocation12 + $0x550] sm:$0xff]
    %v464 = vld [vmem:[#allocation12 + $0x558] sm:$0xff]
    %v465 = vld [vmem:[#allocation12 + $0x560] sm:$0xff]
    %v466 = vld [vmem:[#allocation12 + $0x568] sm:$0xff]
    %v467 = vld [vmem:[#allocation12 + $0x570] sm:$0xff]
    %v468 = vld [vmem:[#allocation12 + $0x578] sm:$0xff]
    %v469 = vld [vmem:[#allocation12 + $0x580] sm:$0xff]
    %v470 = vld [vmem:[#allocation12 + $0x588] sm:$0xff]
    %v471 = vld [vmem:[#allocation12 + $0x590] sm:$0xff]
    %v472 = vld [vmem:[#allocation12 + $0x598] sm:$0xff]
    %v473 = vld [vmem:[#allocation12 + $0x5a0] sm:$0xff]
    %v474 = vld [vmem:[#allocation12 + $0x5a8] sm:$0xff]
    %v475 = vld [vmem:[#allocation12 + $0x5b0] sm:$0xff]
    %v476 = vld [vmem:[#allocation12 + $0x5b8] sm:$0xff]
    %v477 = vld [vmem:[#allocation12 + $0x5c0] sm:$0xff]
    %v478 = vld [vmem:[#allocation12 + $0x5c8] sm:$0xff]
    %v479 = vld [vmem:[#allocation12 + $0x5d0] sm:$0xff]
    %v480 = vld [vmem:[#allocation12 + $0x5d8] sm:$0xff]
    %v481 = vld [vmem:[#allocation12 + $0x5e0] sm:$0xff]
    %v482 = vld [vmem:[#allocation12 + $0x5e8] sm:$0xff]
    %v483 = vld [vmem:[#allocation12 + $0x5f0] sm:$0xff]
    %v484 = vld [vmem:[#allocation12 + $0x5f8] sm:$0xff]
    %v485 = vld [vmem:[#allocation12 + $0x600] sm:$0xff]
    %v486 = vld [vmem:[#allocation12 + $0x608] sm:$0xff]
    %v487 = vld [vmem:[#allocation12 + $0x610] sm:$0xff]
    %v488 = vld [vmem:[#allocation12 + $0x618] sm:$0xff]
    %v489 = vld [vmem:[#allocation12 + $0x620] sm:$0xff]
    %v490 = vld [vmem:[#allocation12 + $0x628] sm:$0xff]
    %v491 = vld [vmem:[#allocation12 + $0x630] sm:$0xff]
    %v492 = vld [vmem:[#allocation12 + $0x638] sm:$0xff]
    %v493 = vld [vmem:[#allocation12 + $0x640] sm:$0xff]
    %v494 = vld [vmem:[#allocation12 + $0x648] sm:$0xff]
    %v495 = vld [vmem:[#allocation12 + $0x650] sm:$0xff]
    %v496 = vld [vmem:[#allocation12 + $0x658] sm:$0xff]
    %v497 = vld [vmem:[#allocation12 + $0x660] sm:$0xff]
    %v498 = vld [vmem:[#allocation12 + $0x668] sm:$0xff]
    %v499 = vld [vmem:[#allocation12 + $0x670] sm:$0xff]
    %v500 = vld [vmem:[#allocation12 + $0x678] sm:$0xff]
    %v501 = vld [vmem:[#allocation12 + $0x680] sm:$0xff]
    %v502 = vld [vmem:[#allocation12 + $0x688] sm:$0xff]
    %v503 = vld [vmem:[#allocation12 + $0x690] sm:$0xff]
    %v504 = vld [vmem:[#allocation12 + $0x698] sm:$0xff]
    %v505 = vld [vmem:[#allocation12 + $0x6a0] sm:$0xff]
    %v506 = vld [vmem:[#allocation12 + $0x6a8] sm:$0xff]
    %v507 = vld [vmem:[#allocation12 + $0x6b0] sm:$0xff]
    %v508 = vld [vmem:[#allocation12 + $0x6b8] sm:$0xff]
    %v509 = vld [vmem:[#allocation12 + $0x6c0] sm:$0xff]
    %v510 = vld [vmem:[#allocation12 + $0x6c8] sm:$0xff]
    %v511 = vld [vmem:[#allocation12 + $0x6d0] sm:$0xff]
    %v512 = vld [vmem:[#allocation12 + $0x6d8] sm:$0xff]
    %v513 = vld [vmem:[#allocation12 + $0x6e0] sm:$0xff]
    %v514 = vld [vmem:[#allocation12 + $0x6e8] sm:$0xff]
    %v515 = vld [vmem:[#allocation12 + $0x6f0] sm:$0xff]
    %v516 = vld [vmem:[#allocation12 + $0x6f8] sm:$0xff]
    %v517 = vld [vmem:[#allocation12 + $0x700] sm:$0xff]
    %v518 = vld [vmem:[#allocation12 + $0x708] sm:$0xff]
    %v519 = vld [vmem:[#allocation12 + $0x710] sm:$0xff]
    %v520 = vld [vmem:[#allocation12 + $0x718] sm:$0xff]
    %v521 = vld [vmem:[#allocation12 + $0x720] sm:$0xff]
    %v522 = vld [vmem:[#allocation12 + $0x728] sm:$0xff]
    %v523 = vld [vmem:[#allocation12 + $0x730] sm:$0xff]
    %v524 = vld [vmem:[#allocation12 + $0x738] sm:$0xff]
    %v525 = vld [vmem:[#allocation12 + $0x740] sm:$0xff]
    %v526 = vld [vmem:[#allocation12 + $0x748] sm:$0xff]
    %v527 = vld [vmem:[#allocation12 + $0x750] sm:$0xff]
    %v528 = vld [vmem:[#allocation12 + $0x758] sm:$0xff]
    %v529 = vld [vmem:[#allocation12 + $0x760] sm:$0xff]
    %v530 = vld [vmem:[#allocation12 + $0x768] sm:$0xff]
    %v531 = vld [vmem:[#allocation12 + $0x770] sm:$0xff]
    %v532 = vld [vmem:[#allocation12 + $0x778] sm:$0xff]
    %v533 = vld [vmem:[#allocation12 + $0x780] sm:$0xff]
    %v534 = vld [vmem:[#allocation12 + $0x788] sm:$0xff]
    %v535 = vld [vmem:[#allocation12 + $0x790] sm:$0xff]
    %v536 = vld [vmem:[#allocation12 + $0x798] sm:$0xff]
    %v537 = vld [vmem:[#allocation12 + $0x7a0] sm:$0xff]
    %v538 = vld [vmem:[#allocation12 + $0x7a8] sm:$0xff]
    %v539 = vld [vmem:[#allocation12 + $0x7b0] sm:$0xff]
    %v540 = vld [vmem:[#allocation12 + $0x7b8] sm:$0xff]
    %v541 = vld [vmem:[#allocation12 + $0x7c0] sm:$0xff]
    %v542 = vld [vmem:[#allocation12 + $0x7c8] sm:$0xff]
    %v543 = vld [vmem:[#allocation12 + $0x7d0] sm:$0xff]
    %v544 = vld [vmem:[#allocation12 + $0x7d8] sm:$0xff]
    %v545 = vld [vmem:[#allocation12 + $0x7e0] sm:$0xff]
    %v546 = vld [vmem:[#allocation12 + $0x7e8] sm:$0xff]
    %v547 = vld [vmem:[#allocation12 + $0x7f0] sm:$0xff]
    %v548 = vld [vmem:[#allocation12 + $0x7f8] sm:$0xff]
    %v549 = vld [vmem:[#allocation12 + $0x800] sm:$0xff]
    %v550 = vld [vmem:[#allocation12 + $0x808] sm:$0xff]
    %v551 = vld [vmem:[#allocation12 + $0x810] sm:$0xff]
    %v552 = vld [vmem:[#allocation12 + $0x818] sm:$0xff]
    %v553 = vld [vmem:[#allocation12 + $0x820] sm:$0xff]
    %v554 = vld [vmem:[#allocation12 + $0x828] sm:$0xff]
    %v555 = vld [vmem:[#allocation12 + $0x830] sm:$0xff]
    %v556 = vld [vmem:[#allocation12 + $0x838] sm:$0xff]
    %v557 = vld [vmem:[#allocation12 + $0x840] sm:$0xff]
    %v558 = vld [vmem:[#allocation12 + $0x848] sm:$0xff]
    %v559 = vld [vmem:[#allocation12 + $0x850] sm:$0xff]
    %v560 = vld [vmem:[#allocation12 + $0x858] sm:$0xff]
    %v561 = vld [vmem:[#allocation12 + $0x860] sm:$0xff]
    %v562 = vld [vmem:[#allocation12 + $0x868] sm:$0xff]
    %v563 = vld [vmem:[#allocation12 + $0x870] sm:$0xff]
    %v564 = vld [vmem:[#allocation12 + $0x878] sm:$0xff]
    %v565 = vld [vmem:[#allocation12 + $0x880] sm:$0xff]
    %v566 = vld [vmem:[#allocation12 + $0x888] sm:$0xff]
    %v567 = vld [vmem:[#allocation12 + $0x890] sm:$0xff]
    %v568 = vld [vmem:[#allocation12 + $0x898] sm:$0xff]
    %v569 = vld [vmem:[#allocation12 + $0x8a0] sm:$0xff]
    %v570 = vld [vmem:[#allocation12 + $0x8a8] sm:$0xff]
    %v571 = vld [vmem:[#allocation12 + $0x8b0] sm:$0xff]
    %v572 = vld [vmem:[#allocation12 + $0x8b8] sm:$0xff]
    %v573 = vld [vmem:[#allocation12 + $0x8c0] sm:$0xff]
    %v574 = vld [vmem:[#allocation12 + $0x8c8] sm:$0xff]
    %v575 = vld [vmem:[#allocation12 + $0x8d0] sm:$0xff]
    %v576 = vld [vmem:[#allocation12 + $0x8d8] sm:$0xff]
    %v577 = vld [vmem:[#allocation12 + $0x8e0] sm:$0xff]
    %v578 = vld [vmem:[#allocation12 + $0x8e8] sm:$0xff]
    %v579 = vld [vmem:[#allocation12 + $0x8f0] sm:$0xff]
    %v580 = vld [vmem:[#allocation12 + $0x8f8] sm:$0xff]
    %v869 = vunpack.c.l.b16 %v293
    %v870 = vunpack.c.h.b16 %v293
    %v871 = vunpack.c.l.b16 %v294
    %v872 = vunpack.c.h.b16 %v294
    %v873 = vunpack.c.l.b16 %v295
    %v874 = vunpack.c.h.b16 %v295
    %v875 = vunpack.c.l.b16 %v296
    %v876 = vunpack.c.h.b16 %v296
    %v877 = vunpack.c.l.b16 %v297
    %v878 = vunpack.c.h.b16 %v297
    %v879 = vunpack.c.l.b16 %v298
    %v880 = vunpack.c.h.b16 %v298
    %v881 = vunpack.c.l.b16 %v299
    %v882 = vunpack.c.h.b16 %v299
    %v883 = vunpack.c.l.b16 %v300
    %v884 = vunpack.c.h.b16 %v300
    %v885 = vunpack.c.l.b16 %v301
    %v886 = vunpack.c.h.b16 %v301
    %v887 = vunpack.c.l.b16 %v302
    %v888 = vunpack.c.h.b16 %v302
    %v889 = vunpack.c.l.b16 %v303
    %v890 = vunpack.c.h.b16 %v303
    %v891 = vunpack.c.l.b16 %v304
    %v892 = vunpack.c.h.b16 %v304
    %v893 = vunpack.c.l.b16 %v305
    %v894 = vunpack.c.h.b16 %v305
    %v895 = vunpack.c.l.b16 %v306
    %v896 = vunpack.c.h.b16 %v306
    %v897 = vunpack.c.l.b16 %v307
    %v898 = vunpack.c.h.b16 %v307
    %v899 = vunpack.c.l.b16 %v308
    %v900 = vunpack.c.h.b16 %v308
    %v901 = vunpack.c.l.b16 %v309
    %v902 = vunpack.c.h.b16 %v309
    %v903 = vunpack.c.l.b16 %v310
    %v904 = vunpack.c.h.b16 %v310
    %v905 = vunpack.c.l.b16 %v311
    %v906 = vunpack.c.h.b16 %v311
    %v907 = vunpack.c.l.b16 %v312
    %v908 = vunpack.c.h.b16 %v312
    %v909 = vunpack.c.l.b16 %v313
    %v910 = vunpack.c.h.b16 %v313
    %v911 = vunpack.c.l.b16 %v314
    %v912 = vunpack.c.h.b16 %v314
    %v913 = vunpack.c.l.b16 %v315
    %v914 = vunpack.c.h.b16 %v315
    %v915 = vunpack.c.l.b16 %v316
    %v916 = vunpack.c.h.b16 %v316
    %v917 = vunpack.c.l.b16 %v317
    %v918 = vunpack.c.h.b16 %v317
    %v919 = vunpack.c.l.b16 %v318
    %v920 = vunpack.c.h.b16 %v318
    %v921 = vunpack.c.l.b16 %v319
    %v922 = vunpack.c.h.b16 %v319
    %v923 = vunpack.c.l.b16 %v320
    %v924 = vunpack.c.h.b16 %v320
    %v925 = vunpack.c.l.b16 %v321
    %v926 = vunpack.c.h.b16 %v321
    %v927 = vunpack.c.l.b16 %v322
    %v928 = vunpack.c.h.b16 %v322
    %v929 = vunpack.c.l.b16 %v323
    %v930 = vunpack.c.h.b16 %v323
    %v931 = vunpack.c.l.b16 %v324
    %v932 = vunpack.c.h.b16 %v324
    %v933 = vunpack.c.l.b16 %v325
    %v934 = vunpack.c.h.b16 %v325
    %v935 = vunpack.c.l.b16 %v326
    %v936 = vunpack.c.h.b16 %v326
    %v937 = vunpack.c.l.b16 %v327
    %v938 = vunpack.c.h.b16 %v327
    %v939 = vunpack.c.l.b16 %v328
    %v940 = vunpack.c.h.b16 %v328
    %v941 = vunpack.c.l.b16 %v329
    %v942 = vunpack.c.h.b16 %v329
    %v943 = vunpack.c.l.b16 %v330
    %v944 = vunpack.c.h.b16 %v330
    %v945 = vunpack.c.l.b16 %v331
    %v946 = vunpack.c.h.b16 %v331
    %v947 = vunpack.c.l.b16 %v332
    %v948 = vunpack.c.h.b16 %v332
    %v949 = vunpack.c.l.b16 %v333
    %v950 = vunpack.c.h.b16 %v333
    %v951 = vunpack.c.l.b16 %v334
    %v952 = vunpack.c.h.b16 %v334
    %v953 = vunpack.c.l.b16 %v335
    %v954 = vunpack.c.h.b16 %v335
    %v955 = vunpack.c.l.b16 %v336
    %v956 = vunpack.c.h.b16 %v336
    %v957 = vunpack.c.l.b16 %v337
    %v958 = vunpack.c.h.b16 %v337
    %v959 = vunpack.c.l.b16 %v338
    %v960 = vunpack.c.h.b16 %v338
    %v961 = vunpack.c.l.b16 %v339
    %v962 = vunpack.c.h.b16 %v339
    %v963 = vunpack.c.l.b16 %v340
    %v964 = vunpack.c.h.b16 %v340
    %v965 = vunpack.c.l.b16 %v341
    %v966 = vunpack.c.h.b16 %v341
    %v967 = vunpack.c.l.b16 %v342
    %v968 = vunpack.c.h.b16 %v342
    %v969 = vunpack.c.l.b16 %v343
    %v970 = vunpack.c.h.b16 %v343
    %v971 = vunpack.c.l.b16 %v344
    %v972 = vunpack.c.h.b16 %v344
    %v973 = vunpack.c.l.b16 %v345
    %v974 = vunpack.c.h.b16 %v345
    %v975 = vunpack.c.l.b16 %v346
    %v976 = vunpack.c.h.b16 %v346
    %v977 = vunpack.c.l.b16 %v347
    %v978 = vunpack.c.h.b16 %v347
    %v979 = vunpack.c.l.b16 %v348
    %v980 = vunpack.c.h.b16 %v348
    %v981 = vunpack.c.l.b16 %v349
    %v982 = vunpack.c.h.b16 %v349
    %v983 = vunpack.c.l.b16 %v350
    %v984 = vunpack.c.h.b16 %v350
    %v985 = vunpack.c.l.b16 %v351
    %v986 = vunpack.c.h.b16 %v351
    %v987 = vunpack.c.l.b16 %v352
    %v988 = vunpack.c.h.b16 %v352
    %v989 = vunpack.c.l.b16 %v353
    %v990 = vunpack.c.h.b16 %v353
    %v991 = vunpack.c.l.b16 %v354
    %v992 = vunpack.c.h.b16 %v354
    %v993 = vunpack.c.l.b16 %v355
    %v994 = vunpack.c.h.b16 %v355
    %v995 = vunpack.c.l.b16 %v356
    %v996 = vunpack.c.h.b16 %v356
    %v997 = vunpack.c.l.b16 %v357
    %v998 = vunpack.c.h.b16 %v357
    %v999 = vunpack.c.l.b16 %v358
    %v1000 = vunpack.c.h.b16 %v358
    %v1001 = vunpack.c.l.b16 %v359
    %v1002 = vunpack.c.h.b16 %v359
    %v1003 = vunpack.c.l.b16 %v360
    %v1004 = vunpack.c.h.b16 %v360
    %v1005 = vunpack.c.l.b16 %v361
    %v1006 = vunpack.c.h.b16 %v361
    %v1007 = vunpack.c.l.b16 %v362
    %v1008 = vunpack.c.h.b16 %v362
    %v1009 = vunpack.c.l.b16 %v363
    %v1010 = vunpack.c.h.b16 %v363
    %v1011 = vunpack.c.l.b16 %v364
    %v1012 = vunpack.c.h.b16 %v364
    %v1013 = vunpack.c.l.b16 %v365
    %v1014 = vunpack.c.h.b16 %v365
    %v1015 = vunpack.c.l.b16 %v366
    %v1016 = vunpack.c.h.b16 %v366
    %v1017 = vunpack.c.l.b16 %v367
    %v1018 = vunpack.c.h.b16 %v367
    %v1019 = vunpack.c.l.b16 %v368
    %v1020 = vunpack.c.h.b16 %v368
    %v1021 = vunpack.c.l.b16 %v369
    %v1022 = vunpack.c.h.b16 %v369
    %v1023 = vunpack.c.l.b16 %v370
    %v1024 = vunpack.c.h.b16 %v370
    %v1025 = vunpack.c.l.b16 %v371
    %v1026 = vunpack.c.h.b16 %v371
    %v1027 = vunpack.c.l.b16 %v372
    %v1028 = vunpack.c.h.b16 %v372
    %v1029 = vunpack.c.l.b16 %v373
    %v1030 = vunpack.c.h.b16 %v373
    %v1031 = vunpack.c.l.b16 %v374
    %v1032 = vunpack.c.h.b16 %v374
    %v1033 = vunpack.c.l.b16 %v375
    %v1034 = vunpack.c.h.b16 %v375
    %v1035 = vunpack.c.l.b16 %v376
    %v1036 = vunpack.c.h.b16 %v376
    %v1037 = vunpack.c.l.b16 %v377
    %v1038 = vunpack.c.h.b16 %v377
    %v1039 = vunpack.c.l.b16 %v378
    %v1040 = vunpack.c.h.b16 %v378
    %v1041 = vunpack.c.l.b16 %v379
    %v1042 = vunpack.c.h.b16 %v379
    %v1043 = vunpack.c.l.b16 %v380
    %v1044 = vunpack.c.h.b16 %v380
    %v1045 = vunpack.c.l.b16 %v381
    %v1046 = vunpack.c.h.b16 %v381
    %v1047 = vunpack.c.l.b16 %v382
    %v1048 = vunpack.c.h.b16 %v382
    %v1049 = vunpack.c.l.b16 %v383
    %v1050 = vunpack.c.h.b16 %v383
    %v1051 = vunpack.c.l.b16 %v384
    %v1052 = vunpack.c.h.b16 %v384
    %v1053 = vunpack.c.l.b16 %v385
    %v1054 = vunpack.c.h.b16 %v385
    %v1055 = vunpack.c.l.b16 %v386
    %v1056 = vunpack.c.h.b16 %v386
    %v1057 = vunpack.c.l.b16 %v387
    %v1058 = vunpack.c.h.b16 %v387
    %v1059 = vunpack.c.l.b16 %v388
    %v1060 = vunpack.c.h.b16 %v388
    %v1061 = vunpack.c.l.b16 %v389
    %v1062 = vunpack.c.h.b16 %v389
    %v1063 = vunpack.c.l.b16 %v390
    %v1064 = vunpack.c.h.b16 %v390
    %v1065 = vunpack.c.l.b16 %v391
    %v1066 = vunpack.c.h.b16 %v391
    %v1067 = vunpack.c.l.b16 %v392
    %v1068 = vunpack.c.h.b16 %v392
    %v1069 = vunpack.c.l.b16 %v393
    %v1070 = vunpack.c.h.b16 %v393
    %v1071 = vunpack.c.l.b16 %v394
    %v1072 = vunpack.c.h.b16 %v394
    %v1073 = vunpack.c.l.b16 %v395
    %v1074 = vunpack.c.h.b16 %v395
    %v1075 = vunpack.c.l.b16 %v396
    %v1076 = vunpack.c.h.b16 %v396
    %v1077 = vunpack.c.l.b16 %v397
    %v1078 = vunpack.c.h.b16 %v397
    %v1079 = vunpack.c.l.b16 %v398
    %v1080 = vunpack.c.h.b16 %v398
    %v1081 = vunpack.c.l.b16 %v399
    %v1082 = vunpack.c.h.b16 %v399
    %v1083 = vunpack.c.l.b16 %v400
    %v1084 = vunpack.c.h.b16 %v400
    %v1085 = vunpack.c.l.b16 %v401
    %v1086 = vunpack.c.h.b16 %v401
    %v1087 = vunpack.c.l.b16 %v402
    %v1088 = vunpack.c.h.b16 %v402
    %v1089 = vunpack.c.l.b16 %v403
    %v1090 = vunpack.c.h.b16 %v403
    %v1091 = vunpack.c.l.b16 %v404
    %v1092 = vunpack.c.h.b16 %v404
    %v1093 = vunpack.c.l.b16 %v405
    %v1094 = vunpack.c.h.b16 %v405
    %v1095 = vunpack.c.l.b16 %v406
    %v1096 = vunpack.c.h.b16 %v406
    %v1097 = vunpack.c.l.b16 %v407
    %v1098 = vunpack.c.h.b16 %v407
    %v1099 = vunpack.c.l.b16 %v408
    %v1100 = vunpack.c.h.b16 %v408
    %v1101 = vunpack.c.l.b16 %v409
    %v1102 = vunpack.c.h.b16 %v409
    %v1103 = vunpack.c.l.b16 %v410
    %v1104 = vunpack.c.h.b16 %v410
    %v1105 = vunpack.c.l.b16 %v411
    %v1106 = vunpack.c.h.b16 %v411
    %v1107 = vunpack.c.l.b16 %v412
    %v1108 = vunpack.c.h.b16 %v412
    %v1109 = vunpack.c.l.b16 %v413
    %v1110 = vunpack.c.h.b16 %v413
    %v1111 = vunpack.c.l.b16 %v414
    %v1112 = vunpack.c.h.b16 %v414
    %v1113 = vunpack.c.l.b16 %v415
    %v1114 = vunpack.c.h.b16 %v415
    %v1115 = vunpack.c.l.b16 %v416
    %v1116 = vunpack.c.h.b16 %v416
    %v1117 = vunpack.c.l.b16 %v417
    %v1118 = vunpack.c.h.b16 %v417
    %v1119 = vunpack.c.l.b16 %v418
    %v1120 = vunpack.c.h.b16 %v418
    %v1121 = vunpack.c.l.b16 %v419
    %v1122 = vunpack.c.h.b16 %v419
    %v1123 = vunpack.c.l.b16 %v420
    %v1124 = vunpack.c.h.b16 %v420
    %v1125 = vunpack.c.l.b16 %v421
    %v1126 = vunpack.c.h.b16 %v421
    %v1127 = vunpack.c.l.b16 %v422
    %v1128 = vunpack.c.h.b16 %v422
    %v1129 = vunpack.c.l.b16 %v423
    %v1130 = vunpack.c.h.b16 %v423
    %v1131 = vunpack.c.l.b16 %v424
    %v1132 = vunpack.c.h.b16 %v424
    %v1133 = vunpack.c.l.b16 %v425
    %v1134 = vunpack.c.h.b16 %v425
    %v1135 = vunpack.c.l.b16 %v426
    %v1136 = vunpack.c.h.b16 %v426
    %v1137 = vunpack.c.l.b16 %v427
    %v1138 = vunpack.c.h.b16 %v427
    %v1139 = vunpack.c.l.b16 %v428
    %v1140 = vunpack.c.h.b16 %v428
    %v1141 = vunpack.c.l.b16 %v429
    %v1142 = vunpack.c.h.b16 %v429
    %v1143 = vunpack.c.l.b16 %v430
    %v1144 = vunpack.c.h.b16 %v430
    %v1145 = vunpack.c.l.b16 %v431
    %v1146 = vunpack.c.h.b16 %v431
    %v1147 = vunpack.c.l.b16 %v432
    %v1148 = vunpack.c.h.b16 %v432
    %v1149 = vunpack.c.l.b16 %v433
    %v1150 = vunpack.c.h.b16 %v433
    %v1151 = vunpack.c.l.b16 %v434
    %v1152 = vunpack.c.h.b16 %v434
    %v1153 = vunpack.c.l.b16 %v435
    %v1154 = vunpack.c.h.b16 %v435
    %v1155 = vunpack.c.l.b16 %v436
    %v1156 = vunpack.c.h.b16 %v436
    %v1157 = vunpack.c.l.b16 %v437
    %v1158 = vunpack.c.h.b16 %v437
    %v1159 = vunpack.c.l.b16 %v438
    %v1160 = vunpack.c.h.b16 %v438
    %v1161 = vunpack.c.l.b16 %v439
    %v1162 = vunpack.c.h.b16 %v439
    %v1163 = vunpack.c.l.b16 %v440
    %v1164 = vunpack.c.h.b16 %v440
    %v1165 = vunpack.c.l.b16 %v441
    %v1166 = vunpack.c.h.b16 %v441
    %v1167 = vunpack.c.l.b16 %v442
    %v1168 = vunpack.c.h.b16 %v442
    %v1169 = vunpack.c.l.b16 %v443
    %v1170 = vunpack.c.h.b16 %v443
    %v1171 = vunpack.c.l.b16 %v444
    %v1172 = vunpack.c.h.b16 %v444
    %v1173 = vunpack.c.l.b16 %v445
    %v1174 = vunpack.c.h.b16 %v445
    %v1175 = vunpack.c.l.b16 %v446
    %v1176 = vunpack.c.h.b16 %v446
    %v1177 = vunpack.c.l.b16 %v447
    %v1178 = vunpack.c.h.b16 %v447
    %v1179 = vunpack.c.l.b16 %v448
    %v1180 = vunpack.c.h.b16 %v448
    %v1181 = vunpack.c.l.b16 %v449
    %v1182 = vunpack.c.h.b16 %v449
    %v1183 = vunpack.c.l.b16 %v450
    %v1184 = vunpack.c.h.b16 %v450
    %v1185 = vunpack.c.l.b16 %v451
    %v1186 = vunpack.c.h.b16 %v451
    %v1187 = vunpack.c.l.b16 %v452
    %v1188 = vunpack.c.h.b16 %v452
    %v1189 = vunpack.c.l.b16 %v453
    %v1190 = vunpack.c.h.b16 %v453
    %v1191 = vunpack.c.l.b16 %v454
    %v1192 = vunpack.c.h.b16 %v454
    %v1193 = vunpack.c.l.b16 %v455
    %v1194 = vunpack.c.h.b16 %v455
    %v1195 = vunpack.c.l.b16 %v456
    %v1196 = vunpack.c.h.b16 %v456
    %v1197 = vunpack.c.l.b16 %v457
    %v1198 = vunpack.c.h.b16 %v457
    %v1199 = vunpack.c.l.b16 %v458
    %v1200 = vunpack.c.h.b16 %v458
    %v1201 = vunpack.c.l.b16 %v459
    %v1202 = vunpack.c.h.b16 %v459
    %v1203 = vunpack.c.l.b16 %v460
    %v1204 = vunpack.c.h.b16 %v460
    %v1205 = vunpack.c.l.b16 %v461
    %v1206 = vunpack.c.h.b16 %v461
    %v1207 = vunpack.c.l.b16 %v462
    %v1208 = vunpack.c.h.b16 %v462
    %v1209 = vunpack.c.l.b16 %v463
    %v1210 = vunpack.c.h.b16 %v463
    %v1211 = vunpack.c.l.b16 %v464
    %v1212 = vunpack.c.h.b16 %v464
    %v1213 = vunpack.c.l.b16 %v465
    %v1214 = vunpack.c.h.b16 %v465
    %v1215 = vunpack.c.l.b16 %v466
    %v1216 = vunpack.c.h.b16 %v466
    %v1217 = vunpack.c.l.b16 %v467
    %v1218 = vunpack.c.h.b16 %v467
    %v1219 = vunpack.c.l.b16 %v468
    %v1220 = vunpack.c.h.b16 %v468
    %v1221 = vunpack.c.l.b16 %v469
    %v1222 = vunpack.c.h.b16 %v469
    %v1223 = vunpack.c.l.b16 %v470
    %v1224 = vunpack.c.h.b16 %v470
    %v1225 = vunpack.c.l.b16 %v471
    %v1226 = vunpack.c.h.b16 %v471
    %v1227 = vunpack.c.l.b16 %v472
    %v1228 = vunpack.c.h.b16 %v472
    %v1229 = vunpack.c.l.b16 %v473
    %v1230 = vunpack.c.h.b16 %v473
    %v1231 = vunpack.c.l.b16 %v474
    %v1232 = vunpack.c.h.b16 %v474
    %v1233 = vunpack.c.l.b16 %v475
    %v1234 = vunpack.c.h.b16 %v475
    %v1235 = vunpack.c.l.b16 %v476
    %v1236 = vunpack.c.h.b16 %v476
    %v1237 = vunpack.c.l.b16 %v477
    %v1238 = vunpack.c.h.b16 %v477
    %v1239 = vunpack.c.l.b16 %v478
    %v1240 = vunpack.c.h.b16 %v478
    %v1241 = vunpack.c.l.b16 %v479
    %v1242 = vunpack.c.h.b16 %v479
    %v1243 = vunpack.c.l.b16 %v480
    %v1244 = vunpack.c.h.b16 %v480
    %v1245 = vunpack.c.l.b16 %v481
    %v1246 = vunpack.c.h.b16 %v481
    %v1247 = vunpack.c.l.b16 %v482
    %v1248 = vunpack.c.h.b16 %v482
    %v1249 = vunpack.c.l.b16 %v483
    %v1250 = vunpack.c.h.b16 %v483
    %v1251 = vunpack.c.l.b16 %v484
    %v1252 = vunpack.c.h.b16 %v484
    %v1253 = vunpack.c.l.b16 %v485
    %v1254 = vunpack.c.h.b16 %v485
    %v1255 = vunpack.c.l.b16 %v486
    %v1256 = vunpack.c.h.b16 %v486
    %v1257 = vunpack.c.l.b16 %v487
    %v1258 = vunpack.c.h.b16 %v487
    %v1259 = vunpack.c.l.b16 %v488
    %v1260 = vunpack.c.h.b16 %v488
    %v1261 = vunpack.c.l.b16 %v489
    %v1262 = vunpack.c.h.b16 %v489
    %v1263 = vunpack.c.l.b16 %v490
    %v1264 = vunpack.c.h.b16 %v490
    %v1265 = vunpack.c.l.b16 %v491
    %v1266 = vunpack.c.h.b16 %v491
    %v1267 = vunpack.c.l.b16 %v492
    %v1268 = vunpack.c.h.b16 %v492
    %v1269 = vunpack.c.l.b16 %v493
    %v1270 = vunpack.c.h.b16 %v493
    %v1271 = vunpack.c.l.b16 %v494
    %v1272 = vunpack.c.h.b16 %v494
    %v1273 = vunpack.c.l.b16 %v495
    %v1274 = vunpack.c.h.b16 %v495
    %v1275 = vunpack.c.l.b16 %v496
    %v1276 = vunpack.c.h.b16 %v496
    %v1277 = vunpack.c.l.b16 %v497
    %v1278 = vunpack.c.h.b16 %v497
    %v1279 = vunpack.c.l.b16 %v498
    %v1280 = vunpack.c.h.b16 %v498
    %v1281 = vunpack.c.l.b16 %v499
    %v1282 = vunpack.c.h.b16 %v499
    %v1283 = vunpack.c.l.b16 %v500
    %v1284 = vunpack.c.h.b16 %v500
    %v1285 = vunpack.c.l.b16 %v501
    %v1286 = vunpack.c.h.b16 %v501
    %v1287 = vunpack.c.l.b16 %v502
    %v1288 = vunpack.c.h.b16 %v502
    %v1289 = vunpack.c.l.b16 %v503
    %v1290 = vunpack.c.h.b16 %v503
    %v1291 = vunpack.c.l.b16 %v504
    %v1292 = vunpack.c.h.b16 %v504
    %v1293 = vunpack.c.l.b16 %v505
    %v1294 = vunpack.c.h.b16 %v505
    %v1295 = vunpack.c.l.b16 %v506
    %v1296 = vunpack.c.h.b16 %v506
    %v1297 = vunpack.c.l.b16 %v507
    %v1298 = vunpack.c.h.b16 %v507
    %v1299 = vunpack.c.l.b16 %v508
    %v1300 = vunpack.c.h.b16 %v508
    %v1301 = vunpack.c.l.b16 %v509
    %v1302 = vunpack.c.h.b16 %v509
    %v1303 = vunpack.c.l.b16 %v510
    %v1304 = vunpack.c.h.b16 %v510
    %v1305 = vunpack.c.l.b16 %v511
    %v1306 = vunpack.c.h.b16 %v511
    %v1307 = vunpack.c.l.b16 %v512
    %v1308 = vunpack.c.h.b16 %v512
    %v1309 = vunpack.c.l.b16 %v513
    %v1310 = vunpack.c.h.b16 %v513
    %v1311 = vunpack.c.l.b16 %v514
    %v1312 = vunpack.c.h.b16 %v514
    %v1313 = vunpack.c.l.b16 %v515
    %v1314 = vunpack.c.h.b16 %v515
    %v1315 = vunpack.c.l.b16 %v516
    %v1316 = vunpack.c.h.b16 %v516
    %v1317 = vunpack.c.l.b16 %v517
    %v1318 = vunpack.c.h.b16 %v517
    %v1319 = vunpack.c.l.b16 %v518
    %v1320 = vunpack.c.h.b16 %v518
    %v1321 = vunpack.c.l.b16 %v519
    %v1322 = vunpack.c.h.b16 %v519
    %v1323 = vunpack.c.l.b16 %v520
    %v1324 = vunpack.c.h.b16 %v520
    %v1325 = vunpack.c.l.b16 %v521
    %v1326 = vunpack.c.h.b16 %v521
    %v1327 = vunpack.c.l.b16 %v522
    %v1328 = vunpack.c.h.b16 %v522
    %v1329 = vunpack.c.l.b16 %v523
    %v1330 = vunpack.c.h.b16 %v523
    %v1331 = vunpack.c.l.b16 %v524
    %v1332 = vunpack.c.h.b16 %v524
    %v1333 = vunpack.c.l.b16 %v525
    %v1334 = vunpack.c.h.b16 %v525
    %v1335 = vunpack.c.l.b16 %v526
    %v1336 = vunpack.c.h.b16 %v526
    %v1337 = vunpack.c.l.b16 %v527
    %v1338 = vunpack.c.h.b16 %v527
    %v1339 = vunpack.c.l.b16 %v528
    %v1340 = vunpack.c.h.b16 %v528
    %v1341 = vunpack.c.l.b16 %v529
    %v1342 = vunpack.c.h.b16 %v529
    %v1343 = vunpack.c.l.b16 %v530
    %v1344 = vunpack.c.h.b16 %v530
    %v1345 = vunpack.c.l.b16 %v531
    %v1346 = vunpack.c.h.b16 %v531
    %v1347 = vunpack.c.l.b16 %v532
    %v1348 = vunpack.c.h.b16 %v532
    %v1349 = vunpack.c.l.b16 %v533
    %v1350 = vunpack.c.h.b16 %v533
    %v1351 = vunpack.c.l.b16 %v534
    %v1352 = vunpack.c.h.b16 %v534
    %v1353 = vunpack.c.l.b16 %v535
    %v1354 = vunpack.c.h.b16 %v535
    %v1355 = vunpack.c.l.b16 %v536
    %v1356 = vunpack.c.h.b16 %v536
    %v1357 = vunpack.c.l.b16 %v537
    %v1358 = vunpack.c.h.b16 %v537
    %v1359 = vunpack.c.l.b16 %v538
    %v1360 = vunpack.c.h.b16 %v538
    %v1361 = vunpack.c.l.b16 %v539
    %v1362 = vunpack.c.h.b16 %v539
    %v1363 = vunpack.c.l.b16 %v540
    %v1364 = vunpack.c.h.b16 %v540
    %v1365 = vunpack.c.l.b16 %v541
    %v1366 = vunpack.c.h.b16 %v541
    %v1367 = vunpack.c.l.b16 %v542
    %v1368 = vunpack.c.h.b16 %v542
    %v1369 = vunpack.c.l.b16 %v543
    %v1370 = vunpack.c.h.b16 %v543
    %v1371 = vunpack.c.l.b16 %v544
    %v1372 = vunpack.c.h.b16 %v544
    %v1373 = vunpack.c.l.b16 %v545
    %v1374 = vunpack.c.h.b16 %v545
    %v1375 = vunpack.c.l.b16 %v546
    %v1376 = vunpack.c.h.b16 %v546
    %v1377 = vunpack.c.l.b16 %v547
    %v1378 = vunpack.c.h.b16 %v547
    %v1379 = vunpack.c.l.b16 %v548
    %v1380 = vunpack.c.h.b16 %v548
    %v1381 = vunpack.c.l.b16 %v549
    %v1382 = vunpack.c.h.b16 %v549
    %v1383 = vunpack.c.l.b16 %v550
    %v1384 = vunpack.c.h.b16 %v550
    %v1385 = vunpack.c.l.b16 %v551
    %v1386 = vunpack.c.h.b16 %v551
    %v1387 = vunpack.c.l.b16 %v552
    %v1388 = vunpack.c.h.b16 %v552
    %v1389 = vunpack.c.l.b16 %v553
    %v1390 = vunpack.c.h.b16 %v553
    %v1391 = vunpack.c.l.b16 %v554
    %v1392 = vunpack.c.h.b16 %v554
    %v1393 = vunpack.c.l.b16 %v555
    %v1394 = vunpack.c.h.b16 %v555
    %v1395 = vunpack.c.l.b16 %v556
    %v1396 = vunpack.c.h.b16 %v556
    %v1397 = vunpack.c.l.b16 %v557
    %v1398 = vunpack.c.h.b16 %v557
    %v1399 = vunpack.c.l.b16 %v558
    %v1400 = vunpack.c.h.b16 %v558
    %v1401 = vunpack.c.l.b16 %v559
    %v1402 = vunpack.c.h.b16 %v559
    %v1403 = vunpack.c.l.b16 %v560
    %v1404 = vunpack.c.h.b16 %v560
    %v1405 = vunpack.c.l.b16 %v561
    %v1406 = vunpack.c.h.b16 %v561
    %v1407 = vunpack.c.l.b16 %v562
    %v1408 = vunpack.c.h.b16 %v562
    %v1409 = vunpack.c.l.b16 %v563
    %v1410 = vunpack.c.h.b16 %v563
    %v1411 = vunpack.c.l.b16 %v564
    %v1412 = vunpack.c.h.b16 %v564
    %v1413 = vunpack.c.l.b16 %v565
    %v1414 = vunpack.c.h.b16 %v565
    %v1415 = vunpack.c.l.b16 %v566
    %v1416 = vunpack.c.h.b16 %v566
    %v1417 = vunpack.c.l.b16 %v567
    %v1418 = vunpack.c.h.b16 %v567
    %v1419 = vunpack.c.l.b16 %v568
    %v1420 = vunpack.c.h.b16 %v568
    %v1421 = vunpack.c.l.b16 %v569
    %v1422 = vunpack.c.h.b16 %v569
    %v1423 = vunpack.c.l.b16 %v570
    %v1424 = vunpack.c.h.b16 %v570
    %v1425 = vunpack.c.l.b16 %v571
    %v1426 = vunpack.c.h.b16 %v571
    %v1427 = vunpack.c.l.b16 %v572
    %v1428 = vunpack.c.h.b16 %v572
    %v1429 = vunpack.c.l.b16 %v573
    %v1430 = vunpack.c.h.b16 %v573
    %v1431 = vunpack.c.l.b16 %v574
    %v1432 = vunpack.c.h.b16 %v574
    %v1433 = vunpack.c.l.b16 %v575
    %v1434 = vunpack.c.h.b16 %v575
    %v1435 = vunpack.c.l.b16 %v576
    %v1436 = vunpack.c.h.b16 %v576
    %v1437 = vunpack.c.l.b16 %v577
    %v1438 = vunpack.c.h.b16 %v577
    %v1439 = vunpack.c.l.b16 %v578
    %v1440 = vunpack.c.h.b16 %v578
    %v1441 = vunpack.c.l.b16 %v579
    %v1442 = vunpack.c.h.b16 %v579
    %v1443 = vunpack.c.l.b16 %v580
    %v1444 = vunpack.c.h.b16 %v580
    %v1445 = vpack.c.b16 %v875, %v869
    %v1446 = vpack.c.b16 %v876, %v870
    %v1447 = vpack.c.b16 %v877, %v871
    %v1448 = vpack.c.b16 %v878, %v872
    %v1449 = vpack.c.b16 %v879, %v873
    %v1450 = vpack.c.b16 %v880, %v874
    %v1451 = vpack.c.b16 %v887, %v881
    %v1452 = vpack.c.b16 %v888, %v882
    %v1453 = vpack.c.b16 %v889, %v883
    %v1454 = vpack.c.b16 %v890, %v884
    %v1455 = vpack.c.b16 %v891, %v885
    %v1456 = vpack.c.b16 %v892, %v886
    %v1457 = vpack.c.b16 %v899, %v893
    %v1458 = vpack.c.b16 %v900, %v894
    %v1459 = vpack.c.b16 %v901, %v895
    %v1460 = vpack.c.b16 %v902, %v896
    %v1461 = vpack.c.b16 %v903, %v897
    %v1462 = vpack.c.b16 %v904, %v898
    %v1463 = vpack.c.b16 %v911, %v905
    %v1464 = vpack.c.b16 %v912, %v906
    %v1465 = vpack.c.b16 %v913, %v907
    %v1466 = vpack.c.b16 %v914, %v908
    %v1467 = vpack.c.b16 %v915, %v909
    %v1468 = vpack.c.b16 %v916, %v910
    %v1469 = vpack.c.b16 %v923, %v917
    %v1470 = vpack.c.b16 %v924, %v918
    %v1471 = vpack.c.b16 %v925, %v919
    %v1472 = vpack.c.b16 %v926, %v920
    %v1473 = vpack.c.b16 %v927, %v921
    %v1474 = vpack.c.b16 %v928, %v922
    %v1475 = vpack.c.b16 %v935, %v929
    %v1476 = vpack.c.b16 %v936, %v930
    %v1477 = vpack.c.b16 %v937, %v931
    %v1478 = vpack.c.b16 %v938, %v932
    %v1479 = vpack.c.b16 %v939, %v933
    %v1480 = vpack.c.b16 %v940, %v934
    %v1481 = vpack.c.b16 %v947, %v941
    %v1482 = vpack.c.b16 %v948, %v942
    %v1483 = vpack.c.b16 %v949, %v943
    %v1484 = vpack.c.b16 %v950, %v944
    %v1485 = vpack.c.b16 %v951, %v945
    %v1486 = vpack.c.b16 %v952, %v946
    %v1487 = vpack.c.b16 %v959, %v953
    %v1488 = vpack.c.b16 %v960, %v954
    %v1489 = vpack.c.b16 %v961, %v955
    %v1490 = vpack.c.b16 %v962, %v956
    %v1491 = vpack.c.b16 %v963, %v957
    %v1492 = vpack.c.b16 %v964, %v958
    %v1493 = vpack.c.b16 %v971, %v965
    %v1494 = vpack.c.b16 %v972, %v966
    %v1495 = vpack.c.b16 %v973, %v967
    %v1496 = vpack.c.b16 %v974, %v968
    %v1497 = vpack.c.b16 %v975, %v969
    %v1498 = vpack.c.b16 %v976, %v970
    %v1499 = vpack.c.b16 %v983, %v977
    %v1500 = vpack.c.b16 %v984, %v978
    %v1501 = vpack.c.b16 %v985, %v979
    %v1502 = vpack.c.b16 %v986, %v980
    %v1503 = vpack.c.b16 %v987, %v981
    %v1504 = vpack.c.b16 %v988, %v982
    %v1505 = vpack.c.b16 %v995, %v989
    %v1506 = vpack.c.b16 %v996, %v990
    %v1507 = vpack.c.b16 %v997, %v991
    %v1508 = vpack.c.b16 %v998, %v992
    %v1509 = vpack.c.b16 %v999, %v993
    %v1510 = vpack.c.b16 %v1000, %v994
    %v1511 = vpack.c.b16 %v1007, %v1001
    %v1512 = vpack.c.b16 %v1008, %v1002
    %v1513 = vpack.c.b16 %v1009, %v1003
    %v1514 = vpack.c.b16 %v1010, %v1004
    %v1515 = vpack.c.b16 %v1011, %v1005
    %v1516 = vpack.c.b16 %v1012, %v1006
    %v1517 = vpack.c.b16 %v1019, %v1013
    %v1518 = vpack.c.b16 %v1020, %v1014
    %v1519 = vpack.c.b16 %v1021, %v1015
    %v1520 = vpack.c.b16 %v1022, %v1016
    %v1521 = vpack.c.b16 %v1023, %v1017
    %v1522 = vpack.c.b16 %v1024, %v1018
    %v1523 = vpack.c.b16 %v1031, %v1025
    %v1524 = vpack.c.b16 %v1032, %v1026
    %v1525 = vpack.c.b16 %v1033, %v1027
    %v1526 = vpack.c.b16 %v1034, %v1028
    %v1527 = vpack.c.b16 %v1035, %v1029
    %v1528 = vpack.c.b16 %v1036, %v1030
    %v1529 = vpack.c.b16 %v1043, %v1037
    %v1530 = vpack.c.b16 %v1044, %v1038
    %v1531 = vpack.c.b16 %v1045, %v1039
    %v1532 = vpack.c.b16 %v1046, %v1040
    %v1533 = vpack.c.b16 %v1047, %v1041
    %v1534 = vpack.c.b16 %v1048, %v1042
    %v1535 = vpack.c.b16 %v1055, %v1049
    %v1536 = vpack.c.b16 %v1056, %v1050
    %v1537 = vpack.c.b16 %v1057, %v1051
    %v1538 = vpack.c.b16 %v1058, %v1052
    %v1539 = vpack.c.b16 %v1059, %v1053
    %v1540 = vpack.c.b16 %v1060, %v1054
    %v1541 = vpack.c.b16 %v1067, %v1061
    %v1542 = vpack.c.b16 %v1068, %v1062
    %v1543 = vpack.c.b16 %v1069, %v1063
    %v1544 = vpack.c.b16 %v1070, %v1064
    %v1545 = vpack.c.b16 %v1071, %v1065
    %v1546 = vpack.c.b16 %v1072, %v1066
    %v1547 = vpack.c.b16 %v1079, %v1073
    %v1548 = vpack.c.b16 %v1080, %v1074
    %v1549 = vpack.c.b16 %v1081, %v1075
    %v1550 = vpack.c.b16 %v1082, %v1076
    %v1551 = vpack.c.b16 %v1083, %v1077
    %v1552 = vpack.c.b16 %v1084, %v1078
    %v1553 = vpack.c.b16 %v1091, %v1085
    %v1554 = vpack.c.b16 %v1092, %v1086
    %v1555 = vpack.c.b16 %v1093, %v1087
    %v1556 = vpack.c.b16 %v1094, %v1088
    %v1557 = vpack.c.b16 %v1095, %v1089
    %v1558 = vpack.c.b16 %v1096, %v1090
    %v1559 = vpack.c.b16 %v1103, %v1097
    %v1560 = vpack.c.b16 %v1104, %v1098
    %v1561 = vpack.c.b16 %v1105, %v1099
    %v1562 = vpack.c.b16 %v1106, %v1100
    %v1563 = vpack.c.b16 %v1107, %v1101
    %v1564 = vpack.c.b16 %v1108, %v1102
    %v1565 = vpack.c.b16 %v1115, %v1109
    %v1566 = vpack.c.b16 %v1116, %v1110
    %v1567 = vpack.c.b16 %v1117, %v1111
    %v1568 = vpack.c.b16 %v1118, %v1112
    %v1569 = vpack.c.b16 %v1119, %v1113
    %v1570 = vpack.c.b16 %v1120, %v1114
    %v1571 = vpack.c.b16 %v1127, %v1121
    %v1572 = vpack.c.b16 %v1128, %v1122
    %v1573 = vpack.c.b16 %v1129, %v1123
    %v1574 = vpack.c.b16 %v1130, %v1124
    %v1575 = vpack.c.b16 %v1131, %v1125
    %v1576 = vpack.c.b16 %v1132, %v1126
    %v1577 = vpack.c.b16 %v1139, %v1133
    %v1578 = vpack.c.b16 %v1140, %v1134
    %v1579 = vpack.c.b16 %v1141, %v1135
    %v1580 = vpack.c.b16 %v1142, %v1136
    %v1581 = vpack.c.b16 %v1143, %v1137
    %v1582 = vpack.c.b16 %v1144, %v1138
    %v1583 = vpack.c.b16 %v1151, %v1145
    %v1584 = vpack.c.b16 %v1152, %v1146
    %v1585 = vpack.c.b16 %v1153, %v1147
    %v1586 = vpack.c.b16 %v1154, %v1148
    %v1587 = vpack.c.b16 %v1155, %v1149
    %v1588 = vpack.c.b16 %v1156, %v1150
    %v1589 = vpack.c.b16 %v1163, %v1157
    %v1590 = vpack.c.b16 %v1164, %v1158
    %v1591 = vpack.c.b16 %v1165, %v1159
    %v1592 = vpack.c.b16 %v1166, %v1160
    %v1593 = vpack.c.b16 %v1167, %v1161
    %v1594 = vpack.c.b16 %v1168, %v1162
    %v1595 = vpack.c.b16 %v1175, %v1169
    %v1596 = vpack.c.b16 %v1176, %v1170
    %v1597 = vpack.c.b16 %v1177, %v1171
    %v1598 = vpack.c.b16 %v1178, %v1172
    %v1599 = vpack.c.b16 %v1179, %v1173
    %v1600 = vpack.c.b16 %v1180, %v1174
    %v1601 = vpack.c.b16 %v1187, %v1181
    %v1602 = vpack.c.b16 %v1188, %v1182
    %v1603 = vpack.c.b16 %v1189, %v1183
    %v1604 = vpack.c.b16 %v1190, %v1184
    %v1605 = vpack.c.b16 %v1191, %v1185
    %v1606 = vpack.c.b16 %v1192, %v1186
    %v1607 = vpack.c.b16 %v1199, %v1193
    %v1608 = vpack.c.b16 %v1200, %v1194
    %v1609 = vpack.c.b16 %v1201, %v1195
    %v1610 = vpack.c.b16 %v1202, %v1196
    %v1611 = vpack.c.b16 %v1203, %v1197
    %v1612 = vpack.c.b16 %v1204, %v1198
    %v1613 = vpack.c.b16 %v1211, %v1205
    %v1614 = vpack.c.b16 %v1212, %v1206
    %v1615 = vpack.c.b16 %v1213, %v1207
    %v1616 = vpack.c.b16 %v1214, %v1208
    %v1617 = vpack.c.b16 %v1215, %v1209
    %v1618 = vpack.c.b16 %v1216, %v1210
    %v1619 = vpack.c.b16 %v1223, %v1217
    %v1620 = vpack.c.b16 %v1224, %v1218
    %v1621 = vpack.c.b16 %v1225, %v1219
    %v1622 = vpack.c.b16 %v1226, %v1220
    %v1623 = vpack.c.b16 %v1227, %v1221
    %v1624 = vpack.c.b16 %v1228, %v1222
    %v1625 = vpack.c.b16 %v1235, %v1229
    %v1626 = vpack.c.b16 %v1236, %v1230
    %v1627 = vpack.c.b16 %v1237, %v1231
    %v1628 = vpack.c.b16 %v1238, %v1232
    %v1629 = vpack.c.b16 %v1239, %v1233
    %v1630 = vpack.c.b16 %v1240, %v1234
    %v1631 = vpack.c.b16 %v1247, %v1241
    %v1632 = vpack.c.b16 %v1248, %v1242
    %v1633 = vpack.c.b16 %v1249, %v1243
    %v1634 = vpack.c.b16 %v1250, %v1244
    %v1635 = vpack.c.b16 %v1251, %v1245
    %v1636 = vpack.c.b16 %v1252, %v1246
    %v1637 = vpack.c.b16 %v1259, %v1253
    %v1638 = vpack.c.b16 %v1260, %v1254
    %v1639 = vpack.c.b16 %v1261, %v1255
    %v1640 = vpack.c.b16 %v1262, %v1256
    %v1641 = vpack.c.b16 %v1263, %v1257
    %v1642 = vpack.c.b16 %v1264, %v1258
    %v1643 = vpack.c.b16 %v1271, %v1265
    %v1644 = vpack.c.b16 %v1272, %v1266
    %v1645 = vpack.c.b16 %v1273, %v1267
    %v1646 = vpack.c.b16 %v1274, %v1268
    %v1647 = vpack.c.b16 %v1275, %v1269
    %v1648 = vpack.c.b16 %v1276, %v1270
    %v1649 = vpack.c.b16 %v1283, %v1277
    %v1650 = vpack.c.b16 %v1284, %v1278
    %v1651 = vpack.c.b16 %v1285, %v1279
    %v1652 = vpack.c.b16 %v1286, %v1280
    %v1653 = vpack.c.b16 %v1287, %v1281
    %v1654 = vpack.c.b16 %v1288, %v1282
    %v1655 = vpack.c.b16 %v1295, %v1289
    %v1656 = vpack.c.b16 %v1296, %v1290
    %v1657 = vpack.c.b16 %v1297, %v1291
    %v1658 = vpack.c.b16 %v1298, %v1292
    %v1659 = vpack.c.b16 %v1299, %v1293
    %v1660 = vpack.c.b16 %v1300, %v1294
    %v1661 = vpack.c.b16 %v1307, %v1301
    %v1662 = vpack.c.b16 %v1308, %v1302
    %v1663 = vpack.c.b16 %v1309, %v1303
    %v1664 = vpack.c.b16 %v1310, %v1304
    %v1665 = vpack.c.b16 %v1311, %v1305
    %v1666 = vpack.c.b16 %v1312, %v1306
    %v1667 = vpack.c.b16 %v1319, %v1313
    %v1668 = vpack.c.b16 %v1320, %v1314
    %v1669 = vpack.c.b16 %v1321, %v1315
    %v1670 = vpack.c.b16 %v1322, %v1316
    %v1671 = vpack.c.b16 %v1323, %v1317
    %v1672 = vpack.c.b16 %v1324, %v1318
    %v1673 = vpack.c.b16 %v1331, %v1325
    %v1674 = vpack.c.b16 %v1332, %v1326
    %v1675 = vpack.c.b16 %v1333, %v1327
    %v1676 = vpack.c.b16 %v1334, %v1328
    %v1677 = vpack.c.b16 %v1335, %v1329
    %v1678 = vpack.c.b16 %v1336, %v1330
    %v1679 = vpack.c.b16 %v1343, %v1337
    %v1680 = vpack.c.b16 %v1344, %v1338
    %v1681 = vpack.c.b16 %v1345, %v1339
    %v1682 = vpack.c.b16 %v1346, %v1340
    %v1683 = vpack.c.b16 %v1347, %v1341
    %v1684 = vpack.c.b16 %v1348, %v1342
    %v1685 = vpack.c.b16 %v1355, %v1349
    %v1686 = vpack.c.b16 %v1356, %v1350
    %v1687 = vpack.c.b16 %v1357, %v1351
    %v1688 = vpack.c.b16 %v1358, %v1352
    %v1689 = vpack.c.b16 %v1359, %v1353
    %v1690 = vpack.c.b16 %v1360, %v1354
    %v1691 = vpack.c.b16 %v1367, %v1361
    %v1692 = vpack.c.b16 %v1368, %v1362
    %v1693 = vpack.c.b16 %v1369, %v1363
    %v1694 = vpack.c.b16 %v1370, %v1364
    %v1695 = vpack.c.b16 %v1371, %v1365
    %v1696 = vpack.c.b16 %v1372, %v1366
    %v1697 = vpack.c.b16 %v1379, %v1373
    %v1698 = vpack.c.b16 %v1380, %v1374
    %v1699 = vpack.c.b16 %v1381, %v1375
    %v1700 = vpack.c.b16 %v1382, %v1376
    %v1701 = vpack.c.b16 %v1383, %v1377
    %v1702 = vpack.c.b16 %v1384, %v1378
    %v1703 = vpack.c.b16 %v1391, %v1385
    %v1704 = vpack.c.b16 %v1392, %v1386
    %v1705 = vpack.c.b16 %v1393, %v1387
    %v1706 = vpack.c.b16 %v1394, %v1388
    %v1707 = vpack.c.b16 %v1395, %v1389
    %v1708 = vpack.c.b16 %v1396, %v1390
    %v1709 = vpack.c.b16 %v1403, %v1397
    %v1710 = vpack.c.b16 %v1404, %v1398
    %v1711 = vpack.c.b16 %v1405, %v1399
    %v1712 = vpack.c.b16 %v1406, %v1400
    %v1713 = vpack.c.b16 %v1407, %v1401
    %v1714 = vpack.c.b16 %v1408, %v1402
    %v1715 = vpack.c.b16 %v1415, %v1409
    %v1716 = vpack.c.b16 %v1416, %v1410
    %v1717 = vpack.c.b16 %v1417, %v1411
    %v1718 = vpack.c.b16 %v1418, %v1412
    %v1719 = vpack.c.b16 %v1419, %v1413
    %v1720 = vpack.c.b16 %v1420, %v1414
    %v1721 = vpack.c.b16 %v1427, %v1421
    %v1722 = vpack.c.b16 %v1428, %v1422
    %v1723 = vpack.c.b16 %v1429, %v1423
    %v1724 = vpack.c.b16 %v1430, %v1424
    %v1725 = vpack.c.b16 %v1431, %v1425
    %v1726 = vpack.c.b16 %v1432, %v1426
    %v1727 = vpack.c.b16 %v1439, %v1433
    %v1728 = vpack.c.b16 %v1440, %v1434
    %v1729 = vpack.c.b16 %v1441, %v1435
    %v1730 = vpack.c.b16 %v1442, %v1436
    %v1731 = vpack.c.b16 %v1443, %v1437
    %v1732 = vpack.c.b16 %v1444, %v1438
    %2021 = vmatprep.subr.bf16.mxu0 %v1446
    %2022 = vmatpush1.bf16.msra.mxu0 %v1445
    %2023 = vmatprep.subr.bf16.mxu0 %v1452
    %2024 = vmatpush1.bf16.msra.mxu0 %v1451
    %2025 = vmatprep.subr.bf16.mxu0 %v1458
    %2026 = vmatpush1.bf16.msra.mxu0 %v1457
    %2027 = vmatprep.subr.bf16.mxu0 %v1464
    %2028 = vmatpush1.bf16.msra.mxu0 %v1463
    %2029 = vmatprep.subr.bf16.mxu0 %v1470
    %2030 = vmatpush1.bf16.msra.mxu0 %v1469
    %2031 = vmatprep.subr.bf16.mxu0 %v1476
    %2032 = vmatpush1.bf16.msra.mxu0 %v1475
    %2033 = vmatprep.subr.bf16.mxu0 %v1482
    %2034 = vmatpush1.bf16.msra.mxu0 %v1481
    %2035 = vmatprep.subr.bf16.mxu0 %v1488
    %2036 = vmatpush1.bf16.msra.mxu0 %v1487
    %2037 = vmatprep.subr.bf16.mxu0 %v1494
    %2038 = vmatpush1.bf16.msra.mxu0 %v1493
    %2039 = vmatprep.subr.bf16.mxu0 %v1500
    %2040 = vmatpush1.bf16.msra.mxu0 %v1499
    %2041 = vmatprep.subr.bf16.mxu0 %v1506
    %2042 = vmatpush1.bf16.msra.mxu0 %v1505
    %2043 = vmatprep.subr.bf16.mxu0 %v1512
    %2044 = vmatpush1.bf16.msra.mxu0 %v1511
    %2045 = vmatprep.subr.bf16.mxu0 %v1518
    %2046 = vmatpush1.bf16.msra.mxu0 %v1517
    %2047 = vmatprep.subr.bf16.mxu0 %v1524
    %2048 = vmatpush1.bf16.msra.mxu0 %v1523
    %2049 = vmatprep.subr.bf16.mxu0 %v1530
    %2050 = vmatpush1.bf16.msra.mxu0 %v1529
    %2051 = vmatprep.subr.bf16.mxu0 %v1536
    %2052 = vmatpush1.bf16.msra.mxu0 %v1535
    %2053 = vmatprep.mubr.bf16.mxu0 %v288
    %2054 = vmatmul.mubr.bf16.gmra.mrb[0].mxu0 %v287
    %v2055 = vpop.f32.mrb[0].mxu0
    %v2056 = vadd.f32 0.0, %v2055
    %v2057 = vpop.f32.mrb[0].mxu0
    %v2058 = vadd.f32 0.0, %v2057
    %v2059 = vpop.f32.mrb[0].mxu0
    %v2060 = vadd.f32 0.0, %v2059
    %v2061 = vpop.f32.mrb[0].mxu0
    %v2062 = vadd.f32 0.0, %v2061
    %2063 = vdwg.mxu0
    %2064 = vmatprep.subr.bf16.mxu0 %v1542
    %2065 = vmatpush1.bf16.msra.mxu0 %v1541
    %2066 = vmatprep.subr.bf16.mxu0 %v1548
    %2067 = vmatpush1.bf16.msra.mxu0 %v1547
    %2068 = vmatprep.subr.bf16.mxu0 %v1554
    %2069 = vmatpush1.bf16.msra.mxu0 %v1553
    %2070 = vmatprep.subr.bf16.mxu0 %v1560
    %2071 = vmatpush1.bf16.msra.mxu0 %v1559
    %2072 = vmatprep.subr.bf16.mxu0 %v1566
    %2073 = vmatpush1.bf16.msra.mxu0 %v1565
    %2074 = vmatprep.subr.bf16.mxu0 %v1572
    %2075 = vmatpush1.bf16.msra.mxu0 %v1571
    %2076 = vmatprep.subr.bf16.mxu0 %v1578
    %2077 = vmatpush1.bf16.msra.mxu0 %v1577
    %2078 = vmatprep.subr.bf16.mxu0 %v1584
    %2079 = vmatpush1.bf16.msra.mxu0 %v1583
    %2080 = vmatprep.subr.bf16.mxu0 %v1590
    %2081 = vmatpush1.bf16.msra.mxu0 %v1589
    %2082 = vmatprep.subr.bf16.mxu0 %v1596
    %2083 = vmatpush1.bf16.msra.mxu0 %v1595
    %2084 = vmatprep.subr.bf16.mxu0 %v1602
    %2085 = vmatpush1.bf16.msra.mxu0 %v1601
    %2086 = vmatprep.subr.bf16.mxu0 %v1608
    %2087 = vmatpush1.bf16.msra.mxu0 %v1607
    %2088 = vmatprep.subr.bf16.mxu0 %v1614
    %2089 = vmatpush1.bf16.msra.mxu0 %v1613
    %2090 = vmatprep.subr.bf16.mxu0 %v1620
    %2091 = vmatpush1.bf16.msra.mxu0 %v1619
    %2092 = vmatprep.subr.bf16.mxu0 %v1626
    %2093 = vmatpush1.bf16.msra.mxu0 %v1625
    %2094 = vmatprep.subr.bf16.mxu0 %v1632
    %2095 = vmatpush1.bf16.msra.mxu0 %v1631
    %2096 = vmatprep.mubr.bf16.mxu0 %v290
    %2097 = vmatmul.mubr.bf16.gmra.mrb[0].mxu0 %v289
    %v2098 = vpop.f32.mrb[0].mxu0
    %v2099 = vadd.f32 %v2056, %v2098
    %v2100 = vpop.f32.mrb[0].mxu0
    %v2101 = vadd.f32 %v2058, %v2100
    %v2102 = vpop.f32.mrb[0].mxu0
    %v2103 = vadd.f32 %v2060, %v2102
    %v2104 = vpop.f32.mrb[0].mxu0
    %v2105 = vadd.f32 %v2062, %v2104
    %2106 = vdwg.mxu0
    %2107 = vmatprep.subr.bf16.mxu0 %v1638
    %2108 = vmatpush1.bf16.msra.mxu0 %v1637
    %2109 = vmatprep.subr.bf16.mxu0 %v1644
    %2110 = vmatpush1.bf16.msra.mxu0 %v1643
    %2111 = vmatprep.subr.bf16.mxu0 %v1650
    %2112 = vmatpush1.bf16.msra.mxu0 %v1649
    %2113 = vmatprep.subr.bf16.mxu0 %v1656
    %2114 = vmatpush1.bf16.msra.mxu0 %v1655
    %2115 = vmatprep.subr.bf16.mxu0 %v1662
    %2116 = vmatpush1.bf16.msra.mxu0 %v1661
    %2117 = vmatprep.subr.bf16.mxu0 %v1668
    %2118 = vmatpush1.bf16.msra.mxu0 %v1667
    %2119 = vmatprep.subr.bf16.mxu0 %v1674
    %2120 = vmatpush1.bf16.msra.mxu0 %v1673
    %2121 = vmatprep.subr.bf16.mxu0 %v1680
    %2122 = vmatpush1.bf16.msra.mxu0 %v1679
    %2123 = vmatprep.subr.bf16.mxu0 %v1686
    %2124 = vmatpush1.bf16.msra.mxu0 %v1685
    %2125 = vmatprep.subr.bf16.mxu0 %v1692
    %2126 = vmatpush1.bf16.msra.mxu0 %v1691
    %2127 = vmatprep.subr.bf16.mxu0 %v1698
    %2128 = vmatpush1.bf16.msra.mxu0 %v1697
    %2129 = vmatprep.subr.bf16.mxu0 %v1704
    %2130 = vmatpush1.bf16.msra.mxu0 %v1703
    %2131 = vmatprep.subr.bf16.mxu0 %v1710
    %2132 = vmatpush1.bf16.msra.mxu0 %v1709
    %2133 = vmatprep.subr.bf16.mxu0 %v1716
    %2134 = vmatpush1.bf16.msra.mxu0 %v1715
    %2135 = vmatprep.subr.bf16.mxu0 %v1722
    %2136 = vmatpush1.bf16.msra.mxu0 %v1721
    %2137 = vmatprep.subr.bf16.mxu0 %v1728
    %2138 = vmatpush1.bf16.msra.mxu0 %v1727
    %2139 = vmatprep.mubr.bf16.mxu0 %v292
    %2140 = vmatmul.mubr.bf16.gmra.mrb[0].mxu0 %v291
    %v2141 = vpop.f32.mrb[0].mxu0
    %v2142 = vadd.f32 %v2099, %v2141
    %v2143 = vpop.f32.mrb[0].mxu0
    %v2144 = vadd.f32 %v2101, %v2143
    %v2145 = vpop.f32.mrb[0].mxu0
    %v2146 = vadd.f32 %v2103, %v2145
    %v2147 = vpop.f32.mrb[0].mxu0
    %v2148 = vadd.f32 %v2105, %v2147
    %2149 = vdwg.mxu0
    %2150 = vmatprep.subr.bf16.mxu0 %v1448
    %2151 = vmatpush1.bf16.msra.mxu0 %v1447
    %2152 = vmatprep.subr.bf16.mxu0 %v1454
    %2153 = vmatpush1.bf16.msra.mxu0 %v1453
    %2154 = vmatprep.subr.bf16.mxu0 %v1460
    %2155 = vmatpush1.bf16.msra.mxu0 %v1459
    %2156 = vmatprep.subr.bf16.mxu0 %v1466
    %2157 = vmatpush1.bf16.msra.mxu0 %v1465
    %2158 = vmatprep.subr.bf16.mxu0 %v1472
    %2159 = vmatpush1.bf16.msra.mxu0 %v1471
    %2160 = vmatprep.subr.bf16.mxu0 %v1478
    %2161 = vmatpush1.bf16.msra.mxu0 %v1477
    %2162 = vmatprep.subr.bf16.mxu0 %v1484
    %2163 = vmatpush1.bf16.msra.mxu0 %v1483
    %2164 = vmatprep.subr.bf16.mxu0 %v1490
    %2165 = vmatpush1.bf16.msra.mxu0 %v1489
    %2166 = vmatprep.subr.bf16.mxu0 %v1496
    %2167 = vmatpush1.bf16.msra.mxu0 %v1495
    %2168 = vmatprep.subr.bf16.mxu0 %v1502
    %2169 = vmatpush1.bf16.msra.mxu0 %v1501
    %2170 = vmatprep.subr.bf16.mxu0 %v1508
    %2171 = vmatpush1.bf16.msra.mxu0 %v1507
    %2172 = vmatprep.subr.bf16.mxu0 %v1514
    %2173 = vmatpush1.bf16.msra.mxu0 %v1513
    %2174 = vmatprep.subr.bf16.mxu0 %v1520
    %2175 = vmatpush1.bf16.msra.mxu0 %v1519
    %2176 = vmatprep.subr.bf16.mxu0 %v1526
    %2177 = vmatpush1.bf16.msra.mxu0 %v1525
    %2178 = vmatprep.subr.bf16.mxu0 %v1532
    %2179 = vmatpush1.bf16.msra.mxu0 %v1531
    %2180 = vmatprep.subr.bf16.mxu0 %v1538
    %2181 = vmatpush1.bf16.msra.mxu0 %v1537
    %2182 = vmatprep.mubr.bf16.mxu0 %v288
    %2183 = vmatmul.mubr.bf16.gmra.mrb[0].mxu0 %v287
    %v2184 = vpop.f32.mrb[0].mxu0
    %v2185 = vadd.f32 0.0, %v2184
    %v2186 = vpop.f32.mrb[0].mxu0
    %v2187 = vadd.f32 0.0, %v2186
    %v2188 = vpop.f32.mrb[0].mxu0
    %v2189 = vadd.f32 0.0, %v2188
    %v2190 = vpop.f32.mrb[0].mxu0
    %v2191 = vadd.f32 0.0, %v2190
    %2192 = vdwg.mxu0
    %2193 = vmatprep.subr.bf16.mxu0 %v1544
    %2194 = vmatpush1.bf16.msra.mxu0 %v1543
    %2195 = vmatprep.subr.bf16.mxu0 %v1550
    %2196 = vmatpush1.bf16.msra.mxu0 %v1549
    %2197 = vmatprep.subr.bf16.mxu0 %v1556
    %2198 = vmatpush1.bf16.msra.mxu0 %v1555
    %2199 = vmatprep.subr.bf16.mxu0 %v1562
    %2200 = vmatpush1.bf16.msra.mxu0 %v1561
    %2201 = vmatprep.subr.bf16.mxu0 %v1568
    %2202 = vmatpush1.bf16.msra.mxu0 %v1567
    %2203 = vmatprep.subr.bf16.mxu0 %v1574
    %2204 = vmatpush1.bf16.msra.mxu0 %v1573
    %2205 = vmatprep.subr.bf16.mxu0 %v1580
    %2206 = vmatpush1.bf16.msra.mxu0 %v1579
    %2207 = vmatprep.subr.bf16.mxu0 %v1586
    %2208 = vmatpush1.bf16.msra.mxu0 %v1585
    %2209 = vmatprep.subr.bf16.mxu0 %v1592
    %2210 = vmatpush1.bf16.msra.mxu0 %v1591
    %2211 = vmatprep.subr.bf16.mxu0 %v1598
    %2212 = vmatpush1.bf16.msra.mxu0 %v1597
    %2213 = vmatprep.subr.bf16.mxu0 %v1604
    %2214 = vmatpush1.bf16.msra.mxu0 %v1603
    %2215 = vmatprep.subr.bf16.mxu0 %v1610
    %2216 = vmatpush1.bf16.msra.mxu0 %v1609
    %2217 = vmatprep.subr.bf16.mxu0 %v1616
    %2218 = vmatpush1.bf16.msra.mxu0 %v1615
    %2219 = vmatprep.subr.bf16.mxu0 %v1622
    %2220 = vmatpush1.bf16.msra.mxu0 %v1621
    %2221 = vmatprep.subr.bf16.mxu0 %v1628
    %2222 = vmatpush1.bf16.msra.mxu0 %v1627
    %2223 = vmatprep.subr.bf16.mxu0 %v1634
    %2224 = vmatpush1.bf16.msra.mxu0 %v1633
    %2225 = vmatprep.mubr.bf16.mxu0 %v290
    %2226 = vmatmul.mubr.bf16.gmra.mrb[0].mxu0 %v289
    %v2227 = vpop.f32.mrb[0].mxu0
    %v2228 = vadd.f32 %v2185, %v2227
    %v2229 = vpop.f32.mrb[0].mxu0
    %v2230 = vadd.f32 %v2187, %v2229
    %v2231 = vpop.f32.mrb[0].mxu0
    %v2232 = vadd.f32 %v2189, %v2231
    %v2233 = vpop.f32.mrb[0].mxu0
    %v2234 = vadd.f32 %v2191, %v2233
    %2235 = vdwg.mxu0
    %2236 = vmatprep.subr.bf16.mxu0 %v1640
    %2237 = vmatpush1.bf16.msra.mxu0 %v1639
    %2238 = vmatprep.subr.bf16.mxu0 %v1646
    %2239 = vmatpush1.bf16.msra.mxu0 %v1645
    %2240 = vmatprep.subr.bf16.mxu0 %v1652
    %2241 = vmatpush1.bf16.msra.mxu0 %v1651
    %2242 = vmatprep.subr.bf16.mxu0 %v1658
    %2243 = vmatpush1.bf16.msra.mxu0 %v1657
    %2244 = vmatprep.subr.bf16.mxu0 %v1664
    %2245 = vmatpush1.bf16.msra.mxu0 %v1663
    %2246 = vmatprep.subr.bf16.mxu0 %v1670
    %2247 = vmatpush1.bf16.msra.mxu0 %v1669
    %2248 = vmatprep.subr.bf16.mxu0 %v1676
    %2249 = vmatpush1.bf16.msra.mxu0 %v1675
    %2250 = vmatprep.subr.bf16.mxu0 %v1682
    %2251 = vmatpush1.bf16.msra.mxu0 %v1681
    %2252 = vmatprep.subr.bf16.mxu0 %v1688
    %2253 = vmatpush1.bf16.msra.mxu0 %v1687
    %2254 = vmatprep.subr.bf16.mxu0 %v1694
    %2255 = vmatpush1.bf16.msra.mxu0 %v1693
    %2256 = vmatprep.subr.bf16.mxu0 %v1700
    %2257 = vmatpush1.bf16.msra.mxu0 %v1699
    %2258 = vmatprep.subr.bf16.mxu0 %v1706
    %2259 = vmatpush1.bf16.msra.mxu0 %v1705
    %2260 = vmatprep.subr.bf16.mxu0 %v1712
    %2261 = vmatpush1.bf16.msra.mxu0 %v1711
    %2262 = vmatprep.subr.bf16.mxu0 %v1718
    %2263 = vmatpush1.bf16.msra.mxu0 %v1717
    %2264 = vmatprep.subr.bf16.mxu0 %v1724
    %2265 = vmatpush1.bf16.msra.mxu0 %v1723
    %2266 = vmatprep.subr.bf16.mxu0 %v1730
    %2267 = vmatpush1.bf16.msra.mxu0 %v1729
    %2268 = vmatprep.mubr.bf16.mxu0 %v292
    %2269 = vmatmul.mubr.bf16.gmra.mrb[0].mxu0 %v291
    %v2270 = vpop.f32.mrb[0].mxu0
    %v2271 = vadd.f32 %v2228, %v2270
    %v2272 = vpop.f32.mrb[0].mxu0
    %v2273 = vadd.f32 %v2230, %v2272
    %v2274 = vpop.f32.mrb[0].mxu0
    %v2275 = vadd.f32 %v2232, %v2274
    %v2276 = vpop.f32.mrb[0].mxu0
    %v2277 = vadd.f32 %v2234, %v2276
    %2278 = vdwg.mxu0
    %2279 = vmatprep.subr.bf16.mxu0 %v1450
    %2280 = vmatpush1.bf16.msra.mxu0 %v1449
    %2281 = vmatprep.subr.bf16.mxu0 %v1456
    %2282 = vmatpush1.bf16.msra.mxu0 %v1455
    %2283 = vmatprep.subr.bf16.mxu0 %v1462
    %2284 = vmatpush1.bf16.msra.mxu0 %v1461
    %2285 = vmatprep.subr.bf16.mxu0 %v1468
    %2286 = vmatpush1.bf16.msra.mxu0 %v1467
    %2287 = vmatprep.subr.bf16.mxu0 %v1474
    %2288 = vmatpush1.bf16.msra.mxu0 %v1473
    %2289 = vmatprep.subr.bf16.mxu0 %v1480
    %2290 = vmatpush1.bf16.msra.mxu0 %v1479
    %2291 = vmatprep.subr.bf16.mxu0 %v1486
    %2292 = vmatpush1.bf16.msra.mxu0 %v1485
    %2293 = vmatprep.subr.bf16.mxu0 %v1492
    %2294 = vmatpush1.bf16.msra.mxu0 %v1491
    %2295 = vmatprep.subr.bf16.mxu0 %v1498
    %2296 = vmatpush1.bf16.msra.mxu0 %v1497
    %2297 = vmatprep.subr.bf16.mxu0 %v1504
    %2298 = vmatpush1.bf16.msra.mxu0 %v1503
    %2299 = vmatprep.subr.bf16.mxu0 %v1510
    %2300 = vmatpush1.bf16.msra.mxu0 %v1509
    %2301 = vmatprep.subr.bf16.mxu0 %v1516
    %2302 = vmatpush1.bf16.msra.mxu0 %v1515
    %2303 = vmatprep.subr.bf16.mxu0 %v1522
    %2304 = vmatpush1.bf16.msra.mxu0 %v1521
    %2305 = vmatprep.subr.bf16.mxu0 %v1528
    %2306 = vmatpush1.bf16.msra.mxu0 %v1527
    %2307 = vmatprep.subr.bf16.mxu0 %v1534
    %2308 = vmatpush1.bf16.msra.mxu0 %v1533
    %2309 = vmatprep.subr.bf16.mxu0 %v1540
    %2310 = vmatpush1.bf16.msra.mxu0 %v1539
    %2311 = vmatprep.mubr.bf16.mxu0 %v288
    %2312 = vmatmul.mubr.bf16.gmra.mrb[0].mxu0 %v287
    %v2313 = vpop.f32.mrb[0].mxu0
    %v2314 = vadd.f32 0.0, %v2313
    %v2315 = vpop.f32.mrb[0].mxu0
    %v2316 = vadd.f32 0.0, %v2315
    %v2317 = vpop.f32.mrb[0].mxu0
    %v2318 = vadd.f32 0.0, %v2317
    %v2319 = vpop.f32.mrb[0].mxu0
    %v2320 = vadd.f32 0.0, %v2319
    %2321 = vdwg.mxu0
    %2322 = vmatprep.subr.bf16.mxu0 %v1546
    %2323 = vmatpush1.bf16.msra.mxu0 %v1545
    %2324 = vmatprep.subr.bf16.mxu0 %v1552
    %2325 = vmatpush1.bf16.msra.mxu0 %v1551
    %2326 = vmatprep.subr.bf16.mxu0 %v1558
    %2327 = vmatpush1.bf16.msra.mxu0 %v1557
    %2328 = vmatprep.subr.bf16.mxu0 %v1564
    %2329 = vmatpush1.bf16.msra.mxu0 %v1563
    %2330 = vmatprep.subr.bf16.mxu0 %v1570
    %2331 = vmatpush1.bf16.msra.mxu0 %v1569
    %2332 = vmatprep.subr.bf16.mxu0 %v1576
    %2333 = vmatpush1.bf16.msra.mxu0 %v1575
    %2334 = vmatprep.subr.bf16.mxu0 %v1582
    %2335 = vmatpush1.bf16.msra.mxu0 %v1581
    %2336 = vmatprep.subr.bf16.mxu0 %v1588
    %2337 = vmatpush1.bf16.msra.mxu0 %v1587
    %2338 = vmatprep.subr.bf16.mxu0 %v1594
    %2339 = vmatpush1.bf16.msra.mxu0 %v1593
    %2340 = vmatprep.subr.bf16.mxu0 %v1600
    %2341 = vmatpush1.bf16.msra.mxu0 %v1599
    %2342 = vmatprep.subr.bf16.mxu0 %v1606
    %2343 = vmatpush1.bf16.msra.mxu0 %v1605
    %2344 = vmatprep.subr.bf16.mxu0 %v1612
    %2345 = vmatpush1.bf16.msra.mxu0 %v1611
    %2346 = vmatprep.subr.bf16.mxu0 %v1618
    %2347 = vmatpush1.bf16.msra.mxu0 %v1617
    %2348 = vmatprep.subr.bf16.mxu0 %v1624
    %2349 = vmatpush1.bf16.msra.mxu0 %v1623
    %2350 = vmatprep.subr.bf16.mxu0 %v1630
    %2351 = vmatpush1.bf16.msra.mxu0 %v1629
    %2352 = vmatprep.subr.bf16.mxu0 %v1636
    %2353 = vmatpush1.bf16.msra.mxu0 %v1635
    %2354 = vmatprep.mubr.bf16.mxu0 %v290
    %2355 = vmatmul.mubr.bf16.gmra.mrb[0].mxu0 %v289
    %v2356 = vpop.f32.mrb[0].mxu0
    %v2357 = vadd.f32 %v2314, %v2356
    %v2358 = vpop.f32.mrb[0].mxu0
    %v2359 = vadd.f32 %v2316, %v2358
    %v2360 = vpop.f32.mrb[0].mxu0
    %v2361 = vadd.f32 %v2318, %v2360
    %v2362 = vpop.f32.mrb[0].mxu0
    %v2363 = vadd.f32 %v2320, %v2362
    %2364 = vdwg.mxu0
    %2365 = vmatprep.subr.bf16.mxu0 %v1642
    %2366 = vmatpush1.bf16.msra.mxu0 %v1641
    %2367 = vmatprep.subr.bf16.mxu0 %v1648
    %2368 = vmatpush1.bf16.msra.mxu0 %v1647
    %2369 = vmatprep.subr.bf16.mxu0 %v1654
    %2370 = vmatpush1.bf16.msra.mxu0 %v1653
    %2371 = vmatprep.subr.bf16.mxu0 %v1660
    %2372 = vmatpush1.bf16.msra.mxu0 %v1659
    %2373 = vmatprep.subr.bf16.mxu0 %v1666
    %2374 = vmatpush1.bf16.msra.mxu0 %v1665
    %2375 = vmatprep.subr.bf16.mxu0 %v1672
    %2376 = vmatpush1.bf16.msra.mxu0 %v1671
    %2377 = vmatprep.subr.bf16.mxu0 %v1678
    %2378 = vmatpush1.bf16.msra.mxu0 %v1677
    %2379 = vmatprep.subr.bf16.mxu0 %v1684
    %2380 = vmatpush1.bf16.msra.mxu0 %v1683
    %2381 = vmatprep.subr.bf16.mxu0 %v1690
    %2382 = vmatpush1.bf16.msra.mxu0 %v1689
    %2383 = vmatprep.subr.bf16.mxu0 %v1696
    %2384 = vmatpush1.bf16.msra.mxu0 %v1695
    %2385 = vmatprep.subr.bf16.mxu0 %v1702
    %2386 = vmatpush1.bf16.msra.mxu0 %v1701
    %2387 = vmatprep.subr.bf16.mxu0 %v1708
    %2388 = vmatpush1.bf16.msra.mxu0 %v1707
    %2389 = vmatprep.subr.bf16.mxu0 %v1714
    %2390 = vmatpush1.bf16.msra.mxu0 %v1713
    %2391 = vmatprep.subr.bf16.mxu0 %v1720
    %2392 = vmatpush1.bf16.msra.mxu0 %v1719
    %2393 = vmatprep.subr.bf16.mxu0 %v1726
    %2394 = vmatpush1.bf16.msra.mxu0 %v1725
    %2395 = vmatprep.subr.bf16.mxu0 %v1732
    %2396 = vmatpush1.bf16.msra.mxu0 %v1731
    %2397 = vmatprep.mubr.bf16.mxu0 %v292
    %2398 = vmatmul.mubr.bf16.gmra.mrb[0].mxu0 %v291
    %v2399 = vpop.f32.mrb[0].mxu0
    %v2400 = vadd.f32 %v2357, %v2399
    %v2401 = vpop.f32.mrb[0].mxu0
    %v2402 = vadd.f32 %v2359, %v2401
    %v2403 = vpop.f32.mrb[0].mxu0
    %v2404 = vadd.f32 %v2361, %v2403
    %v2405 = vpop.f32.mrb[0].mxu0
    %v2406 = vadd.f32 %v2363, %v2405
    %2407 = vdwg.mxu0
    %2408 = vmatprep.subr.mxu0 %v239
    %2409 = vmatpush1.xpose.msra.mxu0 %v238
    %2410 = vmatprep.subr.mxu0 0.0
    %2411 = vmatpush1.xpose.msra.mxu0 0.0
    %2412 = vmatprep.subr.mxu0 0.0
    %2413 = vmatpush1.xpose.msra.mxu0 0.0
    %2414 = vmatprep.subr.mxu0 0.0
    %2415 = vmatpush1.xpose.msra.mxu0 0.0
    %2416 = vmatprep.subr.mxu0 0.0
    %2417 = vmatpush1.xpose.msra.mxu0 0.0
    %2418 = vmatprep.subr.mxu0 0.0
    %2419 = vmatpush1.xpose.msra.mxu0 0.0
    %2420 = vmatprep.subr.mxu0 0.0
    %2421 = vmatpush1.xpose.msra.mxu0 0.0
    %2422 = vmatprep.subr.mxu0 0.0
    %2423 = vmatpush1.xpose.msra.mxu0 0.0
    %2424 = vmatprep.subr.mxu0 0.0
    %2425 = vmatpush1.xpose.msra.mxu0 0.0
    %2426 = vmatprep.subr.mxu0 0.0
    %2427 = vmatpush1.xpose.msra.mxu0 0.0
    %2428 = vmatprep.subr.mxu0 0.0
    %2429 = vmatpush1.xpose.msra.mxu0 0.0
    %2430 = vmatprep.subr.mxu0 0.0
    %2431 = vmatpush1.xpose.msra.mxu0 0.0
    %2432 = vmatprep.subr.mxu0 0.0
    %2433 = vmatpush1.xpose.msra.mxu0 0.0
    %2434 = vmatprep.subr.mxu0 0.0
    %2435 = vmatpush1.xpose.msra.mxu0 0.0
    %2436 = vmatprep.subr.mxu0 0.0
    %2437 = vmatpush1.xpose.msra.mxu0 0.0
    %2438 = vmatprep.subr.mxu0 0.0
    %2439 = vmatpush1.xpose.msra.mxu0 0.0
    %2440 = vmatprep.subr.mxu0 0.0
    %2441 = vmatpush1.xpose.msra.mxu0 0.0
    %2442 = vmatprep.subr.mxu0 0.0
    %2443 = vmatpush1.xpose.msra.mxu0 0.0
    %2444 = vmatprep.subr.mxu0 0.0
    %2445 = vmatpush1.xpose.msra.mxu0 0.0
    %2446 = vmatprep.subr.mxu0 0.0
    %2447 = vmatpush1.xpose.msra.mxu0 0.0
    %2448 = vmatprep.subr.mxu0 0.0
    %2449 = vmatpush1.xpose.msra.mxu0 0.0
    %2450 = vmatprep.subr.mxu0 0.0
    %2451 = vmatpush1.xpose.msra.mxu0 0.0
    %2452 = vmatprep.subr.mxu0 0.0
    %2453 = vmatpush1.xpose.msra.mxu0 0.0
    %2454 = vmatprep.subr.mxu0 0.0
    %2455 = vmatpush1.xpose.msra.mxu0 0.0
    %2456 = vmatprep.subr.mxu0 0.0
    %2457 = vmatpush1.xpose.msra.mxu0 0.0
    %2458 = vmatprep.subr.mxu0 0.0
    %2459 = vmatpush1.xpose.msra.mxu0 0.0
    %2460 = vmatprep.subr.mxu0 0.0
    %2461 = vmatpush1.xpose.msra.mxu0 0.0
    %2462 = vmatprep.subr.mxu0 0.0
    %2463 = vmatpush1.xpose.msra.mxu0 0.0
    %2464 = vmatprep.subr.mxu0 0.0
    %2465 = vmatpush1.xpose.msra.mxu0 0.0
    %2466 = vmatprep.subr.mxu0 0.0
    %2467 = vmatpush1.xpose.msra.mxu0 0.0
    %2468 = vmatprep.subr.mxu0 0.0
    %2469 = vmatpush1.xpose.msra.mxu0 0.0
    %2470 = vmatprep.subr.mxu0 0.0
    %2471 = vmatpush1.xpose.msra.mxu0 0.0
    %2472 = vmatprep.mubr.f32.mxu0 %v2144
    %2473 = vmatmul.mubr.f32.gmra.mrb[0].mxu0 %v2142
    %v2474 = vpop.f32.mrb[0].mxu0
    %v2475 = vadd.f32 0.0, %v2474
    %v2476 = vpop.f32.mrb[0].mxu0
    %2477 = vdwg.mxu0
    %2478 = vmatprep.subr.mxu0 %v241
    %2479 = vmatpush1.xpose.msra.mxu0 %v240
    %2480 = vmatprep.subr.mxu0 0.0
    %2481 = vmatpush1.xpose.msra.mxu0 0.0
    %2482 = vmatprep.subr.mxu0 0.0
    %2483 = vmatpush1.xpose.msra.mxu0 0.0
    %2484 = vmatprep.subr.mxu0 0.0
    %2485 = vmatpush1.xpose.msra.mxu0 0.0
    %2486 = vmatprep.subr.mxu0 0.0
    %2487 = vmatpush1.xpose.msra.mxu0 0.0
    %2488 = vmatprep.subr.mxu0 0.0
    %2489 = vmatpush1.xpose.msra.mxu0 0.0
    %2490 = vmatprep.subr.mxu0 0.0
    %2491 = vmatpush1.xpose.msra.mxu0 0.0
    %2492 = vmatprep.subr.mxu0 0.0
    %2493 = vmatpush1.xpose.msra.mxu0 0.0
    %2494 = vmatprep.subr.mxu0 0.0
    %2495 = vmatpush1.xpose.msra.mxu0 0.0
    %2496 = vmatprep.subr.mxu0 0.0
    %2497 = vmatpush1.xpose.msra.mxu0 0.0
    %2498 = vmatprep.subr.mxu0 0.0
    %2499 = vmatpush1.xpose.msra.mxu0 0.0
    %2500 = vmatprep.subr.mxu0 0.0
    %2501 = vmatpush1.xpose.msra.mxu0 0.0
    %2502 = vmatprep.subr.mxu0 0.0
    %2503 = vmatpush1.xpose.msra.mxu0 0.0
    %2504 = vmatprep.subr.mxu0 0.0
    %2505 = vmatpush1.xpose.msra.mxu0 0.0
    %2506 = vmatprep.subr.mxu0 0.0
    %2507 = vmatpush1.xpose.msra.mxu0 0.0
    %2508 = vmatprep.subr.mxu0 0.0
    %2509 = vmatpush1.xpose.msra.mxu0 0.0
    %2510 = vmatprep.subr.mxu0 0.0
    %2511 = vmatpush1.xpose.msra.mxu0 0.0
    %2512 = vmatprep.subr.mxu0 0.0
    %2513 = vmatpush1.xpose.msra.mxu0 0.0
    %2514 = vmatprep.subr.mxu0 0.0
    %2515 = vmatpush1.xpose.msra.mxu0 0.0
    %2516 = vmatprep.subr.mxu0 0.0
    %2517 = vmatpush1.xpose.msra.mxu0 0.0
    %2518 = vmatprep.subr.mxu0 0.0
    %2519 = vmatpush1.xpose.msra.mxu0 0.0
    %2520 = vmatprep.subr.mxu0 0.0
    %2521 = vmatpush1.xpose.msra.mxu0 0.0
    %2522 = vmatprep.subr.mxu0 0.0
    %2523 = vmatpush1.xpose.msra.mxu0 0.0
    %2524 = vmatprep.subr.mxu0 0.0
    %2525 = vmatpush1.xpose.msra.mxu0 0.0
    %2526 = vmatprep.subr.mxu0 0.0
    %2527 = vmatpush1.xpose.msra.mxu0 0.0
    %2528 = vmatprep.subr.mxu0 0.0
    %2529 = vmatpush1.xpose.msra.mxu0 0.0
    %2530 = vmatprep.subr.mxu0 0.0
    %2531 = vmatpush1.xpose.msra.mxu0 0.0
    %2532 = vmatprep.subr.mxu0 0.0
    %2533 = vmatpush1.xpose.msra.mxu0 0.0
    %2534 = vmatprep.subr.mxu0 0.0
    %2535 = vmatpush1.xpose.msra.mxu0 0.0
    %2536 = vmatprep.subr.mxu0 0.0
    %2537 = vmatpush1.xpose.msra.mxu0 0.0
    %2538 = vmatprep.subr.mxu0 0.0
    %2539 = vmatpush1.xpose.msra.mxu0 0.0
    %2540 = vmatprep.subr.mxu0 0.0
    %2541 = vmatpush1.xpose.msra.mxu0 0.0
    %2542 = vmatprep.mubr.f32.mxu0 %v2273
    %2543 = vmatmul.mubr.f32.gmra.mrb[0].mxu0 %v2271
    %v2544 = vpop.f32.mrb[0].mxu0
    %v2545 = vadd.f32 %v2475, %v2544
    %v2546 = vpop.f32.mrb[0].mxu0
    %2547 = vdwg.mxu0
    %2548 = vmatprep.subr.mxu0 %v243
    %2549 = vmatpush1.xpose.msra.mxu0 %v242
    %2550 = vmatprep.subr.mxu0 0.0
    %2551 = vmatpush1.xpose.msra.mxu0 0.0
    %2552 = vmatprep.subr.mxu0 0.0
    %2553 = vmatpush1.xpose.msra.mxu0 0.0
    %2554 = vmatprep.subr.mxu0 0.0
    %2555 = vmatpush1.xpose.msra.mxu0 0.0
    %2556 = vmatprep.subr.mxu0 0.0
    %2557 = vmatpush1.xpose.msra.mxu0 0.0
    %2558 = vmatprep.subr.mxu0 0.0
    %2559 = vmatpush1.xpose.msra.mxu0 0.0
    %2560 = vmatprep.subr.mxu0 0.0
    %2561 = vmatpush1.xpose.msra.mxu0 0.0
    %2562 = vmatprep.subr.mxu0 0.0
    %2563 = vmatpush1.xpose.msra.mxu0 0.0
    %2564 = vmatprep.subr.mxu0 0.0
    %2565 = vmatpush1.xpose.msra.mxu0 0.0
    %2566 = vmatprep.subr.mxu0 0.0
    %2567 = vmatpush1.xpose.msra.mxu0 0.0
    %2568 = vmatprep.subr.mxu0 0.0
    %2569 = vmatpush1.xpose.msra.mxu0 0.0
    %2570 = vmatprep.subr.mxu0 0.0
    %2571 = vmatpush1.xpose.msra.mxu0 0.0
    %2572 = vmatprep.subr.mxu0 0.0
    %2573 = vmatpush1.xpose.msra.mxu0 0.0
    %2574 = vmatprep.subr.mxu0 0.0
    %2575 = vmatpush1.xpose.msra.mxu0 0.0
    %2576 = vmatprep.subr.mxu0 0.0
    %2577 = vmatpush1.xpose.msra.mxu0 0.0
    %2578 = vmatprep.subr.mxu0 0.0
    %2579 = vmatpush1.xpose.msra.mxu0 0.0
    %2580 = vmatprep.subr.mxu0 0.0
    %2581 = vmatpush1.xpose.msra.mxu0 0.0
    %2582 = vmatprep.subr.mxu0 0.0
    %2583 = vmatpush1.xpose.msra.mxu0 0.0
    %2584 = vmatprep.subr.mxu0 0.0
    %2585 = vmatpush1.xpose.msra.mxu0 0.0
    %2586 = vmatprep.subr.mxu0 0.0
    %2587 = vmatpush1.xpose.msra.mxu0 0.0
    %2588 = vmatprep.subr.mxu0 0.0
    %2589 = vmatpush1.xpose.msra.mxu0 0.0
    %2590 = vmatprep.subr.mxu0 0.0
    %2591 = vmatpush1.xpose.msra.mxu0 0.0
    %2592 = vmatprep.subr.mxu0 0.0
    %2593 = vmatpush1.xpose.msra.mxu0 0.0
    %2594 = vmatprep.subr.mxu0 0.0
    %2595 = vmatpush1.xpose.msra.mxu0 0.0
    %2596 = vmatprep.subr.mxu0 0.0
    %2597 = vmatpush1.xpose.msra.mxu0 0.0
    %2598 = vmatprep.subr.mxu0 0.0
    %2599 = vmatpush1.xpose.msra.mxu0 0.0
    %2600 = vmatprep.subr.mxu0 0.0
    %2601 = vmatpush1.xpose.msra.mxu0 0.0
    %2602 = vmatprep.subr.mxu0 0.0
    %2603 = vmatpush1.xpose.msra.mxu0 0.0
    %2604 = vmatprep.subr.mxu0 0.0
    %2605 = vmatpush1.xpose.msra.mxu0 0.0
    %2606 = vmatprep.subr.mxu0 0.0
    %2607 = vmatpush1.xpose.msra.mxu0 0.0
    %2608 = vmatprep.subr.mxu0 0.0
    %2609 = vmatpush1.xpose.msra.mxu0 0.0
    %2610 = vmatprep.subr.mxu0 0.0
    %2611 = vmatpush1.xpose.msra.mxu0 0.0
    %2612 = vmatprep.mubr.f32.mxu0 %v2402
    %2613 = vmatmul.mubr.f32.gmra.mrb[0].mxu0 %v2400
    %v2614 = vpop.f32.mrb[0].mxu0
    %v2615 = vadd.f32 %v2545, %v2614
    %v2616 = vpop.f32.mrb[0].mxu0
    %2617 = vdwg.mxu0
    %2618 = vmatprep.subr.mxu0 %v245
    %2619 = vmatpush1.xpose.msra.mxu0 %v244
    %2620 = vmatprep.subr.mxu0 0.0
    %2621 = vmatpush1.xpose.msra.mxu0 0.0
    %2622 = vmatprep.subr.mxu0 0.0
    %2623 = vmatpush1.xpose.msra.mxu0 0.0
    %2624 = vmatprep.subr.mxu0 0.0
    %2625 = vmatpush1.xpose.msra.mxu0 0.0
    %2626 = vmatprep.subr.mxu0 0.0
    %2627 = vmatpush1.xpose.msra.mxu0 0.0
    %2628 = vmatprep.subr.mxu0 0.0
    %2629 = vmatpush1.xpose.msra.mxu0 0.0
    %2630 = vmatprep.subr.mxu0 0.0
    %2631 = vmatpush1.xpose.msra.mxu0 0.0
    %2632 = vmatprep.subr.mxu0 0.0
    %2633 = vmatpush1.xpose.msra.mxu0 0.0
    %2634 = vmatprep.subr.mxu0 0.0
    %2635 = vmatpush1.xpose.msra.mxu0 0.0
    %2636 = vmatprep.subr.mxu0 0.0
    %2637 = vmatpush1.xpose.msra.mxu0 0.0
    %2638 = vmatprep.subr.mxu0 0.0
    %2639 = vmatpush1.xpose.msra.mxu0 0.0
    %2640 = vmatprep.subr.mxu0 0.0
    %2641 = vmatpush1.xpose.msra.mxu0 0.0
    %2642 = vmatprep.subr.mxu0 0.0
    %2643 = vmatpush1.xpose.msra.mxu0 0.0
    %2644 = vmatprep.subr.mxu0 0.0
    %2645 = vmatpush1.xpose.msra.mxu0 0.0
    %2646 = vmatprep.subr.mxu0 0.0
    %2647 = vmatpush1.xpose.msra.mxu0 0.0
    %2648 = vmatprep.subr.mxu0 0.0
    %2649 = vmatpush1.xpose.msra.mxu0 0.0
    %2650 = vmatprep.subr.mxu0 0.0
    %2651 = vmatpush1.xpose.msra.mxu0 0.0
    %2652 = vmatprep.subr.mxu0 0.0
    %2653 = vmatpush1.xpose.msra.mxu0 0.0
    %2654 = vmatprep.subr.mxu0 0.0
    %2655 = vmatpush1.xpose.msra.mxu0 0.0
    %2656 = vmatprep.subr.mxu0 0.0
    %2657 = vmatpush1.xpose.msra.mxu0 0.0
    %2658 = vmatprep.subr.mxu0 0.0
    %2659 = vmatpush1.xpose.msra.mxu0 0.0
    %2660 = vmatprep.subr.mxu0 0.0
    %2661 = vmatpush1.xpose.msra.mxu0 0.0
    %2662 = vmatprep.subr.mxu0 0.0
    %2663 = vmatpush1.xpose.msra.mxu0 0.0
    %2664 = vmatprep.subr.mxu0 0.0
    %2665 = vmatpush1.xpose.msra.mxu0 0.0
    %2666 = vmatprep.subr.mxu0 0.0
    %2667 = vmatpush1.xpose.msra.mxu0 0.0
    %2668 = vmatprep.subr.mxu0 0.0
    %2669 = vmatpush1.xpose.msra.mxu0 0.0
    %2670 = vmatprep.subr.mxu0 0.0
    %2671 = vmatpush1.xpose.msra.mxu0 0.0
    %2672 = vmatprep.subr.mxu0 0.0
    %2673 = vmatpush1.xpose.msra.mxu0 0.0
    %2674 = vmatprep.subr.mxu0 0.0
    %2675 = vmatpush1.xpose.msra.mxu0 0.0
    %2676 = vmatprep.subr.mxu0 0.0
    %2677 = vmatpush1.xpose.msra.mxu0 0.0
    %2678 = vmatprep.subr.mxu0 0.0
    %2679 = vmatpush1.xpose.msra.mxu0 0.0
    %2680 = vmatprep.subr.mxu0 0.0
    %2681 = vmatpush1.xpose.msra.mxu0 0.0
    %2682 = vmatprep.mubr.f32.mxu0 %v2148
    %2683 = vmatmul.mubr.f32.gmra.mrb[0].mxu0 %v2146
    %v2684 = vpop.f32.mrb[0].mxu0
    %v2685 = vadd.f32 0.0, %v2684
    %v2686 = vpop.f32.mrb[0].mxu0
    %2687 = vdwg.mxu0
    %2688 = vmatprep.subr.mxu0 %v247
    %2689 = vmatpush1.xpose.msra.mxu0 %v246
    %2690 = vmatprep.subr.mxu0 0.0
    %2691 = vmatpush1.xpose.msra.mxu0 0.0
    %2692 = vmatprep.subr.mxu0 0.0
    %2693 = vmatpush1.xpose.msra.mxu0 0.0
    %2694 = vmatprep.subr.mxu0 0.0
    %2695 = vmatpush1.xpose.msra.mxu0 0.0
    %2696 = vmatprep.subr.mxu0 0.0
    %2697 = vmatpush1.xpose.msra.mxu0 0.0
    %2698 = vmatprep.subr.mxu0 0.0
    %2699 = vmatpush1.xpose.msra.mxu0 0.0
    %2700 = vmatprep.subr.mxu0 0.0
    %2701 = vmatpush1.xpose.msra.mxu0 0.0
    %2702 = vmatprep.subr.mxu0 0.0
    %2703 = vmatpush1.xpose.msra.mxu0 0.0
    %2704 = vmatprep.subr.mxu0 0.0
    %2705 = vmatpush1.xpose.msra.mxu0 0.0
    %2706 = vmatprep.subr.mxu0 0.0
    %2707 = vmatpush1.xpose.msra.mxu0 0.0
    %2708 = vmatprep.subr.mxu0 0.0
    %2709 = vmatpush1.xpose.msra.mxu0 0.0
    %2710 = vmatprep.subr.mxu0 0.0
    %2711 = vmatpush1.xpose.msra.mxu0 0.0
    %2712 = vmatprep.subr.mxu0 0.0
    %2713 = vmatpush1.xpose.msra.mxu0 0.0
    %2714 = vmatprep.subr.mxu0 0.0
    %2715 = vmatpush1.xpose.msra.mxu0 0.0
    %2716 = vmatprep.subr.mxu0 0.0
    %2717 = vmatpush1.xpose.msra.mxu0 0.0
    %2718 = vmatprep.subr.mxu0 0.0
    %2719 = vmatpush1.xpose.msra.mxu0 0.0
    %2720 = vmatprep.subr.mxu0 0.0
    %2721 = vmatpush1.xpose.msra.mxu0 0.0
    %2722 = vmatprep.subr.mxu0 0.0
    %2723 = vmatpush1.xpose.msra.mxu0 0.0
    %2724 = vmatprep.subr.mxu0 0.0
    %2725 = vmatpush1.xpose.msra.mxu0 0.0
    %2726 = vmatprep.subr.mxu0 0.0
    %2727 = vmatpush1.xpose.msra.mxu0 0.0
    %2728 = vmatprep.subr.mxu0 0.0
    %2729 = vmatpush1.xpose.msra.mxu0 0.0
    %2730 = vmatprep.subr.mxu0 0.0
    %2731 = vmatpush1.xpose.msra.mxu0 0.0
    %2732 = vmatprep.subr.mxu0 0.0
    %2733 = vmatpush1.xpose.msra.mxu0 0.0
    %2734 = vmatprep.subr.mxu0 0.0
    %2735 = vmatpush1.xpose.msra.mxu0 0.0
    %2736 = vmatprep.subr.mxu0 0.0
    %2737 = vmatpush1.xpose.msra.mxu0 0.0
    %2738 = vmatprep.subr.mxu0 0.0
    %2739 = vmatpush1.xpose.msra.mxu0 0.0
    %2740 = vmatprep.subr.mxu0 0.0
    %2741 = vmatpush1.xpose.msra.mxu0 0.0
    %2742 = vmatprep.subr.mxu0 0.0
    %2743 = vmatpush1.xpose.msra.mxu0 0.0
    %2744 = vmatprep.subr.mxu0 0.0
    %2745 = vmatpush1.xpose.msra.mxu0 0.0
    %2746 = vmatprep.subr.mxu0 0.0
    %2747 = vmatpush1.xpose.msra.mxu0 0.0
    %2748 = vmatprep.subr.mxu0 0.0
    %2749 = vmatpush1.xpose.msra.mxu0 0.0
    %2750 = vmatprep.subr.mxu0 0.0
    %2751 = vmatpush1.xpose.msra.mxu0 0.0
    %2752 = vmatprep.mubr.f32.mxu0 %v2277
    %2753 = vmatmul.mubr.f32.gmra.mrb[0].mxu0 %v2275
    %v2754 = vpop.f32.mrb[0].mxu0
    %v2755 = vadd.f32 %v2685, %v2754
    %v2756 = vpop.f32.mrb[0].mxu0
    %2757 = vdwg.mxu0
    %2758 = vmatprep.subr.mxu0 %v249
    %2759 = vmatpush1.xpose.msra.mxu0 %v248
    %2760 = vmatprep.subr.mxu0 0.0
    %2761 = vmatpush1.xpose.msra.mxu0 0.0
    %2762 = vmatprep.subr.mxu0 0.0
    %2763 = vmatpush1.xpose.msra.mxu0 0.0
    %2764 = vmatprep.subr.mxu0 0.0
    %2765 = vmatpush1.xpose.msra.mxu0 0.0
    %2766 = vmatprep.subr.mxu0 0.0
    %2767 = vmatpush1.xpose.msra.mxu0 0.0
    %2768 = vmatprep.subr.mxu0 0.0
    %2769 = vmatpush1.xpose.msra.mxu0 0.0
    %2770 = vmatprep.subr.mxu0 0.0
    %2771 = vmatpush1.xpose.msra.mxu0 0.0
    %2772 = vmatprep.subr.mxu0 0.0
    %2773 = vmatpush1.xpose.msra.mxu0 0.0
    %2774 = vmatprep.subr.mxu0 0.0
    %2775 = vmatpush1.xpose.msra.mxu0 0.0
    %2776 = vmatprep.subr.mxu0 0.0
    %2777 = vmatpush1.xpose.msra.mxu0 0.0
    %2778 = vmatprep.subr.mxu0 0.0
    %2779 = vmatpush1.xpose.msra.mxu0 0.0
    %2780 = vmatprep.subr.mxu0 0.0
    %2781 = vmatpush1.xpose.msra.mxu0 0.0
    %2782 = vmatprep.subr.mxu0 0.0
    %2783 = vmatpush1.xpose.msra.mxu0 0.0
    %2784 = vmatprep.subr.mxu0 0.0
    %2785 = vmatpush1.xpose.msra.mxu0 0.0
    %2786 = vmatprep.subr.mxu0 0.0
    %2787 = vmatpush1.xpose.msra.mxu0 0.0
    %2788 = vmatprep.subr.mxu0 0.0
    %2789 = vmatpush1.xpose.msra.mxu0 0.0
    %2790 = vmatprep.subr.mxu0 0.0
    %2791 = vmatpush1.xpose.msra.mxu0 0.0
    %2792 = vmatprep.subr.mxu0 0.0
    %2793 = vmatpush1.xpose.msra.mxu0 0.0
    %2794 = vmatprep.subr.mxu0 0.0
    %2795 = vmatpush1.xpose.msra.mxu0 0.0
    %2796 = vmatprep.subr.mxu0 0.0
    %2797 = vmatpush1.xpose.msra.mxu0 0.0
    %2798 = vmatprep.subr.mxu0 0.0
    %2799 = vmatpush1.xpose.msra.mxu0 0.0
    %2800 = vmatprep.subr.mxu0 0.0
    %2801 = vmatpush1.xpose.msra.mxu0 0.0
    %2802 = vmatprep.subr.mxu0 0.0
    %2803 = vmatpush1.xpose.msra.mxu0 0.0
    %2804 = vmatprep.subr.mxu0 0.0
    %2805 = vmatpush1.xpose.msra.mxu0 0.0
    %2806 = vmatprep.subr.mxu0 0.0
    %2807 = vmatpush1.xpose.msra.mxu0 0.0
    %2808 = vmatprep.subr.mxu0 0.0
    %2809 = vmatpush1.xpose.msra.mxu0 0.0
    %2810 = vmatprep.subr.mxu0 0.0
    %2811 = vmatpush1.xpose.msra.mxu0 0.0
    %2812 = vmatprep.subr.mxu0 0.0
    %2813 = vmatpush1.xpose.msra.mxu0 0.0
    %2814 = vmatprep.subr.mxu0 0.0
    %2815 = vmatpush1.xpose.msra.mxu0 0.0
    %2816 = vmatprep.subr.mxu0 0.0
    %2817 = vmatpush1.xpose.msra.mxu0 0.0
    %2818 = vmatprep.subr.mxu0 0.0
    %2819 = vmatpush1.xpose.msra.mxu0 0.0
    %2820 = vmatprep.subr.mxu0 0.0
    %2821 = vmatpush1.xpose.msra.mxu0 0.0
    %2822 = vmatprep.mubr.f32.mxu0 %v2406
    %2823 = vmatmul.mubr.f32.gmra.mrb[0].mxu0 %v2404
    %v2824 = vpop.f32.mrb[0].mxu0
    %v2825 = vadd.f32 %v2755, %v2824
    %v2826 = vpop.f32.mrb[0].mxu0
    %2827 = vdwg.mxu0
    %vm2828 = vcmask 64512
    %v2829 = vsel %vm2828, %v2615, -inf
    %2830 = vmax.xlane.f32.xlu0 %v2829
    %v2831 = vpop.xlane.xlu0 %2830
    %v2832 = vsel %vm2828, %v2825, -inf
    %2833 = vmax.xlane.f32.xlu0 %v2832
    %v2834 = vpop.xlane.xlu0 %2833
    %v2835 = vsub.f32 %v2615, %v2831
    %v2836 = vsub.f32 %v2825, %v2834
    %v2837 = vmul.f32 %v2835, 1.442695
    %v2838 = vpow.pop %v2837
    %v2839 = vmul.f32 %v2836, 1.442695
    %v2840 = vpow.pop %v2839
    %v2841 = vsel %vm2828, %v2838, 0.0
    %2842 = vadd.xlane.f32.xlu0 %v2841
    %v2843 = vpop.xlane.xlu0 %2842
    %v2844 = vsel %vm2828, %v2840, 0.0
    %2845 = vadd.xlane.f32.xlu0 %v2844
    %v2846 = vpop.xlane.xlu0 %2845
    %v2847 = vrcp.pop %v2843
    %v2848 = vmul.f32 %v2838, %v2847
    %v2849 = vrcp.pop %v2846
    %v2850 = vmul.f32 %v2840, %v2849
    %v2852 = vsel %vm2828, %v2848, 0
    %2854 = vmatprep.subr.mxu0 %v239
    %2855 = vmatpush1.msra.mxu0 %v238
    %2856 = vmatprep.subr.mxu0 0.0
    %2857 = vmatpush1.msra.mxu0 0.0
    %2858 = vmatprep.subr.mxu0 0.0
    %2859 = vmatpush1.msra.mxu0 0.0
    %2860 = vmatprep.subr.mxu0 0.0
    %2861 = vmatpush1.msra.mxu0 0.0
    %2862 = vmatprep.subr.mxu0 0.0
    %2863 = vmatpush1.msra.mxu0 0.0
    %2864 = vmatprep.subr.mxu0 0.0
    %2865 = vmatpush1.msra.mxu0 0.0
    %2866 = vmatprep.subr.mxu0 0.0
    %2867 = vmatpush1.msra.mxu0 0.0
    %2868 = vmatprep.subr.mxu0 0.0
    %2869 = vmatpush1.msra.mxu0 0.0
    %2870 = vmatprep.subr.mxu0 0.0
    %2871 = vmatpush1.msra.mxu0 0.0
    %2872 = vmatprep.subr.mxu0 0.0
    %2873 = vmatpush1.msra.mxu0 0.0
    %2874 = vmatprep.subr.mxu0 0.0
    %2875 = vmatpush1.msra.mxu0 0.0
    %2876 = vmatprep.subr.mxu0 0.0
    %2877 = vmatpush1.msra.mxu0 0.0
    %2878 = vmatprep.subr.mxu0 0.0
    %2879 = vmatpush1.msra.mxu0 0.0
    %2880 = vmatprep.subr.mxu0 0.0
    %2881 = vmatpush1.msra.mxu0 0.0
    %2882 = vmatprep.subr.mxu0 0.0
    %2883 = vmatpush1.msra.mxu0 0.0
    %2884 = vmatprep.subr.mxu0 0.0
    %2885 = vmatpush1.msra.mxu0 0.0
    %2886 = vmatprep.subr.mxu0 0.0
    %2887 = vmatpush1.msra.mxu0 0.0
    %2888 = vmatprep.subr.mxu0 0.0
    %2889 = vmatpush1.msra.mxu0 0.0
    %2890 = vmatprep.subr.mxu0 0.0
    %2891 = vmatpush1.msra.mxu0 0.0
    %2892 = vmatprep.subr.mxu0 0.0
    %2893 = vmatpush1.msra.mxu0 0.0
    %2894 = vmatprep.subr.mxu0 0.0
    %2895 = vmatpush1.msra.mxu0 0.0
    %2896 = vmatprep.subr.mxu0 0.0
    %2897 = vmatpush1.msra.mxu0 0.0
    %2898 = vmatprep.subr.mxu0 0.0
    %2899 = vmatpush1.msra.mxu0 0.0
    %2900 = vmatprep.subr.mxu0 0.0
    %2901 = vmatpush1.msra.mxu0 0.0
    %2902 = vmatprep.subr.mxu0 0.0
    %2903 = vmatpush1.msra.mxu0 0.0
    %2904 = vmatprep.subr.mxu0 0.0
    %2905 = vmatpush1.msra.mxu0 0.0
    %2906 = vmatprep.subr.mxu0 0.0
    %2907 = vmatpush1.msra.mxu0 0.0
    %2908 = vmatprep.subr.mxu0 0.0
    %2909 = vmatpush1.msra.mxu0 0.0
    %2910 = vmatprep.subr.mxu0 0.0
    %2911 = vmatpush1.msra.mxu0 0.0
    %2912 = vmatprep.subr.mxu0 0.0
    %2913 = vmatpush1.msra.mxu0 0.0
    %2914 = vmatprep.subr.mxu0 0.0
    %2915 = vmatpush1.msra.mxu0 0.0
    %2916 = vmatprep.subr.mxu0 0.0
    %2917 = vmatpush1.msra.mxu0 0.0
    %2918 = vmatprep.mubr.f32.mxu0 0.0
    %2919 = vmatmul.mubr.f32.gmra.mrb[0].mxu0 %v2852
    %v2920 = vpop.f32.mrb[0].mxu0
    %v2921 = vadd.f32 0.0, %v2920
    %v2922 = vpop.f32.mrb[0].mxu0
    %v2923 = vadd.f32 0.0, %v2922
    %2924 = vdwg.mxu0
    %2925 = vmatprep.subr.mxu0 %v241
    %2926 = vmatpush1.msra.mxu0 %v240
    %2927 = vmatprep.subr.mxu0 0.0
    %2928 = vmatpush1.msra.mxu0 0.0
    %2929 = vmatprep.subr.mxu0 0.0
    %2930 = vmatpush1.msra.mxu0 0.0
    %2931 = vmatprep.subr.mxu0 0.0
    %2932 = vmatpush1.msra.mxu0 0.0
    %2933 = vmatprep.subr.mxu0 0.0
    %2934 = vmatpush1.msra.mxu0 0.0
    %2935 = vmatprep.subr.mxu0 0.0
    %2936 = vmatpush1.msra.mxu0 0.0
    %2937 = vmatprep.subr.mxu0 0.0
    %2938 = vmatpush1.msra.mxu0 0.0
    %2939 = vmatprep.subr.mxu0 0.0
    %2940 = vmatpush1.msra.mxu0 0.0
    %2941 = vmatprep.subr.mxu0 0.0
    %2942 = vmatpush1.msra.mxu0 0.0
    %2943 = vmatprep.subr.mxu0 0.0
    %2944 = vmatpush1.msra.mxu0 0.0
    %2945 = vmatprep.subr.mxu0 0.0
    %2946 = vmatpush1.msra.mxu0 0.0
    %2947 = vmatprep.subr.mxu0 0.0
    %2948 = vmatpush1.msra.mxu0 0.0
    %2949 = vmatprep.subr.mxu0 0.0
    %2950 = vmatpush1.msra.mxu0 0.0
    %2951 = vmatprep.subr.mxu0 0.0
    %2952 = vmatpush1.msra.mxu0 0.0
    %2953 = vmatprep.subr.mxu0 0.0
    %2954 = vmatpush1.msra.mxu0 0.0
    %2955 = vmatprep.subr.mxu0 0.0
    %2956 = vmatpush1.msra.mxu0 0.0
    %2957 = vmatprep.subr.mxu0 0.0
    %2958 = vmatpush1.msra.mxu0 0.0
    %2959 = vmatprep.subr.mxu0 0.0
    %2960 = vmatpush1.msra.mxu0 0.0
    %2961 = vmatprep.subr.mxu0 0.0
    %2962 = vmatpush1.msra.mxu0 0.0
    %2963 = vmatprep.subr.mxu0 0.0
    %2964 = vmatpush1.msra.mxu0 0.0
    %2965 = vmatprep.subr.mxu0 0.0
    %2966 = vmatpush1.msra.mxu0 0.0
    %2967 = vmatprep.subr.mxu0 0.0
    %2968 = vmatpush1.msra.mxu0 0.0
    %2969 = vmatprep.subr.mxu0 0.0
    %2970 = vmatpush1.msra.mxu0 0.0
    %2971 = vmatprep.subr.mxu0 0.0
    %2972 = vmatpush1.msra.mxu0 0.0
    %2973 = vmatprep.subr.mxu0 0.0
    %2974 = vmatpush1.msra.mxu0 0.0
    %2975 = vmatprep.subr.mxu0 0.0
    %2976 = vmatpush1.msra.mxu0 0.0
    %2977 = vmatprep.subr.mxu0 0.0
    %2978 = vmatpush1.msra.mxu0 0.0
    %2979 = vmatprep.subr.mxu0 0.0
    %2980 = vmatpush1.msra.mxu0 0.0
    %2981 = vmatprep.subr.mxu0 0.0
    %2982 = vmatpush1.msra.mxu0 0.0
    %2983 = vmatprep.subr.mxu0 0.0
    %2984 = vmatpush1.msra.mxu0 0.0
    %2985 = vmatprep.subr.mxu0 0.0
    %2986 = vmatpush1.msra.mxu0 0.0
    %2987 = vmatprep.subr.mxu0 0.0
    %2988 = vmatpush1.msra.mxu0 0.0
    %2989 = vmatprep.mubr.f32.mxu0 0.0
    %2990 = vmatmul.mubr.f32.gmra.mrb[0].mxu0 %v2852
    %v2991 = vpop.f32.mrb[0].mxu0
    %v2992 = vadd.f32 0.0, %v2991
    %v2993 = vpop.f32.mrb[0].mxu0
    %v2994 = vadd.f32 0.0, %v2993
    %2995 = vdwg.mxu0
    %2996 = vmatprep.subr.mxu0 %v243
    %2997 = vmatpush1.msra.mxu0 %v242
    %2998 = vmatprep.subr.mxu0 0.0
    %2999 = vmatpush1.msra.mxu0 0.0
    %3000 = vmatprep.subr.mxu0 0.0
    %3001 = vmatpush1.msra.mxu0 0.0
    %3002 = vmatprep.subr.mxu0 0.0
    %3003 = vmatpush1.msra.mxu0 0.0
    %3004 = vmatprep.subr.mxu0 0.0
    %3005 = vmatpush1.msra.mxu0 0.0
    %3006 = vmatprep.subr.mxu0 0.0
    %3007 = vmatpush1.msra.mxu0 0.0
    %3008 = vmatprep.subr.mxu0 0.0
    %3009 = vmatpush1.msra.mxu0 0.0
    %3010 = vmatprep.subr.mxu0 0.0
    %3011 = vmatpush1.msra.mxu0 0.0
    %3012 = vmatprep.subr.mxu0 0.0
    %3013 = vmatpush1.msra.mxu0 0.0
    %3014 = vmatprep.subr.mxu0 0.0
    %3015 = vmatpush1.msra.mxu0 0.0
    %3016 = vmatprep.subr.mxu0 0.0
    %3017 = vmatpush1.msra.mxu0 0.0
    %3018 = vmatprep.subr.mxu0 0.0
    %3019 = vmatpush1.msra.mxu0 0.0
    %3020 = vmatprep.subr.mxu0 0.0
    %3021 = vmatpush1.msra.mxu0 0.0
    %3022 = vmatprep.subr.mxu0 0.0
    %3023 = vmatpush1.msra.mxu0 0.0
    %3024 = vmatprep.subr.mxu0 0.0
    %3025 = vmatpush1.msra.mxu0 0.0
    %3026 = vmatprep.subr.mxu0 0.0
    %3027 = vmatpush1.msra.mxu0 0.0
    %3028 = vmatprep.subr.mxu0 0.0
    %3029 = vmatpush1.msra.mxu0 0.0
    %3030 = vmatprep.subr.mxu0 0.0
    %3031 = vmatpush1.msra.mxu0 0.0
    %3032 = vmatprep.subr.mxu0 0.0
    %3033 = vmatpush1.msra.mxu0 0.0
    %3034 = vmatprep.subr.mxu0 0.0
    %3035 = vmatpush1.msra.mxu0 0.0
    %3036 = vmatprep.subr.mxu0 0.0
    %3037 = vmatpush1.msra.mxu0 0.0
    %3038 = vmatprep.subr.mxu0 0.0
    %3039 = vmatpush1.msra.mxu0 0.0
    %3040 = vmatprep.subr.mxu0 0.0
    %3041 = vmatpush1.msra.mxu0 0.0
    %3042 = vmatprep.subr.mxu0 0.0
    %3043 = vmatpush1.msra.mxu0 0.0
    %3044 = vmatprep.subr.mxu0 0.0
    %3045 = vmatpush1.msra.mxu0 0.0
    %3046 = vmatprep.subr.mxu0 0.0
    %3047 = vmatpush1.msra.mxu0 0.0
    %3048 = vmatprep.subr.mxu0 0.0
    %3049 = vmatpush1.msra.mxu0 0.0
    %3050 = vmatprep.subr.mxu0 0.0
    %3051 = vmatpush1.msra.mxu0 0.0
    %3052 = vmatprep.subr.mxu0 0.0
    %3053 = vmatpush1.msra.mxu0 0.0
    %3054 = vmatprep.subr.mxu0 0.0
    %3055 = vmatpush1.msra.mxu0 0.0
    %3056 = vmatprep.subr.mxu0 0.0
    %3057 = vmatpush1.msra.mxu0 0.0
    %3058 = vmatprep.subr.mxu0 0.0
    %3059 = vmatpush1.msra.mxu0 0.0
    %3060 = vmatprep.mubr.f32.mxu0 0.0
    %3061 = vmatmul.mubr.f32.gmra.mrb[0].mxu0 %v2852
    %v3062 = vpop.f32.mrb[0].mxu0
    %v3063 = vadd.f32 0.0, %v3062
    %v3064 = vpop.f32.mrb[0].mxu0
    %v3065 = vadd.f32 0.0, %v3064
    %3066 = vdwg.mxu0
    %v3068 = vsel %vm2828, %v2850, 0
    %3070 = vmatprep.subr.mxu0 %v245
    %3071 = vmatpush1.msra.mxu0 %v244
    %3072 = vmatprep.subr.mxu0 0.0
    %3073 = vmatpush1.msra.mxu0 0.0
    %3074 = vmatprep.subr.mxu0 0.0
    %3075 = vmatpush1.msra.mxu0 0.0
    %3076 = vmatprep.subr.mxu0 0.0
    %3077 = vmatpush1.msra.mxu0 0.0
    %3078 = vmatprep.subr.mxu0 0.0
    %3079 = vmatpush1.msra.mxu0 0.0
    %3080 = vmatprep.subr.mxu0 0.0
    %3081 = vmatpush1.msra.mxu0 0.0
    %3082 = vmatprep.subr.mxu0 0.0
    %3083 = vmatpush1.msra.mxu0 0.0
    %3084 = vmatprep.subr.mxu0 0.0
    %3085 = vmatpush1.msra.mxu0 0.0
    %3086 = vmatprep.subr.mxu0 0.0
    %3087 = vmatpush1.msra.mxu0 0.0
    %3088 = vmatprep.subr.mxu0 0.0
    %3089 = vmatpush1.msra.mxu0 0.0
    %3090 = vmatprep.subr.mxu0 0.0
    %3091 = vmatpush1.msra.mxu0 0.0
    %3092 = vmatprep.subr.mxu0 0.0
    %3093 = vmatpush1.msra.mxu0 0.0
    %3094 = vmatprep.subr.mxu0 0.0
    %3095 = vmatpush1.msra.mxu0 0.0
    %3096 = vmatprep.subr.mxu0 0.0
    %3097 = vmatpush1.msra.mxu0 0.0
    %3098 = vmatprep.subr.mxu0 0.0
    %3099 = vmatpush1.msra.mxu0 0.0
    %3100 = vmatprep.subr.mxu0 0.0
    %3101 = vmatpush1.msra.mxu0 0.0
    %3102 = vmatprep.subr.mxu0 0.0
    %3103 = vmatpush1.msra.mxu0 0.0
    %3104 = vmatprep.subr.mxu0 0.0
    %3105 = vmatpush1.msra.mxu0 0.0
    %3106 = vmatprep.subr.mxu0 0.0
    %3107 = vmatpush1.msra.mxu0 0.0
    %3108 = vmatprep.subr.mxu0 0.0
    %3109 = vmatpush1.msra.mxu0 0.0
    %3110 = vmatprep.subr.mxu0 0.0
    %3111 = vmatpush1.msra.mxu0 0.0
    %3112 = vmatprep.subr.mxu0 0.0
    %3113 = vmatpush1.msra.mxu0 0.0
    %3114 = vmatprep.subr.mxu0 0.0
    %3115 = vmatpush1.msra.mxu0 0.0
    %3116 = vmatprep.subr.mxu0 0.0
    %3117 = vmatpush1.msra.mxu0 0.0
    %3118 = vmatprep.subr.mxu0 0.0
    %3119 = vmatpush1.msra.mxu0 0.0
    %3120 = vmatprep.subr.mxu0 0.0
    %3121 = vmatpush1.msra.mxu0 0.0
    %3122 = vmatprep.subr.mxu0 0.0
    %3123 = vmatpush1.msra.mxu0 0.0
    %3124 = vmatprep.subr.mxu0 0.0
    %3125 = vmatpush1.msra.mxu0 0.0
    %3126 = vmatprep.subr.mxu0 0.0
    %3127 = vmatpush1.msra.mxu0 0.0
    %3128 = vmatprep.subr.mxu0 0.0
    %3129 = vmatpush1.msra.mxu0 0.0
    %3130 = vmatprep.subr.mxu0 0.0
    %3131 = vmatpush1.msra.mxu0 0.0
    %3132 = vmatprep.subr.mxu0 0.0
    %3133 = vmatpush1.msra.mxu0 0.0
    %3134 = vmatprep.mubr.f32.mxu0 0.0
    %3135 = vmatmul.mubr.f32.gmra.mrb[0].mxu0 %v3068
    %v3136 = vpop.f32.mrb[0].mxu0
    %v3137 = vadd.f32 0.0, %v3136
    %v3138 = vpop.f32.mrb[0].mxu0
    %v3139 = vadd.f32 0.0, %v3138
    %3140 = vdwg.mxu0
    %3141 = vmatprep.subr.mxu0 %v247
    %3142 = vmatpush1.msra.mxu0 %v246
    %3143 = vmatprep.subr.mxu0 0.0
    %3144 = vmatpush1.msra.mxu0 0.0
    %3145 = vmatprep.subr.mxu0 0.0
    %3146 = vmatpush1.msra.mxu0 0.0
    %3147 = vmatprep.subr.mxu0 0.0
    %3148 = vmatpush1.msra.mxu0 0.0
    %3149 = vmatprep.subr.mxu0 0.0
    %3150 = vmatpush1.msra.mxu0 0.0
    %3151 = vmatprep.subr.mxu0 0.0
    %3152 = vmatpush1.msra.mxu0 0.0
    %3153 = vmatprep.subr.mxu0 0.0
    %3154 = vmatpush1.msra.mxu0 0.0
    %3155 = vmatprep.subr.mxu0 0.0
    %3156 = vmatpush1.msra.mxu0 0.0
    %3157 = vmatprep.subr.mxu0 0.0
    %3158 = vmatpush1.msra.mxu0 0.0
    %3159 = vmatprep.subr.mxu0 0.0
    %3160 = vmatpush1.msra.mxu0 0.0
    %3161 = vmatprep.subr.mxu0 0.0
    %3162 = vmatpush1.msra.mxu0 0.0
    %3163 = vmatprep.subr.mxu0 0.0
    %3164 = vmatpush1.msra.mxu0 0.0
    %3165 = vmatprep.subr.mxu0 0.0
    %3166 = vmatpush1.msra.mxu0 0.0
    %3167 = vmatprep.subr.mxu0 0.0
    %3168 = vmatpush1.msra.mxu0 0.0
    %3169 = vmatprep.subr.mxu0 0.0
    %3170 = vmatpush1.msra.mxu0 0.0
    %3171 = vmatprep.subr.mxu0 0.0
    %3172 = vmatpush1.msra.mxu0 0.0
    %3173 = vmatprep.subr.mxu0 0.0
    %3174 = vmatpush1.msra.mxu0 0.0
    %3175 = vmatprep.subr.mxu0 0.0
    %3176 = vmatpush1.msra.mxu0 0.0
    %3177 = vmatprep.subr.mxu0 0.0
    %3178 = vmatpush1.msra.mxu0 0.0
    %3179 = vmatprep.subr.mxu0 0.0
    %3180 = vmatpush1.msra.mxu0 0.0
    %3181 = vmatprep.subr.mxu0 0.0
    %3182 = vmatpush1.msra.mxu0 0.0
    %3183 = vmatprep.subr.mxu0 0.0
    %3184 = vmatpush1.msra.mxu0 0.0
    %3185 = vmatprep.subr.mxu0 0.0
    %3186 = vmatpush1.msra.mxu0 0.0
    %3187 = vmatprep.subr.mxu0 0.0
    %3188 = vmatpush1.msra.mxu0 0.0
    %3189 = vmatprep.subr.mxu0 0.0
    %3190 = vmatpush1.msra.mxu0 0.0
    %3191 = vmatprep.subr.mxu0 0.0
    %3192 = vmatpush1.msra.mxu0 0.0
    %3193 = vmatprep.subr.mxu0 0.0
    %3194 = vmatpush1.msra.mxu0 0.0
    %3195 = vmatprep.subr.mxu0 0.0
    %3196 = vmatpush1.msra.mxu0 0.0
    %3197 = vmatprep.subr.mxu0 0.0
    %3198 = vmatpush1.msra.mxu0 0.0
    %3199 = vmatprep.subr.mxu0 0.0
    %3200 = vmatpush1.msra.mxu0 0.0
    %3201 = vmatprep.subr.mxu0 0.0
    %3202 = vmatpush1.msra.mxu0 0.0
    %3203 = vmatprep.subr.mxu0 0.0
    %3204 = vmatpush1.msra.mxu0 0.0
    %3205 = vmatprep.mubr.f32.mxu0 0.0
    %3206 = vmatmul.mubr.f32.gmra.mrb[0].mxu0 %v3068
    %v3207 = vpop.f32.mrb[0].mxu0
    %v3208 = vadd.f32 0.0, %v3207
    %v3209 = vpop.f32.mrb[0].mxu0
    %v3210 = vadd.f32 0.0, %v3209
    %3211 = vdwg.mxu0
    %3212 = vmatprep.subr.mxu0 %v249
    %3213 = vmatpush1.msra.mxu0 %v248
    %3214 = vmatprep.subr.mxu0 0.0
    %3215 = vmatpush1.msra.mxu0 0.0
    %3216 = vmatprep.subr.mxu0 0.0
    %3217 = vmatpush1.msra.mxu0 0.0
    %3218 = vmatprep.subr.mxu0 0.0
    %3219 = vmatpush1.msra.mxu0 0.0
    %3220 = vmatprep.subr.mxu0 0.0
    %3221 = vmatpush1.msra.mxu0 0.0
    %3222 = vmatprep.subr.mxu0 0.0
    %3223 = vmatpush1.msra.mxu0 0.0
    %3224 = vmatprep.subr.mxu0 0.0
    %3225 = vmatpush1.msra.mxu0 0.0
    %3226 = vmatprep.subr.mxu0 0.0
    %3227 = vmatpush1.msra.mxu0 0.0
    %3228 = vmatprep.subr.mxu0 0.0
    %3229 = vmatpush1.msra.mxu0 0.0
    %3230 = vmatprep.subr.mxu0 0.0
    %3231 = vmatpush1.msra.mxu0 0.0
    %3232 = vmatprep.subr.mxu0 0.0
    %3233 = vmatpush1.msra.mxu0 0.0
    %3234 = vmatprep.subr.mxu0 0.0
    %3235 = vmatpush1.msra.mxu0 0.0
    %3236 = vmatprep.subr.mxu0 0.0
    %3237 = vmatpush1.msra.mxu0 0.0
    %3238 = vmatprep.subr.mxu0 0.0
    %3239 = vmatpush1.msra.mxu0 0.0
    %3240 = vmatprep.subr.mxu0 0.0
    %3241 = vmatpush1.msra.mxu0 0.0
    %3242 = vmatprep.subr.mxu0 0.0
    %3243 = vmatpush1.msra.mxu0 0.0
    %3244 = vmatprep.subr.mxu0 0.0
    %3245 = vmatpush1.msra.mxu0 0.0
    %3246 = vmatprep.subr.mxu0 0.0
    %3247 = vmatpush1.msra.mxu0 0.0
    %3248 = vmatprep.subr.mxu0 0.0
    %3249 = vmatpush1.msra.mxu0 0.0
    %3250 = vmatprep.subr.mxu0 0.0
    %3251 = vmatpush1.msra.mxu0 0.0
    %3252 = vmatprep.subr.mxu0 0.0
    %3253 = vmatpush1.msra.mxu0 0.0
    %3254 = vmatprep.subr.mxu0 0.0
    %3255 = vmatpush1.msra.mxu0 0.0
    %3256 = vmatprep.subr.mxu0 0.0
    %3257 = vmatpush1.msra.mxu0 0.0
    %3258 = vmatprep.subr.mxu0 0.0
    %3259 = vmatpush1.msra.mxu0 0.0
    %3260 = vmatprep.subr.mxu0 0.0
    %3261 = vmatpush1.msra.mxu0 0.0
    %3262 = vmatprep.subr.mxu0 0.0
    %3263 = vmatpush1.msra.mxu0 0.0
    %3264 = vmatprep.subr.mxu0 0.0
    %3265 = vmatpush1.msra.mxu0 0.0
    %3266 = vmatprep.subr.mxu0 0.0
    %3267 = vmatpush1.msra.mxu0 0.0
    %3268 = vmatprep.subr.mxu0 0.0
    %3269 = vmatpush1.msra.mxu0 0.0
    %3270 = vmatprep.subr.mxu0 0.0
    %3271 = vmatpush1.msra.mxu0 0.0
    %3272 = vmatprep.subr.mxu0 0.0
    %3273 = vmatpush1.msra.mxu0 0.0
    %3274 = vmatprep.subr.mxu0 0.0
    %3275 = vmatpush1.msra.mxu0 0.0
    %3276 = vmatprep.mubr.f32.mxu0 0.0
    %3277 = vmatmul.mubr.f32.gmra.mrb[0].mxu0 %v3068
    %v3278 = vpop.f32.mrb[0].mxu0
    %v3279 = vadd.f32 0.0, %v3278
    %v3280 = vpop.f32.mrb[0].mxu0
    %v3281 = vadd.f32 0.0, %v3280
    %3282 = vdwg.mxu0
    %v3283 = vlaneseq
    %v3284 = vshrl.u32 %v3283, 7
    %v3285 = vsub.s32 0, %v3284
    %v3286 = vrot.slane %v286, %v3285
    %3288 = vbcast.lane.b32.xlu0 %v3286, 256
    %v3289 = vpop.permute.xlu0 %3288
    %v3290 = vlaneseq
    %v3291 = vshrl.u32 %v3290, 7
    %v3292 = vsub.s32 1, %v3291
    %v3293 = vrot.slane %v286, %v3292
    %3295 = vbcast.lane.b32.xlu0 %v3293, 256
    %v3296 = vpop.permute.xlu0 %3295
    %v3297 = vmul.f32 %v3289, %v2921
    %v3298 = vmul.f32 %v3289, %v2923
    %v3299 = vmul.f32 %v3289, %v2992
    %v3300 = vmul.f32 %v3289, %v2994
    %v3301 = vmul.f32 %v3289, %v3063
    %v3302 = vmul.f32 %v3289, %v3065
    %v3303 = vmul.f32 %v3296, %v3137
    %v3304 = vmul.f32 %v3296, %v3139
    %v3305 = vmul.f32 %v3296, %v3208
    %v3306 = vmul.f32 %v3296, %v3210
    %v3307 = vmul.f32 %v3296, %v3279
    %v3308 = vmul.f32 %v3296, %v3281
    %v3309 = vadd.f32 %v238, %v3297
    %v3310 = vadd.f32 %v239, %v3298
    %v3311 = vadd.f32 %v240, %v3299
    %v3312 = vadd.f32 %v241, %v3300
    %v3313 = vadd.f32 %v242, %v3301
    %v3314 = vadd.f32 %v243, %v3302
    %v3315 = vadd.f32 %v244, %v3303
    %v3316 = vadd.f32 %v245, %v3304
    %v3317 = vadd.f32 %v246, %v3305
    %v3318 = vadd.f32 %v247, %v3306
    %v3319 = vadd.f32 %v248, %v3307
    %v3320 = vadd.f32 %v249, %v3308
    %s3321 = scalar_lea.vmem %s4, 2
    %v3322 = vld [vmem:[%s3321] sm:$0x3]
    %v3323 = vpack.c.bf16 %v268, %v262
    %v3324 = vpack.c.bf16 %v269, %v263
    %v3325 = vpack.c.bf16 %v270, %v264
    %v3326 = vpack.c.bf16 %v271, %v265
    %v3327 = vpack.c.bf16 %v272, %v266
    %v3328 = vpack.c.bf16 %v273, %v267
    %v3329 = vld [vmem:[#allocation13] sm:$0xff]
    %v3330 = vld [vmem:[#allocation13 + $0x8] sm:$0xff]
    %v3331 = vld [vmem:[#allocation13 + $0x10] sm:$0xff]
    %v3332 = vld [vmem:[#allocation13 + $0x18] sm:$0xff]
    %v3333 = vld [vmem:[#allocation13 + $0x20] sm:$0xff]
    %v3334 = vld [vmem:[#allocation13 + $0x28] sm:$0xff]
    %v3335 = vld [vmem:[#allocation13 + $0x30] sm:$0xff]
    %v3336 = vld [vmem:[#allocation13 + $0x38] sm:$0xff]
    %v3337 = vld [vmem:[#allocation13 + $0x40] sm:$0xff]
    %v3338 = vld [vmem:[#allocation13 + $0x48] sm:$0xff]
    %v3339 = vld [vmem:[#allocation13 + $0x50] sm:$0xff]
    %v3340 = vld [vmem:[#allocation13 + $0x58] sm:$0xff]
    %v3341 = vld [vmem:[#allocation13 + $0x60] sm:$0xff]
    %v3342 = vld [vmem:[#allocation13 + $0x68] sm:$0xff]
    %v3343 = vld [vmem:[#allocation13 + $0x70] sm:$0xff]
    %v3344 = vld [vmem:[#allocation13 + $0x78] sm:$0xff]
    %v3345 = vld [vmem:[#allocation13 + $0x80] sm:$0xff]
    %v3346 = vld [vmem:[#allocation13 + $0x88] sm:$0xff]
    %v3347 = vld [vmem:[#allocation13 + $0x90] sm:$0xff]
    %v3348 = vld [vmem:[#allocation13 + $0x98] sm:$0xff]
    %v3349 = vld [vmem:[#allocation13 + $0xa0] sm:$0xff]
    %v3350 = vld [vmem:[#allocation13 + $0xa8] sm:$0xff]
    %v3351 = vld [vmem:[#allocation13 + $0xb0] sm:$0xff]
    %v3352 = vld [vmem:[#allocation13 + $0xb8] sm:$0xff]
    %v3353 = vld [vmem:[#allocation13 + $0xc0] sm:$0xff]
    %v3354 = vld [vmem:[#allocation13 + $0xc8] sm:$0xff]
    %v3355 = vld [vmem:[#allocation13 + $0xd0] sm:$0xff]
    %v3356 = vld [vmem:[#allocation13 + $0xd8] sm:$0xff]
    %v3357 = vld [vmem:[#allocation13 + $0xe0] sm:$0xff]
    %v3358 = vld [vmem:[#allocation13 + $0xe8] sm:$0xff]
    %v3359 = vld [vmem:[#allocation13 + $0xf0] sm:$0xff]
    %v3360 = vld [vmem:[#allocation13 + $0xf8] sm:$0xff]
    %v3361 = vld [vmem:[#allocation13 + $0x100] sm:$0xff]
    %v3362 = vld [vmem:[#allocation13 + $0x108] sm:$0xff]
    %v3363 = vld [vmem:[#allocation13 + $0x110] sm:$0xff]
    %v3364 = vld [vmem:[#allocation13 + $0x118] sm:$0xff]
    %v3365 = vld [vmem:[#allocation13 + $0x120] sm:$0xff]
    %v3366 = vld [vmem:[#allocation13 + $0x128] sm:$0xff]
    %v3367 = vld [vmem:[#allocation13 + $0x130] sm:$0xff]
    %v3368 = vld [vmem:[#allocation13 + $0x138] sm:$0xff]
    %v3369 = vld [vmem:[#allocation13 + $0x140] sm:$0xff]
    %v3370 = vld [vmem:[#allocation13 + $0x148] sm:$0xff]
    %v3371 = vld [vmem:[#allocation13 + $0x150] sm:$0xff]
    %v3372 = vld [vmem:[#allocation13 + $0x158] sm:$0xff]
    %v3373 = vld [vmem:[#allocation13 + $0x160] sm:$0xff]
    %v3374 = vld [vmem:[#allocation13 + $0x168] sm:$0xff]
    %v3375 = vld [vmem:[#allocation13 + $0x170] sm:$0xff]
    %v3376 = vld [vmem:[#allocation13 + $0x178] sm:$0xff]
    %v3377 = vld [vmem:[#allocation13 + $0x180] sm:$0xff]
    %v3378 = vld [vmem:[#allocation13 + $0x188] sm:$0xff]
    %v3379 = vld [vmem:[#allocation13 + $0x190] sm:$0xff]
    %v3380 = vld [vmem:[#allocation13 + $0x198] sm:$0xff]
    %v3381 = vld [vmem:[#allocation13 + $0x1a0] sm:$0xff]
    %v3382 = vld [vmem:[#allocation13 + $0x1a8] sm:$0xff]
    %v3383 = vld [vmem:[#allocation13 + $0x1b0] sm:$0xff]
    %v3384 = vld [vmem:[#allocation13 + $0x1b8] sm:$0xff]
    %v3385 = vld [vmem:[#allocation13 + $0x1c0] sm:$0xff]
    %v3386 = vld [vmem:[#allocation13 + $0x1c8] sm:$0xff]
    %v3387 = vld [vmem:[#allocation13 + $0x1d0] sm:$0xff]
    %v3388 = vld [vmem:[#allocation13 + $0x1d8] sm:$0xff]
    %v3389 = vld [vmem:[#allocation13 + $0x1e0] sm:$0xff]
    %v3390 = vld [vmem:[#allocation13 + $0x1e8] sm:$0xff]
    %v3391 = vld [vmem:[#allocation13 + $0x1f0] sm:$0xff]
    %v3392 = vld [vmem:[#allocation13 + $0x1f8] sm:$0xff]
    %v3393 = vld [vmem:[#allocation13 + $0x200] sm:$0xff]
    %v3394 = vld [vmem:[#allocation13 + $0x208] sm:$0xff]
    %v3395 = vld [vmem:[#allocation13 + $0x210] sm:$0xff]
    %v3396 = vld [vmem:[#allocation13 + $0x218] sm:$0xff]
    %v3397 = vld [vmem:[#allocation13 + $0x220] sm:$0xff]
    %v3398 = vld [vmem:[#allocation13 + $0x228] sm:$0xff]
    %v3399 = vld [vmem:[#allocation13 + $0x230] sm:$0xff]
    %v3400 = vld [vmem:[#allocation13 + $0x238] sm:$0xff]
    %v3401 = vld [vmem:[#allocation13 + $0x240] sm:$0xff]
    %v3402 = vld [vmem:[#allocation13 + $0x248] sm:$0xff]
    %v3403 = vld [vmem:[#allocation13 + $0x250] sm:$0xff]
    %v3404 = vld [vmem:[#allocation13 + $0x258] sm:$0xff]
    %v3405 = vld [vmem:[#allocation13 + $0x260] sm:$0xff]
    %v3406 = vld [vmem:[#allocation13 + $0x268] sm:$0xff]
    %v3407 = vld [vmem:[#allocation13 + $0x270] sm:$0xff]
    %v3408 = vld [vmem:[#allocation13 + $0x278] sm:$0xff]
    %v3409 = vld [vmem:[#allocation13 + $0x280] sm:$0xff]
    %v3410 = vld [vmem:[#allocation13 + $0x288] sm:$0xff]
    %v3411 = vld [vmem:[#allocation13 + $0x290] sm:$0xff]
    %v3412 = vld [vmem:[#allocation13 + $0x298] sm:$0xff]
    %v3413 = vld [vmem:[#allocation13 + $0x2a0] sm:$0xff]
    %v3414 = vld [vmem:[#allocation13 + $0x2a8] sm:$0xff]
    %v3415 = vld [vmem:[#allocation13 + $0x2b0] sm:$0xff]
    %v3416 = vld [vmem:[#allocation13 + $0x2b8] sm:$0xff]
    %v3417 = vld [vmem:[#allocation13 + $0x2c0] sm:$0xff]
    %v3418 = vld [vmem:[#allocation13 + $0x2c8] sm:$0xff]
    %v3419 = vld [vmem:[#allocation13 + $0x2d0] sm:$0xff]
    %v3420 = vld [vmem:[#allocation13 + $0x2d8] sm:$0xff]
    %v3421 = vld [vmem:[#allocation13 + $0x2e0] sm:$0xff]
    %v3422 = vld [vmem:[#allocation13 + $0x2e8] sm:$0xff]
    %v3423 = vld [vmem:[#allocation13 + $0x2f0] sm:$0xff]
    %v3424 = vld [vmem:[#allocation13 + $0x2f8] sm:$0xff]
    %v3425 = vld [vmem:[#allocation13 + $0x300] sm:$0xff]
    %v3426 = vld [vmem:[#allocation13 + $0x308] sm:$0xff]
    %v3427 = vld [vmem:[#allocation13 + $0x310] sm:$0xff]
    %v3428 = vld [vmem:[#allocation13 + $0x318] sm:$0xff]
    %v3429 = vld [vmem:[#allocation13 + $0x320] sm:$0xff]
    %v3430 = vld [vmem:[#allocation13 + $0x328] sm:$0xff]
    %v3431 = vld [vmem:[#allocation13 + $0x330] sm:$0xff]
    %v3432 = vld [vmem:[#allocation13 + $0x338] sm:$0xff]
    %v3433 = vld [vmem:[#allocation13 + $0x340] sm:$0xff]
    %v3434 = vld [vmem:[#allocation13 + $0x348] sm:$0xff]
    %v3435 = vld [vmem:[#allocation13 + $0x350] sm:$0xff]
    %v3436 = vld [vmem:[#allocation13 + $0x358] sm:$0xff]
    %v3437 = vld [vmem:[#allocation13 + $0x360] sm:$0xff]
    %v3438 = vld [vmem:[#allocation13 + $0x368] sm:$0xff]
    %v3439 = vld [vmem:[#allocation13 + $0x370] sm:$0xff]
    %v3440 = vld [vmem:[#allocation13 + $0x378] sm:$0xff]
    %v3441 = vld [vmem:[#allocation13 + $0x380] sm:$0xff]
    %v3442 = vld [vmem:[#allocation13 + $0x388] sm:$0xff]
    %v3443 = vld [vmem:[#allocation13 + $0x390] sm:$0xff]
    %v3444 = vld [vmem:[#allocation13 + $0x398] sm:$0xff]
    %v3445 = vld [vmem:[#allocation13 + $0x3a0] sm:$0xff]
    %v3446 = vld [vmem:[#allocation13 + $0x3a8] sm:$0xff]
    %v3447 = vld [vmem:[#allocation13 + $0x3b0] sm:$0xff]
    %v3448 = vld [vmem:[#allocation13 + $0x3b8] sm:$0xff]
    %v3449 = vld [vmem:[#allocation13 + $0x3c0] sm:$0xff]
    %v3450 = vld [vmem:[#allocation13 + $0x3c8] sm:$0xff]
    %v3451 = vld [vmem:[#allocation13 + $0x3d0] sm:$0xff]
    %v3452 = vld [vmem:[#allocation13 + $0x3d8] sm:$0xff]
    %v3453 = vld [vmem:[#allocation13 + $0x3e0] sm:$0xff]
    %v3454 = vld [vmem:[#allocation13 + $0x3e8] sm:$0xff]
    %v3455 = vld [vmem:[#allocation13 + $0x3f0] sm:$0xff]
    %v3456 = vld [vmem:[#allocation13 + $0x3f8] sm:$0xff]
    %v3457 = vld [vmem:[#allocation13 + $0x400] sm:$0xff]
    %v3458 = vld [vmem:[#allocation13 + $0x408] sm:$0xff]
    %v3459 = vld [vmem:[#allocation13 + $0x410] sm:$0xff]
    %v3460 = vld [vmem:[#allocation13 + $0x418] sm:$0xff]
    %v3461 = vld [vmem:[#allocation13 + $0x420] sm:$0xff]
    %v3462 = vld [vmem:[#allocation13 + $0x428] sm:$0xff]
    %v3463 = vld [vmem:[#allocation13 + $0x430] sm:$0xff]
    %v3464 = vld [vmem:[#allocation13 + $0x438] sm:$0xff]
    %v3465 = vld [vmem:[#allocation13 + $0x440] sm:$0xff]
    %v3466 = vld [vmem:[#allocation13 + $0x448] sm:$0xff]
    %v3467 = vld [vmem:[#allocation13 + $0x450] sm:$0xff]
    %v3468 = vld [vmem:[#allocation13 + $0x458] sm:$0xff]
    %v3469 = vld [vmem:[#allocation13 + $0x460] sm:$0xff]
    %v3470 = vld [vmem:[#allocation13 + $0x468] sm:$0xff]
    %v3471 = vld [vmem:[#allocation13 + $0x470] sm:$0xff]
    %v3472 = vld [vmem:[#allocation13 + $0x478] sm:$0xff]
    %v3473 = vld [vmem:[#allocation13 + $0x480] sm:$0xff]
    %v3474 = vld [vmem:[#allocation13 + $0x488] sm:$0xff]
    %v3475 = vld [vmem:[#allocation13 + $0x490] sm:$0xff]
    %v3476 = vld [vmem:[#allocation13 + $0x498] sm:$0xff]
    %v3477 = vld [vmem:[#allocation13 + $0x4a0] sm:$0xff]
    %v3478 = vld [vmem:[#allocation13 + $0x4a8] sm:$0xff]
    %v3479 = vld [vmem:[#allocation13 + $0x4b0] sm:$0xff]
    %v3480 = vld [vmem:[#allocation13 + $0x4b8] sm:$0xff]
    %v3481 = vld [vmem:[#allocation13 + $0x4c0] sm:$0xff]
    %v3482 = vld [vmem:[#allocation13 + $0x4c8] sm:$0xff]
    %v3483 = vld [vmem:[#allocation13 + $0x4d0] sm:$0xff]
    %v3484 = vld [vmem:[#allocation13 + $0x4d8] sm:$0xff]
    %v3485 = vld [vmem:[#allocation13 + $0x4e0] sm:$0xff]
    %v3486 = vld [vmem:[#allocation13 + $0x4e8] sm:$0xff]
    %v3487 = vld [vmem:[#allocation13 + $0x4f0] sm:$0xff]
    %v3488 = vld [vmem:[#allocation13 + $0x4f8] sm:$0xff]
    %v3489 = vld [vmem:[#allocation13 + $0x500] sm:$0xff]
    %v3490 = vld [vmem:[#allocation13 + $0x508] sm:$0xff]
    %v3491 = vld [vmem:[#allocation13 + $0x510] sm:$0xff]
    %v3492 = vld [vmem:[#allocation13 + $0x518] sm:$0xff]
    %v3493 = vld [vmem:[#allocation13 + $0x520] sm:$0xff]
    %v3494 = vld [vmem:[#allocation13 + $0x528] sm:$0xff]
    %v3495 = vld [vmem:[#allocation13 + $0x530] sm:$0xff]
    %v3496 = vld [vmem:[#allocation13 + $0x538] sm:$0xff]
    %v3497 = vld [vmem:[#allocation13 + $0x540] sm:$0xff]
    %v3498 = vld [vmem:[#allocation13 + $0x548] sm:$0xff]
    %v3499 = vld [vmem:[#allocation13 + $0x550] sm:$0xff]
    %v3500 = vld [vmem:[#allocation13 + $0x558] sm:$0xff]
    %v3501 = vld [vmem:[#allocation13 + $0x560] sm:$0xff]
    %v3502 = vld [vmem:[#allocation13 + $0x568] sm:$0xff]
    %v3503 = vld [vmem:[#allocation13 + $0x570] sm:$0xff]
    %v3504 = vld [vmem:[#allocation13 + $0x578] sm:$0xff]
    %v3505 = vld [vmem:[#allocation13 + $0x580] sm:$0xff]
    %v3506 = vld [vmem:[#allocation13 + $0x588] sm:$0xff]
    %v3507 = vld [vmem:[#allocation13 + $0x590] sm:$0xff]
    %v3508 = vld [vmem:[#allocation13 + $0x598] sm:$0xff]
    %v3509 = vld [vmem:[#allocation13 + $0x5a0] sm:$0xff]
    %v3510 = vld [vmem:[#allocation13 + $0x5a8] sm:$0xff]
    %v3511 = vld [vmem:[#allocation13 + $0x5b0] sm:$0xff]
    %v3512 = vld [vmem:[#allocation13 + $0x5b8] sm:$0xff]
    %v3513 = vld [vmem:[#allocation13 + $0x5c0] sm:$0xff]
    %v3514 = vld [vmem:[#allocation13 + $0x5c8] sm:$0xff]
    %v3515 = vld [vmem:[#allocation13 + $0x5d0] sm:$0xff]
    %v3516 = vld [vmem:[#allocation13 + $0x5d8] sm:$0xff]
    %v3517 = vld [vmem:[#allocation13 + $0x5e0] sm:$0xff]
    %v3518 = vld [vmem:[#allocation13 + $0x5e8] sm:$0xff]
    %v3519 = vld [vmem:[#allocation13 + $0x5f0] sm:$0xff]
    %v3520 = vld [vmem:[#allocation13 + $0x5f8] sm:$0xff]
    %v3521 = vld [vmem:[#allocation13 + $0x600] sm:$0xff]
    %v3522 = vld [vmem:[#allocation13 + $0x608] sm:$0xff]
    %v3523 = vld [vmem:[#allocation13 + $0x610] sm:$0xff]
    %v3524 = vld [vmem:[#allocation13 + $0x618] sm:$0xff]
    %v3525 = vld [vmem:[#allocation13 + $0x620] sm:$0xff]
    %v3526 = vld [vmem:[#allocation13 + $0x628] sm:$0xff]
    %v3527 = vld [vmem:[#allocation13 + $0x630] sm:$0xff]
    %v3528 = vld [vmem:[#allocation13 + $0x638] sm:$0xff]
    %v3529 = vld [vmem:[#allocation13 + $0x640] sm:$0xff]
    %v3530 = vld [vmem:[#allocation13 + $0x648] sm:$0xff]
    %v3531 = vld [vmem:[#allocation13 + $0x650] sm:$0xff]
    %v3532 = vld [vmem:[#allocation13 + $0x658] sm:$0xff]
    %v3533 = vld [vmem:[#allocation13 + $0x660] sm:$0xff]
    %v3534 = vld [vmem:[#allocation13 + $0x668] sm:$0xff]
    %v3535 = vld [vmem:[#allocation13 + $0x670] sm:$0xff]
    %v3536 = vld [vmem:[#allocation13 + $0x678] sm:$0xff]
    %v3537 = vld [vmem:[#allocation13 + $0x680] sm:$0xff]
    %v3538 = vld [vmem:[#allocation13 + $0x688] sm:$0xff]
    %v3539 = vld [vmem:[#allocation13 + $0x690] sm:$0xff]
    %v3540 = vld [vmem:[#allocation13 + $0x698] sm:$0xff]
    %v3541 = vld [vmem:[#allocation13 + $0x6a0] sm:$0xff]
    %v3542 = vld [vmem:[#allocation13 + $0x6a8] sm:$0xff]
    %v3543 = vld [vmem:[#allocation13 + $0x6b0] sm:$0xff]
    %v3544 = vld [vmem:[#allocation13 + $0x6b8] sm:$0xff]
    %v3545 = vld [vmem:[#allocation13 + $0x6c0] sm:$0xff]
    %v3546 = vld [vmem:[#allocation13 + $0x6c8] sm:$0xff]
    %v3547 = vld [vmem:[#allocation13 + $0x6d0] sm:$0xff]
    %v3548 = vld [vmem:[#allocation13 + $0x6d8] sm:$0xff]
    %v3549 = vld [vmem:[#allocation13 + $0x6e0] sm:$0xff]
    %v3550 = vld [vmem:[#allocation13 + $0x6e8] sm:$0xff]
    %v3551 = vld [vmem:[#allocation13 + $0x6f0] sm:$0xff]
    %v3552 = vld [vmem:[#allocation13 + $0x6f8] sm:$0xff]
    %v3553 = vld [vmem:[#allocation13 + $0x700] sm:$0xff]
    %v3554 = vld [vmem:[#allocation13 + $0x708] sm:$0xff]
    %v3555 = vld [vmem:[#allocation13 + $0x710] sm:$0xff]
    %v3556 = vld [vmem:[#allocation13 + $0x718] sm:$0xff]
    %v3557 = vld [vmem:[#allocation13 + $0x720] sm:$0xff]
    %v3558 = vld [vmem:[#allocation13 + $0x728] sm:$0xff]
    %v3559 = vld [vmem:[#allocation13 + $0x730] sm:$0xff]
    %v3560 = vld [vmem:[#allocation13 + $0x738] sm:$0xff]
    %v3561 = vld [vmem:[#allocation13 + $0x740] sm:$0xff]
    %v3562 = vld [vmem:[#allocation13 + $0x748] sm:$0xff]
    %v3563 = vld [vmem:[#allocation13 + $0x750] sm:$0xff]
    %v3564 = vld [vmem:[#allocation13 + $0x758] sm:$0xff]
    %v3565 = vld [vmem:[#allocation13 + $0x760] sm:$0xff]
    %v3566 = vld [vmem:[#allocation13 + $0x768] sm:$0xff]
    %v3567 = vld [vmem:[#allocation13 + $0x770] sm:$0xff]
    %v3568 = vld [vmem:[#allocation13 + $0x778] sm:$0xff]
    %v3569 = vld [vmem:[#allocation13 + $0x780] sm:$0xff]
    %v3570 = vld [vmem:[#allocation13 + $0x788] sm:$0xff]
    %v3571 = vld [vmem:[#allocation13 + $0x790] sm:$0xff]
    %v3572 = vld [vmem:[#allocation13 + $0x798] sm:$0xff]
    %v3573 = vld [vmem:[#allocation13 + $0x7a0] sm:$0xff]
    %v3574 = vld [vmem:[#allocation13 + $0x7a8] sm:$0xff]
    %v3575 = vld [vmem:[#allocation13 + $0x7b0] sm:$0xff]
    %v3576 = vld [vmem:[#allocation13 + $0x7b8] sm:$0xff]
    %v3577 = vld [vmem:[#allocation13 + $0x7c0] sm:$0xff]
    %v3578 = vld [vmem:[#allocation13 + $0x7c8] sm:$0xff]
    %v3579 = vld [vmem:[#allocation13 + $0x7d0] sm:$0xff]
    %v3580 = vld [vmem:[#allocation13 + $0x7d8] sm:$0xff]
    %v3581 = vld [vmem:[#allocation13 + $0x7e0] sm:$0xff]
    %v3582 = vld [vmem:[#allocation13 + $0x7e8] sm:$0xff]
    %v3583 = vld [vmem:[#allocation13 + $0x7f0] sm:$0xff]
    %v3584 = vld [vmem:[#allocation13 + $0x7f8] sm:$0xff]
    %v3585 = vld [vmem:[#allocation13 + $0x800] sm:$0xff]
    %v3586 = vld [vmem:[#allocation13 + $0x808] sm:$0xff]
    %v3587 = vld [vmem:[#allocation13 + $0x810] sm:$0xff]
    %v3588 = vld [vmem:[#allocation13 + $0x818] sm:$0xff]
    %v3589 = vld [vmem:[#allocation13 + $0x820] sm:$0xff]
    %v3590 = vld [vmem:[#allocation13 + $0x828] sm:$0xff]
    %v3591 = vld [vmem:[#allocation13 + $0x830] sm:$0xff]
    %v3592 = vld [vmem:[#allocation13 + $0x838] sm:$0xff]
    %v3593 = vld [vmem:[#allocation13 + $0x840] sm:$0xff]
    %v3594 = vld [vmem:[#allocation13 + $0x848] sm:$0xff]
    %v3595 = vld [vmem:[#allocation13 + $0x850] sm:$0xff]
    %v3596 = vld [vmem:[#allocation13 + $0x858] sm:$0xff]
    %v3597 = vld [vmem:[#allocation13 + $0x860] sm:$0xff]
    %v3598 = vld [vmem:[#allocation13 + $0x868] sm:$0xff]
    %v3599 = vld [vmem:[#allocation13 + $0x870] sm:$0xff]
    %v3600 = vld [vmem:[#allocation13 + $0x878] sm:$0xff]
    %v3601 = vld [vmem:[#allocation13 + $0x880] sm:$0xff]
    %v3602 = vld [vmem:[#allocation13 + $0x888] sm:$0xff]
    %v3603 = vld [vmem:[#allocation13 + $0x890] sm:$0xff]
    %v3604 = vld [vmem:[#allocation13 + $0x898] sm:$0xff]
    %v3605 = vld [vmem:[#allocation13 + $0x8a0] sm:$0xff]
    %v3606 = vld [vmem:[#allocation13 + $0x8a8] sm:$0xff]
    %v3607 = vld [vmem:[#allocation13 + $0x8b0] sm:$0xff]
    %v3608 = vld [vmem:[#allocation13 + $0x8b8] sm:$0xff]
    %v3609 = vld [vmem:[#allocation13 + $0x8c0] sm:$0xff]
    %v3610 = vld [vmem:[#allocation13 + $0x8c8] sm:$0xff]
    %v3611 = vld [vmem:[#allocation13 + $0x8d0] sm:$0xff]
    %v3612 = vld [vmem:[#allocation13 + $0x8d8] sm:$0xff]
    %v3613 = vld [vmem:[#allocation13 + $0x8e0] sm:$0xff]
    %v3614 = vld [vmem:[#allocation13 + $0x8e8] sm:$0xff]
    %v3615 = vld [vmem:[#allocation13 + $0x8f0] sm:$0xff]
    %v3616 = vld [vmem:[#allocation13 + $0x8f8] sm:$0xff]
    %v3905 = vunpack.c.l.b16 %v3329
    %v3906 = vunpack.c.h.b16 %v3329
    %v3907 = vunpack.c.l.b16 %v3330
    %v3908 = vunpack.c.h.b16 %v3330
    %v3909 = vunpack.c.l.b16 %v3331
    %v3910 = vunpack.c.h.b16 %v3331
    %v3911 = vunpack.c.l.b16 %v3332
    %v3912 = vunpack.c.h.b16 %v3332
    %v3913 = vunpack.c.l.b16 %v3333
    %v3914 = vunpack.c.h.b16 %v3333
    %v3915 = vunpack.c.l.b16 %v3334
    %v3916 = vunpack.c.h.b16 %v3334
    %v3917 = vunpack.c.l.b16 %v3335
    %v3918 = vunpack.c.h.b16 %v3335
    %v3919 = vunpack.c.l.b16 %v3336
    %v3920 = vunpack.c.h.b16 %v3336
    %v3921 = vunpack.c.l.b16 %v3337
    %v3922 = vunpack.c.h.b16 %v3337
    %v3923 = vunpack.c.l.b16 %v3338
    %v3924 = vunpack.c.h.b16 %v3338
    %v3925 = vunpack.c.l.b16 %v3339
    %v3926 = vunpack.c.h.b16 %v3339
    %v3927 = vunpack.c.l.b16 %v3340
    %v3928 = vunpack.c.h.b16 %v3340
    %v3929 = vunpack.c.l.b16 %v3341
    %v3930 = vunpack.c.h.b16 %v3341
    %v3931 = vunpack.c.l.b16 %v3342
    %v3932 = vunpack.c.h.b16 %v3342
    %v3933 = vunpack.c.l.b16 %v3343
    %v3934 = vunpack.c.h.b16 %v3343
    %v3935 = vunpack.c.l.b16 %v3344
    %v3936 = vunpack.c.h.b16 %v3344
    %v3937 = vunpack.c.l.b16 %v3345
    %v3938 = vunpack.c.h.b16 %v3345
    %v3939 = vunpack.c.l.b16 %v3346
    %v3940 = vunpack.c.h.b16 %v3346
    %v3941 = vunpack.c.l.b16 %v3347
    %v3942 = vunpack.c.h.b16 %v3347
    %v3943 = vunpack.c.l.b16 %v3348
    %v3944 = vunpack.c.h.b16 %v3348
    %v3945 = vunpack.c.l.b16 %v3349
    %v3946 = vunpack.c.h.b16 %v3349
    %v3947 = vunpack.c.l.b16 %v3350
    %v3948 = vunpack.c.h.b16 %v3350
    %v3949 = vunpack.c.l.b16 %v3351
    %v3950 = vunpack.c.h.b16 %v3351
    %v3951 = vunpack.c.l.b16 %v3352
    %v3952 = vunpack.c.h.b16 %v3352
    %v3953 = vunpack.c.l.b16 %v3353
    %v3954 = vunpack.c.h.b16 %v3353
    %v3955 = vunpack.c.l.b16 %v3354
    %v3956 = vunpack.c.h.b16 %v3354
    %v3957 = vunpack.c.l.b16 %v3355
    %v3958 = vunpack.c.h.b16 %v3355
    %v3959 = vunpack.c.l.b16 %v3356
    %v3960 = vunpack.c.h.b16 %v3356
    %v3961 = vunpack.c.l.b16 %v3357
    %v3962 = vunpack.c.h.b16 %v3357
    %v3963 = vunpack.c.l.b16 %v3358
    %v3964 = vunpack.c.h.b16 %v3358
    %v3965 = vunpack.c.l.b16 %v3359
    %v3966 = vunpack.c.h.b16 %v3359
    %v3967 = vunpack.c.l.b16 %v3360
    %v3968 = vunpack.c.h.b16 %v3360
    %v3969 = vunpack.c.l.b16 %v3361
    %v3970 = vunpack.c.h.b16 %v3361
    %v3971 = vunpack.c.l.b16 %v3362
    %v3972 = vunpack.c.h.b16 %v3362
    %v3973 = vunpack.c.l.b16 %v3363
    %v3974 = vunpack.c.h.b16 %v3363
    %v3975 = vunpack.c.l.b16 %v3364
    %v3976 = vunpack.c.h.b16 %v3364
    %v3977 = vunpack.c.l.b16 %v3365
    %v3978 = vunpack.c.h.b16 %v3365
    %v3979 = vunpack.c.l.b16 %v3366
    %v3980 = vunpack.c.h.b16 %v3366
    %v3981 = vunpack.c.l.b16 %v3367
    %v3982 = vunpack.c.h.b16 %v3367
    %v3983 = vunpack.c.l.b16 %v3368
    %v3984 = vunpack.c.h.b16 %v3368
    %v3985 = vunpack.c.l.b16 %v3369
    %v3986 = vunpack.c.h.b16 %v3369
    %v3987 = vunpack.c.l.b16 %v3370
    %v3988 = vunpack.c.h.b16 %v3370
    %v3989 = vunpack.c.l.b16 %v3371
    %v3990 = vunpack.c.h.b16 %v3371
    %v3991 = vunpack.c.l.b16 %v3372
    %v3992 = vunpack.c.h.b16 %v3372
    %v3993 = vunpack.c.l.b16 %v3373
    %v3994 = vunpack.c.h.b16 %v3373
    %v3995 = vunpack.c.l.b16 %v3374
    %v3996 = vunpack.c.h.b16 %v3374
    %v3997 = vunpack.c.l.b16 %v3375
    %v3998 = vunpack.c.h.b16 %v3375
    %v3999 = vunpack.c.l.b16 %v3376
    %v4000 = vunpack.c.h.b16 %v3376
    %v4001 = vunpack.c.l.b16 %v3377
    %v4002 = vunpack.c.h.b16 %v3377
    %v4003 = vunpack.c.l.b16 %v3378
    %v4004 = vunpack.c.h.b16 %v3378
    %v4005 = vunpack.c.l.b16 %v3379
    %v4006 = vunpack.c.h.b16 %v3379
    %v4007 = vunpack.c.l.b16 %v3380
    %v4008 = vunpack.c.h.b16 %v3380
    %v4009 = vunpack.c.l.b16 %v3381
    %v4010 = vunpack.c.h.b16 %v3381
    %v4011 = vunpack.c.l.b16 %v3382
    %v4012 = vunpack.c.h.b16 %v3382
    %v4013 = vunpack.c.l.b16 %v3383
    %v4014 = vunpack.c.h.b16 %v3383
    %v4015 = vunpack.c.l.b16 %v3384
    %v4016 = vunpack.c.h.b16 %v3384
    %v4017 = vunpack.c.l.b16 %v3385
    %v4018 = vunpack.c.h.b16 %v3385
    %v4019 = vunpack.c.l.b16 %v3386
    %v4020 = vunpack.c.h.b16 %v3386
    %v4021 = vunpack.c.l.b16 %v3387
    %v4022 = vunpack.c.h.b16 %v3387
    %v4023 = vunpack.c.l.b16 %v3388
    %v4024 = vunpack.c.h.b16 %v3388
    %v4025 = vunpack.c.l.b16 %v3389
    %v4026 = vunpack.c.h.b16 %v3389
    %v4027 = vunpack.c.l.b16 %v3390
    %v4028 = vunpack.c.h.b16 %v3390
    %v4029 = vunpack.c.l.b16 %v3391
    %v4030 = vunpack.c.h.b16 %v3391
    %v4031 = vunpack.c.l.b16 %v3392
    %v4032 = vunpack.c.h.b16 %v3392
    %v4033 = vunpack.c.l.b16 %v3393
    %v4034 = vunpack.c.h.b16 %v3393
    %v4035 = vunpack.c.l.b16 %v3394
    %v4036 = vunpack.c.h.b16 %v3394
    %v4037 = vunpack.c.l.b16 %v3395
    %v4038 = vunpack.c.h.b16 %v3395
    %v4039 = vunpack.c.l.b16 %v3396
    %v4040 = vunpack.c.h.b16 %v3396
    %v4041 = vunpack.c.l.b16 %v3397
    %v4042 = vunpack.c.h.b16 %v3397
    %v4043 = vunpack.c.l.b16 %v3398
    %v4044 = vunpack.c.h.b16 %v3398
    %v4045 = vunpack.c.l.b16 %v3399
    %v4046 = vunpack.c.h.b16 %v3399
    %v4047 = vunpack.c.l.b16 %v3400
    %v4048 = vunpack.c.h.b16 %v3400
    %v4049 = vunpack.c.l.b16 %v3401
    %v4050 = vunpack.c.h.b16 %v3401
    %v4051 = vunpack.c.l.b16 %v3402
    %v4052 = vunpack.c.h.b16 %v3402
    %v4053 = vunpack.c.l.b16 %v3403
    %v4054 = vunpack.c.h.b16 %v3403
    %v4055 = vunpack.c.l.b16 %v3404
    %v4056 = vunpack.c.h.b16 %v3404
    %v4057 = vunpack.c.l.b16 %v3405
    %v4058 = vunpack.c.h.b16 %v3405
    %v4059 = vunpack.c.l.b16 %v3406
    %v4060 = vunpack.c.h.b16 %v3406
    %v4061 = vunpack.c.l.b16 %v3407
    %v4062 = vunpack.c.h.b16 %v3407
    %v4063 = vunpack.c.l.b16 %v3408
    %v4064 = vunpack.c.h.b16 %v3408
    %v4065 = vunpack.c.l.b16 %v3409
    %v4066 = vunpack.c.h.b16 %v3409
    %v4067 = vunpack.c.l.b16 %v3410
    %v4068 = vunpack.c.h.b16 %v3410
    %v4069 = vunpack.c.l.b16 %v3411
    %v4070 = vunpack.c.h.b16 %v3411
    %v4071 = vunpack.c.l.b16 %v3412
    %v4072 = vunpack.c.h.b16 %v3412
    %v4073 = vunpack.c.l.b16 %v3413
    %v4074 = vunpack.c.h.b16 %v3413
    %v4075 = vunpack.c.l.b16 %v3414
    %v4076 = vunpack.c.h.b16 %v3414
    %v4077 = vunpack.c.l.b16 %v3415
    %v4078 = vunpack.c.h.b16 %v3415
    %v4079 = vunpack.c.l.b16 %v3416
    %v4080 = vunpack.c.h.b16 %v3416
    %v4081 = vunpack.c.l.b16 %v3417
    %v4082 = vunpack.c.h.b16 %v3417
    %v4083 = vunpack.c.l.b16 %v3418
    %v4084 = vunpack.c.h.b16 %v3418
    %v4085 = vunpack.c.l.b16 %v3419
    %v4086 = vunpack.c.h.b16 %v3419
    %v4087 = vunpack.c.l.b16 %v3420
    %v4088 = vunpack.c.h.b16 %v3420
    %v4089 = vunpack.c.l.b16 %v3421
    %v4090 = vunpack.c.h.b16 %v3421
    %v4091 = vunpack.c.l.b16 %v3422
    %v4092 = vunpack.c.h.b16 %v3422
    %v4093 = vunpack.c.l.b16 %v3423
    %v4094 = vunpack.c.h.b16 %v3423
    %v4095 = vunpack.c.l.b16 %v3424
    %v4096 = vunpack.c.h.b16 %v3424
    %v4097 = vunpack.c.l.b16 %v3425
    %v4098 = vunpack.c.h.b16 %v3425
    %v4099 = vunpack.c.l.b16 %v3426
    %v4100 = vunpack.c.h.b16 %v3426
    %v4101 = vunpack.c.l.b16 %v3427
    %v4102 = vunpack.c.h.b16 %v3427
    %v4103 = vunpack.c.l.b16 %v3428
    %v4104 = vunpack.c.h.b16 %v3428
    %v4105 = vunpack.c.l.b16 %v3429
    %v4106 = vunpack.c.h.b16 %v3429
    %v4107 = vunpack.c.l.b16 %v3430
    %v4108 = vunpack.c.h.b16 %v3430
    %v4109 = vunpack.c.l.b16 %v3431
    %v4110 = vunpack.c.h.b16 %v3431
    %v4111 = vunpack.c.l.b16 %v3432
    %v4112 = vunpack.c.h.b16 %v3432
    %v4113 = vunpack.c.l.b16 %v3433
    %v4114 = vunpack.c.h.b16 %v3433
    %v4115 = vunpack.c.l.b16 %v3434
    %v4116 = vunpack.c.h.b16 %v3434
    %v4117 = vunpack.c.l.b16 %v3435
    %v4118 = vunpack.c.h.b16 %v3435
    %v4119 = vunpack.c.l.b16 %v3436
    %v4120 = vunpack.c.h.b16 %v3436
    %v4121 = vunpack.c.l.b16 %v3437
    %v4122 = vunpack.c.h.b16 %v3437
    %v4123 = vunpack.c.l.b16 %v3438
    %v4124 = vunpack.c.h.b16 %v3438
    %v4125 = vunpack.c.l.b16 %v3439
    %v4126 = vunpack.c.h.b16 %v3439
    %v4127 = vunpack.c.l.b16 %v3440
    %v4128 = vunpack.c.h.b16 %v3440
    %v4129 = vunpack.c.l.b16 %v3441
    %v4130 = vunpack.c.h.b16 %v3441
    %v4131 = vunpack.c.l.b16 %v3442
    %v4132 = vunpack.c.h.b16 %v3442
    %v4133 = vunpack.c.l.b16 %v3443
    %v4134 = vunpack.c.h.b16 %v3443
    %v4135 = vunpack.c.l.b16 %v3444
    %v4136 = vunpack.c.h.b16 %v3444
    %v4137 = vunpack.c.l.b16 %v3445
    %v4138 = vunpack.c.h.b16 %v3445
    %v4139 = vunpack.c.l.b16 %v3446
    %v4140 = vunpack.c.h.b16 %v3446
    %v4141 = vunpack.c.l.b16 %v3447
    %v4142 = vunpack.c.h.b16 %v3447
    %v4143 = vunpack.c.l.b16 %v3448
    %v4144 = vunpack.c.h.b16 %v3448
    %v4145 = vunpack.c.l.b16 %v3449
    %v4146 = vunpack.c.h.b16 %v3449
    %v4147 = vunpack.c.l.b16 %v3450
    %v4148 = vunpack.c.h.b16 %v3450
    %v4149 = vunpack.c.l.b16 %v3451
    %v4150 = vunpack.c.h.b16 %v3451
    %v4151 = vunpack.c.l.b16 %v3452
    %v4152 = vunpack.c.h.b16 %v3452
    %v4153 = vunpack.c.l.b16 %v3453
    %v4154 = vunpack.c.h.b16 %v3453
    %v4155 = vunpack.c.l.b16 %v3454
    %v4156 = vunpack.c.h.b16 %v3454
    %v4157 = vunpack.c.l.b16 %v3455
    %v4158 = vunpack.c.h.b16 %v3455
    %v4159 = vunpack.c.l.b16 %v3456
    %v4160 = vunpack.c.h.b16 %v3456
    %v4161 = vunpack.c.l.b16 %v3457
    %v4162 = vunpack.c.h.b16 %v3457
    %v4163 = vunpack.c.l.b16 %v3458
    %v4164 = vunpack.c.h.b16 %v3458
    %v4165 = vunpack.c.l.b16 %v3459
    %v4166 = vunpack.c.h.b16 %v3459
    %v4167 = vunpack.c.l.b16 %v3460
    %v4168 = vunpack.c.h.b16 %v3460
    %v4169 = vunpack.c.l.b16 %v3461
    %v4170 = vunpack.c.h.b16 %v3461
    %v4171 = vunpack.c.l.b16 %v3462
    %v4172 = vunpack.c.h.b16 %v3462
    %v4173 = vunpack.c.l.b16 %v3463
    %v4174 = vunpack.c.h.b16 %v3463
    %v4175 = vunpack.c.l.b16 %v3464
    %v4176 = vunpack.c.h.b16 %v3464
    %v4177 = vunpack.c.l.b16 %v3465
    %v4178 = vunpack.c.h.b16 %v3465
    %v4179 = vunpack.c.l.b16 %v3466
    %v4180 = vunpack.c.h.b16 %v3466
    %v4181 = vunpack.c.l.b16 %v3467
    %v4182 = vunpack.c.h.b16 %v3467
    %v4183 = vunpack.c.l.b16 %v3468
    %v4184 = vunpack.c.h.b16 %v3468
    %v4185 = vunpack.c.l.b16 %v3469
    %v4186 = vunpack.c.h.b16 %v3469
    %v4187 = vunpack.c.l.b16 %v3470
    %v4188 = vunpack.c.h.b16 %v3470
    %v4189 = vunpack.c.l.b16 %v3471
    %v4190 = vunpack.c.h.b16 %v3471
    %v4191 = vunpack.c.l.b16 %v3472
    %v4192 = vunpack.c.h.b16 %v3472
    %v4193 = vunpack.c.l.b16 %v3473
    %v4194 = vunpack.c.h.b16 %v3473
    %v4195 = vunpack.c.l.b16 %v3474
    %v4196 = vunpack.c.h.b16 %v3474
    %v4197 = vunpack.c.l.b16 %v3475
    %v4198 = vunpack.c.h.b16 %v3475
    %v4199 = vunpack.c.l.b16 %v3476
    %v4200 = vunpack.c.h.b16 %v3476
    %v4201 = vunpack.c.l.b16 %v3477
    %v4202 = vunpack.c.h.b16 %v3477
    %v4203 = vunpack.c.l.b16 %v3478
    %v4204 = vunpack.c.h.b16 %v3478
    %v4205 = vunpack.c.l.b16 %v3479
    %v4206 = vunpack.c.h.b16 %v3479
    %v4207 = vunpack.c.l.b16 %v3480
    %v4208 = vunpack.c.h.b16 %v3480
    %v4209 = vunpack.c.l.b16 %v3481
    %v4210 = vunpack.c.h.b16 %v3481
    %v4211 = vunpack.c.l.b16 %v3482
    %v4212 = vunpack.c.h.b16 %v3482
    %v4213 = vunpack.c.l.b16 %v3483
    %v4214 = vunpack.c.h.b16 %v3483
    %v4215 = vunpack.c.l.b16 %v3484
    %v4216 = vunpack.c.h.b16 %v3484
    %v4217 = vunpack.c.l.b16 %v3485
    %v4218 = vunpack.c.h.b16 %v3485
    %v4219 = vunpack.c.l.b16 %v3486
    %v4220 = vunpack.c.h.b16 %v3486
    %v4221 = vunpack.c.l.b16 %v3487
    %v4222 = vunpack.c.h.b16 %v3487
    %v4223 = vunpack.c.l.b16 %v3488
    %v4224 = vunpack.c.h.b16 %v3488
    %v4225 = vunpack.c.l.b16 %v3489
    %v4226 = vunpack.c.h.b16 %v3489
    %v4227 = vunpack.c.l.b16 %v3490
    %v4228 = vunpack.c.h.b16 %v3490
    %v4229 = vunpack.c.l.b16 %v3491
    %v4230 = vunpack.c.h.b16 %v3491
    %v4231 = vunpack.c.l.b16 %v3492
    %v4232 = vunpack.c.h.b16 %v3492
    %v4233 = vunpack.c.l.b16 %v3493
    %v4234 = vunpack.c.h.b16 %v3493
    %v4235 = vunpack.c.l.b16 %v3494
    %v4236 = vunpack.c.h.b16 %v3494
    %v4237 = vunpack.c.l.b16 %v3495
    %v4238 = vunpack.c.h.b16 %v3495
    %v4239 = vunpack.c.l.b16 %v3496
    %v4240 = vunpack.c.h.b16 %v3496
    %v4241 = vunpack.c.l.b16 %v3497
    %v4242 = vunpack.c.h.b16 %v3497
    %v4243 = vunpack.c.l.b16 %v3498
    %v4244 = vunpack.c.h.b16 %v3498
    %v4245 = vunpack.c.l.b16 %v3499
    %v4246 = vunpack.c.h.b16 %v3499
    %v4247 = vunpack.c.l.b16 %v3500
    %v4248 = vunpack.c.h.b16 %v3500
    %v4249 = vunpack.c.l.b16 %v3501
    %v4250 = vunpack.c.h.b16 %v3501
    %v4251 = vunpack.c.l.b16 %v3502
    %v4252 = vunpack.c.h.b16 %v3502
    %v4253 = vunpack.c.l.b16 %v3503
    %v4254 = vunpack.c.h.b16 %v3503
    %v4255 = vunpack.c.l.b16 %v3504
    %v4256 = vunpack.c.h.b16 %v3504
    %v4257 = vunpack.c.l.b16 %v3505
    %v4258 = vunpack.c.h.b16 %v3505
    %v4259 = vunpack.c.l.b16 %v3506
    %v4260 = vunpack.c.h.b16 %v3506
    %v4261 = vunpack.c.l.b16 %v3507
    %v4262 = vunpack.c.h.b16 %v3507
    %v4263 = vunpack.c.l.b16 %v3508
    %v4264 = vunpack.c.h.b16 %v3508
    %v4265 = vunpack.c.l.b16 %v3509
    %v4266 = vunpack.c.h.b16 %v3509
    %v4267 = vunpack.c.l.b16 %v3510
    %v4268 = vunpack.c.h.b16 %v3510
    %v4269 = vunpack.c.l.b16 %v3511
    %v4270 = vunpack.c.h.b16 %v3511
    %v4271 = vunpack.c.l.b16 %v3512
    %v4272 = vunpack.c.h.b16 %v3512
    %v4273 = vunpack.c.l.b16 %v3513
    %v4274 = vunpack.c.h.b16 %v3513
    %v4275 = vunpack.c.l.b16 %v3514
    %v4276 = vunpack.c.h.b16 %v3514
    %v4277 = vunpack.c.l.b16 %v3515
    %v4278 = vunpack.c.h.b16 %v3515
    %v4279 = vunpack.c.l.b16 %v3516
    %v4280 = vunpack.c.h.b16 %v3516
    %v4281 = vunpack.c.l.b16 %v3517
    %v4282 = vunpack.c.h.b16 %v3517
    %v4283 = vunpack.c.l.b16 %v3518
    %v4284 = vunpack.c.h.b16 %v3518
    %v4285 = vunpack.c.l.b16 %v3519
    %v4286 = vunpack.c.h.b16 %v3519
    %v4287 = vunpack.c.l.b16 %v3520
    %v4288 = vunpack.c.h.b16 %v3520
    %v4289 = vunpack.c.l.b16 %v3521
    %v4290 = vunpack.c.h.b16 %v3521
    %v4291 = vunpack.c.l.b16 %v3522
    %v4292 = vunpack.c.h.b16 %v3522
    %v4293 = vunpack.c.l.b16 %v3523
    %v4294 = vunpack.c.h.b16 %v3523
    %v4295 = vunpack.c.l.b16 %v3524
    %v4296 = vunpack.c.h.b16 %v3524
    %v4297 = vunpack.c.l.b16 %v3525
    %v4298 = vunpack.c.h.b16 %v3525
    %v4299 = vunpack.c.l.b16 %v3526
    %v4300 = vunpack.c.h.b16 %v3526
    %v4301 = vunpack.c.l.b16 %v3527
    %v4302 = vunpack.c.h.b16 %v3527
    %v4303 = vunpack.c.l.b16 %v3528
    %v4304 = vunpack.c.h.b16 %v3528
    %v4305 = vunpack.c.l.b16 %v3529
    %v4306 = vunpack.c.h.b16 %v3529
    %v4307 = vunpack.c.l.b16 %v3530
    %v4308 = vunpack.c.h.b16 %v3530
    %v4309 = vunpack.c.l.b16 %v3531
    %v4310 = vunpack.c.h.b16 %v3531
    %v4311 = vunpack.c.l.b16 %v3532
    %v4312 = vunpack.c.h.b16 %v3532
    %v4313 = vunpack.c.l.b16 %v3533
    %v4314 = vunpack.c.h.b16 %v3533
    %v4315 = vunpack.c.l.b16 %v3534
    %v4316 = vunpack.c.h.b16 %v3534
    %v4317 = vunpack.c.l.b16 %v3535
    %v4318 = vunpack.c.h.b16 %v3535
    %v4319 = vunpack.c.l.b16 %v3536
    %v4320 = vunpack.c.h.b16 %v3536
    %v4321 = vunpack.c.l.b16 %v3537
    %v4322 = vunpack.c.h.b16 %v3537
    %v4323 = vunpack.c.l.b16 %v3538
    %v4324 = vunpack.c.h.b16 %v3538
    %v4325 = vunpack.c.l.b16 %v3539
    %v4326 = vunpack.c.h.b16 %v3539
    %v4327 = vunpack.c.l.b16 %v3540
    %v4328 = vunpack.c.h.b16 %v3540
    %v4329 = vunpack.c.l.b16 %v3541
    %v4330 = vunpack.c.h.b16 %v3541
    %v4331 = vunpack.c.l.b16 %v3542
    %v4332 = vunpack.c.h.b16 %v3542
    %v4333 = vunpack.c.l.b16 %v3543
    %v4334 = vunpack.c.h.b16 %v3543
    %v4335 = vunpack.c.l.b16 %v3544
    %v4336 = vunpack.c.h.b16 %v3544
    %v4337 = vunpack.c.l.b16 %v3545
    %v4338 = vunpack.c.h.b16 %v3545
    %v4339 = vunpack.c.l.b16 %v3546
    %v4340 = vunpack.c.h.b16 %v3546
    %v4341 = vunpack.c.l.b16 %v3547
    %v4342 = vunpack.c.h.b16 %v3547
    %v4343 = vunpack.c.l.b16 %v3548
    %v4344 = vunpack.c.h.b16 %v3548
    %v4345 = vunpack.c.l.b16 %v3549
    %v4346 = vunpack.c.h.b16 %v3549
    %v4347 = vunpack.c.l.b16 %v3550
    %v4348 = vunpack.c.h.b16 %v3550
    %v4349 = vunpack.c.l.b16 %v3551
    %v4350 = vunpack.c.h.b16 %v3551
    %v4351 = vunpack.c.l.b16 %v3552
    %v4352 = vunpack.c.h.b16 %v3552
    %v4353 = vunpack.c.l.b16 %v3553
    %v4354 = vunpack.c.h.b16 %v3553
    %v4355 = vunpack.c.l.b16 %v3554
    %v4356 = vunpack.c.h.b16 %v3554
    %v4357 = vunpack.c.l.b16 %v3555
    %v4358 = vunpack.c.h.b16 %v3555
    %v4359 = vunpack.c.l.b16 %v3556
    %v4360 = vunpack.c.h.b16 %v3556
    %v4361 = vunpack.c.l.b16 %v3557
    %v4362 = vunpack.c.h.b16 %v3557
    %v4363 = vunpack.c.l.b16 %v3558
    %v4364 = vunpack.c.h.b16 %v3558
    %v4365 = vunpack.c.l.b16 %v3559
    %v4366 = vunpack.c.h.b16 %v3559
    %v4367 = vunpack.c.l.b16 %v3560
    %v4368 = vunpack.c.h.b16 %v3560
    %v4369 = vunpack.c.l.b16 %v3561
    %v4370 = vunpack.c.h.b16 %v3561
    %v4371 = vunpack.c.l.b16 %v3562
    %v4372 = vunpack.c.h.b16 %v3562
    %v4373 = vunpack.c.l.b16 %v3563
    %v4374 = vunpack.c.h.b16 %v3563
    %v4375 = vunpack.c.l.b16 %v3564
    %v4376 = vunpack.c.h.b16 %v3564
    %v4377 = vunpack.c.l.b16 %v3565
    %v4378 = vunpack.c.h.b16 %v3565
    %v4379 = vunpack.c.l.b16 %v3566
    %v4380 = vunpack.c.h.b16 %v3566
    %v4381 = vunpack.c.l.b16 %v3567
    %v4382 = vunpack.c.h.b16 %v3567
    %v4383 = vunpack.c.l.b16 %v3568
    %v4384 = vunpack.c.h.b16 %v3568
    %v4385 = vunpack.c.l.b16 %v3569
    %v4386 = vunpack.c.h.b16 %v3569
    %v4387 = vunpack.c.l.b16 %v3570
    %v4388 = vunpack.c.h.b16 %v3570
    %v4389 = vunpack.c.l.b16 %v3571
    %v4390 = vunpack.c.h.b16 %v3571
    %v4391 = vunpack.c.l.b16 %v3572
    %v4392 = vunpack.c.h.b16 %v3572
    %v4393 = vunpack.c.l.b16 %v3573
    %v4394 = vunpack.c.h.b16 %v3573
    %v4395 = vunpack.c.l.b16 %v3574
    %v4396 = vunpack.c.h.b16 %v3574
    %v4397 = vunpack.c.l.b16 %v3575
    %v4398 = vunpack.c.h.b16 %v3575
    %v4399 = vunpack.c.l.b16 %v3576
    %v4400 = vunpack.c.h.b16 %v3576
    %v4401 = vunpack.c.l.b16 %v3577
    %v4402 = vunpack.c.h.b16 %v3577
    %v4403 = vunpack.c.l.b16 %v3578
    %v4404 = vunpack.c.h.b16 %v3578
    %v4405 = vunpack.c.l.b16 %v3579
    %v4406 = vunpack.c.h.b16 %v3579
    %v4407 = vunpack.c.l.b16 %v3580
    %v4408 = vunpack.c.h.b16 %v3580
    %v4409 = vunpack.c.l.b16 %v3581
    %v4410 = vunpack.c.h.b16 %v3581
    %v4411 = vunpack.c.l.b16 %v3582
    %v4412 = vunpack.c.h.b16 %v3582
    %v4413 = vunpack.c.l.b16 %v3583
    %v4414 = vunpack.c.h.b16 %v3583
    %v4415 = vunpack.c.l.b16 %v3584
    %v4416 = vunpack.c.h.b16 %v3584
    %v4417 = vunpack.c.l.b16 %v3585
    %v4418 = vunpack.c.h.b16 %v3585
    %v4419 = vunpack.c.l.b16 %v3586
    %v4420 = vunpack.c.h.b16 %v3586
    %v4421 = vunpack.c.l.b16 %v3587
    %v4422 = vunpack.c.h.b16 %v3587
    %v4423 = vunpack.c.l.b16 %v3588
    %v4424 = vunpack.c.h.b16 %v3588
    %v4425 = vunpack.c.l.b16 %v3589
    %v4426 = vunpack.c.h.b16 %v3589
    %v4427 = vunpack.c.l.b16 %v3590
    %v4428 = vunpack.c.h.b16 %v3590
    %v4429 = vunpack.c.l.b16 %v3591
    %v4430 = vunpack.c.h.b16 %v3591
    %v4431 = vunpack.c.l.b16 %v3592
    %v4432 = vunpack.c.h.b16 %v3592
    %v4433 = vunpack.c.l.b16 %v3593
    %v4434 = vunpack.c.h.b16 %v3593
    %v4435 = vunpack.c.l.b16 %v3594
    %v4436 = vunpack.c.h.b16 %v3594
    %v4437 = vunpack.c.l.b16 %v3595
    %v4438 = vunpack.c.h.b16 %v3595
    %v4439 = vunpack.c.l.b16 %v3596
    %v4440 = vunpack.c.h.b16 %v3596
    %v4441 = vunpack.c.l.b16 %v3597
    %v4442 = vunpack.c.h.b16 %v3597
    %v4443 = vunpack.c.l.b16 %v3598
    %v4444 = vunpack.c.h.b16 %v3598
    %v4445 = vunpack.c.l.b16 %v3599
    %v4446 = vunpack.c.h.b16 %v3599
    %v4447 = vunpack.c.l.b16 %v3600
    %v4448 = vunpack.c.h.b16 %v3600
    %v4449 = vunpack.c.l.b16 %v3601
    %v4450 = vunpack.c.h.b16 %v3601
    %v4451 = vunpack.c.l.b16 %v3602
    %v4452 = vunpack.c.h.b16 %v3602
    %v4453 = vunpack.c.l.b16 %v3603
    %v4454 = vunpack.c.h.b16 %v3603
    %v4455 = vunpack.c.l.b16 %v3604
    %v4456 = vunpack.c.h.b16 %v3604
    %v4457 = vunpack.c.l.b16 %v3605
    %v4458 = vunpack.c.h.b16 %v3605
    %v4459 = vunpack.c.l.b16 %v3606
    %v4460 = vunpack.c.h.b16 %v3606
    %v4461 = vunpack.c.l.b16 %v3607
    %v4462 = vunpack.c.h.b16 %v3607
    %v4463 = vunpack.c.l.b16 %v3608
    %v4464 = vunpack.c.h.b16 %v3608
    %v4465 = vunpack.c.l.b16 %v3609
    %v4466 = vunpack.c.h.b16 %v3609
    %v4467 = vunpack.c.l.b16 %v3610
    %v4468 = vunpack.c.h.b16 %v3610
    %v4469 = vunpack.c.l.b16 %v3611
    %v4470 = vunpack.c.h.b16 %v3611
    %v4471 = vunpack.c.l.b16 %v3612
    %v4472 = vunpack.c.h.b16 %v3612
    %v4473 = vunpack.c.l.b16 %v3613
    %v4474 = vunpack.c.h.b16 %v3613
    %v4475 = vunpack.c.l.b16 %v3614
    %v4476 = vunpack.c.h.b16 %v3614
    %v4477 = vunpack.c.l.b16 %v3615
    %v4478 = vunpack.c.h.b16 %v3615
    %v4479 = vunpack.c.l.b16 %v3616
    %v4480 = vunpack.c.h.b16 %v3616
    %v4481 = vpack.c.b16 %v3911, %v3905
    %v4482 = vpack.c.b16 %v3912, %v3906
    %v4483 = vpack.c.b16 %v3913, %v3907
    %v4484 = vpack.c.b16 %v3914, %v3908
    %v4485 = vpack.c.b16 %v3915, %v3909
    %v4486 = vpack.c.b16 %v3916, %v3910
    %v4487 = vpack.c.b16 %v3923, %v3917
    %v4488 = vpack.c.b16 %v3924, %v3918
    %v4489 = vpack.c.b16 %v3925, %v3919
    %v4490 = vpack.c.b16 %v3926, %v3920
    %v4491 = vpack.c.b16 %v3927, %v3921
    %v4492 = vpack.c.b16 %v3928, %v3922
    %v4493 = vpack.c.b16 %v3935, %v3929
    %v4494 = vpack.c.b16 %v3936, %v3930
    %v4495 = vpack.c.b16 %v3937, %v3931
    %v4496 = vpack.c.b16 %v3938, %v3932
    %v4497 = vpack.c.b16 %v3939, %v3933
    %v4498 = vpack.c.b16 %v3940, %v3934
    %v4499 = vpack.c.b16 %v3947, %v3941
    %v4500 = vpack.c.b16 %v3948, %v3942
    %v4501 = vpack.c.b16 %v3949, %v3943
    %v4502 = vpack.c.b16 %v3950, %v3944
    %v4503 = vpack.c.b16 %v3951, %v3945
    %v4504 = vpack.c.b16 %v3952, %v3946
    %v4505 = vpack.c.b16 %v3959, %v3953
    %v4506 = vpack.c.b16 %v3960, %v3954
    %v4507 = vpack.c.b16 %v3961, %v3955
    %v4508 = vpack.c.b16 %v3962, %v3956
    %v4509 = vpack.c.b16 %v3963, %v3957
    %v4510 = vpack.c.b16 %v3964, %v3958
    %v4511 = vpack.c.b16 %v3971, %v3965
    %v4512 = vpack.c.b16 %v3972, %v3966
    %v4513 = vpack.c.b16 %v3973, %v3967
    %v4514 = vpack.c.b16 %v3974, %v3968
    %v4515 = vpack.c.b16 %v3975, %v3969
    %v4516 = vpack.c.b16 %v3976, %v3970
    %v4517 = vpack.c.b16 %v3983, %v3977
    %v4518 = vpack.c.b16 %v3984, %v3978
    %v4519 = vpack.c.b16 %v3985, %v3979
    %v4520 = vpack.c.b16 %v3986, %v3980
    %v4521 = vpack.c.b16 %v3987, %v3981
    %v4522 = vpack.c.b16 %v3988, %v3982
    %v4523 = vpack.c.b16 %v3995, %v3989
    %v4524 = vpack.c.b16 %v3996, %v3990
    %v4525 = vpack.c.b16 %v3997, %v3991
    %v4526 = vpack.c.b16 %v3998, %v3992
    %v4527 = vpack.c.b16 %v3999, %v3993
    %v4528 = vpack.c.b16 %v4000, %v3994
    %v4529 = vpack.c.b16 %v4007, %v4001
    %v4530 = vpack.c.b16 %v4008, %v4002
    %v4531 = vpack.c.b16 %v4009, %v4003
    %v4532 = vpack.c.b16 %v4010, %v4004
    %v4533 = vpack.c.b16 %v4011, %v4005
    %v4534 = vpack.c.b16 %v4012, %v4006
    %v4535 = vpack.c.b16 %v4019, %v4013
    %v4536 = vpack.c.b16 %v4020, %v4014
    %v4537 = vpack.c.b16 %v4021, %v4015
    %v4538 = vpack.c.b16 %v4022, %v4016
    %v4539 = vpack.c.b16 %v4023, %v4017
    %v4540 = vpack.c.b16 %v4024, %v4018
    %v4541 = vpack.c.b16 %v4031, %v4025
    %v4542 = vpack.c.b16 %v4032, %v4026
    %v4543 = vpack.c.b16 %v4033, %v4027
    %v4544 = vpack.c.b16 %v4034, %v4028
    %v4545 = vpack.c.b16 %v4035, %v4029
    %v4546 = vpack.c.b16 %v4036, %v4030
    %v4547 = vpack.c.b16 %v4043, %v4037
    %v4548 = vpack.c.b16 %v4044, %v4038
    %v4549 = vpack.c.b16 %v4045, %v4039
    %v4550 = vpack.c.b16 %v4046, %v4040
    %v4551 = vpack.c.b16 %v4047, %v4041
    %v4552 = vpack.c.b16 %v4048, %v4042
    %v4553 = vpack.c.b16 %v4055, %v4049
    %v4554 = vpack.c.b16 %v4056, %v4050
    %v4555 = vpack.c.b16 %v4057, %v4051
    %v4556 = vpack.c.b16 %v4058, %v4052
    %v4557 = vpack.c.b16 %v4059, %v4053
    %v4558 = vpack.c.b16 %v4060, %v4054
    %v4559 = vpack.c.b16 %v4067, %v4061
    %v4560 = vpack.c.b16 %v4068, %v4062
    %v4561 = vpack.c.b16 %v4069, %v4063
    %v4562 = vpack.c.b16 %v4070, %v4064
    %v4563 = vpack.c.b16 %v4071, %v4065
    %v4564 = vpack.c.b16 %v4072, %v4066
    %v4565 = vpack.c.b16 %v4079, %v4073
    %v4566 = vpack.c.b16 %v4080, %v4074
    %v4567 = vpack.c.b16 %v4081, %v4075
    %v4568 = vpack.c.b16 %v4082, %v4076
    %v4569 = vpack.c.b16 %v4083, %v4077
    %v4570 = vpack.c.b16 %v4084, %v4078
    %v4571 = vpack.c.b16 %v4091, %v4085
    %v4572 = vpack.c.b16 %v4092, %v4086
    %v4573 = vpack.c.b16 %v4093, %v4087
    %v4574 = vpack.c.b16 %v4094, %v4088
    %v4575 = vpack.c.b16 %v4095, %v4089
    %v4576 = vpack.c.b16 %v4096, %v4090
    %v4577 = vpack.c.b16 %v4103, %v4097
    %v4578 = vpack.c.b16 %v4104, %v4098
    %v4579 = vpack.c.b16 %v4105, %v4099
    %v4580 = vpack.c.b16 %v4106, %v4100
    %v4581 = vpack.c.b16 %v4107, %v4101
    %v4582 = vpack.c.b16 %v4108, %v4102
    %v4583 = vpack.c.b16 %v4115, %v4109
    %v4584 = vpack.c.b16 %v4116, %v4110
    %v4585 = vpack.c.b16 %v4117, %v4111
    %v4586 = vpack.c.b16 %v4118, %v4112
    %v4587 = vpack.c.b16 %v4119, %v4113
    %v4588 = vpack.c.b16 %v4120, %v4114
    %v4589 = vpack.c.b16 %v4127, %v4121
    %v4590 = vpack.c.b16 %v4128, %v4122
    %v4591 = vpack.c.b16 %v4129, %v4123
    %v4592 = vpack.c.b16 %v4130, %v4124
    %v4593 = vpack.c.b16 %v4131, %v4125
    %v4594 = vpack.c.b16 %v4132, %v4126
    %v4595 = vpack.c.b16 %v4139, %v4133
    %v4596 = vpack.c.b16 %v4140, %v4134
    %v4597 = vpack.c.b16 %v4141, %v4135
    %v4598 = vpack.c.b16 %v4142, %v4136
    %v4599 = vpack.c.b16 %v4143, %v4137
    %v4600 = vpack.c.b16 %v4144, %v4138
    %v4601 = vpack.c.b16 %v4151, %v4145
    %v4602 = vpack.c.b16 %v4152, %v4146
    %v4603 = vpack.c.b16 %v4153, %v4147
    %v4604 = vpack.c.b16 %v4154, %v4148
    %v4605 = vpack.c.b16 %v4155, %v4149
    %v4606 = vpack.c.b16 %v4156, %v4150
    %v4607 = vpack.c.b16 %v4163, %v4157
    %v4608 = vpack.c.b16 %v4164, %v4158
    %v4609 = vpack.c.b16 %v4165, %v4159
    %v4610 = vpack.c.b16 %v4166, %v4160
    %v4611 = vpack.c.b16 %v4167, %v4161
    %v4612 = vpack.c.b16 %v4168, %v4162
    %v4613 = vpack.c.b16 %v4175, %v4169
    %v4614 = vpack.c.b16 %v4176, %v4170
    %v4615 = vpack.c.b16 %v4177, %v4171
    %v4616 = vpack.c.b16 %v4178, %v4172
    %v4617 = vpack.c.b16 %v4179, %v4173
    %v4618 = vpack.c.b16 %v4180, %v4174
    %v4619 = vpack.c.b16 %v4187, %v4181
    %v4620 = vpack.c.b16 %v4188, %v4182
    %v4621 = vpack.c.b16 %v4189, %v4183
    %v4622 = vpack.c.b16 %v4190, %v4184
    %v4623 = vpack.c.b16 %v4191, %v4185
    %v4624 = vpack.c.b16 %v4192, %v4186
    %v4625 = vpack.c.b16 %v4199, %v4193
    %v4626 = vpack.c.b16 %v4200, %v4194
    %v4627 = vpack.c.b16 %v4201, %v4195
    %v4628 = vpack.c.b16 %v4202, %v4196
    %v4629 = vpack.c.b16 %v4203, %v4197
    %v4630 = vpack.c.b16 %v4204, %v4198
    %v4631 = vpack.c.b16 %v4211, %v4205
    %v4632 = vpack.c.b16 %v4212, %v4206
    %v4633 = vpack.c.b16 %v4213, %v4207
    %v4634 = vpack.c.b16 %v4214, %v4208
    %v4635 = vpack.c.b16 %v4215, %v4209
    %v4636 = vpack.c.b16 %v4216, %v4210
    %v4637 = vpack.c.b16 %v4223, %v4217
    %v4638 = vpack.c.b16 %v4224, %v4218
    %v4639 = vpack.c.b16 %v4225, %v4219
    %v4640 = vpack.c.b16 %v4226, %v4220
    %v4641 = vpack.c.b16 %v4227, %v4221
    %v4642 = vpack.c.b16 %v4228, %v4222
    %v4643 = vpack.c.b16 %v4235, %v4229
    %v4644 = vpack.c.b16 %v4236, %v4230
    %v4645 = vpack.c.b16 %v4237, %v4231
    %v4646 = vpack.c.b16 %v4238, %v4232
    %v4647 = vpack.c.b16 %v4239, %v4233
    %v4648 = vpack.c.b16 %v4240, %v4234
    %v4649 = vpack.c.b16 %v4247, %v4241
    %v4650 = vpack.c.b16 %v4248, %v4242
    %v4651 = vpack.c.b16 %v4249, %v4243
    %v4652 = vpack.c.b16 %v4250, %v4244
    %v4653 = vpack.c.b16 %v4251, %v4245
    %v4654 = vpack.c.b16 %v4252, %v4246
    %v4655 = vpack.c.b16 %v4259, %v4253
    %v4656 = vpack.c.b16 %v4260, %v4254
    %v4657 = vpack.c.b16 %v4261, %v4255
    %v4658 = vpack.c.b16 %v4262, %v4256
    %v4659 = vpack.c.b16 %v4263, %v4257
    %v4660 = vpack.c.b16 %v4264, %v4258
    %v4661 = vpack.c.b16 %v4271, %v4265
    %v4662 = vpack.c.b16 %v4272, %v4266
    %v4663 = vpack.c.b16 %v4273, %v4267
    %v4664 = vpack.c.b16 %v4274, %v4268
    %v4665 = vpack.c.b16 %v4275, %v4269
    %v4666 = vpack.c.b16 %v4276, %v4270
    %v4667 = vpack.c.b16 %v4283, %v4277
    %v4668 = vpack.c.b16 %v4284, %v4278
    %v4669 = vpack.c.b16 %v4285, %v4279
    %v4670 = vpack.c.b16 %v4286, %v4280
    %v4671 = vpack.c.b16 %v4287, %v4281
    %v4672 = vpack.c.b16 %v4288, %v4282
    %v4673 = vpack.c.b16 %v4295, %v4289
    %v4674 = vpack.c.b16 %v4296, %v4290
    %v4675 = vpack.c.b16 %v4297, %v4291
    %v4676 = vpack.c.b16 %v4298, %v4292
    %v4677 = vpack.c.b16 %v4299, %v4293
    %v4678 = vpack.c.b16 %v4300, %v4294
    %v4679 = vpack.c.b16 %v4307, %v4301
    %v4680 = vpack.c.b16 %v4308, %v4302
    %v4681 = vpack.c.b16 %v4309, %v4303
    %v4682 = vpack.c.b16 %v4310, %v4304
    %v4683 = vpack.c.b16 %v4311, %v4305
    %v4684 = vpack.c.b16 %v4312, %v4306
    %v4685 = vpack.c.b16 %v4319, %v4313
    %v4686 = vpack.c.b16 %v4320, %v4314
    %v4687 = vpack.c.b16 %v4321, %v4315
    %v4688 = vpack.c.b16 %v4322, %v4316
    %v4689 = vpack.c.b16 %v4323, %v4317
    %v4690 = vpack.c.b16 %v4324, %v4318
    %v4691 = vpack.c.b16 %v4331, %v4325
    %v4692 = vpack.c.b16 %v4332, %v4326
    %v4693 = vpack.c.b16 %v4333, %v4327
    %v4694 = vpack.c.b16 %v4334, %v4328
    %v4695 = vpack.c.b16 %v4335, %v4329
    %v4696 = vpack.c.b16 %v4336, %v4330
    %v4697 = vpack.c.b16 %v4343, %v4337
    %v4698 = vpack.c.b16 %v4344, %v4338
    %v4699 = vpack.c.b16 %v4345, %v4339
    %v4700 = vpack.c.b16 %v4346, %v4340
    %v4701 = vpack.c.b16 %v4347, %v4341
    %v4702 = vpack.c.b16 %v4348, %v4342
    %v4703 = vpack.c.b16 %v4355, %v4349
    %v4704 = vpack.c.b16 %v4356, %v4350
    %v4705 = vpack.c.b16 %v4357, %v4351
    %v4706 = vpack.c.b16 %v4358, %v4352
    %v4707 = vpack.c.b16 %v4359, %v4353
    %v4708 = vpack.c.b16 %v4360, %v4354
    %v4709 = vpack.c.b16 %v4367, %v4361
    %v4710 = vpack.c.b16 %v4368, %v4362
    %v4711 = vpack.c.b16 %v4369, %v4363
    %v4712 = vpack.c.b16 %v4370, %v4364
    %v4713 = vpack.c.b16 %v4371, %v4365
    %v4714 = vpack.c.b16 %v4372, %v4366
    %v4715 = vpack.c.b16 %v4379, %v4373
    %v4716 = vpack.c.b16 %v4380, %v4374
    %v4717 = vpack.c.b16 %v4381, %v4375
    %v4718 = vpack.c.b16 %v4382, %v4376
    %v4719 = vpack.c.b16 %v4383, %v4377
    %v4720 = vpack.c.b16 %v4384, %v4378
    %v4721 = vpack.c.b16 %v4391, %v4385
    %v4722 = vpack.c.b16 %v4392, %v4386
    %v4723 = vpack.c.b16 %v4393, %v4387
    %v4724 = vpack.c.b16 %v4394, %v4388
    %v4725 = vpack.c.b16 %v4395, %v4389
    %v4726 = vpack.c.b16 %v4396, %v4390
    %v4727 = vpack.c.b16 %v4403, %v4397
    %v4728 = vpack.c.b16 %v4404, %v4398
    %v4729 = vpack.c.b16 %v4405, %v4399
    %v4730 = vpack.c.b16 %v4406, %v4400
    %v4731 = vpack.c.b16 %v4407, %v4401
    %v4732 = vpack.c.b16 %v4408, %v4402
    %v4733 = vpack.c.b16 %v4415, %v4409
    %v4734 = vpack.c.b16 %v4416, %v4410
    %v4735 = vpack.c.b16 %v4417, %v4411
    %v4736 = vpack.c.b16 %v4418, %v4412
    %v4737 = vpack.c.b16 %v4419, %v4413
    %v4738 = vpack.c.b16 %v4420, %v4414
    %v4739 = vpack.c.b16 %v4427, %v4421
    %v4740 = vpack.c.b16 %v4428, %v4422
    %v4741 = vpack.c.b16 %v4429, %v4423
    %v4742 = vpack.c.b16 %v4430, %v4424
    %v4743 = vpack.c.b16 %v4431, %v4425
    %v4744 = vpack.c.b16 %v4432, %v4426
    %v4745 = vpack.c.b16 %v4439, %v4433
    %v4746 = vpack.c.b16 %v4440, %v4434
    %v4747 = vpack.c.b16 %v4441, %v4435
    %v4748 = vpack.c.b16 %v4442, %v4436
    %v4749 = vpack.c.b16 %v4443, %v4437
    %v4750 = vpack.c.b16 %v4444, %v4438
    %v4751 = vpack.c.b16 %v4451, %v4445
    %v4752 = vpack.c.b16 %v4452, %v4446
    %v4753 = vpack.c.b16 %v4453, %v4447
    %v4754 = vpack.c.b16 %v4454, %v4448
    %v4755 = vpack.c.b16 %v4455, %v4449
    %v4756 = vpack.c.b16 %v4456, %v4450
    %v4757 = vpack.c.b16 %v4463, %v4457
    %v4758 = vpack.c.b16 %v4464, %v4458
    %v4759 = vpack.c.b16 %v4465, %v4459
    %v4760 = vpack.c.b16 %v4466, %v4460
    %v4761 = vpack.c.b16 %v4467, %v4461
    %v4762 = vpack.c.b16 %v4468, %v4462
    %v4763 = vpack.c.b16 %v4475, %v4469
    %v4764 = vpack.c.b16 %v4476, %v4470
    %v4765 = vpack.c.b16 %v4477, %v4471
    %v4766 = vpack.c.b16 %v4478, %v4472
    %v4767 = vpack.c.b16 %v4479, %v4473
    %v4768 = vpack.c.b16 %v4480, %v4474
    %5057 = vmatprep.subr.bf16.mxu0 %v4482
    %5058 = vmatpush1.bf16.msra.mxu0 %v4481
    %5059 = vmatprep.subr.bf16.mxu0 %v4488
    %5060 = vmatpush1.bf16.msra.mxu0 %v4487
    %5061 = vmatprep.subr.bf16.mxu0 %v4494
    %5062 = vmatpush1.bf16.msra.mxu0 %v4493
    %5063 = vmatprep.subr.bf16.mxu0 %v4500
    %5064 = vmatpush1.bf16.msra.mxu0 %v4499
    %5065 = vmatprep.subr.bf16.mxu0 %v4506
    %5066 = vmatpush1.bf16.msra.mxu0 %v4505
    %5067 = vmatprep.subr.bf16.mxu0 %v4512
    %5068 = vmatpush1.bf16.msra.mxu0 %v4511
    %5069 = vmatprep.subr.bf16.mxu0 %v4518
    %5070 = vmatpush1.bf16.msra.mxu0 %v4517
    %5071 = vmatprep.subr.bf16.mxu0 %v4524
    %5072 = vmatpush1.bf16.msra.mxu0 %v4523
    %5073 = vmatprep.subr.bf16.mxu0 %v4530
    %5074 = vmatpush1.bf16.msra.mxu0 %v4529
    %5075 = vmatprep.subr.bf16.mxu0 %v4536
    %5076 = vmatpush1.bf16.msra.mxu0 %v4535
    %5077 = vmatprep.subr.bf16.mxu0 %v4542
    %5078 = vmatpush1.bf16.msra.mxu0 %v4541
    %5079 = vmatprep.subr.bf16.mxu0 %v4548
    %5080 = vmatpush1.bf16.msra.mxu0 %v4547
    %5081 = vmatprep.subr.bf16.mxu0 %v4554
    %5082 = vmatpush1.bf16.msra.mxu0 %v4553
    %5083 = vmatprep.subr.bf16.mxu0 %v4560
    %5084 = vmatpush1.bf16.msra.mxu0 %v4559
    %5085 = vmatprep.subr.bf16.mxu0 %v4566
    %5086 = vmatpush1.bf16.msra.mxu0 %v4565
    %5087 = vmatprep.subr.bf16.mxu0 %v4572
    %5088 = vmatpush1.bf16.msra.mxu0 %v4571
    %5089 = vmatprep.mubr.bf16.mxu0 %v3324
    %5090 = vmatmul.mubr.bf16.gmra.mrb[0].mxu0 %v3323
    %v5091 = vpop.f32.mrb[0].mxu0
    %v5092 = vadd.f32 0.0, %v5091
    %v5093 = vpop.f32.mrb[0].mxu0
    %v5094 = vadd.f32 0.0, %v5093
    %v5095 = vpop.f32.mrb[0].mxu0
    %v5096 = vadd.f32 0.0, %v5095
    %v5097 = vpop.f32.mrb[0].mxu0
    %v5098 = vadd.f32 0.0, %v5097
    %5099 = vdwg.mxu0
    %5100 = vmatprep.subr.bf16.mxu0 %v4578
    %5101 = vmatpush1.bf16.msra.mxu0 %v4577
    %5102 = vmatprep.subr.bf16.mxu0 %v4584
    %5103 = vmatpush1.bf16.msra.mxu0 %v4583
    %5104 = vmatprep.subr.bf16.mxu0 %v4590
    %5105 = vmatpush1.bf16.msra.mxu0 %v4589
    %5106 = vmatprep.subr.bf16.mxu0 %v4596
    %5107 = vmatpush1.bf16.msra.mxu0 %v4595
    %5108 = vmatprep.subr.bf16.mxu0 %v4602
    %5109 = vmatpush1.bf16.msra.mxu0 %v4601
    %5110 = vmatprep.subr.bf16.mxu0 %v4608
    %5111 = vmatpush1.bf16.msra.mxu0 %v4607
    %5112 = vmatprep.subr.bf16.mxu0 %v4614
    %5113 = vmatpush1.bf16.msra.mxu0 %v4613
    %5114 = vmatprep.subr.bf16.mxu0 %v4620
    %5115 = vmatpush1.bf16.msra.mxu0 %v4619
    %5116 = vmatprep.subr.bf16.mxu0 %v4626
    %5117 = vmatpush1.bf16.msra.mxu0 %v4625
    %5118 = vmatprep.subr.bf16.mxu0 %v4632
    %5119 = vmatpush1.bf16.msra.mxu0 %v4631
    %5120 = vmatprep.subr.bf16.mxu0 %v4638
    %5121 = vmatpush1.bf16.msra.mxu0 %v4637
    %5122 = vmatprep.subr.bf16.mxu0 %v4644
    %5123 = vmatpush1.bf16.msra.mxu0 %v4643
    %5124 = vmatprep.subr.bf16.mxu0 %v4650
    %5125 = vmatpush1.bf16.msra.mxu0 %v4649
    %5126 = vmatprep.subr.bf16.mxu0 %v4656
    %5127 = vmatpush1.bf16.msra.mxu0 %v4655
    %5128 = vmatprep.subr.bf16.mxu0 %v4662
    %5129 = vmatpush1.bf16.msra.mxu0 %v4661
    %5130 = vmatprep.subr.bf16.mxu0 %v4668
    %5131 = vmatpush1.bf16.msra.mxu0 %v4667
    %5132 = vmatprep.mubr.bf16.mxu0 %v3326
    %5133 = vmatmul.mubr.bf16.gmra.mrb[0].mxu0 %v3325
    %v5134 = vpop.f32.mrb[0].mxu0
    %v5135 = vadd.f32 %v5092, %v5134
    %v5136 = vpop.f32.mrb[0].mxu0
    %v5137 = vadd.f32 %v5094, %v5136
    %v5138 = vpop.f32.mrb[0].mxu0
    %v5139 = vadd.f32 %v5096, %v5138
    %v5140 = vpop.f32.mrb[0].mxu0
    %v5141 = vadd.f32 %v5098, %v5140
    %5142 = vdwg.mxu0
    %5143 = vmatprep.subr.bf16.mxu0 %v4674
    %5144 = vmatpush1.bf16.msra.mxu0 %v4673
    %5145 = vmatprep.subr.bf16.mxu0 %v4680
    %5146 = vmatpush1.bf16.msra.mxu0 %v4679
    %5147 = vmatprep.subr.bf16.mxu0 %v4686
    %5148 = vmatpush1.bf16.msra.mxu0 %v4685
    %5149 = vmatprep.subr.bf16.mxu0 %v4692
    %5150 = vmatpush1.bf16.msra.mxu0 %v4691
    %5151 = vmatprep.subr.bf16.mxu0 %v4698
    %5152 = vmatpush1.bf16.msra.mxu0 %v4697
    %5153 = vmatprep.subr.bf16.mxu0 %v4704
    %5154 = vmatpush1.bf16.msra.mxu0 %v4703
    %5155 = vmatprep.subr.bf16.mxu0 %v4710
    %5156 = vmatpush1.bf16.msra.mxu0 %v4709
    %5157 = vmatprep.subr.bf16.mxu0 %v4716
    %5158 = vmatpush1.bf16.msra.mxu0 %v4715
    %5159 = vmatprep.subr.bf16.mxu0 %v4722
    %5160 = vmatpush1.bf16.msra.mxu0 %v4721
    %5161 = vmatprep.subr.bf16.mxu0 %v4728
    %5162 = vmatpush1.bf16.msra.mxu0 %v4727
    %5163 = vmatprep.subr.bf16.mxu0 %v4734
    %5164 = vmatpush1.bf16.msra.mxu0 %v4733
    %5165 = vmatprep.subr.bf16.mxu0 %v4740
    %5166 = vmatpush1.bf16.msra.mxu0 %v4739
    %5167 = vmatprep.subr.bf16.mxu0 %v4746
    %5168 = vmatpush1.bf16.msra.mxu0 %v4745
    %5169 = vmatprep.subr.bf16.mxu0 %v4752
    %5170 = vmatpush1.bf16.msra.mxu0 %v4751
    %5171 = vmatprep.subr.bf16.mxu0 %v4758
    %5172 = vmatpush1.bf16.msra.mxu0 %v4757
    %5173 = vmatprep.subr.bf16.mxu0 %v4764
    %5174 = vmatpush1.bf16.msra.mxu0 %v4763
    %5175 = vmatprep.mubr.bf16.mxu0 %v3328
    %5176 = vmatmul.mubr.bf16.gmra.mrb[0].mxu0 %v3327
    %v5177 = vpop.f32.mrb[0].mxu0
    %v5178 = vadd.f32 %v5135, %v5177
    %v5179 = vpop.f32.mrb[0].mxu0
    %v5180 = vadd.f32 %v5137, %v5179
    %v5181 = vpop.f32.mrb[0].mxu0
    %v5182 = vadd.f32 %v5139, %v5181
    %v5183 = vpop.f32.mrb[0].mxu0
    %v5184 = vadd.f32 %v5141, %v5183
    %5185 = vdwg.mxu0
    %5186 = vmatprep.subr.bf16.mxu0 %v4484
    %5187 = vmatpush1.bf16.msra.mxu0 %v4483
    %5188 = vmatprep.subr.bf16.mxu0 %v4490
    %5189 = vmatpush1.bf16.msra.mxu0 %v4489
    %5190 = vmatprep.subr.bf16.mxu0 %v4496
    %5191 = vmatpush1.bf16.msra.mxu0 %v4495
    %5192 = vmatprep.subr.bf16.mxu0 %v4502
    %5193 = vmatpush1.bf16.msra.mxu0 %v4501
    %5194 = vmatprep.subr.bf16.mxu0 %v4508
    %5195 = vmatpush1.bf16.msra.mxu0 %v4507
    %5196 = vmatprep.subr.bf16.mxu0 %v4514
    %5197 = vmatpush1.bf16.msra.mxu0 %v4513
    %5198 = vmatprep.subr.bf16.mxu0 %v4520
    %5199 = vmatpush1.bf16.msra.mxu0 %v4519
    %5200 = vmatprep.subr.bf16.mxu0 %v4526
    %5201 = vmatpush1.bf16.msra.mxu0 %v4525
    %5202 = vmatprep.subr.bf16.mxu0 %v4532
    %5203 = vmatpush1.bf16.msra.mxu0 %v4531
    %5204 = vmatprep.subr.bf16.mxu0 %v4538
    %5205 = vmatpush1.bf16.msra.mxu0 %v4537
    %5206 = vmatprep.subr.bf16.mxu0 %v4544
    %5207 = vmatpush1.bf16.msra.mxu0 %v4543
    %5208 = vmatprep.subr.bf16.mxu0 %v4550
    %5209 = vmatpush1.bf16.msra.mxu0 %v4549
    %5210 = vmatprep.subr.bf16.mxu0 %v4556
    %5211 = vmatpush1.bf16.msra.mxu0 %v4555
    %5212 = vmatprep.subr.bf16.mxu0 %v4562
    %5213 = vmatpush1.bf16.msra.mxu0 %v4561
    %5214 = vmatprep.subr.bf16.mxu0 %v4568
    %5215 = vmatpush1.bf16.msra.mxu0 %v4567
    %5216 = vmatprep.subr.bf16.mxu0 %v4574
    %5217 = vmatpush1.bf16.msra.mxu0 %v4573
    %5218 = vmatprep.mubr.bf16.mxu0 %v3324
    %5219 = vmatmul.mubr.bf16.gmra.mrb[0].mxu0 %v3323
    %v5220 = vpop.f32.mrb[0].mxu0
    %v5221 = vadd.f32 0.0, %v5220
    %v5222 = vpop.f32.mrb[0].mxu0
    %v5223 = vadd.f32 0.0, %v5222
    %v5224 = vpop.f32.mrb[0].mxu0
    %v5225 = vadd.f32 0.0, %v5224
    %v5226 = vpop.f32.mrb[0].mxu0
    %v5227 = vadd.f32 0.0, %v5226
    %5228 = vdwg.mxu0
    %5229 = vmatprep.subr.bf16.mxu0 %v4580
    %5230 = vmatpush1.bf16.msra.mxu0 %v4579
    %5231 = vmatprep.subr.bf16.mxu0 %v4586
    %5232 = vmatpush1.bf16.msra.mxu0 %v4585
    %5233 = vmatprep.subr.bf16.mxu0 %v4592
    %5234 = vmatpush1.bf16.msra.mxu0 %v4591
    %5235 = vmatprep.subr.bf16.mxu0 %v4598
    %5236 = vmatpush1.bf16.msra.mxu0 %v4597
    %5237 = vmatprep.subr.bf16.mxu0 %v4604
    %5238 = vmatpush1.bf16.msra.mxu0 %v4603
    %5239 = vmatprep.subr.bf16.mxu0 %v4610
    %5240 = vmatpush1.bf16.msra.mxu0 %v4609
    %5241 = vmatprep.subr.bf16.mxu0 %v4616
    %5242 = vmatpush1.bf16.msra.mxu0 %v4615
    %5243 = vmatprep.subr.bf16.mxu0 %v4622
    %5244 = vmatpush1.bf16.msra.mxu0 %v4621
    %5245 = vmatprep.subr.bf16.mxu0 %v4628
    %5246 = vmatpush1.bf16.msra.mxu0 %v4627
    %5247 = vmatprep.subr.bf16.mxu0 %v4634
    %5248 = vmatpush1.bf16.msra.mxu0 %v4633
    %5249 = vmatprep.subr.bf16.mxu0 %v4640
    %5250 = vmatpush1.bf16.msra.mxu0 %v4639
    %5251 = vmatprep.subr.bf16.mxu0 %v4646
    %5252 = vmatpush1.bf16.msra.mxu0 %v4645
    %5253 = vmatprep.subr.bf16.mxu0 %v4652
    %5254 = vmatpush1.bf16.msra.mxu0 %v4651
    %5255 = vmatprep.subr.bf16.mxu0 %v4658
    %5256 = vmatpush1.bf16.msra.mxu0 %v4657
    %5257 = vmatprep.subr.bf16.mxu0 %v4664
    %5258 = vmatpush1.bf16.msra.mxu0 %v4663
    %5259 = vmatprep.subr.bf16.mxu0 %v4670
    %5260 = vmatpush1.bf16.msra.mxu0 %v4669
    %5261 = vmatprep.mubr.bf16.mxu0 %v3326
    %5262 = vmatmul.mubr.bf16.gmra.mrb[0].mxu0 %v3325
    %v5263 = vpop.f32.mrb[0].mxu0
    %v5264 = vadd.f32 %v5221, %v5263
    %v5265 = vpop.f32.mrb[0].mxu0
    %v5266 = vadd.f32 %v5223, %v5265
    %v5267 = vpop.f32.mrb[0].mxu0
    %v5268 = vadd.f32 %v5225, %v5267
    %v5269 = vpop.f32.mrb[0].mxu0
    %v5270 = vadd.f32 %v5227, %v5269
    %5271 = vdwg.mxu0
    %5272 = vmatprep.subr.bf16.mxu0 %v4676
    %5273 = vmatpush1.bf16.msra.mxu0 %v4675
    %5274 = vmatprep.subr.bf16.mxu0 %v4682
    %5275 = vmatpush1.bf16.msra.mxu0 %v4681
    %5276 = vmatprep.subr.bf16.mxu0 %v4688
    %5277 = vmatpush1.bf16.msra.mxu0 %v4687
    %5278 = vmatprep.subr.bf16.mxu0 %v4694
    %5279 = vmatpush1.bf16.msra.mxu0 %v4693
    %5280 = vmatprep.subr.bf16.mxu0 %v4700
    %5281 = vmatpush1.bf16.msra.mxu0 %v4699
    %5282 = vmatprep.subr.bf16.mxu0 %v4706
    %5283 = vmatpush1.bf16.msra.mxu0 %v4705
    %5284 = vmatprep.subr.bf16.mxu0 %v4712
    %5285 = vmatpush1.bf16.msra.mxu0 %v4711
    %5286 = vmatprep.subr.bf16.mxu0 %v4718
    %5287 = vmatpush1.bf16.msra.mxu0 %v4717
    %5288 = vmatprep.subr.bf16.mxu0 %v4724
    %5289 = vmatpush1.bf16.msra.mxu0 %v4723
    %5290 = vmatprep.subr.bf16.mxu0 %v4730
    %5291 = vmatpush1.bf16.msra.mxu0 %v4729
    %5292 = vmatprep.subr.bf16.mxu0 %v4736
    %5293 = vmatpush1.bf16.msra.mxu0 %v4735
    %5294 = vmatprep.subr.bf16.mxu0 %v4742
    %5295 = vmatpush1.bf16.msra.mxu0 %v4741
    %5296 = vmatprep.subr.bf16.mxu0 %v4748
    %5297 = vmatpush1.bf16.msra.mxu0 %v4747
    %5298 = vmatprep.subr.bf16.mxu0 %v4754
    %5299 = vmatpush1.bf16.msra.mxu0 %v4753
    %5300 = vmatprep.subr.bf16.mxu0 %v4760
    %5301 = vmatpush1.bf16.msra.mxu0 %v4759
    %5302 = vmatprep.subr.bf16.mxu0 %v4766
    %5303 = vmatpush1.bf16.msra.mxu0 %v4765
    %5304 = vmatprep.mubr.bf16.mxu0 %v3328
    %5305 = vmatmul.mubr.bf16.gmra.mrb[0].mxu0 %v3327
    %v5306 = vpop.f32.mrb[0].mxu0
    %v5307 = vadd.f32 %v5264, %v5306
    %v5308 = vpop.f32.mrb[0].mxu0
    %v5309 = vadd.f32 %v5266, %v5308
    %v5310 = vpop.f32.mrb[0].mxu0
    %v5311 = vadd.f32 %v5268, %v5310
    %v5312 = vpop.f32.mrb[0].mxu0
    %v5313 = vadd.f32 %v5270, %v5312
    %5314 = vdwg.mxu0
    %5315 = vmatprep.subr.bf16.mxu0 %v4486
    %5316 = vmatpush1.bf16.msra.mxu0 %v4485
    %5317 = vmatprep.subr.bf16.mxu0 %v4492
    %5318 = vmatpush1.bf16.msra.mxu0 %v4491
    %5319 = vmatprep.subr.bf16.mxu0 %v4498
    %5320 = vmatpush1.bf16.msra.mxu0 %v4497
    %5321 = vmatprep.subr.bf16.mxu0 %v4504
    %5322 = vmatpush1.bf16.msra.mxu0 %v4503
    %5323 = vmatprep.subr.bf16.mxu0 %v4510
    %5324 = vmatpush1.bf16.msra.mxu0 %v4509
    %5325 = vmatprep.subr.bf16.mxu0 %v4516
    %5326 = vmatpush1.bf16.msra.mxu0 %v4515
    %5327 = vmatprep.subr.bf16.mxu0 %v4522
    %5328 = vmatpush1.bf16.msra.mxu0 %v4521
    %5329 = vmatprep.subr.bf16.mxu0 %v4528
    %5330 = vmatpush1.bf16.msra.mxu0 %v4527
    %5331 = vmatprep.subr.bf16.mxu0 %v4534
    %5332 = vmatpush1.bf16.msra.mxu0 %v4533
    %5333 = vmatprep.subr.bf16.mxu0 %v4540
    %5334 = vmatpush1.bf16.msra.mxu0 %v4539
    %5335 = vmatprep.subr.bf16.mxu0 %v4546
    %5336 = vmatpush1.bf16.msra.mxu0 %v4545
    %5337 = vmatprep.subr.bf16.mxu0 %v4552
    %5338 = vmatpush1.bf16.msra.mxu0 %v4551
    %5339 = vmatprep.subr.bf16.mxu0 %v4558
    %5340 = vmatpush1.bf16.msra.mxu0 %v4557
    %5341 = vmatprep.subr.bf16.mxu0 %v4564
    %5342 = vmatpush1.bf16.msra.mxu0 %v4563
    %5343 = vmatprep.subr.bf16.mxu0 %v4570
    %5344 = vmatpush1.bf16.msra.mxu0 %v4569
    %5345 = vmatprep.subr.bf16.mxu0 %v4576
    %5346 = vmatpush1.bf16.msra.mxu0 %v4575
    %5347 = vmatprep.mubr.bf16.mxu0 %v3324
    %5348 = vmatmul.mubr.bf16.gmra.mrb[0].mxu0 %v3323
    %v5349 = vpop.f32.mrb[0].mxu0
    %v5350 = vadd.f32 0.0, %v5349
    %v5351 = vpop.f32.mrb[0].mxu0
    %v5352 = vadd.f32 0.0, %v5351
    %v5353 = vpop.f32.mrb[0].mxu0
    %v5354 = vadd.f32 0.0, %v5353
    %v5355 = vpop.f32.mrb[0].mxu0
    %v5356 = vadd.f32 0.0, %v5355
    %5357 = vdwg.mxu0
    %5358 = vmatprep.subr.bf16.mxu0 %v4582
    %5359 = vmatpush1.bf16.msra.mxu0 %v4581
    %5360 = vmatprep.subr.bf16.mxu0 %v4588
    %5361 = vmatpush1.bf16.msra.mxu0 %v4587
    %5362 = vmatprep.subr.bf16.mxu0 %v4594
    %5363 = vmatpush1.bf16.msra.mxu0 %v4593
    %5364 = vmatprep.subr.bf16.mxu0 %v4600
    %5365 = vmatpush1.bf16.msra.mxu0 %v4599
    %5366 = vmatprep.subr.bf16.mxu0 %v4606
    %5367 = vmatpush1.bf16.msra.mxu0 %v4605
    %5368 = vmatprep.subr.bf16.mxu0 %v4612
    %5369 = vmatpush1.bf16.msra.mxu0 %v4611
    %5370 = vmatprep.subr.bf16.mxu0 %v4618
    %5371 = vmatpush1.bf16.msra.mxu0 %v4617
    %5372 = vmatprep.subr.bf16.mxu0 %v4624
    %5373 = vmatpush1.bf16.msra.mxu0 %v4623
    %5374 = vmatprep.subr.bf16.mxu0 %v4630
    %5375 = vmatpush1.bf16.msra.mxu0 %v4629
    %5376 = vmatprep.subr.bf16.mxu0 %v4636
    %5377 = vmatpush1.bf16.msra.mxu0 %v4635
    %5378 = vmatprep.subr.bf16.mxu0 %v4642
    %5379 = vmatpush1.bf16.msra.mxu0 %v4641
    %5380 = vmatprep.subr.bf16.mxu0 %v4648
    %5381 = vmatpush1.bf16.msra.mxu0 %v4647
    %5382 = vmatprep.subr.bf16.mxu0 %v4654
    %5383 = vmatpush1.bf16.msra.mxu0 %v4653
    %5384 = vmatprep.subr.bf16.mxu0 %v4660
    %5385 = vmatpush1.bf16.msra.mxu0 %v4659
    %5386 = vmatprep.subr.bf16.mxu0 %v4666
    %5387 = vmatpush1.bf16.msra.mxu0 %v4665
    %5388 = vmatprep.subr.bf16.mxu0 %v4672
    %5389 = vmatpush1.bf16.msra.mxu0 %v4671
    %5390 = vmatprep.mubr.bf16.mxu0 %v3326
    %5391 = vmatmul.mubr.bf16.gmra.mrb[0].mxu0 %v3325
    %v5392 = vpop.f32.mrb[0].mxu0
    %v5393 = vadd.f32 %v5350, %v5392
    %v5394 = vpop.f32.mrb[0].mxu0
    %v5395 = vadd.f32 %v5352, %v5394
    %v5396 = vpop.f32.mrb[0].mxu0
    %v5397 = vadd.f32 %v5354, %v5396
    %v5398 = vpop.f32.mrb[0].mxu0
    %v5399 = vadd.f32 %v5356, %v5398
    %5400 = vdwg.mxu0
    %5401 = vmatprep.subr.bf16.mxu0 %v4678
    %5402 = vmatpush1.bf16.msra.mxu0 %v4677
    %5403 = vmatprep.subr.bf16.mxu0 %v4684
    %5404 = vmatpush1.bf16.msra.mxu0 %v4683
    %5405 = vmatprep.subr.bf16.mxu0 %v4690
    %5406 = vmatpush1.bf16.msra.mxu0 %v4689
    %5407 = vmatprep.subr.bf16.mxu0 %v4696
    %5408 = vmatpush1.bf16.msra.mxu0 %v4695
    %5409 = vmatprep.subr.bf16.mxu0 %v4702
    %5410 = vmatpush1.bf16.msra.mxu0 %v4701
    %5411 = vmatprep.subr.bf16.mxu0 %v4708
    %5412 = vmatpush1.bf16.msra.mxu0 %v4707
    %5413 = vmatprep.subr.bf16.mxu0 %v4714
    %5414 = vmatpush1.bf16.msra.mxu0 %v4713
    %5415 = vmatprep.subr.bf16.mxu0 %v4720
    %5416 = vmatpush1.bf16.msra.mxu0 %v4719
    %5417 = vmatprep.subr.bf16.mxu0 %v4726
    %5418 = vmatpush1.bf16.msra.mxu0 %v4725
    %5419 = vmatprep.subr.bf16.mxu0 %v4732
    %5420 = vmatpush1.bf16.msra.mxu0 %v4731
    %5421 = vmatprep.subr.bf16.mxu0 %v4738
    %5422 = vmatpush1.bf16.msra.mxu0 %v4737
    %5423 = vmatprep.subr.bf16.mxu0 %v4744
    %5424 = vmatpush1.bf16.msra.mxu0 %v4743
    %5425 = vmatprep.subr.bf16.mxu0 %v4750
    %5426 = vmatpush1.bf16.msra.mxu0 %v4749
    %5427 = vmatprep.subr.bf16.mxu0 %v4756
    %5428 = vmatpush1.bf16.msra.mxu0 %v4755
    %5429 = vmatprep.subr.bf16.mxu0 %v4762
    %5430 = vmatpush1.bf16.msra.mxu0 %v4761
    %5431 = vmatprep.subr.bf16.mxu0 %v4768
    %5432 = vmatpush1.bf16.msra.mxu0 %v4767
    %5433 = vmatprep.mubr.bf16.mxu0 %v3328
    %5434 = vmatmul.mubr.bf16.gmra.mrb[0].mxu0 %v3327
    %v5435 = vpop.f32.mrb[0].mxu0
    %v5436 = vadd.f32 %v5393, %v5435
    %v5437 = vpop.f32.mrb[0].mxu0
    %v5438 = vadd.f32 %v5395, %v5437
    %v5439 = vpop.f32.mrb[0].mxu0
    %v5440 = vadd.f32 %v5397, %v5439
    %v5441 = vpop.f32.mrb[0].mxu0
    %v5442 = vadd.f32 %v5399, %v5441
    %5443 = vdwg.mxu0
    %5444 = vmatprep.subr.mxu0 %v239
    %5445 = vmatpush1.xpose.msra.mxu0 %v238
    %5446 = vmatprep.subr.mxu0 0.0
    %5447 = vmatpush1.xpose.msra.mxu0 0.0
    %5448 = vmatprep.subr.mxu0 0.0
    %5449 = vmatpush1.xpose.msra.mxu0 0.0
    %5450 = vmatprep.subr.mxu0 0.0
    %5451 = vmatpush1.xpose.msra.mxu0 0.0
    %5452 = vmatprep.subr.mxu0 0.0
    %5453 = vmatpush1.xpose.msra.mxu0 0.0
    %5454 = vmatprep.subr.mxu0 0.0
    %5455 = vmatpush1.xpose.msra.mxu0 0.0
    %5456 = vmatprep.subr.mxu0 0.0
    %5457 = vmatpush1.xpose.msra.mxu0 0.0
    %5458 = vmatprep.subr.mxu0 0.0
    %5459 = vmatpush1.xpose.msra.mxu0 0.0
    %5460 = vmatprep.subr.mxu0 0.0
    %5461 = vmatpush1.xpose.msra.mxu0 0.0
    %5462 = vmatprep.subr.mxu0 0.0
    %5463 = vmatpush1.xpose.msra.mxu0 0.0
    %5464 = vmatprep.subr.mxu0 0.0
    %5465 = vmatpush1.xpose.msra.mxu0 0.0
    %5466 = vmatprep.subr.mxu0 0.0
    %5467 = vmatpush1.xpose.msra.mxu0 0.0
    %5468 = vmatprep.subr.mxu0 0.0
    %5469 = vmatpush1.xpose.msra.mxu0 0.0
    %5470 = vmatprep.subr.mxu0 0.0
    %5471 = vmatpush1.xpose.msra.mxu0 0.0
    %5472 = vmatprep.subr.mxu0 0.0
    %5473 = vmatpush1.xpose.msra.mxu0 0.0
    %5474 = vmatprep.subr.mxu0 0.0
    %5475 = vmatpush1.xpose.msra.mxu0 0.0
    %5476 = vmatprep.subr.mxu0 0.0
    %5477 = vmatpush1.xpose.msra.mxu0 0.0
    %5478 = vmatprep.subr.mxu0 0.0
    %5479 = vmatpush1.xpose.msra.mxu0 0.0
    %5480 = vmatprep.subr.mxu0 0.0
    %5481 = vmatpush1.xpose.msra.mxu0 0.0
    %5482 = vmatprep.subr.mxu0 0.0
    %5483 = vmatpush1.xpose.msra.mxu0 0.0
    %5484 = vmatprep.subr.mxu0 0.0
    %5485 = vmatpush1.xpose.msra.mxu0 0.0
    %5486 = vmatprep.subr.mxu0 0.0
    %5487 = vmatpush1.xpose.msra.mxu0 0.0
    %5488 = vmatprep.subr.mxu0 0.0
    %5489 = vmatpush1.xpose.msra.mxu0 0.0
    %5490 = vmatprep.subr.mxu0 0.0
    %5491 = vmatpush1.xpose.msra.mxu0 0.0
    %5492 = vmatprep.subr.mxu0 0.0
    %5493 = vmatpush1.xpose.msra.mxu0 0.0
    %5494 = vmatprep.subr.mxu0 0.0
    %5495 = vmatpush1.xpose.msra.mxu0 0.0
    %5496 = vmatprep.subr.mxu0 0.0
    %5497 = vmatpush1.xpose.msra.mxu0 0.0
    %5498 = vmatprep.subr.mxu0 0.0
    %5499 = vmatpush1.xpose.msra.mxu0 0.0
    %5500 = vmatprep.subr.mxu0 0.0
    %5501 = vmatpush1.xpose.msra.mxu0 0.0
    %5502 = vmatprep.subr.mxu0 0.0
    %5503 = vmatpush1.xpose.msra.mxu0 0.0
    %5504 = vmatprep.subr.mxu0 0.0
    %5505 = vmatpush1.xpose.msra.mxu0 0.0
    %5506 = vmatprep.subr.mxu0 0.0
    %5507 = vmatpush1.xpose.msra.mxu0 0.0
    %5508 = vmatprep.mubr.f32.mxu0 %v5180
    %5509 = vmatmul.mubr.f32.gmra.mrb[0].mxu0 %v5178
    %v5510 = vpop.f32.mrb[0].mxu0
    %v5511 = vadd.f32 0.0, %v5510
    %v5512 = vpop.f32.mrb[0].mxu0
    %5513 = vdwg.mxu0
    %5514 = vmatprep.subr.mxu0 %v241
    %5515 = vmatpush1.xpose.msra.mxu0 %v240
    %5516 = vmatprep.subr.mxu0 0.0
    %5517 = vmatpush1.xpose.msra.mxu0 0.0
    %5518 = vmatprep.subr.mxu0 0.0
    %5519 = vmatpush1.xpose.msra.mxu0 0.0
    %5520 = vmatprep.subr.mxu0 0.0
    %5521 = vmatpush1.xpose.msra.mxu0 0.0
    %5522 = vmatprep.subr.mxu0 0.0
    %5523 = vmatpush1.xpose.msra.mxu0 0.0
    %5524 = vmatprep.subr.mxu0 0.0
    %5525 = vmatpush1.xpose.msra.mxu0 0.0
    %5526 = vmatprep.subr.mxu0 0.0
    %5527 = vmatpush1.xpose.msra.mxu0 0.0
    %5528 = vmatprep.subr.mxu0 0.0
    %5529 = vmatpush1.xpose.msra.mxu0 0.0
    %5530 = vmatprep.subr.mxu0 0.0
    %5531 = vmatpush1.xpose.msra.mxu0 0.0
    %5532 = vmatprep.subr.mxu0 0.0
    %5533 = vmatpush1.xpose.msra.mxu0 0.0
    %5534 = vmatprep.subr.mxu0 0.0
    %5535 = vmatpush1.xpose.msra.mxu0 0.0
    %5536 = vmatprep.subr.mxu0 0.0
    %5537 = vmatpush1.xpose.msra.mxu0 0.0
    %5538 = vmatprep.subr.mxu0 0.0
    %5539 = vmatpush1.xpose.msra.mxu0 0.0
    %5540 = vmatprep.subr.mxu0 0.0
    %5541 = vmatpush1.xpose.msra.mxu0 0.0
    %5542 = vmatprep.subr.mxu0 0.0
    %5543 = vmatpush1.xpose.msra.mxu0 0.0
    %5544 = vmatprep.subr.mxu0 0.0
    %5545 = vmatpush1.xpose.msra.mxu0 0.0
    %5546 = vmatprep.subr.mxu0 0.0
    %5547 = vmatpush1.xpose.msra.mxu0 0.0
    %5548 = vmatprep.subr.mxu0 0.0
    %5549 = vmatpush1.xpose.msra.mxu0 0.0
    %5550 = vmatprep.subr.mxu0 0.0
    %5551 = vmatpush1.xpose.msra.mxu0 0.0
    %5552 = vmatprep.subr.mxu0 0.0
    %5553 = vmatpush1.xpose.msra.mxu0 0.0
    %5554 = vmatprep.subr.mxu0 0.0
    %5555 = vmatpush1.xpose.msra.mxu0 0.0
    %5556 = vmatprep.subr.mxu0 0.0
    %5557 = vmatpush1.xpose.msra.mxu0 0.0
    %5558 = vmatprep.subr.mxu0 0.0
    %5559 = vmatpush1.xpose.msra.mxu0 0.0
    %5560 = vmatprep.subr.mxu0 0.0
    %5561 = vmatpush1.xpose.msra.mxu0 0.0
    %5562 = vmatprep.subr.mxu0 0.0
    %5563 = vmatpush1.xpose.msra.mxu0 0.0
    %5564 = vmatprep.subr.mxu0 0.0
    %5565 = vmatpush1.xpose.msra.mxu0 0.0
    %5566 = vmatprep.subr.mxu0 0.0
    %5567 = vmatpush1.xpose.msra.mxu0 0.0
    %5568 = vmatprep.subr.mxu0 0.0
    %5569 = vmatpush1.xpose.msra.mxu0 0.0
    %5570 = vmatprep.subr.mxu0 0.0
    %5571 = vmatpush1.xpose.msra.mxu0 0.0
    %5572 = vmatprep.subr.mxu0 0.0
    %5573 = vmatpush1.xpose.msra.mxu0 0.0
    %5574 = vmatprep.subr.mxu0 0.0
    %5575 = vmatpush1.xpose.msra.mxu0 0.0
    %5576 = vmatprep.subr.mxu0 0.0
    %5577 = vmatpush1.xpose.msra.mxu0 0.0
    %5578 = vmatprep.mubr.f32.mxu0 %v5309
    %5579 = vmatmul.mubr.f32.gmra.mrb[0].mxu0 %v5307
    %v5580 = vpop.f32.mrb[0].mxu0
    %v5581 = vadd.f32 %v5511, %v5580
    %v5582 = vpop.f32.mrb[0].mxu0
    %5583 = vdwg.mxu0
    %5584 = vmatprep.subr.mxu0 %v243
    %5585 = vmatpush1.xpose.msra.mxu0 %v242
    %5586 = vmatprep.subr.mxu0 0.0
    %5587 = vmatpush1.xpose.msra.mxu0 0.0
    %5588 = vmatprep.subr.mxu0 0.0
    %5589 = vmatpush1.xpose.msra.mxu0 0.0
    %5590 = vmatprep.subr.mxu0 0.0
    %5591 = vmatpush1.xpose.msra.mxu0 0.0
    %5592 = vmatprep.subr.mxu0 0.0
    %5593 = vmatpush1.xpose.msra.mxu0 0.0
    %5594 = vmatprep.subr.mxu0 0.0
    %5595 = vmatpush1.xpose.msra.mxu0 0.0
    %5596 = vmatprep.subr.mxu0 0.0
    %5597 = vmatpush1.xpose.msra.mxu0 0.0
    %5598 = vmatprep.subr.mxu0 0.0
    %5599 = vmatpush1.xpose.msra.mxu0 0.0
    %5600 = vmatprep.subr.mxu0 0.0
    %5601 = vmatpush1.xpose.msra.mxu0 0.0
    %5602 = vmatprep.subr.mxu0 0.0
    %5603 = vmatpush1.xpose.msra.mxu0 0.0
    %5604 = vmatprep.subr.mxu0 0.0
    %5605 = vmatpush1.xpose.msra.mxu0 0.0
    %5606 = vmatprep.subr.mxu0 0.0
    %5607 = vmatpush1.xpose.msra.mxu0 0.0
    %5608 = vmatprep.subr.mxu0 0.0
    %5609 = vmatpush1.xpose.msra.mxu0 0.0
    %5610 = vmatprep.subr.mxu0 0.0
    %5611 = vmatpush1.xpose.msra.mxu0 0.0
    %5612 = vmatprep.subr.mxu0 0.0
    %5613 = vmatpush1.xpose.msra.mxu0 0.0
    %5614 = vmatprep.subr.mxu0 0.0
    %5615 = vmatpush1.xpose.msra.mxu0 0.0
    %5616 = vmatprep.subr.mxu0 0.0
    %5617 = vmatpush1.xpose.msra.mxu0 0.0
    %5618 = vmatprep.subr.mxu0 0.0
    %5619 = vmatpush1.xpose.msra.mxu0 0.0
    %5620 = vmatprep.subr.mxu0 0.0
    %5621 = vmatpush1.xpose.msra.mxu0 0.0
    %5622 = vmatprep.subr.mxu0 0.0
    %5623 = vmatpush1.xpose.msra.mxu0 0.0
    %5624 = vmatprep.subr.mxu0 0.0
    %5625 = vmatpush1.xpose.msra.mxu0 0.0
    %5626 = vmatprep.subr.mxu0 0.0
    %5627 = vmatpush1.xpose.msra.mxu0 0.0
    %5628 = vmatprep.subr.mxu0 0.0
    %5629 = vmatpush1.xpose.msra.mxu0 0.0
    %5630 = vmatprep.subr.mxu0 0.0
    %5631 = vmatpush1.xpose.msra.mxu0 0.0
    %5632 = vmatprep.subr.mxu0 0.0
    %5633 = vmatpush1.xpose.msra.mxu0 0.0
    %5634 = vmatprep.subr.mxu0 0.0
    %5635 = vmatpush1.xpose.msra.mxu0 0.0
    %5636 = vmatprep.subr.mxu0 0.0
    %5637 = vmatpush1.xpose.msra.mxu0 0.0
    %5638 = vmatprep.subr.mxu0 0.0
    %5639 = vmatpush1.xpose.msra.mxu0 0.0
    %5640 = vmatprep.subr.mxu0 0.0
    %5641 = vmatpush1.xpose.msra.mxu0 0.0
    %5642 = vmatprep.subr.mxu0 0.0
    %5643 = vmatpush1.xpose.msra.mxu0 0.0
    %5644 = vmatprep.subr.mxu0 0.0
    %5645 = vmatpush1.xpose.msra.mxu0 0.0
    %5646 = vmatprep.subr.mxu0 0.0
    %5647 = vmatpush1.xpose.msra.mxu0 0.0
    %5648 = vmatprep.mubr.f32.mxu0 %v5438
    %5649 = vmatmul.mubr.f32.gmra.mrb[0].mxu0 %v5436
    %v5650 = vpop.f32.mrb[0].mxu0
    %v5651 = vadd.f32 %v5581, %v5650
    %v5652 = vpop.f32.mrb[0].mxu0
    %5653 = vdwg.mxu0
    %5654 = vmatprep.subr.mxu0 %v245
    %5655 = vmatpush1.xpose.msra.mxu0 %v244
    %5656 = vmatprep.subr.mxu0 0.0
    %5657 = vmatpush1.xpose.msra.mxu0 0.0
    %5658 = vmatprep.subr.mxu0 0.0
    %5659 = vmatpush1.xpose.msra.mxu0 0.0
    %5660 = vmatprep.subr.mxu0 0.0
    %5661 = vmatpush1.xpose.msra.mxu0 0.0
    %5662 = vmatprep.subr.mxu0 0.0
    %5663 = vmatpush1.xpose.msra.mxu0 0.0
    %5664 = vmatprep.subr.mxu0 0.0
    %5665 = vmatpush1.xpose.msra.mxu0 0.0
    %5666 = vmatprep.subr.mxu0 0.0
    %5667 = vmatpush1.xpose.msra.mxu0 0.0
    %5668 = vmatprep.subr.mxu0 0.0
    %5669 = vmatpush1.xpose.msra.mxu0 0.0
    %5670 = vmatprep.subr.mxu0 0.0
    %5671 = vmatpush1.xpose.msra.mxu0 0.0
    %5672 = vmatprep.subr.mxu0 0.0
    %5673 = vmatpush1.xpose.msra.mxu0 0.0
    %5674 = vmatprep.subr.mxu0 0.0
    %5675 = vmatpush1.xpose.msra.mxu0 0.0
    %5676 = vmatprep.subr.mxu0 0.0
    %5677 = vmatpush1.xpose.msra.mxu0 0.0
    %5678 = vmatprep.subr.mxu0 0.0
    %5679 = vmatpush1.xpose.msra.mxu0 0.0
    %5680 = vmatprep.subr.mxu0 0.0
    %5681 = vmatpush1.xpose.msra.mxu0 0.0
    %5682 = vmatprep.subr.mxu0 0.0
    %5683 = vmatpush1.xpose.msra.mxu0 0.0
    %5684 = vmatprep.subr.mxu0 0.0
    %5685 = vmatpush1.xpose.msra.mxu0 0.0
    %5686 = vmatprep.subr.mxu0 0.0
    %5687 = vmatpush1.xpose.msra.mxu0 0.0
    %5688 = vmatprep.subr.mxu0 0.0
    %5689 = vmatpush1.xpose.msra.mxu0 0.0
    %5690 = vmatprep.subr.mxu0 0.0
    %5691 = vmatpush1.xpose.msra.mxu0 0.0
    %5692 = vmatprep.subr.mxu0 0.0
    %5693 = vmatpush1.xpose.msra.mxu0 0.0
    %5694 = vmatprep.subr.mxu0 0.0
    %5695 = vmatpush1.xpose.msra.mxu0 0.0
    %5696 = vmatprep.subr.mxu0 0.0
    %5697 = vmatpush1.xpose.msra.mxu0 0.0
    %5698 = vmatprep.subr.mxu0 0.0
    %5699 = vmatpush1.xpose.msra.mxu0 0.0
    %5700 = vmatprep.subr.mxu0 0.0
    %5701 = vmatpush1.xpose.msra.mxu0 0.0
    %5702 = vmatprep.subr.mxu0 0.0
    %5703 = vmatpush1.xpose.msra.mxu0 0.0
    %5704 = vmatprep.subr.mxu0 0.0
    %5705 = vmatpush1.xpose.msra.mxu0 0.0
    %5706 = vmatprep.subr.mxu0 0.0
    %5707 = vmatpush1.xpose.msra.mxu0 0.0
    %5708 = vmatprep.subr.mxu0 0.0
    %5709 = vmatpush1.xpose.msra.mxu0 0.0
    %5710 = vmatprep.subr.mxu0 0.0
    %5711 = vmatpush1.xpose.msra.mxu0 0.0
    %5712 = vmatprep.subr.mxu0 0.0
    %5713 = vmatpush1.xpose.msra.mxu0 0.0
    %5714 = vmatprep.subr.mxu0 0.0
    %5715 = vmatpush1.xpose.msra.mxu0 0.0
    %5716 = vmatprep.subr.mxu0 0.0
    %5717 = vmatpush1.xpose.msra.mxu0 0.0
    %5718 = vmatprep.mubr.f32.mxu0 %v5184
    %5719 = vmatmul.mubr.f32.gmra.mrb[0].mxu0 %v5182
    %v5720 = vpop.f32.mrb[0].mxu0
    %v5721 = vadd.f32 0.0, %v5720
    %v5722 = vpop.f32.mrb[0].mxu0
    %5723 = vdwg.mxu0
    %5724 = vmatprep.subr.mxu0 %v247
    %5725 = vmatpush1.xpose.msra.mxu0 %v246
    %5726 = vmatprep.subr.mxu0 0.0
    %5727 = vmatpush1.xpose.msra.mxu0 0.0
    %5728 = vmatprep.subr.mxu0 0.0
    %5729 = vmatpush1.xpose.msra.mxu0 0.0
    %5730 = vmatprep.subr.mxu0 0.0
    %5731 = vmatpush1.xpose.msra.mxu0 0.0
    %5732 = vmatprep.subr.mxu0 0.0
    %5733 = vmatpush1.xpose.msra.mxu0 0.0
    %5734 = vmatprep.subr.mxu0 0.0
    %5735 = vmatpush1.xpose.msra.mxu0 0.0
    %5736 = vmatprep.subr.mxu0 0.0
    %5737 = vmatpush1.xpose.msra.mxu0 0.0
    %5738 = vmatprep.subr.mxu0 0.0
    %5739 = vmatpush1.xpose.msra.mxu0 0.0
    %5740 = vmatprep.subr.mxu0 0.0
    %5741 = vmatpush1.xpose.msra.mxu0 0.0
    %5742 = vmatprep.subr.mxu0 0.0
    %5743 = vmatpush1.xpose.msra.mxu0 0.0
    %5744 = vmatprep.subr.mxu0 0.0
    %5745 = vmatpush1.xpose.msra.mxu0 0.0
    %5746 = vmatprep.subr.mxu0 0.0
    %5747 = vmatpush1.xpose.msra.mxu0 0.0
    %5748 = vmatprep.subr.mxu0 0.0
    %5749 = vmatpush1.xpose.msra.mxu0 0.0
    %5750 = vmatprep.subr.mxu0 0.0
    %5751 = vmatpush1.xpose.msra.mxu0 0.0
    %5752 = vmatprep.subr.mxu0 0.0
    %5753 = vmatpush1.xpose.msra.mxu0 0.0
    %5754 = vmatprep.subr.mxu0 0.0
    %5755 = vmatpush1.xpose.msra.mxu0 0.0
    %5756 = vmatprep.subr.mxu0 0.0
    %5757 = vmatpush1.xpose.msra.mxu0 0.0
    %5758 = vmatprep.subr.mxu0 0.0
    %5759 = vmatpush1.xpose.msra.mxu0 0.0
    %5760 = vmatprep.subr.mxu0 0.0
    %5761 = vmatpush1.xpose.msra.mxu0 0.0
    %5762 = vmatprep.subr.mxu0 0.0
    %5763 = vmatpush1.xpose.msra.mxu0 0.0
    %5764 = vmatprep.subr.mxu0 0.0
    %5765 = vmatpush1.xpose.msra.mxu0 0.0
    %5766 = vmatprep.subr.mxu0 0.0
    %5767 = vmatpush1.xpose.msra.mxu0 0.0
    %5768 = vmatprep.subr.mxu0 0.0
    %5769 = vmatpush1.xpose.msra.mxu0 0.0
    %5770 = vmatprep.subr.mxu0 0.0
    %5771 = vmatpush1.xpose.msra.mxu0 0.0
    %5772 = vmatprep.subr.mxu0 0.0
    %5773 = vmatpush1.xpose.msra.mxu0 0.0
    %5774 = vmatprep.subr.mxu0 0.0
    %5775 = vmatpush1.xpose.msra.mxu0 0.0
    %5776 = vmatprep.subr.mxu0 0.0
    %5777 = vmatpush1.xpose.msra.mxu0 0.0
    %5778 = vmatprep.subr.mxu0 0.0
    %5779 = vmatpush1.xpose.msra.mxu0 0.0
    %5780 = vmatprep.subr.mxu0 0.0
    %5781 = vmatpush1.xpose.msra.mxu0 0.0
    %5782 = vmatprep.subr.mxu0 0.0
    %5783 = vmatpush1.xpose.msra.mxu0 0.0
    %5784 = vmatprep.subr.mxu0 0.0
    %5785 = vmatpush1.xpose.msra.mxu0 0.0
    %5786 = vmatprep.subr.mxu0 0.0
    %5787 = vmatpush1.xpose.msra.mxu0 0.0
    %5788 = vmatprep.mubr.f32.mxu0 %v5313
    %5789 = vmatmul.mubr.f32.gmra.mrb[0].mxu0 %v5311
    %v5790 = vpop.f32.mrb[0].mxu0
    %v5791 = vadd.f32 %v5721, %v5790
    %v5792 = vpop.f32.mrb[0].mxu0
    %5793 = vdwg.mxu0
    %5794 = vmatprep.subr.mxu0 %v249
    %5795 = vmatpush1.xpose.msra.mxu0 %v248
    %5796 = vmatprep.subr.mxu0 0.0
    %5797 = vmatpush1.xpose.msra.mxu0 0.0
    %5798 = vmatprep.subr.mxu0 0.0
    %5799 = vmatpush1.xpose.msra.mxu0 0.0
    %5800 = vmatprep.subr.mxu0 0.0
    %5801 = vmatpush1.xpose.msra.mxu0 0.0
    %5802 = vmatprep.subr.mxu0 0.0
    %5803 = vmatpush1.xpose.msra.mxu0 0.0
    %5804 = vmatprep.subr.mxu0 0.0
    %5805 = vmatpush1.xpose.msra.mxu0 0.0
    %5806 = vmatprep.subr.mxu0 0.0
    %5807 = vmatpush1.xpose.msra.mxu0 0.0
    %5808 = vmatprep.subr.mxu0 0.0
    %5809 = vmatpush1.xpose.msra.mxu0 0.0
    %5810 = vmatprep.subr.mxu0 0.0
    %5811 = vmatpush1.xpose.msra.mxu0 0.0
    %5812 = vmatprep.subr.mxu0 0.0
    %5813 = vmatpush1.xpose.msra.mxu0 0.0
    %5814 = vmatprep.subr.mxu0 0.0
    %5815 = vmatpush1.xpose.msra.mxu0 0.0
    %5816 = vmatprep.subr.mxu0 0.0
    %5817 = vmatpush1.xpose.msra.mxu0 0.0
    %5818 = vmatprep.subr.mxu0 0.0
    %5819 = vmatpush1.xpose.msra.mxu0 0.0
    %5820 = vmatprep.subr.mxu0 0.0
    %5821 = vmatpush1.xpose.msra.mxu0 0.0
    %5822 = vmatprep.subr.mxu0 0.0
    %5823 = vmatpush1.xpose.msra.mxu0 0.0
    %5824 = vmatprep.subr.mxu0 0.0
    %5825 = vmatpush1.xpose.msra.mxu0 0.0
    %5826 = vmatprep.subr.mxu0 0.0
    %5827 = vmatpush1.xpose.msra.mxu0 0.0
    %5828 = vmatprep.subr.mxu0 0.0
    %5829 = vmatpush1.xpose.msra.mxu0 0.0
    %5830 = vmatprep.subr.mxu0 0.0
    %5831 = vmatpush1.xpose.msra.mxu0 0.0
    %5832 = vmatprep.subr.mxu0 0.0
    %5833 = vmatpush1.xpose.msra.mxu0 0.0
    %5834 = vmatprep.subr.mxu0 0.0
    %5835 = vmatpush1.xpose.msra.mxu0 0.0
    %5836 = vmatprep.subr.mxu0 0.0
    %5837 = vmatpush1.xpose.msra.mxu0 0.0
    %5838 = vmatprep.subr.mxu0 0.0
    %5839 = vmatpush1.xpose.msra.mxu0 0.0
    %5840 = vmatprep.subr.mxu0 0.0
    %5841 = vmatpush1.xpose.msra.mxu0 0.0
    %5842 = vmatprep.subr.mxu0 0.0
    %5843 = vmatpush1.xpose.msra.mxu0 0.0
    %5844 = vmatprep.subr.mxu0 0.0
    %5845 = vmatpush1.xpose.msra.mxu0 0.0
    %5846 = vmatprep.subr.mxu0 0.0
    %5847 = vmatpush1.xpose.msra.mxu0 0.0
    %5848 = vmatprep.subr.mxu0 0.0
    %5849 = vmatpush1.xpose.msra.mxu0 0.0
    %5850 = vmatprep.subr.mxu0 0.0
    %5851 = vmatpush1.xpose.msra.mxu0 0.0
    %5852 = vmatprep.subr.mxu0 0.0
    %5853 = vmatpush1.xpose.msra.mxu0 0.0
    %5854 = vmatprep.subr.mxu0 0.0
    %5855 = vmatpush1.xpose.msra.mxu0 0.0
    %5856 = vmatprep.subr.mxu0 0.0
    %5857 = vmatpush1.xpose.msra.mxu0 0.0
    %5858 = vmatprep.mubr.f32.mxu0 %v5442
    %5859 = vmatmul.mubr.f32.gmra.mrb[0].mxu0 %v5440
    %v5860 = vpop.f32.mrb[0].mxu0
    %v5861 = vadd.f32 %v5791, %v5860
    %v5862 = vpop.f32.mrb[0].mxu0
    %5863 = vdwg.mxu0
    %v5864 = vsel %vm2828, %v5651, -inf
    %5865 = vmax.xlane.f32.xlu0 %v5864
    %v5866 = vpop.xlane.xlu0 %5865
    %v5867 = vsel %vm2828, %v5861, -inf
    %5868 = vmax.xlane.f32.xlu0 %v5867
    %v5869 = vpop.xlane.xlu0 %5868
    %v5870 = vsub.f32 %v5651, %v5866
    %v5871 = vsub.f32 %v5861, %v5869
    %v5872 = vmul.f32 %v5870, 1.442695
    %v5873 = vpow.pop %v5872
    %v5874 = vmul.f32 %v5871, 1.442695
    %v5875 = vpow.pop %v5874
    %v5876 = vsel %vm2828, %v5873, 0.0
    %5877 = vadd.xlane.f32.xlu0 %v5876
    %v5878 = vpop.xlane.xlu0 %5877
    %v5879 = vsel %vm2828, %v5875, 0.0
    %5880 = vadd.xlane.f32.xlu0 %v5879
    %v5881 = vpop.xlane.xlu0 %5880
    %v5882 = vrcp.pop %v5878
    %v5883 = vmul.f32 %v5873, %v5882
    %v5884 = vrcp.pop %v5881
    %v5885 = vmul.f32 %v5875, %v5884
    %v5887 = vsel %vm2828, %v5883, 0
    %5889 = vmatprep.subr.mxu0 %v239
    %5890 = vmatpush1.msra.mxu0 %v238
    %5891 = vmatprep.subr.mxu0 0.0
    %5892 = vmatpush1.msra.mxu0 0.0
    %5893 = vmatprep.subr.mxu0 0.0
    %5894 = vmatpush1.msra.mxu0 0.0
    %5895 = vmatprep.subr.mxu0 0.0
    %5896 = vmatpush1.msra.mxu0 0.0
    %5897 = vmatprep.subr.mxu0 0.0
    %5898 = vmatpush1.msra.mxu0 0.0
    %5899 = vmatprep.subr.mxu0 0.0
    %5900 = vmatpush1.msra.mxu0 0.0
    %5901 = vmatprep.subr.mxu0 0.0
    %5902 = vmatpush1.msra.mxu0 0.0
    %5903 = vmatprep.subr.mxu0 0.0
    %5904 = vmatpush1.msra.mxu0 0.0
    %5905 = vmatprep.subr.mxu0 0.0
    %5906 = vmatpush1.msra.mxu0 0.0
    %5907 = vmatprep.subr.mxu0 0.0
    %5908 = vmatpush1.msra.mxu0 0.0
    %5909 = vmatprep.subr.mxu0 0.0
    %5910 = vmatpush1.msra.mxu0 0.0
    %5911 = vmatprep.subr.mxu0 0.0
    %5912 = vmatpush1.msra.mxu0 0.0
    %5913 = vmatprep.subr.mxu0 0.0
    %5914 = vmatpush1.msra.mxu0 0.0
    %5915 = vmatprep.subr.mxu0 0.0
    %5916 = vmatpush1.msra.mxu0 0.0
    %5917 = vmatprep.subr.mxu0 0.0
    %5918 = vmatpush1.msra.mxu0 0.0
    %5919 = vmatprep.subr.mxu0 0.0
    %5920 = vmatpush1.msra.mxu0 0.0
    %5921 = vmatprep.subr.mxu0 0.0
    %5922 = vmatpush1.msra.mxu0 0.0
    %5923 = vmatprep.subr.mxu0 0.0
    %5924 = vmatpush1.msra.mxu0 0.0
    %5925 = vmatprep.subr.mxu0 0.0
    %5926 = vmatpush1.msra.mxu0 0.0
    %5927 = vmatprep.subr.mxu0 0.0
    %5928 = vmatpush1.msra.mxu0 0.0
    %5929 = vmatprep.subr.mxu0 0.0
    %5930 = vmatpush1.msra.mxu0 0.0
    %5931 = vmatprep.subr.mxu0 0.0
    %5932 = vmatpush1.msra.mxu0 0.0
    %5933 = vmatprep.subr.mxu0 0.0
    %5934 = vmatpush1.msra.mxu0 0.0
    %5935 = vmatprep.subr.mxu0 0.0
    %5936 = vmatpush1.msra.mxu0 0.0
    %5937 = vmatprep.subr.mxu0 0.0
    %5938 = vmatpush1.msra.mxu0 0.0
    %5939 = vmatprep.subr.mxu0 0.0
    %5940 = vmatpush1.msra.mxu0 0.0
    %5941 = vmatprep.subr.mxu0 0.0
    %5942 = vmatpush1.msra.mxu0 0.0
    %5943 = vmatprep.subr.mxu0 0.0
    %5944 = vmatpush1.msra.mxu0 0.0
    %5945 = vmatprep.subr.mxu0 0.0
    %5946 = vmatpush1.msra.mxu0 0.0
    %5947 = vmatprep.subr.mxu0 0.0
    %5948 = vmatpush1.msra.mxu0 0.0
    %5949 = vmatprep.subr.mxu0 0.0
    %5950 = vmatpush1.msra.mxu0 0.0
    %5951 = vmatprep.subr.mxu0 0.0
    %5952 = vmatpush1.msra.mxu0 0.0
    %5953 = vmatprep.mubr.f32.mxu0 0.0
    %5954 = vmatmul.mubr.f32.gmra.mrb[0].mxu0 %v5887
    %v5955 = vpop.f32.mrb[0].mxu0
    %v5956 = vadd.f32 0.0, %v5955
    %v5957 = vpop.f32.mrb[0].mxu0
    %v5958 = vadd.f32 0.0, %v5957
    %5959 = vdwg.mxu0
    %5960 = vmatprep.subr.mxu0 %v241
    %5961 = vmatpush1.msra.mxu0 %v240
    %5962 = vmatprep.subr.mxu0 0.0
    %5963 = vmatpush1.msra.mxu0 0.0
    %5964 = vmatprep.subr.mxu0 0.0
    %5965 = vmatpush1.msra.mxu0 0.0
    %5966 = vmatprep.subr.mxu0 0.0
    %5967 = vmatpush1.msra.mxu0 0.0
    %5968 = vmatprep.subr.mxu0 0.0
    %5969 = vmatpush1.msra.mxu0 0.0
    %5970 = vmatprep.subr.mxu0 0.0
    %5971 = vmatpush1.msra.mxu0 0.0
    %5972 = vmatprep.subr.mxu0 0.0
    %5973 = vmatpush1.msra.mxu0 0.0
    %5974 = vmatprep.subr.mxu0 0.0
    %5975 = vmatpush1.msra.mxu0 0.0
    %5976 = vmatprep.subr.mxu0 0.0
    %5977 = vmatpush1.msra.mxu0 0.0
    %5978 = vmatprep.subr.mxu0 0.0
    %5979 = vmatpush1.msra.mxu0 0.0
    %5980 = vmatprep.subr.mxu0 0.0
    %5981 = vmatpush1.msra.mxu0 0.0
    %5982 = vmatprep.subr.mxu0 0.0
    %5983 = vmatpush1.msra.mxu0 0.0
    %5984 = vmatprep.subr.mxu0 0.0
    %5985 = vmatpush1.msra.mxu0 0.0
    %5986 = vmatprep.subr.mxu0 0.0
    %5987 = vmatpush1.msra.mxu0 0.0
    %5988 = vmatprep.subr.mxu0 0.0
    %5989 = vmatpush1.msra.mxu0 0.0
    %5990 = vmatprep.subr.mxu0 0.0
    %5991 = vmatpush1.msra.mxu0 0.0
    %5992 = vmatprep.subr.mxu0 0.0
    %5993 = vmatpush1.msra.mxu0 0.0
    %5994 = vmatprep.subr.mxu0 0.0
    %5995 = vmatpush1.msra.mxu0 0.0
    %5996 = vmatprep.subr.mxu0 0.0
    %5997 = vmatpush1.msra.mxu0 0.0
    %5998 = vmatprep.subr.mxu0 0.0
    %5999 = vmatpush1.msra.mxu0 0.0
    %6000 = vmatprep.subr.mxu0 0.0
    %6001 = vmatpush1.msra.mxu0 0.0
    %6002 = vmatprep.subr.mxu0 0.0
    %6003 = vmatpush1.msra.mxu0 0.0
    %6004 = vmatprep.subr.mxu0 0.0
    %6005 = vmatpush1.msra.mxu0 0.0
    %6006 = vmatprep.subr.mxu0 0.0
    %6007 = vmatpush1.msra.mxu0 0.0
    %6008 = vmatprep.subr.mxu0 0.0
    %6009 = vmatpush1.msra.mxu0 0.0
    %6010 = vmatprep.subr.mxu0 0.0
    %6011 = vmatpush1.msra.mxu0 0.0
    %6012 = vmatprep.subr.mxu0 0.0
    %6013 = vmatpush1.msra.mxu0 0.0
    %6014 = vmatprep.subr.mxu0 0.0
    %6015 = vmatpush1.msra.mxu0 0.0
    %6016 = vmatprep.subr.mxu0 0.0
    %6017 = vmatpush1.msra.mxu0 0.0
    %6018 = vmatprep.subr.mxu0 0.0
    %6019 = vmatpush1.msra.mxu0 0.0
    %6020 = vmatprep.subr.mxu0 0.0
    %6021 = vmatpush1.msra.mxu0 0.0
    %6022 = vmatprep.subr.mxu0 0.0
    %6023 = vmatpush1.msra.mxu0 0.0
    %6024 = vmatprep.mubr.f32.mxu0 0.0
    %6025 = vmatmul.mubr.f32.gmra.mrb[0].mxu0 %v5887
    %v6026 = vpop.f32.mrb[0].mxu0
    %v6027 = vadd.f32 0.0, %v6026
    %v6028 = vpop.f32.mrb[0].mxu0
    %v6029 = vadd.f32 0.0, %v6028
    %6030 = vdwg.mxu0
    %6031 = vmatprep.subr.mxu0 %v243
    %6032 = vmatpush1.msra.mxu0 %v242
    %6033 = vmatprep.subr.mxu0 0.0
    %6034 = vmatpush1.msra.mxu0 0.0
    %6035 = vmatprep.subr.mxu0 0.0
    %6036 = vmatpush1.msra.mxu0 0.0
    %6037 = vmatprep.subr.mxu0 0.0
    %6038 = vmatpush1.msra.mxu0 0.0
    %6039 = vmatprep.subr.mxu0 0.0
    %6040 = vmatpush1.msra.mxu0 0.0
    %6041 = vmatprep.subr.mxu0 0.0
    %6042 = vmatpush1.msra.mxu0 0.0
    %6043 = vmatprep.subr.mxu0 0.0
    %6044 = vmatpush1.msra.mxu0 0.0
    %6045 = vmatprep.subr.mxu0 0.0
    %6046 = vmatpush1.msra.mxu0 0.0
    %6047 = vmatprep.subr.mxu0 0.0
    %6048 = vmatpush1.msra.mxu0 0.0
    %6049 = vmatprep.subr.mxu0 0.0
    %6050 = vmatpush1.msra.mxu0 0.0
    %6051 = vmatprep.subr.mxu0 0.0
    %6052 = vmatpush1.msra.mxu0 0.0
    %6053 = vmatprep.subr.mxu0 0.0
    %6054 = vmatpush1.msra.mxu0 0.0
    %6055 = vmatprep.subr.mxu0 0.0
    %6056 = vmatpush1.msra.mxu0 0.0
    %6057 = vmatprep.subr.mxu0 0.0
    %6058 = vmatpush1.msra.mxu0 0.0
    %6059 = vmatprep.subr.mxu0 0.0
    %6060 = vmatpush1.msra.mxu0 0.0
    %6061 = vmatprep.subr.mxu0 0.0
    %6062 = vmatpush1.msra.mxu0 0.0
    %6063 = vmatprep.subr.mxu0 0.0
    %6064 = vmatpush1.msra.mxu0 0.0
    %6065 = vmatprep.subr.mxu0 0.0
    %6066 = vmatpush1.msra.mxu0 0.0
    %6067 = vmatprep.subr.mxu0 0.0
    %6068 = vmatpush1.msra.mxu0 0.0
    %6069 = vmatprep.subr.mxu0 0.0
    %6070 = vmatpush1.msra.mxu0 0.0
    %6071 = vmatprep.subr.mxu0 0.0
    %6072 = vmatpush1.msra.mxu0 0.0
    %6073 = vmatprep.subr.mxu0 0.0
    %6074 = vmatpush1.msra.mxu0 0.0
    %6075 = vmatprep.subr.mxu0 0.0
    %6076 = vmatpush1.msra.mxu0 0.0
    %6077 = vmatprep.subr.mxu0 0.0
    %6078 = vmatpush1.msra.mxu0 0.0
    %6079 = vmatprep.subr.mxu0 0.0
    %6080 = vmatpush1.msra.mxu0 0.0
    %6081 = vmatprep.subr.mxu0 0.0
    %6082 = vmatpush1.msra.mxu0 0.0
    %6083 = vmatprep.subr.mxu0 0.0
    %6084 = vmatpush1.msra.mxu0 0.0
    %6085 = vmatprep.subr.mxu0 0.0
    %6086 = vmatpush1.msra.mxu0 0.0
    %6087 = vmatprep.subr.mxu0 0.0
    %6088 = vmatpush1.msra.mxu0 0.0
    %6089 = vmatprep.subr.mxu0 0.0
    %6090 = vmatpush1.msra.mxu0 0.0
    %6091 = vmatprep.subr.mxu0 0.0
    %6092 = vmatpush1.msra.mxu0 0.0
    %6093 = vmatprep.subr.mxu0 0.0
    %6094 = vmatpush1.msra.mxu0 0.0
    %6095 = vmatprep.mubr.f32.mxu0 0.0
    %6096 = vmatmul.mubr.f32.gmra.mrb[0].mxu0 %v5887
    %v6097 = vpop.f32.mrb[0].mxu0
    %v6098 = vadd.f32 0.0, %v6097
    %v6099 = vpop.f32.mrb[0].mxu0
    %v6100 = vadd.f32 0.0, %v6099
    %6101 = vdwg.mxu0
    %v6103 = vsel %vm2828, %v5885, 0
    %6105 = vmatprep.subr.mxu0 %v245
    %6106 = vmatpush1.msra.mxu0 %v244
    %6107 = vmatprep.subr.mxu0 0.0
    %6108 = vmatpush1.msra.mxu0 0.0
    %6109 = vmatprep.subr.mxu0 0.0
    %6110 = vmatpush1.msra.mxu0 0.0
    %6111 = vmatprep.subr.mxu0 0.0
    %6112 = vmatpush1.msra.mxu0 0.0
    %6113 = vmatprep.subr.mxu0 0.0
    %6114 = vmatpush1.msra.mxu0 0.0
    %6115 = vmatprep.subr.mxu0 0.0
    %6116 = vmatpush1.msra.mxu0 0.0
    %6117 = vmatprep.subr.mxu0 0.0
    %6118 = vmatpush1.msra.mxu0 0.0
    %6119 = vmatprep.subr.mxu0 0.0
    %6120 = vmatpush1.msra.mxu0 0.0
    %6121 = vmatprep.subr.mxu0 0.0
    %6122 = vmatpush1.msra.mxu0 0.0
    %6123 = vmatprep.subr.mxu0 0.0
    %6124 = vmatpush1.msra.mxu0 0.0
    %6125 = vmatprep.subr.mxu0 0.0
    %6126 = vmatpush1.msra.mxu0 0.0
    %6127 = vmatprep.subr.mxu0 0.0
    %6128 = vmatpush1.msra.mxu0 0.0
    %6129 = vmatprep.subr.mxu0 0.0
    %6130 = vmatpush1.msra.mxu0 0.0
    %6131 = vmatprep.subr.mxu0 0.0
    %6132 = vmatpush1.msra.mxu0 0.0
    %6133 = vmatprep.subr.mxu0 0.0
    %6134 = vmatpush1.msra.mxu0 0.0
    %6135 = vmatprep.subr.mxu0 0.0
    %6136 = vmatpush1.msra.mxu0 0.0
    %6137 = vmatprep.subr.mxu0 0.0
    %6138 = vmatpush1.msra.mxu0 0.0
    %6139 = vmatprep.subr.mxu0 0.0
    %6140 = vmatpush1.msra.mxu0 0.0
    %6141 = vmatprep.subr.mxu0 0.0
    %6142 = vmatpush1.msra.mxu0 0.0
    %6143 = vmatprep.subr.mxu0 0.0
    %6144 = vmatpush1.msra.mxu0 0.0
    %6145 = vmatprep.subr.mxu0 0.0
    %6146 = vmatpush1.msra.mxu0 0.0
    %6147 = vmatprep.subr.mxu0 0.0
    %6148 = vmatpush1.msra.mxu0 0.0
    %6149 = vmatprep.subr.mxu0 0.0
    %6150 = vmatpush1.msra.mxu0 0.0
    %6151 = vmatprep.subr.mxu0 0.0
    %6152 = vmatpush1.msra.mxu0 0.0
    %6153 = vmatprep.subr.mxu0 0.0
    %6154 = vmatpush1.msra.mxu0 0.0
    %6155 = vmatprep.subr.mxu0 0.0
    %6156 = vmatpush1.msra.mxu0 0.0
    %6157 = vmatprep.subr.mxu0 0.0
    %6158 = vmatpush1.msra.mxu0 0.0
    %6159 = vmatprep.subr.mxu0 0.0
    %6160 = vmatpush1.msra.mxu0 0.0
    %6161 = vmatprep.subr.mxu0 0.0
    %6162 = vmatpush1.msra.mxu0 0.0
    %6163 = vmatprep.subr.mxu0 0.0
    %6164 = vmatpush1.msra.mxu0 0.0
    %6165 = vmatprep.subr.mxu0 0.0
    %6166 = vmatpush1.msra.mxu0 0.0
    %6167 = vmatprep.subr.mxu0 0.0
    %6168 = vmatpush1.msra.mxu0 0.0
    %6169 = vmatprep.mubr.f32.mxu0 0.0
    %6170 = vmatmul.mubr.f32.gmra.mrb[0].mxu0 %v6103
    %v6171 = vpop.f32.mrb[0].mxu0
    %v6172 = vadd.f32 0.0, %v6171
    %v6173 = vpop.f32.mrb[0].mxu0
    %v6174 = vadd.f32 0.0, %v6173
    %6175 = vdwg.mxu0
    %6176 = vmatprep.subr.mxu0 %v247
    %6177 = vmatpush1.msra.mxu0 %v246
    %6178 = vmatprep.subr.mxu0 0.0
    %6179 = vmatpush1.msra.mxu0 0.0
    %6180 = vmatprep.subr.mxu0 0.0
    %6181 = vmatpush1.msra.mxu0 0.0
    %6182 = vmatprep.subr.mxu0 0.0
    %6183 = vmatpush1.msra.mxu0 0.0
    %6184 = vmatprep.subr.mxu0 0.0
    %6185 = vmatpush1.msra.mxu0 0.0
    %6186 = vmatprep.subr.mxu0 0.0
    %6187 = vmatpush1.msra.mxu0 0.0
    %6188 = vmatprep.subr.mxu0 0.0
    %6189 = vmatpush1.msra.mxu0 0.0
    %6190 = vmatprep.subr.mxu0 0.0
    %6191 = vmatpush1.msra.mxu0 0.0
    %6192 = vmatprep.subr.mxu0 0.0
    %6193 = vmatpush1.msra.mxu0 0.0
    %6194 = vmatprep.subr.mxu0 0.0
    %6195 = vmatpush1.msra.mxu0 0.0
    %6196 = vmatprep.subr.mxu0 0.0
    %6197 = vmatpush1.msra.mxu0 0.0
    %6198 = vmatprep.subr.mxu0 0.0
    %6199 = vmatpush1.msra.mxu0 0.0
    %6200 = vmatprep.subr.mxu0 0.0
    %6201 = vmatpush1.msra.mxu0 0.0
    %6202 = vmatprep.subr.mxu0 0.0
    %6203 = vmatpush1.msra.mxu0 0.0
    %6204 = vmatprep.subr.mxu0 0.0
    %6205 = vmatpush1.msra.mxu0 0.0
    %6206 = vmatprep.subr.mxu0 0.0
    %6207 = vmatpush1.msra.mxu0 0.0
    %6208 = vmatprep.subr.mxu0 0.0
    %6209 = vmatpush1.msra.mxu0 0.0
    %6210 = vmatprep.subr.mxu0 0.0
    %6211 = vmatpush1.msra.mxu0 0.0
    %6212 = vmatprep.subr.mxu0 0.0
    %6213 = vmatpush1.msra.mxu0 0.0
    %6214 = vmatprep.subr.mxu0 0.0
    %6215 = vmatpush1.msra.mxu0 0.0
    %6216 = vmatprep.subr.mxu0 0.0
    %6217 = vmatpush1.msra.mxu0 0.0
    %6218 = vmatprep.subr.mxu0 0.0
    %6219 = vmatpush1.msra.mxu0 0.0
    %6220 = vmatprep.subr.mxu0 0.0
    %6221 = vmatpush1.msra.mxu0 0.0
    %6222 = vmatprep.subr.mxu0 0.0
    %6223 = vmatpush1.msra.mxu0 0.0
    %6224 = vmatprep.subr.mxu0 0.0
    %6225 = vmatpush1.msra.mxu0 0.0
    %6226 = vmatprep.subr.mxu0 0.0
    %6227 = vmatpush1.msra.mxu0 0.0
    %6228 = vmatprep.subr.mxu0 0.0
    %6229 = vmatpush1.msra.mxu0 0.0
    %6230 = vmatprep.subr.mxu0 0.0
    %6231 = vmatpush1.msra.mxu0 0.0
    %6232 = vmatprep.subr.mxu0 0.0
    %6233 = vmatpush1.msra.mxu0 0.0
    %6234 = vmatprep.subr.mxu0 0.0
    %6235 = vmatpush1.msra.mxu0 0.0
    %6236 = vmatprep.subr.mxu0 0.0
    %6237 = vmatpush1.msra.mxu0 0.0
    %6238 = vmatprep.subr.mxu0 0.0
    %6239 = vmatpush1.msra.mxu0 0.0
    %6240 = vmatprep.mubr.f32.mxu0 0.0
    %6241 = vmatmul.mubr.f32.gmra.mrb[0].mxu0 %v6103
    %v6242 = vpop.f32.mrb[0].mxu0
    %v6243 = vadd.f32 0.0, %v6242
    %v6244 = vpop.f32.mrb[0].mxu0
    %v6245 = vadd.f32 0.0, %v6244
    %6246 = vdwg.mxu0
    %6247 = vmatprep.subr.mxu0 %v249
    %6248 = vmatpush1.msra.mxu0 %v248
    %6249 = vmatprep.subr.mxu0 0.0
    %6250 = vmatpush1.msra.mxu0 0.0
    %6251 = vmatprep.subr.mxu0 0.0
    %6252 = vmatpush1.msra.mxu0 0.0
    %6253 = vmatprep.subr.mxu0 0.0
    %6254 = vmatpush1.msra.mxu0 0.0
    %6255 = vmatprep.subr.mxu0 0.0
    %6256 = vmatpush1.msra.mxu0 0.0
    %6257 = vmatprep.subr.mxu0 0.0
    %6258 = vmatpush1.msra.mxu0 0.0
    %6259 = vmatprep.subr.mxu0 0.0
    %6260 = vmatpush1.msra.mxu0 0.0
    %6261 = vmatprep.subr.mxu0 0.0
    %6262 = vmatpush1.msra.mxu0 0.0
    %6263 = vmatprep.subr.mxu0 0.0
    %6264 = vmatpush1.msra.mxu0 0.0
    %6265 = vmatprep.subr.mxu0 0.0
    %6266 = vmatpush1.msra.mxu0 0.0
    %6267 = vmatprep.subr.mxu0 0.0
    %6268 = vmatpush1.msra.mxu0 0.0
    %6269 = vmatprep.subr.mxu0 0.0
    %6270 = vmatpush1.msra.mxu0 0.0
    %6271 = vmatprep.subr.mxu0 0.0
    %6272 = vmatpush1.msra.mxu0 0.0
    %6273 = vmatprep.subr.mxu0 0.0
    %6274 = vmatpush1.msra.mxu0 0.0
    %6275 = vmatprep.subr.mxu0 0.0
    %6276 = vmatpush1.msra.mxu0 0.0
    %6277 = vmatprep.subr.mxu0 0.0
    %6278 = vmatpush1.msra.mxu0 0.0
    %6279 = vmatprep.subr.mxu0 0.0
    %6280 = vmatpush1.msra.mxu0 0.0
    %6281 = vmatprep.subr.mxu0 0.0
    %6282 = vmatpush1.msra.mxu0 0.0
    %6283 = vmatprep.subr.mxu0 0.0
    %6284 = vmatpush1.msra.mxu0 0.0
    %6285 = vmatprep.subr.mxu0 0.0
    %6286 = vmatpush1.msra.mxu0 0.0
    %6287 = vmatprep.subr.mxu0 0.0
    %6288 = vmatpush1.msra.mxu0 0.0
    %6289 = vmatprep.subr.mxu0 0.0
    %6290 = vmatpush1.msra.mxu0 0.0
    %6291 = vmatprep.subr.mxu0 0.0
    %6292 = vmatpush1.msra.mxu0 0.0
    %6293 = vmatprep.subr.mxu0 0.0
    %6294 = vmatpush1.msra.mxu0 0.0
    %6295 = vmatprep.subr.mxu0 0.0
    %6296 = vmatpush1.msra.mxu0 0.0
    %6297 = vmatprep.subr.mxu0 0.0
    %6298 = vmatpush1.msra.mxu0 0.0
    %6299 = vmatprep.subr.mxu0 0.0
    %6300 = vmatpush1.msra.mxu0 0.0
    %6301 = vmatprep.subr.mxu0 0.0
    %6302 = vmatpush1.msra.mxu0 0.0
    %6303 = vmatprep.subr.mxu0 0.0
    %6304 = vmatpush1.msra.mxu0 0.0
    %6305 = vmatprep.subr.mxu0 0.0
    %6306 = vmatpush1.msra.mxu0 0.0
    %6307 = vmatprep.subr.mxu0 0.0
    %6308 = vmatpush1.msra.mxu0 0.0
    %6309 = vmatprep.subr.mxu0 0.0
    %6310 = vmatpush1.msra.mxu0 0.0
    %6311 = vmatprep.mubr.f32.mxu0 0.0
    %6312 = vmatmul.mubr.f32.gmra.mrb[0].mxu0 %v6103
    %v6313 = vpop.f32.mrb[0].mxu0
    %v6314 = vadd.f32 0.0, %v6313
    %v6315 = vpop.f32.mrb[0].mxu0
    %v6316 = vadd.f32 0.0, %v6315
    %6317 = vdwg.mxu0
    %v6318 = vlaneseq
    %v6319 = vshrl.u32 %v6318, 7
    %v6320 = vsub.s32 0, %v6319
    %v6321 = vrot.slane %v3322, %v6320
    %6323 = vbcast.lane.b32.xlu0 %v6321, 256
    %v6324 = vpop.permute.xlu0 %6323
    %v6325 = vlaneseq
    %v6326 = vshrl.u32 %v6325, 7
    %v6327 = vsub.s32 1, %v6326
    %v6328 = vrot.slane %v3322, %v6327
    %6330 = vbcast.lane.b32.xlu0 %v6328, 256
    %v6331 = vpop.permute.xlu0 %6330
    %v6332 = vmul.f32 %v6324, %v5956
    %v6333 = vmul.f32 %v6324, %v5958
    %v6334 = vmul.f32 %v6324, %v6027
    %v6335 = vmul.f32 %v6324, %v6029
    %v6336 = vmul.f32 %v6324, %v6098
    %v6337 = vmul.f32 %v6324, %v6100
    %v6338 = vmul.f32 %v6331, %v6172
    %v6339 = vmul.f32 %v6331, %v6174
    %v6340 = vmul.f32 %v6331, %v6243
    %v6341 = vmul.f32 %v6331, %v6245
    %v6342 = vmul.f32 %v6331, %v6314
    %v6343 = vmul.f32 %v6331, %v6316
    %v6344 = vadd.f32 %v238, %v6332
    %v6345 = vadd.f32 %v239, %v6333
    %v6346 = vadd.f32 %v240, %v6334
    %v6347 = vadd.f32 %v241, %v6335
    %v6348 = vadd.f32 %v242, %v6336
    %v6349 = vadd.f32 %v243, %v6337
    %v6350 = vadd.f32 %v244, %v6338
    %v6351 = vadd.f32 %v245, %v6339
    %v6352 = vadd.f32 %v246, %v6340
    %v6353 = vadd.f32 %v247, %v6341
    %v6354 = vadd.f32 %v248, %v6342
    %v6355 = vadd.f32 %v249, %v6343
    %v6356 = vpack.c.bf16 %v3315, %v3309
    %v6357 = vpack.c.bf16 %v3316, %v3310
    %v6358 = vpack.c.bf16 %v3317, %v3311
    %v6359 = vpack.c.bf16 %v3318, %v3312
    %v6360 = vpack.c.bf16 %v3319, %v3313
    %v6361 = vpack.c.bf16 %v3320, %v3314
    %v6362 = vpack.c.bf16 %v6350, %v6344
    %v6363 = vpack.c.bf16 %v6351, %v6345
    %v6364 = vpack.c.bf16 %v6352, %v6346
    %v6365 = vpack.c.bf16 %v6353, %v6347
    %v6366 = vpack.c.bf16 %v6354, %v6348
    %v6367 = vpack.c.bf16 %v6355, %v6349
    %s6368 = smul.u32 4, 192
    %s6369 = smul.u32 %s6368, 6
    %s6370 = sshll.u32 %s6369, 4
    %6371 = dma.done [#allocation4], %s6370
    %v6372 = vld [vmem:[#allocation2] sm:$0xff]
    %v6373 = vld [vmem:[#allocation2 + $0x8] sm:$0xff]
    %v6374 = vld [vmem:[#allocation2 + $0x10] sm:$0xff]
    %v6375 = vld [vmem:[#allocation2 + $0x18] sm:$0xff]
    %v6376 = vld [vmem:[#allocation2 + $0x20] sm:$0xff]
    %v6377 = vld [vmem:[#allocation2 + $0x28] sm:$0xff]
    %v6378 = vld [vmem:[#allocation2 + $0x30] sm:$0xff]
    %v6379 = vld [vmem:[#allocation2 + $0x38] sm:$0xff]
    %v6380 = vld [vmem:[#allocation2 + $0x40] sm:$0xff]
    %v6381 = vld [vmem:[#allocation2 + $0x48] sm:$0xff]
    %v6382 = vld [vmem:[#allocation2 + $0x50] sm:$0xff]
    %v6383 = vld [vmem:[#allocation2 + $0x58] sm:$0xff]
    %v6384 = vld [vmem:[#allocation2 + $0x60] sm:$0xff]
    %v6385 = vld [vmem:[#allocation2 + $0x68] sm:$0xff]
    %v6386 = vld [vmem:[#allocation2 + $0x70] sm:$0xff]
    %v6387 = vld [vmem:[#allocation2 + $0x78] sm:$0xff]
    %v6388 = vld [vmem:[#allocation2 + $0x80] sm:$0xff]
    %v6389 = vld [vmem:[#allocation2 + $0x88] sm:$0xff]
    %v6390 = vld [vmem:[#allocation2 + $0x90] sm:$0xff]
    %v6391 = vld [vmem:[#allocation2 + $0x98] sm:$0xff]
    %v6392 = vld [vmem:[#allocation2 + $0xa0] sm:$0xff]
    %v6393 = vld [vmem:[#allocation2 + $0xa8] sm:$0xff]
    %v6394 = vld [vmem:[#allocation2 + $0xb0] sm:$0xff]
    %v6395 = vld [vmem:[#allocation2 + $0xb8] sm:$0xff]
    %v6396 = vld [vmem:[#allocation2 + $0xc0] sm:$0xff]
    %v6397 = vld [vmem:[#allocation2 + $0xc8] sm:$0xff]
    %v6398 = vld [vmem:[#allocation2 + $0xd0] sm:$0xff]
    %v6399 = vld [vmem:[#allocation2 + $0xd8] sm:$0xff]
    %v6400 = vld [vmem:[#allocation2 + $0xe0] sm:$0xff]
    %v6401 = vld [vmem:[#allocation2 + $0xe8] sm:$0xff]
    %v6402 = vld [vmem:[#allocation2 + $0xf0] sm:$0xff]
    %v6403 = vld [vmem:[#allocation2 + $0xf8] sm:$0xff]
    %v6404 = vld [vmem:[#allocation2 + $0x100] sm:$0xff]
    %v6405 = vld [vmem:[#allocation2 + $0x108] sm:$0xff]
    %v6406 = vld [vmem:[#allocation2 + $0x110] sm:$0xff]
    %v6407 = vld [vmem:[#allocation2 + $0x118] sm:$0xff]
    %v6408 = vld [vmem:[#allocation2 + $0x120] sm:$0xff]
    %v6409 = vld [vmem:[#allocation2 + $0x128] sm:$0xff]
    %v6410 = vld [vmem:[#allocation2 + $0x130] sm:$0xff]
    %v6411 = vld [vmem:[#allocation2 + $0x138] sm:$0xff]
    %v6412 = vld [vmem:[#allocation2 + $0x140] sm:$0xff]
    %v6413 = vld [vmem:[#allocation2 + $0x148] sm:$0xff]
    %v6414 = vld [vmem:[#allocation2 + $0x150] sm:$0xff]
    %v6415 = vld [vmem:[#allocation2 + $0x158] sm:$0xff]
    %v6416 = vld [vmem:[#allocation2 + $0x160] sm:$0xff]
    %v6417 = vld [vmem:[#allocation2 + $0x168] sm:$0xff]
    %v6418 = vld [vmem:[#allocation2 + $0x170] sm:$0xff]
    %v6419 = vld [vmem:[#allocation2 + $0x178] sm:$0xff]
    %v6420 = vld [vmem:[#allocation2 + $0x180] sm:$0xff]
    %v6421 = vld [vmem:[#allocation2 + $0x188] sm:$0xff]
    %v6422 = vld [vmem:[#allocation2 + $0x190] sm:$0xff]
    %v6423 = vld [vmem:[#allocation2 + $0x198] sm:$0xff]
    %v6424 = vld [vmem:[#allocation2 + $0x1a0] sm:$0xff]
    %v6425 = vld [vmem:[#allocation2 + $0x1a8] sm:$0xff]
    %v6426 = vld [vmem:[#allocation2 + $0x1b0] sm:$0xff]
    %v6427 = vld [vmem:[#allocation2 + $0x1b8] sm:$0xff]
    %v6428 = vld [vmem:[#allocation2 + $0x1c0] sm:$0xff]
    %v6429 = vld [vmem:[#allocation2 + $0x1c8] sm:$0xff]
    %v6430 = vld [vmem:[#allocation2 + $0x1d0] sm:$0xff]
    %v6431 = vld [vmem:[#allocation2 + $0x1d8] sm:$0xff]
    %v6432 = vld [vmem:[#allocation2 + $0x1e0] sm:$0xff]
    %v6433 = vld [vmem:[#allocation2 + $0x1e8] sm:$0xff]
    %v6434 = vld [vmem:[#allocation2 + $0x1f0] sm:$0xff]
    %v6435 = vld [vmem:[#allocation2 + $0x1f8] sm:$0xff]
    %v6436 = vld [vmem:[#allocation2 + $0x200] sm:$0xff]
    %v6437 = vld [vmem:[#allocation2 + $0x208] sm:$0xff]
    %v6438 = vld [vmem:[#allocation2 + $0x210] sm:$0xff]
    %v6439 = vld [vmem:[#allocation2 + $0x218] sm:$0xff]
    %v6440 = vld [vmem:[#allocation2 + $0x220] sm:$0xff]
    %v6441 = vld [vmem:[#allocation2 + $0x228] sm:$0xff]
    %v6442 = vld [vmem:[#allocation2 + $0x230] sm:$0xff]
    %v6443 = vld [vmem:[#allocation2 + $0x238] sm:$0xff]
    %v6444 = vld [vmem:[#allocation2 + $0x240] sm:$0xff]
    %v6445 = vld [vmem:[#allocation2 + $0x248] sm:$0xff]
    %v6446 = vld [vmem:[#allocation2 + $0x250] sm:$0xff]
    %v6447 = vld [vmem:[#allocation2 + $0x258] sm:$0xff]
    %v6448 = vld [vmem:[#allocation2 + $0x260] sm:$0xff]
    %v6449 = vld [vmem:[#allocation2 + $0x268] sm:$0xff]
    %v6450 = vld [vmem:[#allocation2 + $0x270] sm:$0xff]
    %v6451 = vld [vmem:[#allocation2 + $0x278] sm:$0xff]
    %v6452 = vld [vmem:[#allocation2 + $0x280] sm:$0xff]
    %v6453 = vld [vmem:[#allocation2 + $0x288] sm:$0xff]
    %v6454 = vld [vmem:[#allocation2 + $0x290] sm:$0xff]
    %v6455 = vld [vmem:[#allocation2 + $0x298] sm:$0xff]
    %v6456 = vld [vmem:[#allocation2 + $0x2a0] sm:$0xff]
    %v6457 = vld [vmem:[#allocation2 + $0x2a8] sm:$0xff]
    %v6458 = vld [vmem:[#allocation2 + $0x2b0] sm:$0xff]
    %v6459 = vld [vmem:[#allocation2 + $0x2b8] sm:$0xff]
    %v6460 = vld [vmem:[#allocation2 + $0x2c0] sm:$0xff]
    %v6461 = vld [vmem:[#allocation2 + $0x2c8] sm:$0xff]
    %v6462 = vld [vmem:[#allocation2 + $0x2d0] sm:$0xff]
    %v6463 = vld [vmem:[#allocation2 + $0x2d8] sm:$0xff]
    %v6464 = vld [vmem:[#allocation2 + $0x2e0] sm:$0xff]
    %v6465 = vld [vmem:[#allocation2 + $0x2e8] sm:$0xff]
    %v6466 = vld [vmem:[#allocation2 + $0x2f0] sm:$0xff]
    %v6467 = vld [vmem:[#allocation2 + $0x2f8] sm:$0xff]
    %v6468 = vld [vmem:[#allocation2 + $0x300] sm:$0xff]
    %v6469 = vld [vmem:[#allocation2 + $0x308] sm:$0xff]
    %v6470 = vld [vmem:[#allocation2 + $0x310] sm:$0xff]
    %v6471 = vld [vmem:[#allocation2 + $0x318] sm:$0xff]
    %v6472 = vld [vmem:[#allocation2 + $0x320] sm:$0xff]
    %v6473 = vld [vmem:[#allocation2 + $0x328] sm:$0xff]
    %v6474 = vld [vmem:[#allocation2 + $0x330] sm:$0xff]
    %v6475 = vld [vmem:[#allocation2 + $0x338] sm:$0xff]
    %v6476 = vld [vmem:[#allocation2 + $0x340] sm:$0xff]
    %v6477 = vld [vmem:[#allocation2 + $0x348] sm:$0xff]
    %v6478 = vld [vmem:[#allocation2 + $0x350] sm:$0xff]
    %v6479 = vld [vmem:[#allocation2 + $0x358] sm:$0xff]
    %v6480 = vld [vmem:[#allocation2 + $0x360] sm:$0xff]
    %v6481 = vld [vmem:[#allocation2 + $0x368] sm:$0xff]
    %v6482 = vld [vmem:[#allocation2 + $0x370] sm:$0xff]
    %v6483 = vld [vmem:[#allocation2 + $0x378] sm:$0xff]
    %v6484 = vld [vmem:[#allocation2 + $0x380] sm:$0xff]
    %v6485 = vld [vmem:[#allocation2 + $0x388] sm:$0xff]
    %v6486 = vld [vmem:[#allocation2 + $0x390] sm:$0xff]
    %v6487 = vld [vmem:[#allocation2 + $0x398] sm:$0xff]
    %v6488 = vld [vmem:[#allocation2 + $0x3a0] sm:$0xff]
    %v6489 = vld [vmem:[#allocation2 + $0x3a8] sm:$0xff]
    %v6490 = vld [vmem:[#allocation2 + $0x3b0] sm:$0xff]
    %v6491 = vld [vmem:[#allocation2 + $0x3b8] sm:$0xff]
    %v6492 = vld [vmem:[#allocation2 + $0x3c0] sm:$0xff]
    %v6493 = vld [vmem:[#allocation2 + $0x3c8] sm:$0xff]
    %v6494 = vld [vmem:[#allocation2 + $0x3d0] sm:$0xff]
    %v6495 = vld [vmem:[#allocation2 + $0x3d8] sm:$0xff]
    %v6496 = vld [vmem:[#allocation2 + $0x3e0] sm:$0xff]
    %v6497 = vld [vmem:[#allocation2 + $0x3e8] sm:$0xff]
    %v6498 = vld [vmem:[#allocation2 + $0x3f0] sm:$0xff]
    %v6499 = vld [vmem:[#allocation2 + $0x3f8] sm:$0xff]
    %v6500 = vld [vmem:[#allocation2 + $0x400] sm:$0xff]
    %v6501 = vld [vmem:[#allocation2 + $0x408] sm:$0xff]
    %v6502 = vld [vmem:[#allocation2 + $0x410] sm:$0xff]
    %v6503 = vld [vmem:[#allocation2 + $0x418] sm:$0xff]
    %v6504 = vld [vmem:[#allocation2 + $0x420] sm:$0xff]
    %v6505 = vld [vmem:[#allocation2 + $0x428] sm:$0xff]
    %v6506 = vld [vmem:[#allocation2 + $0x430] sm:$0xff]
    %v6507 = vld [vmem:[#allocation2 + $0x438] sm:$0xff]
    %v6508 = vld [vmem:[#allocation2 + $0x440] sm:$0xff]
    %v6509 = vld [vmem:[#allocation2 + $0x448] sm:$0xff]
    %v6510 = vld [vmem:[#allocation2 + $0x450] sm:$0xff]
    %v6511 = vld [vmem:[#allocation2 + $0x458] sm:$0xff]
    %v6512 = vld [vmem:[#allocation2 + $0x460] sm:$0xff]
    %v6513 = vld [vmem:[#allocation2 + $0x468] sm:$0xff]
    %v6514 = vld [vmem:[#allocation2 + $0x470] sm:$0xff]
    %v6515 = vld [vmem:[#allocation2 + $0x478] sm:$0xff]
    %v6516 = vld [vmem:[#allocation2 + $0x480] sm:$0xff]
    %v6517 = vld [vmem:[#allocation2 + $0x488] sm:$0xff]
    %v6518 = vld [vmem:[#allocation2 + $0x490] sm:$0xff]
    %v6519 = vld [vmem:[#allocation2 + $0x498] sm:$0xff]
    %v6520 = vld [vmem:[#allocation2 + $0x4a0] sm:$0xff]
    %v6521 = vld [vmem:[#allocation2 + $0x4a8] sm:$0xff]
    %v6522 = vld [vmem:[#allocation2 + $0x4b0] sm:$0xff]
    %v6523 = vld [vmem:[#allocation2 + $0x4b8] sm:$0xff]
    %v6524 = vld [vmem:[#allocation2 + $0x4c0] sm:$0xff]
    %v6525 = vld [vmem:[#allocation2 + $0x4c8] sm:$0xff]
    %v6526 = vld [vmem:[#allocation2 + $0x4d0] sm:$0xff]
    %v6527 = vld [vmem:[#allocation2 + $0x4d8] sm:$0xff]
    %v6528 = vld [vmem:[#allocation2 + $0x4e0] sm:$0xff]
    %v6529 = vld [vmem:[#allocation2 + $0x4e8] sm:$0xff]
    %v6530 = vld [vmem:[#allocation2 + $0x4f0] sm:$0xff]
    %v6531 = vld [vmem:[#allocation2 + $0x4f8] sm:$0xff]
    %v6532 = vld [vmem:[#allocation2 + $0x500] sm:$0xff]
    %v6533 = vld [vmem:[#allocation2 + $0x508] sm:$0xff]
    %v6534 = vld [vmem:[#allocation2 + $0x510] sm:$0xff]
    %v6535 = vld [vmem:[#allocation2 + $0x518] sm:$0xff]
    %v6536 = vld [vmem:[#allocation2 + $0x520] sm:$0xff]
    %v6537 = vld [vmem:[#allocation2 + $0x528] sm:$0xff]
    %v6538 = vld [vmem:[#allocation2 + $0x530] sm:$0xff]
    %v6539 = vld [vmem:[#allocation2 + $0x538] sm:$0xff]
    %v6540 = vld [vmem:[#allocation2 + $0x540] sm:$0xff]
    %v6541 = vld [vmem:[#allocation2 + $0x548] sm:$0xff]
    %v6542 = vld [vmem:[#allocation2 + $0x550] sm:$0xff]
    %v6543 = vld [vmem:[#allocation2 + $0x558] sm:$0xff]
    %v6544 = vld [vmem:[#allocation2 + $0x560] sm:$0xff]
    %v6545 = vld [vmem:[#allocation2 + $0x568] sm:$0xff]
    %v6546 = vld [vmem:[#allocation2 + $0x570] sm:$0xff]
    %v6547 = vld [vmem:[#allocation2 + $0x578] sm:$0xff]
    %v6548 = vld [vmem:[#allocation2 + $0x580] sm:$0xff]
    %v6549 = vld [vmem:[#allocation2 + $0x588] sm:$0xff]
    %v6550 = vld [vmem:[#allocation2 + $0x590] sm:$0xff]
    %v6551 = vld [vmem:[#allocation2 + $0x598] sm:$0xff]
    %v6552 = vld [vmem:[#allocation2 + $0x5a0] sm:$0xff]
    %v6553 = vld [vmem:[#allocation2 + $0x5a8] sm:$0xff]
    %v6554 = vld [vmem:[#allocation2 + $0x5b0] sm:$0xff]
    %v6555 = vld [vmem:[#allocation2 + $0x5b8] sm:$0xff]
    %v6556 = vld [vmem:[#allocation2 + $0x5c0] sm:$0xff]
    %v6557 = vld [vmem:[#allocation2 + $0x5c8] sm:$0xff]
    %v6558 = vld [vmem:[#allocation2 + $0x5d0] sm:$0xff]
    %v6559 = vld [vmem:[#allocation2 + $0x5d8] sm:$0xff]
    %v6560 = vld [vmem:[#allocation2 + $0x5e0] sm:$0xff]
    %v6561 = vld [vmem:[#allocation2 + $0x5e8] sm:$0xff]
    %v6562 = vld [vmem:[#allocation2 + $0x5f0] sm:$0xff]
    %v6563 = vld [vmem:[#allocation2 + $0x5f8] sm:$0xff]
    %v6564 = vld [vmem:[#allocation2 + $0x600] sm:$0xff]
    %v6565 = vld [vmem:[#allocation2 + $0x608] sm:$0xff]
    %v6566 = vld [vmem:[#allocation2 + $0x610] sm:$0xff]
    %v6567 = vld [vmem:[#allocation2 + $0x618] sm:$0xff]
    %v6568 = vld [vmem:[#allocation2 + $0x620] sm:$0xff]
    %v6569 = vld [vmem:[#allocation2 + $0x628] sm:$0xff]
    %v6570 = vld [vmem:[#allocation2 + $0x630] sm:$0xff]
    %v6571 = vld [vmem:[#allocation2 + $0x638] sm:$0xff]
    %v6572 = vld [vmem:[#allocation2 + $0x640] sm:$0xff]
    %v6573 = vld [vmem:[#allocation2 + $0x648] sm:$0xff]
    %v6574 = vld [vmem:[#allocation2 + $0x650] sm:$0xff]
    %v6575 = vld [vmem:[#allocation2 + $0x658] sm:$0xff]
    %v6576 = vld [vmem:[#allocation2 + $0x660] sm:$0xff]
    %v6577 = vld [vmem:[#allocation2 + $0x668] sm:$0xff]
    %v6578 = vld [vmem:[#allocation2 + $0x670] sm:$0xff]
    %v6579 = vld [vmem:[#allocation2 + $0x678] sm:$0xff]
    %v6580 = vld [vmem:[#allocation2 + $0x680] sm:$0xff]
    %v6581 = vld [vmem:[#allocation2 + $0x688] sm:$0xff]
    %v6582 = vld [vmem:[#allocation2 + $0x690] sm:$0xff]
    %v6583 = vld [vmem:[#allocation2 + $0x698] sm:$0xff]
    %v6584 = vld [vmem:[#allocation2 + $0x6a0] sm:$0xff]
    %v6585 = vld [vmem:[#allocation2 + $0x6a8] sm:$0xff]
    %v6586 = vld [vmem:[#allocation2 + $0x6b0] sm:$0xff]
    %v6587 = vld [vmem:[#allocation2 + $0x6b8] sm:$0xff]
    %v6588 = vld [vmem:[#allocation2 + $0x6c0] sm:$0xff]
    %v6589 = vld [vmem:[#allocation2 + $0x6c8] sm:$0xff]
    %v6590 = vld [vmem:[#allocation2 + $0x6d0] sm:$0xff]
    %v6591 = vld [vmem:[#allocation2 + $0x6d8] sm:$0xff]
    %v6592 = vld [vmem:[#allocation2 + $0x6e0] sm:$0xff]
    %v6593 = vld [vmem:[#allocation2 + $0x6e8] sm:$0xff]
    %v6594 = vld [vmem:[#allocation2 + $0x6f0] sm:$0xff]
    %v6595 = vld [vmem:[#allocation2 + $0x6f8] sm:$0xff]
    %v6596 = vld [vmem:[#allocation2 + $0x700] sm:$0xff]
    %v6597 = vld [vmem:[#allocation2 + $0x708] sm:$0xff]
    %v6598 = vld [vmem:[#allocation2 + $0x710] sm:$0xff]
    %v6599 = vld [vmem:[#allocation2 + $0x718] sm:$0xff]
    %v6600 = vld [vmem:[#allocation2 + $0x720] sm:$0xff]
    %v6601 = vld [vmem:[#allocation2 + $0x728] sm:$0xff]
    %v6602 = vld [vmem:[#allocation2 + $0x730] sm:$0xff]
    %v6603 = vld [vmem:[#allocation2 + $0x738] sm:$0xff]
    %v6604 = vld [vmem:[#allocation2 + $0x740] sm:$0xff]
    %v6605 = vld [vmem:[#allocation2 + $0x748] sm:$0xff]
    %v6606 = vld [vmem:[#allocation2 + $0x750] sm:$0xff]
    %v6607 = vld [vmem:[#allocation2 + $0x758] sm:$0xff]
    %v6608 = vld [vmem:[#allocation2 + $0x760] sm:$0xff]
    %v6609 = vld [vmem:[#allocation2 + $0x768] sm:$0xff]
    %v6610 = vld [vmem:[#allocation2 + $0x770] sm:$0xff]
    %v6611 = vld [vmem:[#allocation2 + $0x778] sm:$0xff]
    %v6612 = vld [vmem:[#allocation2 + $0x780] sm:$0xff]
    %v6613 = vld [vmem:[#allocation2 + $0x788] sm:$0xff]
    %v6614 = vld [vmem:[#allocation2 + $0x790] sm:$0xff]
    %v6615 = vld [vmem:[#allocation2 + $0x798] sm:$0xff]
    %v6616 = vld [vmem:[#allocation2 + $0x7a0] sm:$0xff]
    %v6617 = vld [vmem:[#allocation2 + $0x7a8] sm:$0xff]
    %v6618 = vld [vmem:[#allocation2 + $0x7b0] sm:$0xff]
    %v6619 = vld [vmem:[#allocation2 + $0x7b8] sm:$0xff]
    %v6620 = vld [vmem:[#allocation2 + $0x7c0] sm:$0xff]
    %v6621 = vld [vmem:[#allocation2 + $0x7c8] sm:$0xff]
    %v6622 = vld [vmem:[#allocation2 + $0x7d0] sm:$0xff]
    %v6623 = vld [vmem:[#allocation2 + $0x7d8] sm:$0xff]
    %v6624 = vld [vmem:[#allocation2 + $0x7e0] sm:$0xff]
    %v6625 = vld [vmem:[#allocation2 + $0x7e8] sm:$0xff]
    %v6626 = vld [vmem:[#allocation2 + $0x7f0] sm:$0xff]
    %v6627 = vld [vmem:[#allocation2 + $0x7f8] sm:$0xff]
    %v6628 = vld [vmem:[#allocation2 + $0x800] sm:$0xff]
    %v6629 = vld [vmem:[#allocation2 + $0x808] sm:$0xff]
    %v6630 = vld [vmem:[#allocation2 + $0x810] sm:$0xff]
    %v6631 = vld [vmem:[#allocation2 + $0x818] sm:$0xff]
    %v6632 = vld [vmem:[#allocation2 + $0x820] sm:$0xff]
    %v6633 = vld [vmem:[#allocation2 + $0x828] sm:$0xff]
    %v6634 = vld [vmem:[#allocation2 + $0x830] sm:$0xff]
    %v6635 = vld [vmem:[#allocation2 + $0x838] sm:$0xff]
    %v6636 = vld [vmem:[#allocation2 + $0x840] sm:$0xff]
    %v6637 = vld [vmem:[#allocation2 + $0x848] sm:$0xff]
    %v6638 = vld [vmem:[#allocation2 + $0x850] sm:$0xff]
    %v6639 = vld [vmem:[#allocation2 + $0x858] sm:$0xff]
    %v6640 = vld [vmem:[#allocation2 + $0x860] sm:$0xff]
    %v6641 = vld [vmem:[#allocation2 + $0x868] sm:$0xff]
    %v6642 = vld [vmem:[#allocation2 + $0x870] sm:$0xff]
    %v6643 = vld [vmem:[#allocation2 + $0x878] sm:$0xff]
    %v6644 = vld [vmem:[#allocation2 + $0x880] sm:$0xff]
    %v6645 = vld [vmem:[#allocation2 + $0x888] sm:$0xff]
    %v6646 = vld [vmem:[#allocation2 + $0x890] sm:$0xff]
    %v6647 = vld [vmem:[#allocation2 + $0x898] sm:$0xff]
    %v6648 = vld [vmem:[#allocation2 + $0x8a0] sm:$0xff]
    %v6649 = vld [vmem:[#allocation2 + $0x8a8] sm:$0xff]
    %v6650 = vld [vmem:[#allocation2 + $0x8b0] sm:$0xff]
    %v6651 = vld [vmem:[#allocation2 + $0x8b8] sm:$0xff]
    %v6652 = vld [vmem:[#allocation2 + $0x8c0] sm:$0xff]
    %v6653 = vld [vmem:[#allocation2 + $0x8c8] sm:$0xff]
    %v6654 = vld [vmem:[#allocation2 + $0x8d0] sm:$0xff]
    %v6655 = vld [vmem:[#allocation2 + $0x8d8] sm:$0xff]
    %v6656 = vld [vmem:[#allocation2 + $0x8e0] sm:$0xff]
    %v6657 = vld [vmem:[#allocation2 + $0x8e8] sm:$0xff]
    %v6658 = vld [vmem:[#allocation2 + $0x8f0] sm:$0xff]
    %v6659 = vld [vmem:[#allocation2 + $0x8f8] sm:$0xff]
    %v6660 = vld [vmem:[#allocation2 + $0x900] sm:$0xff]
    %v6661 = vld [vmem:[#allocation2 + $0x908] sm:$0xff]
    %v6662 = vld [vmem:[#allocation2 + $0x910] sm:$0xff]
    %v6663 = vld [vmem:[#allocation2 + $0x918] sm:$0xff]
    %v6664 = vld [vmem:[#allocation2 + $0x920] sm:$0xff]
    %v6665 = vld [vmem:[#allocation2 + $0x928] sm:$0xff]
    %v6666 = vld [vmem:[#allocation2 + $0x930] sm:$0xff]
    %v6667 = vld [vmem:[#allocation2 + $0x938] sm:$0xff]
    %v6668 = vld [vmem:[#allocation2 + $0x940] sm:$0xff]
    %v6669 = vld [vmem:[#allocation2 + $0x948] sm:$0xff]
    %v6670 = vld [vmem:[#allocation2 + $0x950] sm:$0xff]
    %v6671 = vld [vmem:[#allocation2 + $0x958] sm:$0xff]
    %v6672 = vld [vmem:[#allocation2 + $0x960] sm:$0xff]
    %v6673 = vld [vmem:[#allocation2 + $0x968] sm:$0xff]
    %v6674 = vld [vmem:[#allocation2 + $0x970] sm:$0xff]
    %v6675 = vld [vmem:[#allocation2 + $0x978] sm:$0xff]
    %v6676 = vld [vmem:[#allocation2 + $0x980] sm:$0xff]
    %v6677 = vld [vmem:[#allocation2 + $0x988] sm:$0xff]
    %v6678 = vld [vmem:[#allocation2 + $0x990] sm:$0xff]
    %v6679 = vld [vmem:[#allocation2 + $0x998] sm:$0xff]
    %v6680 = vld [vmem:[#allocation2 + $0x9a0] sm:$0xff]
    %v6681 = vld [vmem:[#allocation2 + $0x9a8] sm:$0xff]
    %v6682 = vld [vmem:[#allocation2 + $0x9b0] sm:$0xff]
    %v6683 = vld [vmem:[#allocation2 + $0x9b8] sm:$0xff]
    %v6684 = vld [vmem:[#allocation2 + $0x9c0] sm:$0xff]
    %v6685 = vld [vmem:[#allocation2 + $0x9c8] sm:$0xff]
    %v6686 = vld [vmem:[#allocation2 + $0x9d0] sm:$0xff]
    %v6687 = vld [vmem:[#allocation2 + $0x9d8] sm:$0xff]
    %v6688 = vld [vmem:[#allocation2 + $0x9e0] sm:$0xff]
    %v6689 = vld [vmem:[#allocation2 + $0x9e8] sm:$0xff]
    %v6690 = vld [vmem:[#allocation2 + $0x9f0] sm:$0xff]
    %v6691 = vld [vmem:[#allocation2 + $0x9f8] sm:$0xff]
    %v6692 = vld [vmem:[#allocation2 + $0xa00] sm:$0xff]
    %v6693 = vld [vmem:[#allocation2 + $0xa08] sm:$0xff]
    %v6694 = vld [vmem:[#allocation2 + $0xa10] sm:$0xff]
    %v6695 = vld [vmem:[#allocation2 + $0xa18] sm:$0xff]
    %v6696 = vld [vmem:[#allocation2 + $0xa20] sm:$0xff]
    %v6697 = vld [vmem:[#allocation2 + $0xa28] sm:$0xff]
    %v6698 = vld [vmem:[#allocation2 + $0xa30] sm:$0xff]
    %v6699 = vld [vmem:[#allocation2 + $0xa38] sm:$0xff]
    %v6700 = vld [vmem:[#allocation2 + $0xa40] sm:$0xff]
    %v6701 = vld [vmem:[#allocation2 + $0xa48] sm:$0xff]
    %v6702 = vld [vmem:[#allocation2 + $0xa50] sm:$0xff]
    %v6703 = vld [vmem:[#allocation2 + $0xa58] sm:$0xff]
    %v6704 = vld [vmem:[#allocation2 + $0xa60] sm:$0xff]
    %v6705 = vld [vmem:[#allocation2 + $0xa68] sm:$0xff]
    %v6706 = vld [vmem:[#allocation2 + $0xa70] sm:$0xff]
    %v6707 = vld [vmem:[#allocation2 + $0xa78] sm:$0xff]
    %v6708 = vld [vmem:[#allocation2 + $0xa80] sm:$0xff]
    %v6709 = vld [vmem:[#allocation2 + $0xa88] sm:$0xff]
    %v6710 = vld [vmem:[#allocation2 + $0xa90] sm:$0xff]
    %v6711 = vld [vmem:[#allocation2 + $0xa98] sm:$0xff]
    %v6712 = vld [vmem:[#allocation2 + $0xaa0] sm:$0xff]
    %v6713 = vld [vmem:[#allocation2 + $0xaa8] sm:$0xff]
    %v6714 = vld [vmem:[#allocation2 + $0xab0] sm:$0xff]
    %v6715 = vld [vmem:[#allocation2 + $0xab8] sm:$0xff]
    %v6716 = vld [vmem:[#allocation2 + $0xac0] sm:$0xff]
    %v6717 = vld [vmem:[#allocation2 + $0xac8] sm:$0xff]
    %v6718 = vld [vmem:[#allocation2 + $0xad0] sm:$0xff]
    %v6719 = vld [vmem:[#allocation2 + $0xad8] sm:$0xff]
    %v6720 = vld [vmem:[#allocation2 + $0xae0] sm:$0xff]
    %v6721 = vld [vmem:[#allocation2 + $0xae8] sm:$0xff]
    %v6722 = vld [vmem:[#allocation2 + $0xaf0] sm:$0xff]
    %v6723 = vld [vmem:[#allocation2 + $0xaf8] sm:$0xff]
    %v6724 = vld [vmem:[#allocation2 + $0xb00] sm:$0xff]
    %v6725 = vld [vmem:[#allocation2 + $0xb08] sm:$0xff]
    %v6726 = vld [vmem:[#allocation2 + $0xb10] sm:$0xff]
    %v6727 = vld [vmem:[#allocation2 + $0xb18] sm:$0xff]
    %v6728 = vld [vmem:[#allocation2 + $0xb20] sm:$0xff]
    %v6729 = vld [vmem:[#allocation2 + $0xb28] sm:$0xff]
    %v6730 = vld [vmem:[#allocation2 + $0xb30] sm:$0xff]
    %v6731 = vld [vmem:[#allocation2 + $0xb38] sm:$0xff]
    %v6732 = vld [vmem:[#allocation2 + $0xb40] sm:$0xff]
    %v6733 = vld [vmem:[#allocation2 + $0xb48] sm:$0xff]
    %v6734 = vld [vmem:[#allocation2 + $0xb50] sm:$0xff]
    %v6735 = vld [vmem:[#allocation2 + $0xb58] sm:$0xff]
    %v6736 = vld [vmem:[#allocation2 + $0xb60] sm:$0xff]
    %v6737 = vld [vmem:[#allocation2 + $0xb68] sm:$0xff]
    %v6738 = vld [vmem:[#allocation2 + $0xb70] sm:$0xff]
    %v6739 = vld [vmem:[#allocation2 + $0xb78] sm:$0xff]
    %v6740 = vld [vmem:[#allocation2 + $0xb80] sm:$0xff]
    %v6741 = vld [vmem:[#allocation2 + $0xb88] sm:$0xff]
    %v6742 = vld [vmem:[#allocation2 + $0xb90] sm:$0xff]
    %v6743 = vld [vmem:[#allocation2 + $0xb98] sm:$0xff]
    %v6744 = vld [vmem:[#allocation2 + $0xba0] sm:$0xff]
    %v6745 = vld [vmem:[#allocation2 + $0xba8] sm:$0xff]
    %v6746 = vld [vmem:[#allocation2 + $0xbb0] sm:$0xff]
    %v6747 = vld [vmem:[#allocation2 + $0xbb8] sm:$0xff]
    %v6748 = vld [vmem:[#allocation2 + $0xbc0] sm:$0xff]
    %v6749 = vld [vmem:[#allocation2 + $0xbc8] sm:$0xff]
    %v6750 = vld [vmem:[#allocation2 + $0xbd0] sm:$0xff]
    %v6751 = vld [vmem:[#allocation2 + $0xbd8] sm:$0xff]
    %v6752 = vld [vmem:[#allocation2 + $0xbe0] sm:$0xff]
    %v6753 = vld [vmem:[#allocation2 + $0xbe8] sm:$0xff]
    %v6754 = vld [vmem:[#allocation2 + $0xbf0] sm:$0xff]
    %v6755 = vld [vmem:[#allocation2 + $0xbf8] sm:$0xff]
    %v6756 = vld [vmem:[#allocation2 + $0xc00] sm:$0xff]
    %v6757 = vld [vmem:[#allocation2 + $0xc08] sm:$0xff]
    %v6758 = vld [vmem:[#allocation2 + $0xc10] sm:$0xff]
    %v6759 = vld [vmem:[#allocation2 + $0xc18] sm:$0xff]
    %v6760 = vld [vmem:[#allocation2 + $0xc20] sm:$0xff]
    %v6761 = vld [vmem:[#allocation2 + $0xc28] sm:$0xff]
    %v6762 = vld [vmem:[#allocation2 + $0xc30] sm:$0xff]
    %v6763 = vld [vmem:[#allocation2 + $0xc38] sm:$0xff]
    %v6764 = vld [vmem:[#allocation2 + $0xc40] sm:$0xff]
    %v6765 = vld [vmem:[#allocation2 + $0xc48] sm:$0xff]
    %v6766 = vld [vmem:[#allocation2 + $0xc50] sm:$0xff]
    %v6767 = vld [vmem:[#allocation2 + $0xc58] sm:$0xff]
    %v6768 = vld [vmem:[#allocation2 + $0xc60] sm:$0xff]
    %v6769 = vld [vmem:[#allocation2 + $0xc68] sm:$0xff]
    %v6770 = vld [vmem:[#allocation2 + $0xc70] sm:$0xff]
    %v6771 = vld [vmem:[#allocation2 + $0xc78] sm:$0xff]
    %v6772 = vld [vmem:[#allocation2 + $0xc80] sm:$0xff]
    %v6773 = vld [vmem:[#allocation2 + $0xc88] sm:$0xff]
    %v6774 = vld [vmem:[#allocation2 + $0xc90] sm:$0xff]
    %v6775 = vld [vmem:[#allocation2 + $0xc98] sm:$0xff]
    %v6776 = vld [vmem:[#allocation2 + $0xca0] sm:$0xff]
    %v6777 = vld [vmem:[#allocation2 + $0xca8] sm:$0xff]
    %v6778 = vld [vmem:[#allocation2 + $0xcb0] sm:$0xff]
    %v6779 = vld [vmem:[#allocation2 + $0xcb8] sm:$0xff]
    %v6780 = vld [vmem:[#allocation2 + $0xcc0] sm:$0xff]
    %v6781 = vld [vmem:[#allocation2 + $0xcc8] sm:$0xff]
    %v6782 = vld [vmem:[#allocation2 + $0xcd0] sm:$0xff]
    %v6783 = vld [vmem:[#allocation2 + $0xcd8] sm:$0xff]
    %v6784 = vld [vmem:[#allocation2 + $0xce0] sm:$0xff]
    %v6785 = vld [vmem:[#allocation2 + $0xce8] sm:$0xff]
    %v6786 = vld [vmem:[#allocation2 + $0xcf0] sm:$0xff]
    %v6787 = vld [vmem:[#allocation2 + $0xcf8] sm:$0xff]
    %v6788 = vld [vmem:[#allocation2 + $0xd00] sm:$0xff]
    %v6789 = vld [vmem:[#allocation2 + $0xd08] sm:$0xff]
    %v6790 = vld [vmem:[#allocation2 + $0xd10] sm:$0xff]
    %v6791 = vld [vmem:[#allocation2 + $0xd18] sm:$0xff]
    %v6792 = vld [vmem:[#allocation2 + $0xd20] sm:$0xff]
    %v6793 = vld [vmem:[#allocation2 + $0xd28] sm:$0xff]
    %v6794 = vld [vmem:[#allocation2 + $0xd30] sm:$0xff]
    %v6795 = vld [vmem:[#allocation2 + $0xd38] sm:$0xff]
    %v6796 = vld [vmem:[#allocation2 + $0xd40] sm:$0xff]
    %v6797 = vld [vmem:[#allocation2 + $0xd48] sm:$0xff]
    %v6798 = vld [vmem:[#allocation2 + $0xd50] sm:$0xff]
    %v6799 = vld [vmem:[#allocation2 + $0xd58] sm:$0xff]
    %v6800 = vld [vmem:[#allocation2 + $0xd60] sm:$0xff]
    %v6801 = vld [vmem:[#allocation2 + $0xd68] sm:$0xff]
    %v6802 = vld [vmem:[#allocation2 + $0xd70] sm:$0xff]
    %v6803 = vld [vmem:[#allocation2 + $0xd78] sm:$0xff]
    %v6804 = vld [vmem:[#allocation2 + $0xd80] sm:$0xff]
    %v6805 = vld [vmem:[#allocation2 + $0xd88] sm:$0xff]
    %v6806 = vld [vmem:[#allocation2 + $0xd90] sm:$0xff]
    %v6807 = vld [vmem:[#allocation2 + $0xd98] sm:$0xff]
    %v6808 = vld [vmem:[#allocation2 + $0xda0] sm:$0xff]
    %v6809 = vld [vmem:[#allocation2 + $0xda8] sm:$0xff]
    %v6810 = vld [vmem:[#allocation2 + $0xdb0] sm:$0xff]
    %v6811 = vld [vmem:[#allocation2 + $0xdb8] sm:$0xff]
    %v6812 = vld [vmem:[#allocation2 + $0xdc0] sm:$0xff]
    %v6813 = vld [vmem:[#allocation2 + $0xdc8] sm:$0xff]
    %v6814 = vld [vmem:[#allocation2 + $0xdd0] sm:$0xff]
    %v6815 = vld [vmem:[#allocation2 + $0xdd8] sm:$0xff]
    %v6816 = vld [vmem:[#allocation2 + $0xde0] sm:$0xff]
    %v6817 = vld [vmem:[#allocation2 + $0xde8] sm:$0xff]
    %v6818 = vld [vmem:[#allocation2 + $0xdf0] sm:$0xff]
    %v6819 = vld [vmem:[#allocation2 + $0xdf8] sm:$0xff]
    %v6820 = vld [vmem:[#allocation2 + $0xe00] sm:$0xff]
    %v6821 = vld [vmem:[#allocation2 + $0xe08] sm:$0xff]
    %v6822 = vld [vmem:[#allocation2 + $0xe10] sm:$0xff]
    %v6823 = vld [vmem:[#allocation2 + $0xe18] sm:$0xff]
    %v6824 = vld [vmem:[#allocation2 + $0xe20] sm:$0xff]
    %v6825 = vld [vmem:[#allocation2 + $0xe28] sm:$0xff]
    %v6826 = vld [vmem:[#allocation2 + $0xe30] sm:$0xff]
    %v6827 = vld [vmem:[#allocation2 + $0xe38] sm:$0xff]
    %v6828 = vld [vmem:[#allocation2 + $0xe40] sm:$0xff]
    %v6829 = vld [vmem:[#allocation2 + $0xe48] sm:$0xff]
    %v6830 = vld [vmem:[#allocation2 + $0xe50] sm:$0xff]
    %v6831 = vld [vmem:[#allocation2 + $0xe58] sm:$0xff]
    %v6832 = vld [vmem:[#allocation2 + $0xe60] sm:$0xff]
    %v6833 = vld [vmem:[#allocation2 + $0xe68] sm:$0xff]
    %v6834 = vld [vmem:[#allocation2 + $0xe70] sm:$0xff]
    %v6835 = vld [vmem:[#allocation2 + $0xe78] sm:$0xff]
    %v6836 = vld [vmem:[#allocation2 + $0xe80] sm:$0xff]
    %v6837 = vld [vmem:[#allocation2 + $0xe88] sm:$0xff]
    %v6838 = vld [vmem:[#allocation2 + $0xe90] sm:$0xff]
    %v6839 = vld [vmem:[#allocation2 + $0xe98] sm:$0xff]
    %v6840 = vld [vmem:[#allocation2 + $0xea0] sm:$0xff]
    %v6841 = vld [vmem:[#allocation2 + $0xea8] sm:$0xff]
    %v6842 = vld [vmem:[#allocation2 + $0xeb0] sm:$0xff]
    %v6843 = vld [vmem:[#allocation2 + $0xeb8] sm:$0xff]
    %v6844 = vld [vmem:[#allocation2 + $0xec0] sm:$0xff]
    %v6845 = vld [vmem:[#allocation2 + $0xec8] sm:$0xff]
    %v6846 = vld [vmem:[#allocation2 + $0xed0] sm:$0xff]
    %v6847 = vld [vmem:[#allocation2 + $0xed8] sm:$0xff]
    %v6848 = vld [vmem:[#allocation2 + $0xee0] sm:$0xff]
    %v6849 = vld [vmem:[#allocation2 + $0xee8] sm:$0xff]
    %v6850 = vld [vmem:[#allocation2 + $0xef0] sm:$0xff]
    %v6851 = vld [vmem:[#allocation2 + $0xef8] sm:$0xff]
    %v6852 = vld [vmem:[#allocation2 + $0xf00] sm:$0xff]
    %v6853 = vld [vmem:[#allocation2 + $0xf08] sm:$0xff]
    %v6854 = vld [vmem:[#allocation2 + $0xf10] sm:$0xff]
    %v6855 = vld [vmem:[#allocation2 + $0xf18] sm:$0xff]
    %v6856 = vld [vmem:[#allocation2 + $0xf20] sm:$0xff]
    %v6857 = vld [vmem:[#allocation2 + $0xf28] sm:$0xff]
    %v6858 = vld [vmem:[#allocation2 + $0xf30] sm:$0xff]
    %v6859 = vld [vmem:[#allocation2 + $0xf38] sm:$0xff]
    %v6860 = vld [vmem:[#allocation2 + $0xf40] sm:$0xff]
    %v6861 = vld [vmem:[#allocation2 + $0xf48] sm:$0xff]
    %v6862 = vld [vmem:[#allocation2 + $0xf50] sm:$0xff]
    %v6863 = vld [vmem:[#allocation2 + $0xf58] sm:$0xff]
    %v6864 = vld [vmem:[#allocation2 + $0xf60] sm:$0xff]
    %v6865 = vld [vmem:[#allocation2 + $0xf68] sm:$0xff]
    %v6866 = vld [vmem:[#allocation2 + $0xf70] sm:$0xff]
    %v6867 = vld [vmem:[#allocation2 + $0xf78] sm:$0xff]
    %v6868 = vld [vmem:[#allocation2 + $0xf80] sm:$0xff]
    %v6869 = vld [vmem:[#allocation2 + $0xf88] sm:$0xff]
    %v6870 = vld [vmem:[#allocation2 + $0xf90] sm:$0xff]
    %v6871 = vld [vmem:[#allocation2 + $0xf98] sm:$0xff]
    %v6872 = vld [vmem:[#allocation2 + $0xfa0] sm:$0xff]
    %v6873 = vld [vmem:[#allocation2 + $0xfa8] sm:$0xff]
    %v6874 = vld [vmem:[#allocation2 + $0xfb0] sm:$0xff]
    %v6875 = vld [vmem:[#allocation2 + $0xfb8] sm:$0xff]
    %v6876 = vld [vmem:[#allocation2 + $0xfc0] sm:$0xff]
    %v6877 = vld [vmem:[#allocation2 + $0xfc8] sm:$0xff]
    %v6878 = vld [vmem:[#allocation2 + $0xfd0] sm:$0xff]
    %v6879 = vld [vmem:[#allocation2 + $0xfd8] sm:$0xff]
    %v6880 = vld [vmem:[#allocation2 + $0xfe0] sm:$0xff]
    %v6881 = vld [vmem:[#allocation2 + $0xfe8] sm:$0xff]
    %v6882 = vld [vmem:[#allocation2 + $0xff0] sm:$0xff]
    %v6883 = vld [vmem:[#allocation2 + $0xff8] sm:$0xff]
    %v6884 = vld [vmem:[#allocation2 + $0x1000] sm:$0xff]
    %v6885 = vld [vmem:[#allocation2 + $0x1008] sm:$0xff]
    %v6886 = vld [vmem:[#allocation2 + $0x1010] sm:$0xff]
    %v6887 = vld [vmem:[#allocation2 + $0x1018] sm:$0xff]
    %v6888 = vld [vmem:[#allocation2 + $0x1020] sm:$0xff]
    %v6889 = vld [vmem:[#allocation2 + $0x1028] sm:$0xff]
    %v6890 = vld [vmem:[#allocation2 + $0x1030] sm:$0xff]
    %v6891 = vld [vmem:[#allocation2 + $0x1038] sm:$0xff]
    %v6892 = vld [vmem:[#allocation2 + $0x1040] sm:$0xff]
    %v6893 = vld [vmem:[#allocation2 + $0x1048] sm:$0xff]
    %v6894 = vld [vmem:[#allocation2 + $0x1050] sm:$0xff]
    %v6895 = vld [vmem:[#allocation2 + $0x1058] sm:$0xff]
    %v6896 = vld [vmem:[#allocation2 + $0x1060] sm:$0xff]
    %v6897 = vld [vmem:[#allocation2 + $0x1068] sm:$0xff]
    %v6898 = vld [vmem:[#allocation2 + $0x1070] sm:$0xff]
    %v6899 = vld [vmem:[#allocation2 + $0x1078] sm:$0xff]
    %v6900 = vld [vmem:[#allocation2 + $0x1080] sm:$0xff]
    %v6901 = vld [vmem:[#allocation2 + $0x1088] sm:$0xff]
    %v6902 = vld [vmem:[#allocation2 + $0x1090] sm:$0xff]
    %v6903 = vld [vmem:[#allocation2 + $0x1098] sm:$0xff]
    %v6904 = vld [vmem:[#allocation2 + $0x10a0] sm:$0xff]
    %v6905 = vld [vmem:[#allocation2 + $0x10a8] sm:$0xff]
    %v6906 = vld [vmem:[#allocation2 + $0x10b0] sm:$0xff]
    %v6907 = vld [vmem:[#allocation2 + $0x10b8] sm:$0xff]
    %v6908 = vld [vmem:[#allocation2 + $0x10c0] sm:$0xff]
    %v6909 = vld [vmem:[#allocation2 + $0x10c8] sm:$0xff]
    %v6910 = vld [vmem:[#allocation2 + $0x10d0] sm:$0xff]
    %v6911 = vld [vmem:[#allocation2 + $0x10d8] sm:$0xff]
    %v6912 = vld [vmem:[#allocation2 + $0x10e0] sm:$0xff]
    %v6913 = vld [vmem:[#allocation2 + $0x10e8] sm:$0xff]
    %v6914 = vld [vmem:[#allocation2 + $0x10f0] sm:$0xff]
    %v6915 = vld [vmem:[#allocation2 + $0x10f8] sm:$0xff]
    %v6916 = vld [vmem:[#allocation2 + $0x1100] sm:$0xff]
    %v6917 = vld [vmem:[#allocation2 + $0x1108] sm:$0xff]
    %v6918 = vld [vmem:[#allocation2 + $0x1110] sm:$0xff]
    %v6919 = vld [vmem:[#allocation2 + $0x1118] sm:$0xff]
    %v6920 = vld [vmem:[#allocation2 + $0x1120] sm:$0xff]
    %v6921 = vld [vmem:[#allocation2 + $0x1128] sm:$0xff]
    %v6922 = vld [vmem:[#allocation2 + $0x1130] sm:$0xff]
    %v6923 = vld [vmem:[#allocation2 + $0x1138] sm:$0xff]
    %v6924 = vld [vmem:[#allocation2 + $0x1140] sm:$0xff]
    %v6925 = vld [vmem:[#allocation2 + $0x1148] sm:$0xff]
    %v6926 = vld [vmem:[#allocation2 + $0x1150] sm:$0xff]
    %v6927 = vld [vmem:[#allocation2 + $0x1158] sm:$0xff]
    %v6928 = vld [vmem:[#allocation2 + $0x1160] sm:$0xff]
    %v6929 = vld [vmem:[#allocation2 + $0x1168] sm:$0xff]
    %v6930 = vld [vmem:[#allocation2 + $0x1170] sm:$0xff]
    %v6931 = vld [vmem:[#allocation2 + $0x1178] sm:$0xff]
    %v6932 = vld [vmem:[#allocation2 + $0x1180] sm:$0xff]
    %v6933 = vld [vmem:[#allocation2 + $0x1188] sm:$0xff]
    %v6934 = vld [vmem:[#allocation2 + $0x1190] sm:$0xff]
    %v6935 = vld [vmem:[#allocation2 + $0x1198] sm:$0xff]
    %v6936 = vld [vmem:[#allocation2 + $0x11a0] sm:$0xff]
    %v6937 = vld [vmem:[#allocation2 + $0x11a8] sm:$0xff]
    %v6938 = vld [vmem:[#allocation2 + $0x11b0] sm:$0xff]
    %v6939 = vld [vmem:[#allocation2 + $0x11b8] sm:$0xff]
    %v6940 = vld [vmem:[#allocation2 + $0x11c0] sm:$0xff]
    %v6941 = vld [vmem:[#allocation2 + $0x11c8] sm:$0xff]
    %v6942 = vld [vmem:[#allocation2 + $0x11d0] sm:$0xff]
    %v6943 = vld [vmem:[#allocation2 + $0x11d8] sm:$0xff]
    %v6944 = vld [vmem:[#allocation2 + $0x11e0] sm:$0xff]
    %v6945 = vld [vmem:[#allocation2 + $0x11e8] sm:$0xff]
    %v6946 = vld [vmem:[#allocation2 + $0x11f0] sm:$0xff]
    %v6947 = vld [vmem:[#allocation2 + $0x11f8] sm:$0xff]
    %v6948 = vld [vmem:[#allocation15] sm:$0x3f]
    %v6950 = vlaneseq
    %v6951 = vshrl.u32 %v6950, 7
    %v6952 = vsub.s32 0, %v6951
    %v6953 = vrot.slane %v6948, %v6952
    %v6954 = vlaneseq
    %v6955 = vshrl.u32 %v6954, 7
    %v6956 = vsub.s32 1, %v6955
    %v6957 = vrot.slane %v6948, %v6956
    %v6958 = vlaneseq
    %v6959 = vshrl.u32 %v6958, 7
    %v6960 = vsub.s32 2, %v6959
    %v6961 = vrot.slane %v6948, %v6960
    %v6962 = vlaneseq
    %v6963 = vshrl.u32 %v6962, 7
    %v6964 = vsub.s32 3, %v6963
    %v6965 = vrot.slane %v6948, %v6964
    %v6966 = vlaneseq
    %v6967 = vshrl.u32 %v6966, 7
    %v6968 = vsub.s32 4, %v6967
    %v6969 = vrot.slane %v6948, %v6968
    %v6970 = vlaneseq
    %v6971 = vshrl.u32 %v6970, 7
    %v6972 = vsub.s32 5, %v6971
    %v6973 = vrot.slane %v6948, %v6972
    %6980 = vmatprep.subr.bf16.mxu0 %v6373
    %6981 = vmatpush1.bf16.msra.mxu0 %v6372
    %6982 = vmatprep.subr.bf16.mxu0 %v6379
    %6983 = vmatpush1.bf16.msra.mxu0 %v6378
    %6984 = vmatprep.subr.bf16.mxu0 %v6385
    %6985 = vmatpush1.bf16.msra.mxu0 %v6384
    %6986 = vmatprep.subr.bf16.mxu0 %v6391
    %6987 = vmatpush1.bf16.msra.mxu0 %v6390
    %6988 = vmatprep.subr.bf16.mxu0 %v6397
    %6989 = vmatpush1.bf16.msra.mxu0 %v6396
    %6990 = vmatprep.subr.bf16.mxu0 %v6403
    %6991 = vmatpush1.bf16.msra.mxu0 %v6402
    %6992 = vmatprep.subr.bf16.mxu0 %v6409
    %6993 = vmatpush1.bf16.msra.mxu0 %v6408
    %6994 = vmatprep.subr.bf16.mxu0 %v6415
    %6995 = vmatpush1.bf16.msra.mxu0 %v6414
    %6996 = vmatprep.subr.bf16.mxu0 %v6421
    %6997 = vmatpush1.bf16.msra.mxu0 %v6420
    %6998 = vmatprep.subr.bf16.mxu0 %v6427
    %6999 = vmatpush1.bf16.msra.mxu0 %v6426
    %7000 = vmatprep.subr.bf16.mxu0 %v6433
    %7001 = vmatpush1.bf16.msra.mxu0 %v6432
    %7002 = vmatprep.subr.bf16.mxu0 %v6439
    %7003 = vmatpush1.bf16.msra.mxu0 %v6438
    %7004 = vmatprep.subr.bf16.mxu0 %v6445
    %7005 = vmatpush1.bf16.msra.mxu0 %v6444
    %7006 = vmatprep.subr.bf16.mxu0 %v6451
    %7007 = vmatpush1.bf16.msra.mxu0 %v6450
    %7008 = vmatprep.subr.bf16.mxu0 %v6457
    %7009 = vmatpush1.bf16.msra.mxu0 %v6456
    %7010 = vmatprep.subr.bf16.mxu0 %v6463
    %7011 = vmatpush1.bf16.msra.mxu0 %v6462
    %7012 = vmatprep.mubr.bf16.mxu0 %v6357
    %7013 = vmatmul.mubr.bf16.gmra.mrb[0].mxu0 %v6356
    %v7014 = vpop.f32.mrb[0].mxu0
    %v7015 = vadd.f32 %v6953, %v7014
    %v7016 = vpop.f32.mrb[0].mxu0
    %v7017 = vadd.f32 %v6957, %v7016
    %v7018 = vpop.f32.mrb[0].mxu0
    %v7019 = vadd.f32 %v6953, %v7018
    %v7020 = vpop.f32.mrb[0].mxu0
    %v7021 = vadd.f32 %v6957, %v7020
    %7022 = vdwg.mxu0
    %7023 = vmatprep.subr.bf16.mxu0 %v6469
    %7024 = vmatpush1.bf16.msra.mxu0 %v6468
    %7025 = vmatprep.subr.bf16.mxu0 %v6475
    %7026 = vmatpush1.bf16.msra.mxu0 %v6474
    %7027 = vmatprep.subr.bf16.mxu0 %v6481
    %7028 = vmatpush1.bf16.msra.mxu0 %v6480
    %7029 = vmatprep.subr.bf16.mxu0 %v6487
    %7030 = vmatpush1.bf16.msra.mxu0 %v6486
    %7031 = vmatprep.subr.bf16.mxu0 %v6493
    %7032 = vmatpush1.bf16.msra.mxu0 %v6492
    %7033 = vmatprep.subr.bf16.mxu0 %v6499
    %7034 = vmatpush1.bf16.msra.mxu0 %v6498
    %7035 = vmatprep.subr.bf16.mxu0 %v6505
    %7036 = vmatpush1.bf16.msra.mxu0 %v6504
    %7037 = vmatprep.subr.bf16.mxu0 %v6511
    %7038 = vmatpush1.bf16.msra.mxu0 %v6510
    %7039 = vmatprep.subr.bf16.mxu0 %v6517
    %7040 = vmatpush1.bf16.msra.mxu0 %v6516
    %7041 = vmatprep.subr.bf16.mxu0 %v6523
    %7042 = vmatpush1.bf16.msra.mxu0 %v6522
    %7043 = vmatprep.subr.bf16.mxu0 %v6529
    %7044 = vmatpush1.bf16.msra.mxu0 %v6528
    %7045 = vmatprep.subr.bf16.mxu0 %v6535
    %7046 = vmatpush1.bf16.msra.mxu0 %v6534
    %7047 = vmatprep.subr.bf16.mxu0 %v6541
    %7048 = vmatpush1.bf16.msra.mxu0 %v6540
    %7049 = vmatprep.subr.bf16.mxu0 %v6547
    %7050 = vmatpush1.bf16.msra.mxu0 %v6546
    %7051 = vmatprep.subr.bf16.mxu0 %v6553
    %7052 = vmatpush1.bf16.msra.mxu0 %v6552
    %7053 = vmatprep.subr.bf16.mxu0 %v6559
    %7054 = vmatpush1.bf16.msra.mxu0 %v6558
    %7055 = vmatprep.mubr.bf16.mxu0 %v6359
    %7056 = vmatmul.mubr.bf16.gmra.mrb[0].mxu0 %v6358
    %v7057 = vpop.f32.mrb[0].mxu0
    %v7058 = vadd.f32 %v7015, %v7057
    %v7059 = vpop.f32.mrb[0].mxu0
    %v7060 = vadd.f32 %v7017, %v7059
    %v7061 = vpop.f32.mrb[0].mxu0
    %v7062 = vadd.f32 %v7019, %v7061
    %v7063 = vpop.f32.mrb[0].mxu0
    %v7064 = vadd.f32 %v7021, %v7063
    %7065 = vdwg.mxu0
    %7066 = vmatprep.subr.bf16.mxu0 %v6565
    %7067 = vmatpush1.bf16.msra.mxu0 %v6564
    %7068 = vmatprep.subr.bf16.mxu0 %v6571
    %7069 = vmatpush1.bf16.msra.mxu0 %v6570
    %7070 = vmatprep.subr.bf16.mxu0 %v6577
    %7071 = vmatpush1.bf16.msra.mxu0 %v6576
    %7072 = vmatprep.subr.bf16.mxu0 %v6583
    %7073 = vmatpush1.bf16.msra.mxu0 %v6582
    %7074 = vmatprep.subr.bf16.mxu0 %v6589
    %7075 = vmatpush1.bf16.msra.mxu0 %v6588
    %7076 = vmatprep.subr.bf16.mxu0 %v6595
    %7077 = vmatpush1.bf16.msra.mxu0 %v6594
    %7078 = vmatprep.subr.bf16.mxu0 %v6601
    %7079 = vmatpush1.bf16.msra.mxu0 %v6600
    %7080 = vmatprep.subr.bf16.mxu0 %v6607
    %7081 = vmatpush1.bf16.msra.mxu0 %v6606
    %7082 = vmatprep.subr.bf16.mxu0 %v6613
    %7083 = vmatpush1.bf16.msra.mxu0 %v6612
    %7084 = vmatprep.subr.bf16.mxu0 %v6619
    %7085 = vmatpush1.bf16.msra.mxu0 %v6618
    %7086 = vmatprep.subr.bf16.mxu0 %v6625
    %7087 = vmatpush1.bf16.msra.mxu0 %v6624
    %7088 = vmatprep.subr.bf16.mxu0 %v6631
    %7089 = vmatpush1.bf16.msra.mxu0 %v6630
    %7090 = vmatprep.subr.bf16.mxu0 %v6637
    %7091 = vmatpush1.bf16.msra.mxu0 %v6636
    %7092 = vmatprep.subr.bf16.mxu0 %v6643
    %7093 = vmatpush1.bf16.msra.mxu0 %v6642
    %7094 = vmatprep.subr.bf16.mxu0 %v6649
    %7095 = vmatpush1.bf16.msra.mxu0 %v6648
    %7096 = vmatprep.subr.bf16.mxu0 %v6655
    %7097 = vmatpush1.bf16.msra.mxu0 %v6654
    %7098 = vmatprep.mubr.bf16.mxu0 %v6361
    %7099 = vmatmul.mubr.bf16.gmra.mrb[0].mxu0 %v6360
    %v7100 = vpop.f32.mrb[0].mxu0
    %v7101 = vadd.f32 %v7058, %v7100
    %v7102 = vpop.f32.mrb[0].mxu0
    %v7103 = vadd.f32 %v7060, %v7102
    %v7104 = vpop.f32.mrb[0].mxu0
    %v7105 = vadd.f32 %v7062, %v7104
    %v7106 = vpop.f32.mrb[0].mxu0
    %v7107 = vadd.f32 %v7064, %v7106
    %7108 = vdwg.mxu0
    %7109 = vmatprep.subr.bf16.mxu0 %v6661
    %7110 = vmatpush1.bf16.msra.mxu0 %v6660
    %7111 = vmatprep.subr.bf16.mxu0 %v6667
    %7112 = vmatpush1.bf16.msra.mxu0 %v6666
    %7113 = vmatprep.subr.bf16.mxu0 %v6673
    %7114 = vmatpush1.bf16.msra.mxu0 %v6672
    %7115 = vmatprep.subr.bf16.mxu0 %v6679
    %7116 = vmatpush1.bf16.msra.mxu0 %v6678
    %7117 = vmatprep.subr.bf16.mxu0 %v6685
    %7118 = vmatpush1.bf16.msra.mxu0 %v6684
    %7119 = vmatprep.subr.bf16.mxu0 %v6691
    %7120 = vmatpush1.bf16.msra.mxu0 %v6690
    %7121 = vmatprep.subr.bf16.mxu0 %v6697
    %7122 = vmatpush1.bf16.msra.mxu0 %v6696
    %7123 = vmatprep.subr.bf16.mxu0 %v6703
    %7124 = vmatpush1.bf16.msra.mxu0 %v6702
    %7125 = vmatprep.subr.bf16.mxu0 %v6709
    %7126 = vmatpush1.bf16.msra.mxu0 %v6708
    %7127 = vmatprep.subr.bf16.mxu0 %v6715
    %7128 = vmatpush1.bf16.msra.mxu0 %v6714
    %7129 = vmatprep.subr.bf16.mxu0 %v6721
    %7130 = vmatpush1.bf16.msra.mxu0 %v6720
    %7131 = vmatprep.subr.bf16.mxu0 %v6727
    %7132 = vmatpush1.bf16.msra.mxu0 %v6726
    %7133 = vmatprep.subr.bf16.mxu0 %v6733
    %7134 = vmatpush1.bf16.msra.mxu0 %v6732
    %7135 = vmatprep.subr.bf16.mxu0 %v6739
    %7136 = vmatpush1.bf16.msra.mxu0 %v6738
    %7137 = vmatprep.subr.bf16.mxu0 %v6745
    %7138 = vmatpush1.bf16.msra.mxu0 %v6744
    %7139 = vmatprep.subr.bf16.mxu0 %v6751
    %7140 = vmatpush1.bf16.msra.mxu0 %v6750
    %7141 = vmatprep.mubr.bf16.mxu0 %v6363
    %7142 = vmatmul.mubr.bf16.gmra.mrb[0].mxu0 %v6362
    %v7143 = vpop.f32.mrb[0].mxu0
    %v7144 = vadd.f32 %v7101, %v7143
    %v7145 = vpop.f32.mrb[0].mxu0
    %v7146 = vadd.f32 %v7103, %v7145
    %v7147 = vpop.f32.mrb[0].mxu0
    %v7148 = vadd.f32 %v7105, %v7147
    %v7149 = vpop.f32.mrb[0].mxu0
    %v7150 = vadd.f32 %v7107, %v7149
    %7151 = vdwg.mxu0
    %7152 = vmatprep.subr.bf16.mxu0 %v6757
    %7153 = vmatpush1.bf16.msra.mxu0 %v6756
    %7154 = vmatprep.subr.bf16.mxu0 %v6763
    %7155 = vmatpush1.bf16.msra.mxu0 %v6762
    %7156 = vmatprep.subr.bf16.mxu0 %v6769
    %7157 = vmatpush1.bf16.msra.mxu0 %v6768
    %7158 = vmatprep.subr.bf16.mxu0 %v6775
    %7159 = vmatpush1.bf16.msra.mxu0 %v6774
    %7160 = vmatprep.subr.bf16.mxu0 %v6781
    %7161 = vmatpush1.bf16.msra.mxu0 %v6780
    %7162 = vmatprep.subr.bf16.mxu0 %v6787
    %7163 = vmatpush1.bf16.msra.mxu0 %v6786
    %7164 = vmatprep.subr.bf16.mxu0 %v6793
    %7165 = vmatpush1.bf16.msra.mxu0 %v6792
    %7166 = vmatprep.subr.bf16.mxu0 %v6799
    %7167 = vmatpush1.bf16.msra.mxu0 %v6798
    %7168 = vmatprep.subr.bf16.mxu0 %v6805
    %7169 = vmatpush1.bf16.msra.mxu0 %v6804
    %7170 = vmatprep.subr.bf16.mxu0 %v6811
    %7171 = vmatpush1.bf16.msra.mxu0 %v6810
    %7172 = vmatprep.subr.bf16.mxu0 %v6817
    %7173 = vmatpush1.bf16.msra.mxu0 %v6816
    %7174 = vmatprep.subr.bf16.mxu0 %v6823
    %7175 = vmatpush1.bf16.msra.mxu0 %v6822
    %7176 = vmatprep.subr.bf16.mxu0 %v6829
    %7177 = vmatpush1.bf16.msra.mxu0 %v6828
    %7178 = vmatprep.subr.bf16.mxu0 %v6835
    %7179 = vmatpush1.bf16.msra.mxu0 %v6834
    %7180 = vmatprep.subr.bf16.mxu0 %v6841
    %7181 = vmatpush1.bf16.msra.mxu0 %v6840
    %7182 = vmatprep.subr.bf16.mxu0 %v6847
    %7183 = vmatpush1.bf16.msra.mxu0 %v6846
    %7184 = vmatprep.mubr.bf16.mxu0 %v6365
    %7185 = vmatmul.mubr.bf16.gmra.mrb[0].mxu0 %v6364
    %v7186 = vpop.f32.mrb[0].mxu0
    %v7187 = vadd.f32 %v7144, %v7186
    %v7188 = vpop.f32.mrb[0].mxu0
    %v7189 = vadd.f32 %v7146, %v7188
    %v7190 = vpop.f32.mrb[0].mxu0
    %v7191 = vadd.f32 %v7148, %v7190
    %v7192 = vpop.f32.mrb[0].mxu0
    %v7193 = vadd.f32 %v7150, %v7192
    %7194 = vdwg.mxu0
    %7195 = vmatprep.subr.bf16.mxu0 %v6853
    %7196 = vmatpush1.bf16.msra.mxu0 %v6852
    %7197 = vmatprep.subr.bf16.mxu0 %v6859
    %7198 = vmatpush1.bf16.msra.mxu0 %v6858
    %7199 = vmatprep.subr.bf16.mxu0 %v6865
    %7200 = vmatpush1.bf16.msra.mxu0 %v6864
    %7201 = vmatprep.subr.bf16.mxu0 %v6871
    %7202 = vmatpush1.bf16.msra.mxu0 %v6870
    %7203 = vmatprep.subr.bf16.mxu0 %v6877
    %7204 = vmatpush1.bf16.msra.mxu0 %v6876
    %7205 = vmatprep.subr.bf16.mxu0 %v6883
    %7206 = vmatpush1.bf16.msra.mxu0 %v6882
    %7207 = vmatprep.subr.bf16.mxu0 %v6889
    %7208 = vmatpush1.bf16.msra.mxu0 %v6888
    %7209 = vmatprep.subr.bf16.mxu0 %v6895
    %7210 = vmatpush1.bf16.msra.mxu0 %v6894
    %7211 = vmatprep.subr.bf16.mxu0 %v6901
    %7212 = vmatpush1.bf16.msra.mxu0 %v6900
    %7213 = vmatprep.subr.bf16.mxu0 %v6907
    %7214 = vmatpush1.bf16.msra.mxu0 %v6906
    %7215 = vmatprep.subr.bf16.mxu0 %v6913
    %7216 = vmatpush1.bf16.msra.mxu0 %v6912
    %7217 = vmatprep.subr.bf16.mxu0 %v6919
    %7218 = vmatpush1.bf16.msra.mxu0 %v6918
    %7219 = vmatprep.subr.bf16.mxu0 %v6925
    %7220 = vmatpush1.bf16.msra.mxu0 %v6924
    %7221 = vmatprep.subr.bf16.mxu0 %v6931
    %7222 = vmatpush1.bf16.msra.mxu0 %v6930
    %7223 = vmatprep.subr.bf16.mxu0 %v6937
    %7224 = vmatpush1.bf16.msra.mxu0 %v6936
    %7225 = vmatprep.subr.bf16.mxu0 %v6943
    %7226 = vmatpush1.bf16.msra.mxu0 %v6942
    %7227 = vmatprep.mubr.bf16.mxu0 %v6367
    %7228 = vmatmul.mubr.bf16.gmra.mrb[0].mxu0 %v6366
    %v7229 = vpop.f32.mrb[0].mxu0
    %v7230 = vadd.f32 %v7187, %v7229
    %v7231 = vpop.f32.mrb[0].mxu0
    %v7232 = vadd.f32 %v7189, %v7231
    %v7233 = vpop.f32.mrb[0].mxu0
    %v7234 = vadd.f32 %v7191, %v7233
    %v7235 = vpop.f32.mrb[0].mxu0
    %v7236 = vadd.f32 %v7193, %v7235
    %7237 = vdwg.mxu0
    %7238 = vmatprep.subr.bf16.mxu0 %v6375
    %7239 = vmatpush1.bf16.msra.mxu0 %v6374
    %7240 = vmatprep.subr.bf16.mxu0 %v6381
    %7241 = vmatpush1.bf16.msra.mxu0 %v6380
    %7242 = vmatprep.subr.bf16.mxu0 %v6387
    %7243 = vmatpush1.bf16.msra.mxu0 %v6386
    %7244 = vmatprep.subr.bf16.mxu0 %v6393
    %7245 = vmatpush1.bf16.msra.mxu0 %v6392
    %7246 = vmatprep.subr.bf16.mxu0 %v6399
    %7247 = vmatpush1.bf16.msra.mxu0 %v6398
    %7248 = vmatprep.subr.bf16.mxu0 %v6405
    %7249 = vmatpush1.bf16.msra.mxu0 %v6404
    %7250 = vmatprep.subr.bf16.mxu0 %v6411
    %7251 = vmatpush1.bf16.msra.mxu0 %v6410
    %7252 = vmatprep.subr.bf16.mxu0 %v6417
    %7253 = vmatpush1.bf16.msra.mxu0 %v6416
    %7254 = vmatprep.subr.bf16.mxu0 %v6423
    %7255 = vmatpush1.bf16.msra.mxu0 %v6422
    %7256 = vmatprep.subr.bf16.mxu0 %v6429
    %7257 = vmatpush1.bf16.msra.mxu0 %v6428
    %7258 = vmatprep.subr.bf16.mxu0 %v6435
    %7259 = vmatpush1.bf16.msra.mxu0 %v6434
    %7260 = vmatprep.subr.bf16.mxu0 %v6441
    %7261 = vmatpush1.bf16.msra.mxu0 %v6440
    %7262 = vmatprep.subr.bf16.mxu0 %v6447
    %7263 = vmatpush1.bf16.msra.mxu0 %v6446
    %7264 = vmatprep.subr.bf16.mxu0 %v6453
    %7265 = vmatpush1.bf16.msra.mxu0 %v6452
    %7266 = vmatprep.subr.bf16.mxu0 %v6459
    %7267 = vmatpush1.bf16.msra.mxu0 %v6458
    %7268 = vmatprep.subr.bf16.mxu0 %v6465
    %7269 = vmatpush1.bf16.msra.mxu0 %v6464
    %7270 = vmatprep.mubr.bf16.mxu0 %v6357
    %7271 = vmatmul.mubr.bf16.gmra.mrb[0].mxu0 %v6356
    %v7272 = vpop.f32.mrb[0].mxu0
    %v7273 = vadd.f32 %v6961, %v7272
    %v7274 = vpop.f32.mrb[0].mxu0
    %v7275 = vadd.f32 %v6965, %v7274
    %v7276 = vpop.f32.mrb[0].mxu0
    %v7277 = vadd.f32 %v6961, %v7276
    %v7278 = vpop.f32.mrb[0].mxu0
    %v7279 = vadd.f32 %v6965, %v7278
    %7280 = vdwg.mxu0
    %7281 = vmatprep.subr.bf16.mxu0 %v6471
    %7282 = vmatpush1.bf16.msra.mxu0 %v6470
    %7283 = vmatprep.subr.bf16.mxu0 %v6477
    %7284 = vmatpush1.bf16.msra.mxu0 %v6476
    %7285 = vmatprep.subr.bf16.mxu0 %v6483
    %7286 = vmatpush1.bf16.msra.mxu0 %v6482
    %7287 = vmatprep.subr.bf16.mxu0 %v6489
    %7288 = vmatpush1.bf16.msra.mxu0 %v6488
    %7289 = vmatprep.subr.bf16.mxu0 %v6495
    %7290 = vmatpush1.bf16.msra.mxu0 %v6494
    %7291 = vmatprep.subr.bf16.mxu0 %v6501
    %7292 = vmatpush1.bf16.msra.mxu0 %v6500
    %7293 = vmatprep.subr.bf16.mxu0 %v6507
    %7294 = vmatpush1.bf16.msra.mxu0 %v6506
    %7295 = vmatprep.subr.bf16.mxu0 %v6513
    %7296 = vmatpush1.bf16.msra.mxu0 %v6512
    %7297 = vmatprep.subr.bf16.mxu0 %v6519
    %7298 = vmatpush1.bf16.msra.mxu0 %v6518
    %7299 = vmatprep.subr.bf16.mxu0 %v6525
    %7300 = vmatpush1.bf16.msra.mxu0 %v6524
    %7301 = vmatprep.subr.bf16.mxu0 %v6531
    %7302 = vmatpush1.bf16.msra.mxu0 %v6530
    %7303 = vmatprep.subr.bf16.mxu0 %v6537
    %7304 = vmatpush1.bf16.msra.mxu0 %v6536
    %7305 = vmatprep.subr.bf16.mxu0 %v6543
    %7306 = vmatpush1.bf16.msra.mxu0 %v6542
    %7307 = vmatprep.subr.bf16.mxu0 %v6549
    %7308 = vmatpush1.bf16.msra.mxu0 %v6548
    %7309 = vmatprep.subr.bf16.mxu0 %v6555
    %7310 = vmatpush1.bf16.msra.mxu0 %v6554
    %7311 = vmatprep.subr.bf16.mxu0 %v6561
    %7312 = vmatpush1.bf16.msra.mxu0 %v6560
    %7313 = vmatprep.mubr.bf16.mxu0 %v6359
    %7314 = vmatmul.mubr.bf16.gmra.mrb[0].mxu0 %v6358
    %v7315 = vpop.f32.mrb[0].mxu0
    %v7316 = vadd.f32 %v7273, %v7315
    %v7317 = vpop.f32.mrb[0].mxu0
    %v7318 = vadd.f32 %v7275, %v7317
    %v7319 = vpop.f32.mrb[0].mxu0
    %v7320 = vadd.f32 %v7277, %v7319
    %v7321 = vpop.f32.mrb[0].mxu0
    %v7322 = vadd.f32 %v7279, %v7321
    %7323 = vdwg.mxu0
    %7324 = vmatprep.subr.bf16.mxu0 %v6567
    %7325 = vmatpush1.bf16.msra.mxu0 %v6566
    %7326 = vmatprep.subr.bf16.mxu0 %v6573
    %7327 = vmatpush1.bf16.msra.mxu0 %v6572
    %7328 = vmatprep.subr.bf16.mxu0 %v6579
    %7329 = vmatpush1.bf16.msra.mxu0 %v6578
    %7330 = vmatprep.subr.bf16.mxu0 %v6585
    %7331 = vmatpush1.bf16.msra.mxu0 %v6584
    %7332 = vmatprep.subr.bf16.mxu0 %v6591
    %7333 = vmatpush1.bf16.msra.mxu0 %v6590
    %7334 = vmatprep.subr.bf16.mxu0 %v6597
    %7335 = vmatpush1.bf16.msra.mxu0 %v6596
    %7336 = vmatprep.subr.bf16.mxu0 %v6603
    %7337 = vmatpush1.bf16.msra.mxu0 %v6602
    %7338 = vmatprep.subr.bf16.mxu0 %v6609
    %7339 = vmatpush1.bf16.msra.mxu0 %v6608
    %7340 = vmatprep.subr.bf16.mxu0 %v6615
    %7341 = vmatpush1.bf16.msra.mxu0 %v6614
    %7342 = vmatprep.subr.bf16.mxu0 %v6621
    %7343 = vmatpush1.bf16.msra.mxu0 %v6620
    %7344 = vmatprep.subr.bf16.mxu0 %v6627
    %7345 = vmatpush1.bf16.msra.mxu0 %v6626
    %7346 = vmatprep.subr.bf16.mxu0 %v6633
    %7347 = vmatpush1.bf16.msra.mxu0 %v6632
    %7348 = vmatprep.subr.bf16.mxu0 %v6639
    %7349 = vmatpush1.bf16.msra.mxu0 %v6638
    %7350 = vmatprep.subr.bf16.mxu0 %v6645
    %7351 = vmatpush1.bf16.msra.mxu0 %v6644
    %7352 = vmatprep.subr.bf16.mxu0 %v6651
    %7353 = vmatpush1.bf16.msra.mxu0 %v6650
    %7354 = vmatprep.subr.bf16.mxu0 %v6657
    %7355 = vmatpush1.bf16.msra.mxu0 %v6656
    %7356 = vmatprep.mubr.bf16.mxu0 %v6361
    %7357 = vmatmul.mubr.bf16.gmra.mrb[0].mxu0 %v6360
    %v7358 = vpop.f32.mrb[0].mxu0
    %v7359 = vadd.f32 %v7316, %v7358
    %v7360 = vpop.f32.mrb[0].mxu0
    %v7361 = vadd.f32 %v7318, %v7360
    %v7362 = vpop.f32.mrb[0].mxu0
    %v7363 = vadd.f32 %v7320, %v7362
    %v7364 = vpop.f32.mrb[0].mxu0
    %v7365 = vadd.f32 %v7322, %v7364
    %7366 = vdwg.mxu0
    %7367 = vmatprep.subr.bf16.mxu0 %v6663
    %7368 = vmatpush1.bf16.msra.mxu0 %v6662
    %7369 = vmatprep.subr.bf16.mxu0 %v6669
    %7370 = vmatpush1.bf16.msra.mxu0 %v6668
    %7371 = vmatprep.subr.bf16.mxu0 %v6675
    %7372 = vmatpush1.bf16.msra.mxu0 %v6674
    %7373 = vmatprep.subr.bf16.mxu0 %v6681
    %7374 = vmatpush1.bf16.msra.mxu0 %v6680
    %7375 = vmatprep.subr.bf16.mxu0 %v6687
    %7376 = vmatpush1.bf16.msra.mxu0 %v6686
    %7377 = vmatprep.subr.bf16.mxu0 %v6693
    %7378 = vmatpush1.bf16.msra.mxu0 %v6692
    %7379 = vmatprep.subr.bf16.mxu0 %v6699
    %7380 = vmatpush1.bf16.msra.mxu0 %v6698
    %7381 = vmatprep.subr.bf16.mxu0 %v6705
    %7382 = vmatpush1.bf16.msra.mxu0 %v6704
    %7383 = vmatprep.subr.bf16.mxu0 %v6711
    %7384 = vmatpush1.bf16.msra.mxu0 %v6710
    %7385 = vmatprep.subr.bf16.mxu0 %v6717
    %7386 = vmatpush1.bf16.msra.mxu0 %v6716
    %7387 = vmatprep.subr.bf16.mxu0 %v6723
    %7388 = vmatpush1.bf16.msra.mxu0 %v6722
    %7389 = vmatprep.subr.bf16.mxu0 %v6729
    %7390 = vmatpush1.bf16.msra.mxu0 %v6728
    %7391 = vmatprep.subr.bf16.mxu0 %v6735
    %7392 = vmatpush1.bf16.msra.mxu0 %v6734
    %7393 = vmatprep.subr.bf16.mxu0 %v6741
    %7394 = vmatpush1.bf16.msra.mxu0 %v6740
    %7395 = vmatprep.subr.bf16.mxu0 %v6747
    %7396 = vmatpush1.bf16.msra.mxu0 %v6746
    %7397 = vmatprep.subr.bf16.mxu0 %v6753
    %7398 = vmatpush1.bf16.msra.mxu0 %v6752
    %7399 = vmatprep.mubr.bf16.mxu0 %v6363
    %7400 = vmatmul.mubr.bf16.gmra.mrb[0].mxu0 %v6362
    %v7401 = vpop.f32.mrb[0].mxu0
    %v7402 = vadd.f32 %v7359, %v7401
    %v7403 = vpop.f32.mrb[0].mxu0
    %v7404 = vadd.f32 %v7361, %v7403
    %v7405 = vpop.f32.mrb[0].mxu0
    %v7406 = vadd.f32 %v7363, %v7405
    %v7407 = vpop.f32.mrb[0].mxu0
    %v7408 = vadd.f32 %v7365, %v7407
    %7409 = vdwg.mxu0
    %7410 = vmatprep.subr.bf16.mxu0 %v6759
    %7411 = vmatpush1.bf16.msra.mxu0 %v6758
    %7412 = vmatprep.subr.bf16.mxu0 %v6765
    %7413 = vmatpush1.bf16.msra.mxu0 %v6764
    %7414 = vmatprep.subr.bf16.mxu0 %v6771
    %7415 = vmatpush1.bf16.msra.mxu0 %v6770
    %7416 = vmatprep.subr.bf16.mxu0 %v6777
    %7417 = vmatpush1.bf16.msra.mxu0 %v6776
    %7418 = vmatprep.subr.bf16.mxu0 %v6783
    %7419 = vmatpush1.bf16.msra.mxu0 %v6782
    %7420 = vmatprep.subr.bf16.mxu0 %v6789
    %7421 = vmatpush1.bf16.msra.mxu0 %v6788
    %7422 = vmatprep.subr.bf16.mxu0 %v6795
    %7423 = vmatpush1.bf16.msra.mxu0 %v6794
    %7424 = vmatprep.subr.bf16.mxu0 %v6801
    %7425 = vmatpush1.bf16.msra.mxu0 %v6800
    %7426 = vmatprep.subr.bf16.mxu0 %v6807
    %7427 = vmatpush1.bf16.msra.mxu0 %v6806
    %7428 = vmatprep.subr.bf16.mxu0 %v6813
    %7429 = vmatpush1.bf16.msra.mxu0 %v6812
    %7430 = vmatprep.subr.bf16.mxu0 %v6819
    %7431 = vmatpush1.bf16.msra.mxu0 %v6818
    %7432 = vmatprep.subr.bf16.mxu0 %v6825
    %7433 = vmatpush1.bf16.msra.mxu0 %v6824
    %7434 = vmatprep.subr.bf16.mxu0 %v6831
    %7435 = vmatpush1.bf16.msra.mxu0 %v6830
    %7436 = vmatprep.subr.bf16.mxu0 %v6837
    %7437 = vmatpush1.bf16.msra.mxu0 %v6836
    %7438 = vmatprep.subr.bf16.mxu0 %v6843
    %7439 = vmatpush1.bf16.msra.mxu0 %v6842
    %7440 = vmatprep.subr.bf16.mxu0 %v6849
    %7441 = vmatpush1.bf16.msra.mxu0 %v6848
    %7442 = vmatprep.mubr.bf16.mxu0 %v6365
    %7443 = vmatmul.mubr.bf16.gmra.mrb[0].mxu0 %v6364
    %v7444 = vpop.f32.mrb[0].mxu0
    %v7445 = vadd.f32 %v7402, %v7444
    %v7446 = vpop.f32.mrb[0].mxu0
    %v7447 = vadd.f32 %v7404, %v7446
    %v7448 = vpop.f32.mrb[0].mxu0
    %v7449 = vadd.f32 %v7406, %v7448
    %v7450 = vpop.f32.mrb[0].mxu0
    %v7451 = vadd.f32 %v7408, %v7450
    %7452 = vdwg.mxu0
    %7453 = vmatprep.subr.bf16.mxu0 %v6855
    %7454 = vmatpush1.bf16.msra.mxu0 %v6854
    %7455 = vmatprep.subr.bf16.mxu0 %v6861
    %7456 = vmatpush1.bf16.msra.mxu0 %v6860
    %7457 = vmatprep.subr.bf16.mxu0 %v6867
    %7458 = vmatpush1.bf16.msra.mxu0 %v6866
    %7459 = vmatprep.subr.bf16.mxu0 %v6873
    %7460 = vmatpush1.bf16.msra.mxu0 %v6872
    %7461 = vmatprep.subr.bf16.mxu0 %v6879
    %7462 = vmatpush1.bf16.msra.mxu0 %v6878
    %7463 = vmatprep.subr.bf16.mxu0 %v6885
    %7464 = vmatpush1.bf16.msra.mxu0 %v6884
    %7465 = vmatprep.subr.bf16.mxu0 %v6891
    %7466 = vmatpush1.bf16.msra.mxu0 %v6890
    %7467 = vmatprep.subr.bf16.mxu0 %v6897
    %7468 = vmatpush1.bf16.msra.mxu0 %v6896
    %7469 = vmatprep.subr.bf16.mxu0 %v6903
    %7470 = vmatpush1.bf16.msra.mxu0 %v6902
    %7471 = vmatprep.subr.bf16.mxu0 %v6909
    %7472 = vmatpush1.bf16.msra.mxu0 %v6908
    %7473 = vmatprep.subr.bf16.mxu0 %v6915
    %7474 = vmatpush1.bf16.msra.mxu0 %v6914
    %7475 = vmatprep.subr.bf16.mxu0 %v6921
    %7476 = vmatpush1.bf16.msra.mxu0 %v6920
    %7477 = vmatprep.subr.bf16.mxu0 %v6927
    %7478 = vmatpush1.bf16.msra.mxu0 %v6926
    %7479 = vmatprep.subr.bf16.mxu0 %v6933
    %7480 = vmatpush1.bf16.msra.mxu0 %v6932
    %7481 = vmatprep.subr.bf16.mxu0 %v6939
    %7482 = vmatpush1.bf16.msra.mxu0 %v6938
    %7483 = vmatprep.subr.bf16.mxu0 %v6945
    %7484 = vmatpush1.bf16.msra.mxu0 %v6944
    %7485 = vmatprep.mubr.bf16.mxu0 %v6367
    %7486 = vmatmul.mubr.bf16.gmra.mrb[0].mxu0 %v6366
    %v7487 = vpop.f32.mrb[0].mxu0
    %v7488 = vadd.f32 %v7445, %v7487
    %v7489 = vpop.f32.mrb[0].mxu0
    %v7490 = vadd.f32 %v7447, %v7489
    %v7491 = vpop.f32.mrb[0].mxu0
    %v7492 = vadd.f32 %v7449, %v7491
    %v7493 = vpop.f32.mrb[0].mxu0
    %v7494 = vadd.f32 %v7451, %v7493
    %7495 = vdwg.mxu0
    %7496 = vmatprep.subr.bf16.mxu0 %v6377
    %7497 = vmatpush1.bf16.msra.mxu0 %v6376
    %7498 = vmatprep.subr.bf16.mxu0 %v6383
    %7499 = vmatpush1.bf16.msra.mxu0 %v6382
    %7500 = vmatprep.subr.bf16.mxu0 %v6389
    %7501 = vmatpush1.bf16.msra.mxu0 %v6388
    %7502 = vmatprep.subr.bf16.mxu0 %v6395
    %7503 = vmatpush1.bf16.msra.mxu0 %v6394
    %7504 = vmatprep.subr.bf16.mxu0 %v6401
    %7505 = vmatpush1.bf16.msra.mxu0 %v6400
    %7506 = vmatprep.subr.bf16.mxu0 %v6407
    %7507 = vmatpush1.bf16.msra.mxu0 %v6406
    %7508 = vmatprep.subr.bf16.mxu0 %v6413
    %7509 = vmatpush1.bf16.msra.mxu0 %v6412
    %7510 = vmatprep.subr.bf16.mxu0 %v6419
    %7511 = vmatpush1.bf16.msra.mxu0 %v6418
    %7512 = vmatprep.subr.bf16.mxu0 %v6425
    %7513 = vmatpush1.bf16.msra.mxu0 %v6424
    %7514 = vmatprep.subr.bf16.mxu0 %v6431
    %7515 = vmatpush1.bf16.msra.mxu0 %v6430
    %7516 = vmatprep.subr.bf16.mxu0 %v6437
    %7517 = vmatpush1.bf16.msra.mxu0 %v6436
    %7518 = vmatprep.subr.bf16.mxu0 %v6443
    %7519 = vmatpush1.bf16.msra.mxu0 %v6442
    %7520 = vmatprep.subr.bf16.mxu0 %v6449
    %7521 = vmatpush1.bf16.msra.mxu0 %v6448
    %7522 = vmatprep.subr.bf16.mxu0 %v6455
    %7523 = vmatpush1.bf16.msra.mxu0 %v6454
    %7524 = vmatprep.subr.bf16.mxu0 %v6461
    %7525 = vmatpush1.bf16.msra.mxu0 %v6460
    %7526 = vmatprep.subr.bf16.mxu0 %v6467
    %7527 = vmatpush1.bf16.msra.mxu0 %v6466
    %7528 = vmatprep.mubr.bf16.mxu0 %v6357
    %7529 = vmatmul.mubr.bf16.gmra.mrb[0].mxu0 %v6356
    %v7530 = vpop.f32.mrb[0].mxu0
    %v7531 = vadd.f32 %v6969, %v7530
    %v7532 = vpop.f32.mrb[0].mxu0
    %v7533 = vadd.f32 %v6973, %v7532
    %v7534 = vpop.f32.mrb[0].mxu0
    %v7535 = vadd.f32 %v6969, %v7534
    %v7536 = vpop.f32.mrb[0].mxu0
    %v7537 = vadd.f32 %v6973, %v7536
    %7538 = vdwg.mxu0
    %7539 = vmatprep.subr.bf16.mxu0 %v6473
    %7540 = vmatpush1.bf16.msra.mxu0 %v6472
    %7541 = vmatprep.subr.bf16.mxu0 %v6479
    %7542 = vmatpush1.bf16.msra.mxu0 %v6478
    %7543 = vmatprep.subr.bf16.mxu0 %v6485
    %7544 = vmatpush1.bf16.msra.mxu0 %v6484
    %7545 = vmatprep.subr.bf16.mxu0 %v6491
    %7546 = vmatpush1.bf16.msra.mxu0 %v6490
    %7547 = vmatprep.subr.bf16.mxu0 %v6497
    %7548 = vmatpush1.bf16.msra.mxu0 %v6496
    %7549 = vmatprep.subr.bf16.mxu0 %v6503
    %7550 = vmatpush1.bf16.msra.mxu0 %v6502
    %7551 = vmatprep.subr.bf16.mxu0 %v6509
    %7552 = vmatpush1.bf16.msra.mxu0 %v6508
    %7553 = vmatprep.subr.bf16.mxu0 %v6515
    %7554 = vmatpush1.bf16.msra.mxu0 %v6514
    %7555 = vmatprep.subr.bf16.mxu0 %v6521
    %7556 = vmatpush1.bf16.msra.mxu0 %v6520
    %7557 = vmatprep.subr.bf16.mxu0 %v6527
    %7558 = vmatpush1.bf16.msra.mxu0 %v6526
    %7559 = vmatprep.subr.bf16.mxu0 %v6533
    %7560 = vmatpush1.bf16.msra.mxu0 %v6532
    %7561 = vmatprep.subr.bf16.mxu0 %v6539
    %7562 = vmatpush1.bf16.msra.mxu0 %v6538
    %7563 = vmatprep.subr.bf16.mxu0 %v6545
    %7564 = vmatpush1.bf16.msra.mxu0 %v6544
    %7565 = vmatprep.subr.bf16.mxu0 %v6551
    %7566 = vmatpush1.bf16.msra.mxu0 %v6550
    %7567 = vmatprep.subr.bf16.mxu0 %v6557
    %7568 = vmatpush1.bf16.msra.mxu0 %v6556
    %7569 = vmatprep.subr.bf16.mxu0 %v6563
    %7570 = vmatpush1.bf16.msra.mxu0 %v6562
    %7571 = vmatprep.mubr.bf16.mxu0 %v6359
    %7572 = vmatmul.mubr.bf16.gmra.mrb[0].mxu0 %v6358
    %v7573 = vpop.f32.mrb[0].mxu0
    %v7574 = vadd.f32 %v7531, %v7573
    %v7575 = vpop.f32.mrb[0].mxu0
    %v7576 = vadd.f32 %v7533, %v7575
    %v7577 = vpop.f32.mrb[0].mxu0
    %v7578 = vadd.f32 %v7535, %v7577
    %v7579 = vpop.f32.mrb[0].mxu0
    %v7580 = vadd.f32 %v7537, %v7579
    %7581 = vdwg.mxu0
    %7582 = vmatprep.subr.bf16.mxu0 %v6569
    %7583 = vmatpush1.bf16.msra.mxu0 %v6568
    %7584 = vmatprep.subr.bf16.mxu0 %v6575
    %7585 = vmatpush1.bf16.msra.mxu0 %v6574
    %7586 = vmatprep.subr.bf16.mxu0 %v6581
    %7587 = vmatpush1.bf16.msra.mxu0 %v6580
    %7588 = vmatprep.subr.bf16.mxu0 %v6587
    %7589 = vmatpush1.bf16.msra.mxu0 %v6586
    %7590 = vmatprep.subr.bf16.mxu0 %v6593
    %7591 = vmatpush1.bf16.msra.mxu0 %v6592
    %7592 = vmatprep.subr.bf16.mxu0 %v6599
    %7593 = vmatpush1.bf16.msra.mxu0 %v6598
    %7594 = vmatprep.subr.bf16.mxu0 %v6605
    %7595 = vmatpush1.bf16.msra.mxu0 %v6604
    %7596 = vmatprep.subr.bf16.mxu0 %v6611
    %7597 = vmatpush1.bf16.msra.mxu0 %v6610
    %7598 = vmatprep.subr.bf16.mxu0 %v6617
    %7599 = vmatpush1.bf16.msra.mxu0 %v6616
    %7600 = vmatprep.subr.bf16.mxu0 %v6623
    %7601 = vmatpush1.bf16.msra.mxu0 %v6622
    %7602 = vmatprep.subr.bf16.mxu0 %v6629
    %7603 = vmatpush1.bf16.msra.mxu0 %v6628
    %7604 = vmatprep.subr.bf16.mxu0 %v6635
    %7605 = vmatpush1.bf16.msra.mxu0 %v6634
    %7606 = vmatprep.subr.bf16.mxu0 %v6641
    %7607 = vmatpush1.bf16.msra.mxu0 %v6640
    %7608 = vmatprep.subr.bf16.mxu0 %v6647
    %7609 = vmatpush1.bf16.msra.mxu0 %v6646
    %7610 = vmatprep.subr.bf16.mxu0 %v6653
    %7611 = vmatpush1.bf16.msra.mxu0 %v6652
    %7612 = vmatprep.subr.bf16.mxu0 %v6659
    %7613 = vmatpush1.bf16.msra.mxu0 %v6658
    %7614 = vmatprep.mubr.bf16.mxu0 %v6361
    %7615 = vmatmul.mubr.bf16.gmra.mrb[0].mxu0 %v6360
    %v7616 = vpop.f32.mrb[0].mxu0
    %v7617 = vadd.f32 %v7574, %v7616
    %v7618 = vpop.f32.mrb[0].mxu0
    %v7619 = vadd.f32 %v7576, %v7618
    %v7620 = vpop.f32.mrb[0].mxu0
    %v7621 = vadd.f32 %v7578, %v7620
    %v7622 = vpop.f32.mrb[0].mxu0
    %v7623 = vadd.f32 %v7580, %v7622
    %7624 = vdwg.mxu0
    %7625 = vmatprep.subr.bf16.mxu0 %v6665
    %7626 = vmatpush1.bf16.msra.mxu0 %v6664
    %7627 = vmatprep.subr.bf16.mxu0 %v6671
    %7628 = vmatpush1.bf16.msra.mxu0 %v6670
    %7629 = vmatprep.subr.bf16.mxu0 %v6677
    %7630 = vmatpush1.bf16.msra.mxu0 %v6676
    %7631 = vmatprep.subr.bf16.mxu0 %v6683
    %7632 = vmatpush1.bf16.msra.mxu0 %v6682
    %7633 = vmatprep.subr.bf16.mxu0 %v6689
    %7634 = vmatpush1.bf16.msra.mxu0 %v6688
    %7635 = vmatprep.subr.bf16.mxu0 %v6695
    %7636 = vmatpush1.bf16.msra.mxu0 %v6694
    %7637 = vmatprep.subr.bf16.mxu0 %v6701
    %7638 = vmatpush1.bf16.msra.mxu0 %v6700
    %7639 = vmatprep.subr.bf16.mxu0 %v6707
    %7640 = vmatpush1.bf16.msra.mxu0 %v6706
    %7641 = vmatprep.subr.bf16.mxu0 %v6713
    %7642 = vmatpush1.bf16.msra.mxu0 %v6712
    %7643 = vmatprep.subr.bf16.mxu0 %v6719
    %7644 = vmatpush1.bf16.msra.mxu0 %v6718
    %7645 = vmatprep.subr.bf16.mxu0 %v6725
    %7646 = vmatpush1.bf16.msra.mxu0 %v6724
    %7647 = vmatprep.subr.bf16.mxu0 %v6731
    %7648 = vmatpush1.bf16.msra.mxu0 %v6730
    %7649 = vmatprep.subr.bf16.mxu0 %v6737
    %7650 = vmatpush1.bf16.msra.mxu0 %v6736
    %7651 = vmatprep.subr.bf16.mxu0 %v6743
    %7652 = vmatpush1.bf16.msra.mxu0 %v6742
    %7653 = vmatprep.subr.bf16.mxu0 %v6749
    %7654 = vmatpush1.bf16.msra.mxu0 %v6748
    %7655 = vmatprep.subr.bf16.mxu0 %v6755
    %7656 = vmatpush1.bf16.msra.mxu0 %v6754
    %7657 = vmatprep.mubr.bf16.mxu0 %v6363
    %7658 = vmatmul.mubr.bf16.gmra.mrb[0].mxu0 %v6362
    %v7659 = vpop.f32.mrb[0].mxu0
    %v7660 = vadd.f32 %v7617, %v7659
    %v7661 = vpop.f32.mrb[0].mxu0
    %v7662 = vadd.f32 %v7619, %v7661
    %v7663 = vpop.f32.mrb[0].mxu0
    %v7664 = vadd.f32 %v7621, %v7663
    %v7665 = vpop.f32.mrb[0].mxu0
    %v7666 = vadd.f32 %v7623, %v7665
    %7667 = vdwg.mxu0
    %7668 = vmatprep.subr.bf16.mxu0 %v6761
    %7669 = vmatpush1.bf16.msra.mxu0 %v6760
    %7670 = vmatprep.subr.bf16.mxu0 %v6767
    %7671 = vmatpush1.bf16.msra.mxu0 %v6766
    %7672 = vmatprep.subr.bf16.mxu0 %v6773
    %7673 = vmatpush1.bf16.msra.mxu0 %v6772
    %7674 = vmatprep.subr.bf16.mxu0 %v6779
    %7675 = vmatpush1.bf16.msra.mxu0 %v6778
    %7676 = vmatprep.subr.bf16.mxu0 %v6785
    %7677 = vmatpush1.bf16.msra.mxu0 %v6784
    %7678 = vmatprep.subr.bf16.mxu0 %v6791
    %7679 = vmatpush1.bf16.msra.mxu0 %v6790
    %7680 = vmatprep.subr.bf16.mxu0 %v6797
    %7681 = vmatpush1.bf16.msra.mxu0 %v6796
    %7682 = vmatprep.subr.bf16.mxu0 %v6803
    %7683 = vmatpush1.bf16.msra.mxu0 %v6802
    %7684 = vmatprep.subr.bf16.mxu0 %v6809
    %7685 = vmatpush1.bf16.msra.mxu0 %v6808
    %7686 = vmatprep.subr.bf16.mxu0 %v6815
    %7687 = vmatpush1.bf16.msra.mxu0 %v6814
    %7688 = vmatprep.subr.bf16.mxu0 %v6821
    %7689 = vmatpush1.bf16.msra.mxu0 %v6820
    %7690 = vmatprep.subr.bf16.mxu0 %v6827
    %7691 = vmatpush1.bf16.msra.mxu0 %v6826
    %7692 = vmatprep.subr.bf16.mxu0 %v6833
    %7693 = vmatpush1.bf16.msra.mxu0 %v6832
    %7694 = vmatprep.subr.bf16.mxu0 %v6839
    %7695 = vmatpush1.bf16.msra.mxu0 %v6838
    %7696 = vmatprep.subr.bf16.mxu0 %v6845
    %7697 = vmatpush1.bf16.msra.mxu0 %v6844
    %7698 = vmatprep.subr.bf16.mxu0 %v6851
    %7699 = vmatpush1.bf16.msra.mxu0 %v6850
    %7700 = vmatprep.mubr.bf16.mxu0 %v6365
    %7701 = vmatmul.mubr.bf16.gmra.mrb[0].mxu0 %v6364
    %v7702 = vpop.f32.mrb[0].mxu0
    %v7703 = vadd.f32 %v7660, %v7702
    %v7704 = vpop.f32.mrb[0].mxu0
    %v7705 = vadd.f32 %v7662, %v7704
    %v7706 = vpop.f32.mrb[0].mxu0
    %v7707 = vadd.f32 %v7664, %v7706
    %v7708 = vpop.f32.mrb[0].mxu0
    %v7709 = vadd.f32 %v7666, %v7708
    %7710 = vdwg.mxu0
    %7711 = vmatprep.subr.bf16.mxu0 %v6857
    %7712 = vmatpush1.bf16.msra.mxu0 %v6856
    %7713 = vmatprep.subr.bf16.mxu0 %v6863
    %7714 = vmatpush1.bf16.msra.mxu0 %v6862
    %7715 = vmatprep.subr.bf16.mxu0 %v6869
    %7716 = vmatpush1.bf16.msra.mxu0 %v6868
    %7717 = vmatprep.subr.bf16.mxu0 %v6875
    %7718 = vmatpush1.bf16.msra.mxu0 %v6874
    %7719 = vmatprep.subr.bf16.mxu0 %v6881
    %7720 = vmatpush1.bf16.msra.mxu0 %v6880
    %7721 = vmatprep.subr.bf16.mxu0 %v6887
    %7722 = vmatpush1.bf16.msra.mxu0 %v6886
    %7723 = vmatprep.subr.bf16.mxu0 %v6893
    %7724 = vmatpush1.bf16.msra.mxu0 %v6892
    %7725 = vmatprep.subr.bf16.mxu0 %v6899
    %7726 = vmatpush1.bf16.msra.mxu0 %v6898
    %7727 = vmatprep.subr.bf16.mxu0 %v6905
    %7728 = vmatpush1.bf16.msra.mxu0 %v6904
    %7729 = vmatprep.subr.bf16.mxu0 %v6911
    %7730 = vmatpush1.bf16.msra.mxu0 %v6910
    %7731 = vmatprep.subr.bf16.mxu0 %v6917
    %7732 = vmatpush1.bf16.msra.mxu0 %v6916
    %7733 = vmatprep.subr.bf16.mxu0 %v6923
    %7734 = vmatpush1.bf16.msra.mxu0 %v6922
    %7735 = vmatprep.subr.bf16.mxu0 %v6929
    %7736 = vmatpush1.bf16.msra.mxu0 %v6928
    %7737 = vmatprep.subr.bf16.mxu0 %v6935
    %7738 = vmatpush1.bf16.msra.mxu0 %v6934
    %7739 = vmatprep.subr.bf16.mxu0 %v6941
    %7740 = vmatpush1.bf16.msra.mxu0 %v6940
    %7741 = vmatprep.subr.bf16.mxu0 %v6947
    %7742 = vmatpush1.bf16.msra.mxu0 %v6946
    %7743 = vmatprep.mubr.bf16.mxu0 %v6367
    %7744 = vmatmul.mubr.bf16.gmra.mrb[0].mxu0 %v6366
    %v7745 = vpop.f32.mrb[0].mxu0
    %v7746 = vadd.f32 %v7703, %v7745
    %v7747 = vpop.f32.mrb[0].mxu0
    %v7748 = vadd.f32 %v7705, %v7747
    %v7749 = vpop.f32.mrb[0].mxu0
    %v7750 = vadd.f32 %v7707, %v7749
    %v7751 = vpop.f32.mrb[0].mxu0
    %v7752 = vadd.f32 %v7709, %v7751
    %7753 = vdwg.mxu0
    %v7754 = vmul.f32 %v7230, 0.5
    %v7755 = vmul.f32 %v7232, 0.5
    %v7756 = vmul.f32 %v7488, 0.5
    %v7757 = vmul.f32 %v7490, 0.5
    %v7758 = vmul.f32 %v7746, 0.5
    %v7759 = vmul.f32 %v7748, 0.5
    %v7760 = vmul.f32 %v7234, 0.5
    %v7761 = vmul.f32 %v7236, 0.5
    %v7762 = vmul.f32 %v7492, 0.5
    %v7763 = vmul.f32 %v7494, 0.5
    %v7764 = vmul.f32 %v7750, 0.5
    %v7765 = vmul.f32 %v7752, 0.5
    %s7766 = smul.u32 4, 96
    %s7767 = smul.u32 %s7766, 6
    %s7768 = sshll.u32 %s7767, 4
    %7769 = dma.done %s203, %s7768
    %v7770 = vpack.c.bf16 %v280, %v274
    %v7771 = vpack.c.bf16 %v281, %v275
    %v7772 = vpack.c.bf16 %v282, %v276
    %v7773 = vpack.c.bf16 %v283, %v277
    %v7774 = vpack.c.bf16 %v284, %v278
    %v7775 = vpack.c.bf16 %v285, %v279
    %v7776 = vld [vmem:[#allocation3] sm:$0xff]
    %v7777 = vld [vmem:[#allocation3 + $0x8] sm:$0xff]
    %v7778 = vld [vmem:[#allocation3 + $0x10] sm:$0xff]
    %v7779 = vld [vmem:[#allocation3 + $0x18] sm:$0xff]
    %v7780 = vld [vmem:[#allocation3 + $0x20] sm:$0xff]
    %v7781 = vld [vmem:[#allocation3 + $0x28] sm:$0xff]
    %v7782 = vld [vmem:[#allocation3 + $0x30] sm:$0xff]
    %v7783 = vld [vmem:[#allocation3 + $0x38] sm:$0xff]
    %v7784 = vld [vmem:[#allocation3 + $0x40] sm:$0xff]
    %v7785 = vld [vmem:[#allocation3 + $0x48] sm:$0xff]
    %v7786 = vld [vmem:[#allocation3 + $0x50] sm:$0xff]
    %v7787 = vld [vmem:[#allocation3 + $0x58] sm:$0xff]
    %v7788 = vld [vmem:[#allocation3 + $0x60] sm:$0xff]
    %v7789 = vld [vmem:[#allocation3 + $0x68] sm:$0xff]
    %v7790 = vld [vmem:[#allocation3 + $0x70] sm:$0xff]
    %v7791 = vld [vmem:[#allocation3 + $0x78] sm:$0xff]
    %v7792 = vld [vmem:[#allocation3 + $0x80] sm:$0xff]
    %v7793 = vld [vmem:[#allocation3 + $0x88] sm:$0xff]
    %v7794 = vld [vmem:[#allocation3 + $0x90] sm:$0xff]
    %v7795 = vld [vmem:[#allocation3 + $0x98] sm:$0xff]
    %v7796 = vld [vmem:[#allocation3 + $0xa0] sm:$0xff]
    %v7797 = vld [vmem:[#allocation3 + $0xa8] sm:$0xff]
    %v7798 = vld [vmem:[#allocation3 + $0xb0] sm:$0xff]
    %v7799 = vld [vmem:[#allocation3 + $0xb8] sm:$0xff]
    %v7800 = vld [vmem:[#allocation3 + $0xc0] sm:$0xff]
    %v7801 = vld [vmem:[#allocation3 + $0xc8] sm:$0xff]
    %v7802 = vld [vmem:[#allocation3 + $0xd0] sm:$0xff]
    %v7803 = vld [vmem:[#allocation3 + $0xd8] sm:$0xff]
    %v7804 = vld [vmem:[#allocation3 + $0xe0] sm:$0xff]
    %v7805 = vld [vmem:[#allocation3 + $0xe8] sm:$0xff]
    %v7806 = vld [vmem:[#allocation3 + $0xf0] sm:$0xff]
    %v7807 = vld [vmem:[#allocation3 + $0xf8] sm:$0xff]
    %v7808 = vld [vmem:[#allocation3 + $0x100] sm:$0xff]
    %v7809 = vld [vmem:[#allocation3 + $0x108] sm:$0xff]
    %v7810 = vld [vmem:[#allocation3 + $0x110] sm:$0xff]
    %v7811 = vld [vmem:[#allocation3 + $0x118] sm:$0xff]
    %v7812 = vld [vmem:[#allocation3 + $0x120] sm:$0xff]
    %v7813 = vld [vmem:[#allocation3 + $0x128] sm:$0xff]
    %v7814 = vld [vmem:[#allocation3 + $0x130] sm:$0xff]
    %v7815 = vld [vmem:[#allocation3 + $0x138] sm:$0xff]
    %v7816 = vld [vmem:[#allocation3 + $0x140] sm:$0xff]
    %v7817 = vld [vmem:[#allocation3 + $0x148] sm:$0xff]
    %v7818 = vld [vmem:[#allocation3 + $0x150] sm:$0xff]
    %v7819 = vld [vmem:[#allocation3 + $0x158] sm:$0xff]
    %v7820 = vld [vmem:[#allocation3 + $0x160] sm:$0xff]
    %v7821 = vld [vmem:[#allocation3 + $0x168] sm:$0xff]
    %v7822 = vld [vmem:[#allocation3 + $0x170] sm:$0xff]
    %v7823 = vld [vmem:[#allocation3 + $0x178] sm:$0xff]
    %v7824 = vld [vmem:[#allocation3 + $0x180] sm:$0xff]
    %v7825 = vld [vmem:[#allocation3 + $0x188] sm:$0xff]
    %v7826 = vld [vmem:[#allocation3 + $0x190] sm:$0xff]
    %v7827 = vld [vmem:[#allocation3 + $0x198] sm:$0xff]
    %v7828 = vld [vmem:[#allocation3 + $0x1a0] sm:$0xff]
    %v7829 = vld [vmem:[#allocation3 + $0x1a8] sm:$0xff]
    %v7830 = vld [vmem:[#allocation3 + $0x1b0] sm:$0xff]
    %v7831 = vld [vmem:[#allocation3 + $0x1b8] sm:$0xff]
    %v7832 = vld [vmem:[#allocation3 + $0x1c0] sm:$0xff]
    %v7833 = vld [vmem:[#allocation3 + $0x1c8] sm:$0xff]
    %v7834 = vld [vmem:[#allocation3 + $0x1d0] sm:$0xff]
    %v7835 = vld [vmem:[#allocation3 + $0x1d8] sm:$0xff]
    %v7836 = vld [vmem:[#allocation3 + $0x1e0] sm:$0xff]
    %v7837 = vld [vmem:[#allocation3 + $0x1e8] sm:$0xff]
    %v7838 = vld [vmem:[#allocation3 + $0x1f0] sm:$0xff]
    %v7839 = vld [vmem:[#allocation3 + $0x1f8] sm:$0xff]
    %v7840 = vld [vmem:[#allocation3 + $0x200] sm:$0xff]
    %v7841 = vld [vmem:[#allocation3 + $0x208] sm:$0xff]
    %v7842 = vld [vmem:[#allocation3 + $0x210] sm:$0xff]
    %v7843 = vld [vmem:[#allocation3 + $0x218] sm:$0xff]
    %v7844 = vld [vmem:[#allocation3 + $0x220] sm:$0xff]
    %v7845 = vld [vmem:[#allocation3 + $0x228] sm:$0xff]
    %v7846 = vld [vmem:[#allocation3 + $0x230] sm:$0xff]
    %v7847 = vld [vmem:[#allocation3 + $0x238] sm:$0xff]
    %v7848 = vld [vmem:[#allocation3 + $0x240] sm:$0xff]
    %v7849 = vld [vmem:[#allocation3 + $0x248] sm:$0xff]
    %v7850 = vld [vmem:[#allocation3 + $0x250] sm:$0xff]
    %v7851 = vld [vmem:[#allocation3 + $0x258] sm:$0xff]
    %v7852 = vld [vmem:[#allocation3 + $0x260] sm:$0xff]
    %v7853 = vld [vmem:[#allocation3 + $0x268] sm:$0xff]
    %v7854 = vld [vmem:[#allocation3 + $0x270] sm:$0xff]
    %v7855 = vld [vmem:[#allocation3 + $0x278] sm:$0xff]
    %v7856 = vld [vmem:[#allocation3 + $0x280] sm:$0xff]
    %v7857 = vld [vmem:[#allocation3 + $0x288] sm:$0xff]
    %v7858 = vld [vmem:[#allocation3 + $0x290] sm:$0xff]
    %v7859 = vld [vmem:[#allocation3 + $0x298] sm:$0xff]
    %v7860 = vld [vmem:[#allocation3 + $0x2a0] sm:$0xff]
    %v7861 = vld [vmem:[#allocation3 + $0x2a8] sm:$0xff]
    %v7862 = vld [vmem:[#allocation3 + $0x2b0] sm:$0xff]
    %v7863 = vld [vmem:[#allocation3 + $0x2b8] sm:$0xff]
    %v7864 = vld [vmem:[#allocation3 + $0x2c0] sm:$0xff]
    %v7865 = vld [vmem:[#allocation3 + $0x2c8] sm:$0xff]
    %v7866 = vld [vmem:[#allocation3 + $0x2d0] sm:$0xff]
    %v7867 = vld [vmem:[#allocation3 + $0x2d8] sm:$0xff]
    %v7868 = vld [vmem:[#allocation3 + $0x2e0] sm:$0xff]
    %v7869 = vld [vmem:[#allocation3 + $0x2e8] sm:$0xff]
    %v7870 = vld [vmem:[#allocation3 + $0x2f0] sm:$0xff]
    %v7871 = vld [vmem:[#allocation3 + $0x2f8] sm:$0xff]
    %v7872 = vld [vmem:[#allocation3 + $0x300] sm:$0xff]
    %v7873 = vld [vmem:[#allocation3 + $0x308] sm:$0xff]
    %v7874 = vld [vmem:[#allocation3 + $0x310] sm:$0xff]
    %v7875 = vld [vmem:[#allocation3 + $0x318] sm:$0xff]
    %v7876 = vld [vmem:[#allocation3 + $0x320] sm:$0xff]
    %v7877 = vld [vmem:[#allocation3 + $0x328] sm:$0xff]
    %v7878 = vld [vmem:[#allocation3 + $0x330] sm:$0xff]
    %v7879 = vld [vmem:[#allocation3 + $0x338] sm:$0xff]
    %v7880 = vld [vmem:[#allocation3 + $0x340] sm:$0xff]
    %v7881 = vld [vmem:[#allocation3 + $0x348] sm:$0xff]
    %v7882 = vld [vmem:[#allocation3 + $0x350] sm:$0xff]
    %v7883 = vld [vmem:[#allocation3 + $0x358] sm:$0xff]
    %v7884 = vld [vmem:[#allocation3 + $0x360] sm:$0xff]
    %v7885 = vld [vmem:[#allocation3 + $0x368] sm:$0xff]
    %v7886 = vld [vmem:[#allocation3 + $0x370] sm:$0xff]
    %v7887 = vld [vmem:[#allocation3 + $0x378] sm:$0xff]
    %v7888 = vld [vmem:[#allocation3 + $0x380] sm:$0xff]
    %v7889 = vld [vmem:[#allocation3 + $0x388] sm:$0xff]
    %v7890 = vld [vmem:[#allocation3 + $0x390] sm:$0xff]
    %v7891 = vld [vmem:[#allocation3 + $0x398] sm:$0xff]
    %v7892 = vld [vmem:[#allocation3 + $0x3a0] sm:$0xff]
    %v7893 = vld [vmem:[#allocation3 + $0x3a8] sm:$0xff]
    %v7894 = vld [vmem:[#allocation3 + $0x3b0] sm:$0xff]
    %v7895 = vld [vmem:[#allocation3 + $0x3b8] sm:$0xff]
    %v7896 = vld [vmem:[#allocation3 + $0x3c0] sm:$0xff]
    %v7897 = vld [vmem:[#allocation3 + $0x3c8] sm:$0xff]
    %v7898 = vld [vmem:[#allocation3 + $0x3d0] sm:$0xff]
    %v7899 = vld [vmem:[#allocation3 + $0x3d8] sm:$0xff]
    %v7900 = vld [vmem:[#allocation3 + $0x3e0] sm:$0xff]
    %v7901 = vld [vmem:[#allocation3 + $0x3e8] sm:$0xff]
    %v7902 = vld [vmem:[#allocation3 + $0x3f0] sm:$0xff]
    %v7903 = vld [vmem:[#allocation3 + $0x3f8] sm:$0xff]
    %v7904 = vld [vmem:[#allocation3 + $0x400] sm:$0xff]
    %v7905 = vld [vmem:[#allocation3 + $0x408] sm:$0xff]
    %v7906 = vld [vmem:[#allocation3 + $0x410] sm:$0xff]
    %v7907 = vld [vmem:[#allocation3 + $0x418] sm:$0xff]
    %v7908 = vld [vmem:[#allocation3 + $0x420] sm:$0xff]
    %v7909 = vld [vmem:[#allocation3 + $0x428] sm:$0xff]
    %v7910 = vld [vmem:[#allocation3 + $0x430] sm:$0xff]
    %v7911 = vld [vmem:[#allocation3 + $0x438] sm:$0xff]
    %v7912 = vld [vmem:[#allocation3 + $0x440] sm:$0xff]
    %v7913 = vld [vmem:[#allocation3 + $0x448] sm:$0xff]
    %v7914 = vld [vmem:[#allocation3 + $0x450] sm:$0xff]
    %v7915 = vld [vmem:[#allocation3 + $0x458] sm:$0xff]
    %v7916 = vld [vmem:[#allocation3 + $0x460] sm:$0xff]
    %v7917 = vld [vmem:[#allocation3 + $0x468] sm:$0xff]
    %v7918 = vld [vmem:[#allocation3 + $0x470] sm:$0xff]
    %v7919 = vld [vmem:[#allocation3 + $0x478] sm:$0xff]
    %v7920 = vld [vmem:[#allocation3 + $0x480] sm:$0xff]
    %v7921 = vld [vmem:[#allocation3 + $0x488] sm:$0xff]
    %v7922 = vld [vmem:[#allocation3 + $0x490] sm:$0xff]
    %v7923 = vld [vmem:[#allocation3 + $0x498] sm:$0xff]
    %v7924 = vld [vmem:[#allocation3 + $0x4a0] sm:$0xff]
    %v7925 = vld [vmem:[#allocation3 + $0x4a8] sm:$0xff]
    %v7926 = vld [vmem:[#allocation3 + $0x4b0] sm:$0xff]
    %v7927 = vld [vmem:[#allocation3 + $0x4b8] sm:$0xff]
    %v7928 = vld [vmem:[#allocation3 + $0x4c0] sm:$0xff]
    %v7929 = vld [vmem:[#allocation3 + $0x4c8] sm:$0xff]
    %v7930 = vld [vmem:[#allocation3 + $0x4d0] sm:$0xff]
    %v7931 = vld [vmem:[#allocation3 + $0x4d8] sm:$0xff]
    %v7932 = vld [vmem:[#allocation3 + $0x4e0] sm:$0xff]
    %v7933 = vld [vmem:[#allocation3 + $0x4e8] sm:$0xff]
    %v7934 = vld [vmem:[#allocation3 + $0x4f0] sm:$0xff]
    %v7935 = vld [vmem:[#allocation3 + $0x4f8] sm:$0xff]
    %v7936 = vld [vmem:[#allocation3 + $0x500] sm:$0xff]
    %v7937 = vld [vmem:[#allocation3 + $0x508] sm:$0xff]
    %v7938 = vld [vmem:[#allocation3 + $0x510] sm:$0xff]
    %v7939 = vld [vmem:[#allocation3 + $0x518] sm:$0xff]
    %v7940 = vld [vmem:[#allocation3 + $0x520] sm:$0xff]
    %v7941 = vld [vmem:[#allocation3 + $0x528] sm:$0xff]
    %v7942 = vld [vmem:[#allocation3 + $0x530] sm:$0xff]
    %v7943 = vld [vmem:[#allocation3 + $0x538] sm:$0xff]
    %v7944 = vld [vmem:[#allocation3 + $0x540] sm:$0xff]
    %v7945 = vld [vmem:[#allocation3 + $0x548] sm:$0xff]
    %v7946 = vld [vmem:[#allocation3 + $0x550] sm:$0xff]
    %v7947 = vld [vmem:[#allocation3 + $0x558] sm:$0xff]
    %v7948 = vld [vmem:[#allocation3 + $0x560] sm:$0xff]
    %v7949 = vld [vmem:[#allocation3 + $0x568] sm:$0xff]
    %v7950 = vld [vmem:[#allocation3 + $0x570] sm:$0xff]
    %v7951 = vld [vmem:[#allocation3 + $0x578] sm:$0xff]
    %v7952 = vld [vmem:[#allocation3 + $0x580] sm:$0xff]
    %v7953 = vld [vmem:[#allocation3 + $0x588] sm:$0xff]
    %v7954 = vld [vmem:[#allocation3 + $0x590] sm:$0xff]
    %v7955 = vld [vmem:[#allocation3 + $0x598] sm:$0xff]
    %v7956 = vld [vmem:[#allocation3 + $0x5a0] sm:$0xff]
    %v7957 = vld [vmem:[#allocation3 + $0x5a8] sm:$0xff]
    %v7958 = vld [vmem:[#allocation3 + $0x5b0] sm:$0xff]
    %v7959 = vld [vmem:[#allocation3 + $0x5b8] sm:$0xff]
    %v7960 = vld [vmem:[#allocation3 + $0x5c0] sm:$0xff]
    %v7961 = vld [vmem:[#allocation3 + $0x5c8] sm:$0xff]
    %v7962 = vld [vmem:[#allocation3 + $0x5d0] sm:$0xff]
    %v7963 = vld [vmem:[#allocation3 + $0x5d8] sm:$0xff]
    %v7964 = vld [vmem:[#allocation3 + $0x5e0] sm:$0xff]
    %v7965 = vld [vmem:[#allocation3 + $0x5e8] sm:$0xff]
    %v7966 = vld [vmem:[#allocation3 + $0x5f0] sm:$0xff]
    %v7967 = vld [vmem:[#allocation3 + $0x5f8] sm:$0xff]
    %v7968 = vld [vmem:[#allocation3 + $0x600] sm:$0xff]
    %v7969 = vld [vmem:[#allocation3 + $0x608] sm:$0xff]
    %v7970 = vld [vmem:[#allocation3 + $0x610] sm:$0xff]
    %v7971 = vld [vmem:[#allocation3 + $0x618] sm:$0xff]
    %v7972 = vld [vmem:[#allocation3 + $0x620] sm:$0xff]
    %v7973 = vld [vmem:[#allocation3 + $0x628] sm:$0xff]
    %v7974 = vld [vmem:[#allocation3 + $0x630] sm:$0xff]
    %v7975 = vld [vmem:[#allocation3 + $0x638] sm:$0xff]
    %v7976 = vld [vmem:[#allocation3 + $0x640] sm:$0xff]
    %v7977 = vld [vmem:[#allocation3 + $0x648] sm:$0xff]
    %v7978 = vld [vmem:[#allocation3 + $0x650] sm:$0xff]
    %v7979 = vld [vmem:[#allocation3 + $0x658] sm:$0xff]
    %v7980 = vld [vmem:[#allocation3 + $0x660] sm:$0xff]
    %v7981 = vld [vmem:[#allocation3 + $0x668] sm:$0xff]
    %v7982 = vld [vmem:[#allocation3 + $0x670] sm:$0xff]
    %v7983 = vld [vmem:[#allocation3 + $0x678] sm:$0xff]
    %v7984 = vld [vmem:[#allocation3 + $0x680] sm:$0xff]
    %v7985 = vld [vmem:[#allocation3 + $0x688] sm:$0xff]
    %v7986 = vld [vmem:[#allocation3 + $0x690] sm:$0xff]
    %v7987 = vld [vmem:[#allocation3 + $0x698] sm:$0xff]
    %v7988 = vld [vmem:[#allocation3 + $0x6a0] sm:$0xff]
    %v7989 = vld [vmem:[#allocation3 + $0x6a8] sm:$0xff]
    %v7990 = vld [vmem:[#allocation3 + $0x6b0] sm:$0xff]
    %v7991 = vld [vmem:[#allocation3 + $0x6b8] sm:$0xff]
    %v7992 = vld [vmem:[#allocation3 + $0x6c0] sm:$0xff]
    %v7993 = vld [vmem:[#allocation3 + $0x6c8] sm:$0xff]
    %v7994 = vld [vmem:[#allocation3 + $0x6d0] sm:$0xff]
    %v7995 = vld [vmem:[#allocation3 + $0x6d8] sm:$0xff]
    %v7996 = vld [vmem:[#allocation3 + $0x6e0] sm:$0xff]
    %v7997 = vld [vmem:[#allocation3 + $0x6e8] sm:$0xff]
    %v7998 = vld [vmem:[#allocation3 + $0x6f0] sm:$0xff]
    %v7999 = vld [vmem:[#allocation3 + $0x6f8] sm:$0xff]
    %v8000 = vld [vmem:[#allocation3 + $0x700] sm:$0xff]
    %v8001 = vld [vmem:[#allocation3 + $0x708] sm:$0xff]
    %v8002 = vld [vmem:[#allocation3 + $0x710] sm:$0xff]
    %v8003 = vld [vmem:[#allocation3 + $0x718] sm:$0xff]
    %v8004 = vld [vmem:[#allocation3 + $0x720] sm:$0xff]
    %v8005 = vld [vmem:[#allocation3 + $0x728] sm:$0xff]
    %v8006 = vld [vmem:[#allocation3 + $0x730] sm:$0xff]
    %v8007 = vld [vmem:[#allocation3 + $0x738] sm:$0xff]
    %v8008 = vld [vmem:[#allocation3 + $0x740] sm:$0xff]
    %v8009 = vld [vmem:[#allocation3 + $0x748] sm:$0xff]
    %v8010 = vld [vmem:[#allocation3 + $0x750] sm:$0xff]
    %v8011 = vld [vmem:[#allocation3 + $0x758] sm:$0xff]
    %v8012 = vld [vmem:[#allocation3 + $0x760] sm:$0xff]
    %v8013 = vld [vmem:[#allocation3 + $0x768] sm:$0xff]
    %v8014 = vld [vmem:[#allocation3 + $0x770] sm:$0xff]
    %v8015 = vld [vmem:[#allocation3 + $0x778] sm:$0xff]
    %v8016 = vld [vmem:[#allocation3 + $0x780] sm:$0xff]
    %v8017 = vld [vmem:[#allocation3 + $0x788] sm:$0xff]
    %v8018 = vld [vmem:[#allocation3 + $0x790] sm:$0xff]
    %v8019 = vld [vmem:[#allocation3 + $0x798] sm:$0xff]
    %v8020 = vld [vmem:[#allocation3 + $0x7a0] sm:$0xff]
    %v8021 = vld [vmem:[#allocation3 + $0x7a8] sm:$0xff]
    %v8022 = vld [vmem:[#allocation3 + $0x7b0] sm:$0xff]
    %v8023 = vld [vmem:[#allocation3 + $0x7b8] sm:$0xff]
    %v8024 = vld [vmem:[#allocation3 + $0x7c0] sm:$0xff]
    %v8025 = vld [vmem:[#allocation3 + $0x7c8] sm:$0xff]
    %v8026 = vld [vmem:[#allocation3 + $0x7d0] sm:$0xff]
    %v8027 = vld [vmem:[#allocation3 + $0x7d8] sm:$0xff]
    %v8028 = vld [vmem:[#allocation3 + $0x7e0] sm:$0xff]
    %v8029 = vld [vmem:[#allocation3 + $0x7e8] sm:$0xff]
    %v8030 = vld [vmem:[#allocation3 + $0x7f0] sm:$0xff]
    %v8031 = vld [vmem:[#allocation3 + $0x7f8] sm:$0xff]
    %v8032 = vld [vmem:[#allocation3 + $0x800] sm:$0xff]
    %v8033 = vld [vmem:[#allocation3 + $0x808] sm:$0xff]
    %v8034 = vld [vmem:[#allocation3 + $0x810] sm:$0xff]
    %v8035 = vld [vmem:[#allocation3 + $0x818] sm:$0xff]
    %v8036 = vld [vmem:[#allocation3 + $0x820] sm:$0xff]
    %v8037 = vld [vmem:[#allocation3 + $0x828] sm:$0xff]
    %v8038 = vld [vmem:[#allocation3 + $0x830] sm:$0xff]
    %v8039 = vld [vmem:[#allocation3 + $0x838] sm:$0xff]
    %v8040 = vld [vmem:[#allocation3 + $0x840] sm:$0xff]
    %v8041 = vld [vmem:[#allocation3 + $0x848] sm:$0xff]
    %v8042 = vld [vmem:[#allocation3 + $0x850] sm:$0xff]
    %v8043 = vld [vmem:[#allocation3 + $0x858] sm:$0xff]
    %v8044 = vld [vmem:[#allocation3 + $0x860] sm:$0xff]
    %v8045 = vld [vmem:[#allocation3 + $0x868] sm:$0xff]
    %v8046 = vld [vmem:[#allocation3 + $0x870] sm:$0xff]
    %v8047 = vld [vmem:[#allocation3 + $0x878] sm:$0xff]
    %v8048 = vld [vmem:[#allocation3 + $0x880] sm:$0xff]
    %v8049 = vld [vmem:[#allocation3 + $0x888] sm:$0xff]
    %v8050 = vld [vmem:[#allocation3 + $0x890] sm:$0xff]
    %v8051 = vld [vmem:[#allocation3 + $0x898] sm:$0xff]
    %v8052 = vld [vmem:[#allocation3 + $0x8a0] sm:$0xff]
    %v8053 = vld [vmem:[#allocation3 + $0x8a8] sm:$0xff]
    %v8054 = vld [vmem:[#allocation3 + $0x8b0] sm:$0xff]
    %v8055 = vld [vmem:[#allocation3 + $0x8b8] sm:$0xff]
    %v8056 = vld [vmem:[#allocation3 + $0x8c0] sm:$0xff]
    %v8057 = vld [vmem:[#allocation3 + $0x8c8] sm:$0xff]
    %v8058 = vld [vmem:[#allocation3 + $0x8d0] sm:$0xff]
    %v8059 = vld [vmem:[#allocation3 + $0x8d8] sm:$0xff]
    %v8060 = vld [vmem:[#allocation3 + $0x8e0] sm:$0xff]
    %v8061 = vld [vmem:[#allocation3 + $0x8e8] sm:$0xff]
    %v8062 = vld [vmem:[#allocation3 + $0x8f0] sm:$0xff]
    %v8063 = vld [vmem:[#allocation3 + $0x8f8] sm:$0xff]
    %v8064 = vld [vmem:[#allocation16] sm:$0x3f]
    %v8066 = vlaneseq
    %v8067 = vshrl.u32 %v8066, 7
    %v8068 = vsub.s32 0, %v8067
    %v8069 = vrot.slane %v8064, %v8068
    %v8070 = vlaneseq
    %v8071 = vshrl.u32 %v8070, 7
    %v8072 = vsub.s32 1, %v8071
    %v8073 = vrot.slane %v8064, %v8072
    %v8074 = vlaneseq
    %v8075 = vshrl.u32 %v8074, 7
    %v8076 = vsub.s32 2, %v8075
    %v8077 = vrot.slane %v8064, %v8076
    %v8078 = vlaneseq
    %v8079 = vshrl.u32 %v8078, 7
    %v8080 = vsub.s32 3, %v8079
    %v8081 = vrot.slane %v8064, %v8080
    %v8082 = vlaneseq
    %v8083 = vshrl.u32 %v8082, 7
    %v8084 = vsub.s32 4, %v8083
    %v8085 = vrot.slane %v8064, %v8084
    %v8086 = vlaneseq
    %v8087 = vshrl.u32 %v8086, 7
    %v8088 = vsub.s32 5, %v8087
    %v8089 = vrot.slane %v8064, %v8088
    %8096 = vmatprep.subr.bf16.mxu0 %v7777
    %8097 = vmatpush1.bf16.msra.mxu0 %v7776
    %8098 = vmatprep.subr.bf16.mxu0 %v7783
    %8099 = vmatpush1.bf16.msra.mxu0 %v7782
    %8100 = vmatprep.subr.bf16.mxu0 %v7789
    %8101 = vmatpush1.bf16.msra.mxu0 %v7788
    %8102 = vmatprep.subr.bf16.mxu0 %v7795
    %8103 = vmatpush1.bf16.msra.mxu0 %v7794
    %8104 = vmatprep.subr.bf16.mxu0 %v7801
    %8105 = vmatpush1.bf16.msra.mxu0 %v7800
    %8106 = vmatprep.subr.bf16.mxu0 %v7807
    %8107 = vmatpush1.bf16.msra.mxu0 %v7806
    %8108 = vmatprep.subr.bf16.mxu0 %v7813
    %8109 = vmatpush1.bf16.msra.mxu0 %v7812
    %8110 = vmatprep.subr.bf16.mxu0 %v7819
    %8111 = vmatpush1.bf16.msra.mxu0 %v7818
    %8112 = vmatprep.subr.bf16.mxu0 %v7825
    %8113 = vmatpush1.bf16.msra.mxu0 %v7824
    %8114 = vmatprep.subr.bf16.mxu0 %v7831
    %8115 = vmatpush1.bf16.msra.mxu0 %v7830
    %8116 = vmatprep.subr.bf16.mxu0 %v7837
    %8117 = vmatpush1.bf16.msra.mxu0 %v7836
    %8118 = vmatprep.subr.bf16.mxu0 %v7843
    %8119 = vmatpush1.bf16.msra.mxu0 %v7842
    %8120 = vmatprep.subr.bf16.mxu0 %v7849
    %8121 = vmatpush1.bf16.msra.mxu0 %v7848
    %8122 = vmatprep.subr.bf16.mxu0 %v7855
    %8123 = vmatpush1.bf16.msra.mxu0 %v7854
    %8124 = vmatprep.subr.bf16.mxu0 %v7861
    %8125 = vmatpush1.bf16.msra.mxu0 %v7860
    %8126 = vmatprep.subr.bf16.mxu0 %v7867
    %8127 = vmatpush1.bf16.msra.mxu0 %v7866
    %8128 = vmatprep.mubr.bf16.mxu0 %v7771
    %8129 = vmatmul.mubr.bf16.gmra.mrb[0].mxu0 %v7770
    %v8130 = vpop.f32.mrb[0].mxu0
    %v8131 = vadd.f32 %v8069, %v8130
    %v8132 = vpop.f32.mrb[0].mxu0
    %v8133 = vadd.f32 %v8073, %v8132
    %v8134 = vpop.f32.mrb[0].mxu0
    %v8135 = vadd.f32 %v8069, %v8134
    %v8136 = vpop.f32.mrb[0].mxu0
    %v8137 = vadd.f32 %v8073, %v8136
    %8138 = vdwg.mxu0
    %8139 = vmatprep.subr.bf16.mxu0 %v7873
    %8140 = vmatpush1.bf16.msra.mxu0 %v7872
    %8141 = vmatprep.subr.bf16.mxu0 %v7879
    %8142 = vmatpush1.bf16.msra.mxu0 %v7878
    %8143 = vmatprep.subr.bf16.mxu0 %v7885
    %8144 = vmatpush1.bf16.msra.mxu0 %v7884
    %8145 = vmatprep.subr.bf16.mxu0 %v7891
    %8146 = vmatpush1.bf16.msra.mxu0 %v7890
    %8147 = vmatprep.subr.bf16.mxu0 %v7897
    %8148 = vmatpush1.bf16.msra.mxu0 %v7896
    %8149 = vmatprep.subr.bf16.mxu0 %v7903
    %8150 = vmatpush1.bf16.msra.mxu0 %v7902
    %8151 = vmatprep.subr.bf16.mxu0 %v7909
    %8152 = vmatpush1.bf16.msra.mxu0 %v7908
    %8153 = vmatprep.subr.bf16.mxu0 %v7915
    %8154 = vmatpush1.bf16.msra.mxu0 %v7914
    %8155 = vmatprep.subr.bf16.mxu0 %v7921
    %8156 = vmatpush1.bf16.msra.mxu0 %v7920
    %8157 = vmatprep.subr.bf16.mxu0 %v7927
    %8158 = vmatpush1.bf16.msra.mxu0 %v7926
    %8159 = vmatprep.subr.bf16.mxu0 %v7933
    %8160 = vmatpush1.bf16.msra.mxu0 %v7932
    %8161 = vmatprep.subr.bf16.mxu0 %v7939
    %8162 = vmatpush1.bf16.msra.mxu0 %v7938
    %8163 = vmatprep.subr.bf16.mxu0 %v7945
    %8164 = vmatpush1.bf16.msra.mxu0 %v7944
    %8165 = vmatprep.subr.bf16.mxu0 %v7951
    %8166 = vmatpush1.bf16.msra.mxu0 %v7950
    %8167 = vmatprep.subr.bf16.mxu0 %v7957
    %8168 = vmatpush1.bf16.msra.mxu0 %v7956
    %8169 = vmatprep.subr.bf16.mxu0 %v7963
    %8170 = vmatpush1.bf16.msra.mxu0 %v7962
    %8171 = vmatprep.mubr.bf16.mxu0 %v7773
    %8172 = vmatmul.mubr.bf16.gmra.mrb[0].mxu0 %v7772
    %v8173 = vpop.f32.mrb[0].mxu0
    %v8174 = vadd.f32 %v8131, %v8173
    %v8175 = vpop.f32.mrb[0].mxu0
    %v8176 = vadd.f32 %v8133, %v8175
    %v8177 = vpop.f32.mrb[0].mxu0
    %v8178 = vadd.f32 %v8135, %v8177
    %v8179 = vpop.f32.mrb[0].mxu0
    %v8180 = vadd.f32 %v8137, %v8179
    %8181 = vdwg.mxu0
    %8182 = vmatprep.subr.bf16.mxu0 %v7969
    %8183 = vmatpush1.bf16.msra.mxu0 %v7968
    %8184 = vmatprep.subr.bf16.mxu0 %v7975
    %8185 = vmatpush1.bf16.msra.mxu0 %v7974
    %8186 = vmatprep.subr.bf16.mxu0 %v7981
    %8187 = vmatpush1.bf16.msra.mxu0 %v7980
    %8188 = vmatprep.subr.bf16.mxu0 %v7987
    %8189 = vmatpush1.bf16.msra.mxu0 %v7986
    %8190 = vmatprep.subr.bf16.mxu0 %v7993
    %8191 = vmatpush1.bf16.msra.mxu0 %v7992
    %8192 = vmatprep.subr.bf16.mxu0 %v7999
    %8193 = vmatpush1.bf16.msra.mxu0 %v7998
    %8194 = vmatprep.subr.bf16.mxu0 %v8005
    %8195 = vmatpush1.bf16.msra.mxu0 %v8004
    %8196 = vmatprep.subr.bf16.mxu0 %v8011
    %8197 = vmatpush1.bf16.msra.mxu0 %v8010
    %8198 = vmatprep.subr.bf16.mxu0 %v8017
    %8199 = vmatpush1.bf16.msra.mxu0 %v8016
    %8200 = vmatprep.subr.bf16.mxu0 %v8023
    %8201 = vmatpush1.bf16.msra.mxu0 %v8022
    %8202 = vmatprep.subr.bf16.mxu0 %v8029
    %8203 = vmatpush1.bf16.msra.mxu0 %v8028
    %8204 = vmatprep.subr.bf16.mxu0 %v8035
    %8205 = vmatpush1.bf16.msra.mxu0 %v8034
    %8206 = vmatprep.subr.bf16.mxu0 %v8041
    %8207 = vmatpush1.bf16.msra.mxu0 %v8040
    %8208 = vmatprep.subr.bf16.mxu0 %v8047
    %8209 = vmatpush1.bf16.msra.mxu0 %v8046
    %8210 = vmatprep.subr.bf16.mxu0 %v8053
    %8211 = vmatpush1.bf16.msra.mxu0 %v8052
    %8212 = vmatprep.subr.bf16.mxu0 %v8059
    %8213 = vmatpush1.bf16.msra.mxu0 %v8058
    %8214 = vmatprep.mubr.bf16.mxu0 %v7775
    %8215 = vmatmul.mubr.bf16.gmra.mrb[0].mxu0 %v7774
    %v8216 = vpop.f32.mrb[0].mxu0
    %v8217 = vadd.f32 %v8174, %v8216
    %v8218 = vpop.f32.mrb[0].mxu0
    %v8219 = vadd.f32 %v8176, %v8218
    %v8220 = vpop.f32.mrb[0].mxu0
    %v8221 = vadd.f32 %v8178, %v8220
    %v8222 = vpop.f32.mrb[0].mxu0
    %v8223 = vadd.f32 %v8180, %v8222
    %8224 = vdwg.mxu0
    %8225 = vmatprep.subr.bf16.mxu0 %v7779
    %8226 = vmatpush1.bf16.msra.mxu0 %v7778
    %8227 = vmatprep.subr.bf16.mxu0 %v7785
    %8228 = vmatpush1.bf16.msra.mxu0 %v7784
    %8229 = vmatprep.subr.bf16.mxu0 %v7791
    %8230 = vmatpush1.bf16.msra.mxu0 %v7790
    %8231 = vmatprep.subr.bf16.mxu0 %v7797
    %8232 = vmatpush1.bf16.msra.mxu0 %v7796
    %8233 = vmatprep.subr.bf16.mxu0 %v7803
    %8234 = vmatpush1.bf16.msra.mxu0 %v7802
    %8235 = vmatprep.subr.bf16.mxu0 %v7809
    %8236 = vmatpush1.bf16.msra.mxu0 %v7808
    %8237 = vmatprep.subr.bf16.mxu0 %v7815
    %8238 = vmatpush1.bf16.msra.mxu0 %v7814
    %8239 = vmatprep.subr.bf16.mxu0 %v7821
    %8240 = vmatpush1.bf16.msra.mxu0 %v7820
    %8241 = vmatprep.subr.bf16.mxu0 %v7827
    %8242 = vmatpush1.bf16.msra.mxu0 %v7826
    %8243 = vmatprep.subr.bf16.mxu0 %v7833
    %8244 = vmatpush1.bf16.msra.mxu0 %v7832
    %8245 = vmatprep.subr.bf16.mxu0 %v7839
    %8246 = vmatpush1.bf16.msra.mxu0 %v7838
    %8247 = vmatprep.subr.bf16.mxu0 %v7845
    %8248 = vmatpush1.bf16.msra.mxu0 %v7844
    %8249 = vmatprep.subr.bf16.mxu0 %v7851
    %8250 = vmatpush1.bf16.msra.mxu0 %v7850
    %8251 = vmatprep.subr.bf16.mxu0 %v7857
    %8252 = vmatpush1.bf16.msra.mxu0 %v7856
    %8253 = vmatprep.subr.bf16.mxu0 %v7863
    %8254 = vmatpush1.bf16.msra.mxu0 %v7862
    %8255 = vmatprep.subr.bf16.mxu0 %v7869
    %8256 = vmatpush1.bf16.msra.mxu0 %v7868
    %8257 = vmatprep.mubr.bf16.mxu0 %v7771
    %8258 = vmatmul.mubr.bf16.gmra.mrb[0].mxu0 %v7770
    %v8259 = vpop.f32.mrb[0].mxu0
    %v8260 = vadd.f32 %v8077, %v8259
    %v8261 = vpop.f32.mrb[0].mxu0
    %v8262 = vadd.f32 %v8081, %v8261
    %v8263 = vpop.f32.mrb[0].mxu0
    %v8264 = vadd.f32 %v8077, %v8263
    %v8265 = vpop.f32.mrb[0].mxu0
    %v8266 = vadd.f32 %v8081, %v8265
    %8267 = vdwg.mxu0
    %8268 = vmatprep.subr.bf16.mxu0 %v7875
    %8269 = vmatpush1.bf16.msra.mxu0 %v7874
    %8270 = vmatprep.subr.bf16.mxu0 %v7881
    %8271 = vmatpush1.bf16.msra.mxu0 %v7880
    %8272 = vmatprep.subr.bf16.mxu0 %v7887
    %8273 = vmatpush1.bf16.msra.mxu0 %v7886
    %8274 = vmatprep.subr.bf16.mxu0 %v7893
    %8275 = vmatpush1.bf16.msra.mxu0 %v7892
    %8276 = vmatprep.subr.bf16.mxu0 %v7899
    %8277 = vmatpush1.bf16.msra.mxu0 %v7898
    %8278 = vmatprep.subr.bf16.mxu0 %v7905
    %8279 = vmatpush1.bf16.msra.mxu0 %v7904
    %8280 = vmatprep.subr.bf16.mxu0 %v7911
    %8281 = vmatpush1.bf16.msra.mxu0 %v7910
    %8282 = vmatprep.subr.bf16.mxu0 %v7917
    %8283 = vmatpush1.bf16.msra.mxu0 %v7916
    %8284 = vmatprep.subr.bf16.mxu0 %v7923
    %8285 = vmatpush1.bf16.msra.mxu0 %v7922
    %8286 = vmatprep.subr.bf16.mxu0 %v7929
    %8287 = vmatpush1.bf16.msra.mxu0 %v7928
    %8288 = vmatprep.subr.bf16.mxu0 %v7935
    %8289 = vmatpush1.bf16.msra.mxu0 %v7934
    %8290 = vmatprep.subr.bf16.mxu0 %v7941
    %8291 = vmatpush1.bf16.msra.mxu0 %v7940
    %8292 = vmatprep.subr.bf16.mxu0 %v7947
    %8293 = vmatpush1.bf16.msra.mxu0 %v7946
    %8294 = vmatprep.subr.bf16.mxu0 %v7953
    %8295 = vmatpush1.bf16.msra.mxu0 %v7952
    %8296 = vmatprep.subr.bf16.mxu0 %v7959
    %8297 = vmatpush1.bf16.msra.mxu0 %v7958
    %8298 = vmatprep.subr.bf16.mxu0 %v7965
    %8299 = vmatpush1.bf16.msra.mxu0 %v7964
    %8300 = vmatprep.mubr.bf16.mxu0 %v7773
    %8301 = vmatmul.mubr.bf16.gmra.mrb[0].mxu0 %v7772
    %v8302 = vpop.f32.mrb[0].mxu0
    %v8303 = vadd.f32 %v8260, %v8302
    %v8304 = vpop.f32.mrb[0].mxu0
    %v8305 = vadd.f32 %v8262, %v8304
    %v8306 = vpop.f32.mrb[0].mxu0
    %v8307 = vadd.f32 %v8264, %v8306
    %v8308 = vpop.f32.mrb[0].mxu0
    %v8309 = vadd.f32 %v8266, %v8308
    %8310 = vdwg.mxu0
    %8311 = vmatprep.subr.bf16.mxu0 %v7971
    %8312 = vmatpush1.bf16.msra.mxu0 %v7970
    %8313 = vmatprep.subr.bf16.mxu0 %v7977
    %8314 = vmatpush1.bf16.msra.mxu0 %v7976
    %8315 = vmatprep.subr.bf16.mxu0 %v7983
    %8316 = vmatpush1.bf16.msra.mxu0 %v7982
    %8317 = vmatprep.subr.bf16.mxu0 %v7989
    %8318 = vmatpush1.bf16.msra.mxu0 %v7988
    %8319 = vmatprep.subr.bf16.mxu0 %v7995
    %8320 = vmatpush1.bf16.msra.mxu0 %v7994
    %8321 = vmatprep.subr.bf16.mxu0 %v8001
    %8322 = vmatpush1.bf16.msra.mxu0 %v8000
    %8323 = vmatprep.subr.bf16.mxu0 %v8007
    %8324 = vmatpush1.bf16.msra.mxu0 %v8006
    %8325 = vmatprep.subr.bf16.mxu0 %v8013
    %8326 = vmatpush1.bf16.msra.mxu0 %v8012
    %8327 = vmatprep.subr.bf16.mxu0 %v8019
    %8328 = vmatpush1.bf16.msra.mxu0 %v8018
    %8329 = vmatprep.subr.bf16.mxu0 %v8025
    %8330 = vmatpush1.bf16.msra.mxu0 %v8024
    %8331 = vmatprep.subr.bf16.mxu0 %v8031
    %8332 = vmatpush1.bf16.msra.mxu0 %v8030
    %8333 = vmatprep.subr.bf16.mxu0 %v8037
    %8334 = vmatpush1.bf16.msra.mxu0 %v8036
    %8335 = vmatprep.subr.bf16.mxu0 %v8043
    %8336 = vmatpush1.bf16.msra.mxu0 %v8042
    %8337 = vmatprep.subr.bf16.mxu0 %v8049
    %8338 = vmatpush1.bf16.msra.mxu0 %v8048
    %8339 = vmatprep.subr.bf16.mxu0 %v8055
    %8340 = vmatpush1.bf16.msra.mxu0 %v8054
    %8341 = vmatprep.subr.bf16.mxu0 %v8061
    %8342 = vmatpush1.bf16.msra.mxu0 %v8060
    %8343 = vmatprep.mubr.bf16.mxu0 %v7775
    %8344 = vmatmul.mubr.bf16.gmra.mrb[0].mxu0 %v7774
    %v8345 = vpop.f32.mrb[0].mxu0
    %v8346 = vadd.f32 %v8303, %v8345
    %v8347 = vpop.f32.mrb[0].mxu0
    %v8348 = vadd.f32 %v8305, %v8347
    %v8349 = vpop.f32.mrb[0].mxu0
    %v8350 = vadd.f32 %v8307, %v8349
    %v8351 = vpop.f32.mrb[0].mxu0
    %v8352 = vadd.f32 %v8309, %v8351
    %8353 = vdwg.mxu0
    %8354 = vmatprep.subr.bf16.mxu0 %v7781
    %8355 = vmatpush1.bf16.msra.mxu0 %v7780
    %8356 = vmatprep.subr.bf16.mxu0 %v7787
    %8357 = vmatpush1.bf16.msra.mxu0 %v7786
    %8358 = vmatprep.subr.bf16.mxu0 %v7793
    %8359 = vmatpush1.bf16.msra.mxu0 %v7792
    %8360 = vmatprep.subr.bf16.mxu0 %v7799
    %8361 = vmatpush1.bf16.msra.mxu0 %v7798
    %8362 = vmatprep.subr.bf16.mxu0 %v7805
    %8363 = vmatpush1.bf16.msra.mxu0 %v7804
    %8364 = vmatprep.subr.bf16.mxu0 %v7811
    %8365 = vmatpush1.bf16.msra.mxu0 %v7810
    %8366 = vmatprep.subr.bf16.mxu0 %v7817
    %8367 = vmatpush1.bf16.msra.mxu0 %v7816
    %8368 = vmatprep.subr.bf16.mxu0 %v7823
    %8369 = vmatpush1.bf16.msra.mxu0 %v7822
    %8370 = vmatprep.subr.bf16.mxu0 %v7829
    %8371 = vmatpush1.bf16.msra.mxu0 %v7828
    %8372 = vmatprep.subr.bf16.mxu0 %v7835
    %8373 = vmatpush1.bf16.msra.mxu0 %v7834
    %8374 = vmatprep.subr.bf16.mxu0 %v7841
    %8375 = vmatpush1.bf16.msra.mxu0 %v7840
    %8376 = vmatprep.subr.bf16.mxu0 %v7847
    %8377 = vmatpush1.bf16.msra.mxu0 %v7846
    %8378 = vmatprep.subr.bf16.mxu0 %v7853
    %8379 = vmatpush1.bf16.msra.mxu0 %v7852
    %8380 = vmatprep.subr.bf16.mxu0 %v7859
    %8381 = vmatpush1.bf16.msra.mxu0 %v7858
    %8382 = vmatprep.subr.bf16.mxu0 %v7865
    %8383 = vmatpush1.bf16.msra.mxu0 %v7864
    %8384 = vmatprep.subr.bf16.mxu0 %v7871
    %8385 = vmatpush1.bf16.msra.mxu0 %v7870
    %8386 = vmatprep.mubr.bf16.mxu0 %v7771
    %8387 = vmatmul.mubr.bf16.gmra.mrb[0].mxu0 %v7770
    %v8388 = vpop.f32.mrb[0].mxu0
    %v8389 = vadd.f32 %v8085, %v8388
    %v8390 = vpop.f32.mrb[0].mxu0
    %v8391 = vadd.f32 %v8089, %v8390
    %v8392 = vpop.f32.mrb[0].mxu0
    %v8393 = vadd.f32 %v8085, %v8392
    %v8394 = vpop.f32.mrb[0].mxu0
    %v8395 = vadd.f32 %v8089, %v8394
    %8396 = vdwg.mxu0
    %8397 = vmatprep.subr.bf16.mxu0 %v7877
    %8398 = vmatpush1.bf16.msra.mxu0 %v7876
    %8399 = vmatprep.subr.bf16.mxu0 %v7883
    %8400 = vmatpush1.bf16.msra.mxu0 %v7882
    %8401 = vmatprep.subr.bf16.mxu0 %v7889
    %8402 = vmatpush1.bf16.msra.mxu0 %v7888
    %8403 = vmatprep.subr.bf16.mxu0 %v7895
    %8404 = vmatpush1.bf16.msra.mxu0 %v7894
    %8405 = vmatprep.subr.bf16.mxu0 %v7901
    %8406 = vmatpush1.bf16.msra.mxu0 %v7900
    %8407 = vmatprep.subr.bf16.mxu0 %v7907
    %8408 = vmatpush1.bf16.msra.mxu0 %v7906
    %8409 = vmatprep.subr.bf16.mxu0 %v7913
    %8410 = vmatpush1.bf16.msra.mxu0 %v7912
    %8411 = vmatprep.subr.bf16.mxu0 %v7919
    %8412 = vmatpush1.bf16.msra.mxu0 %v7918
    %8413 = vmatprep.subr.bf16.mxu0 %v7925
    %8414 = vmatpush1.bf16.msra.mxu0 %v7924
    %8415 = vmatprep.subr.bf16.mxu0 %v7931
    %8416 = vmatpush1.bf16.msra.mxu0 %v7930
    %8417 = vmatprep.subr.bf16.mxu0 %v7937
    %8418 = vmatpush1.bf16.msra.mxu0 %v7936
    %8419 = vmatprep.subr.bf16.mxu0 %v7943
    %8420 = vmatpush1.bf16.msra.mxu0 %v7942
    %8421 = vmatprep.subr.bf16.mxu0 %v7949
    %8422 = vmatpush1.bf16.msra.mxu0 %v7948
    %8423 = vmatprep.subr.bf16.mxu0 %v7955
    %8424 = vmatpush1.bf16.msra.mxu0 %v7954
    %8425 = vmatprep.subr.bf16.mxu0 %v7961
    %8426 = vmatpush1.bf16.msra.mxu0 %v7960
    %8427 = vmatprep.subr.bf16.mxu0 %v7967
    %8428 = vmatpush1.bf16.msra.mxu0 %v7966
    %8429 = vmatprep.mubr.bf16.mxu0 %v7773
    %8430 = vmatmul.mubr.bf16.gmra.mrb[0].mxu0 %v7772
    %v8431 = vpop.f32.mrb[0].mxu0
    %v8432 = vadd.f32 %v8389, %v8431
    %v8433 = vpop.f32.mrb[0].mxu0
    %v8434 = vadd.f32 %v8391, %v8433
    %v8435 = vpop.f32.mrb[0].mxu0
    %v8436 = vadd.f32 %v8393, %v8435
    %v8437 = vpop.f32.mrb[0].mxu0
    %v8438 = vadd.f32 %v8395, %v8437
    %8439 = vdwg.mxu0
    %8440 = vmatprep.subr.bf16.mxu0 %v7973
    %8441 = vmatpush1.bf16.msra.mxu0 %v7972
    %8442 = vmatprep.subr.bf16.mxu0 %v7979
    %8443 = vmatpush1.bf16.msra.mxu0 %v7978
    %8444 = vmatprep.subr.bf16.mxu0 %v7985
    %8445 = vmatpush1.bf16.msra.mxu0 %v7984
    %8446 = vmatprep.subr.bf16.mxu0 %v7991
    %8447 = vmatpush1.bf16.msra.mxu0 %v7990
    %8448 = vmatprep.subr.bf16.mxu0 %v7997
    %8449 = vmatpush1.bf16.msra.mxu0 %v7996
    %8450 = vmatprep.subr.bf16.mxu0 %v8003
    %8451 = vmatpush1.bf16.msra.mxu0 %v8002
    %8452 = vmatprep.subr.bf16.mxu0 %v8009
    %8453 = vmatpush1.bf16.msra.mxu0 %v8008
    %8454 = vmatprep.subr.bf16.mxu0 %v8015
    %8455 = vmatpush1.bf16.msra.mxu0 %v8014
    %8456 = vmatprep.subr.bf16.mxu0 %v8021
    %8457 = vmatpush1.bf16.msra.mxu0 %v8020
    %8458 = vmatprep.subr.bf16.mxu0 %v8027
    %8459 = vmatpush1.bf16.msra.mxu0 %v8026
    %8460 = vmatprep.subr.bf16.mxu0 %v8033
    %8461 = vmatpush1.bf16.msra.mxu0 %v8032
    %8462 = vmatprep.subr.bf16.mxu0 %v8039
    %8463 = vmatpush1.bf16.msra.mxu0 %v8038
    %8464 = vmatprep.subr.bf16.mxu0 %v8045
    %8465 = vmatpush1.bf16.msra.mxu0 %v8044
    %8466 = vmatprep.subr.bf16.mxu0 %v8051
    %8467 = vmatpush1.bf16.msra.mxu0 %v8050
    %8468 = vmatprep.subr.bf16.mxu0 %v8057
    %8469 = vmatpush1.bf16.msra.mxu0 %v8056
    %8470 = vmatprep.subr.bf16.mxu0 %v8063
    %8471 = vmatpush1.bf16.msra.mxu0 %v8062
    %8472 = vmatprep.mubr.bf16.mxu0 %v7775
    %8473 = vmatmul.mubr.bf16.gmra.mrb[0].mxu0 %v7774
    %v8474 = vpop.f32.mrb[0].mxu0
    %v8475 = vadd.f32 %v8432, %v8474
    %v8476 = vpop.f32.mrb[0].mxu0
    %v8477 = vadd.f32 %v8434, %v8476
    %v8478 = vpop.f32.mrb[0].mxu0
    %v8479 = vadd.f32 %v8436, %v8478
    %v8480 = vpop.f32.mrb[0].mxu0
    %v8481 = vadd.f32 %v8438, %v8480
    %8482 = vdwg.mxu0
    %v8483 = vxor.u32 %v8217, 2147483648
    %v8484 = vxor.u32 %v8219, 2147483648
    %v8485 = vxor.u32 %v8346, 2147483648
    %v8486 = vxor.u32 %v8348, 2147483648
    %v8487 = vxor.u32 %v8475, 2147483648
    %v8488 = vxor.u32 %v8477, 2147483648
    %v8489 = vxor.u32 %v8221, 2147483648
    %v8490 = vxor.u32 %v8223, 2147483648
    %v8491 = vxor.u32 %v8350, 2147483648
    %v8492 = vxor.u32 %v8352, 2147483648
    %v8493 = vxor.u32 %v8479, 2147483648
    %v8494 = vxor.u32 %v8481, 2147483648
    %v8495 = vmul.f32 %v8483, 1.442695
    %v8496 = vpow.pop %v8495
    %v8497 = vmul.f32 %v8484, 1.442695
    %v8498 = vpow.pop %v8497
    %v8499 = vmul.f32 %v8485, 1.442695
    %v8500 = vpow.pop %v8499
    %v8501 = vmul.f32 %v8486, 1.442695
    %v8502 = vpow.pop %v8501
    %v8503 = vmul.f32 %v8487, 1.442695
    %v8504 = vpow.pop %v8503
    %v8505 = vmul.f32 %v8488, 1.442695
    %v8506 = vpow.pop %v8505
    %v8507 = vmul.f32 %v8489, 1.442695
    %v8508 = vpow.pop %v8507
    %v8509 = vmul.f32 %v8490, 1.442695
    %v8510 = vpow.pop %v8509
    %v8511 = vmul.f32 %v8491, 1.442695
    %v8512 = vpow.pop %v8511
    %v8513 = vmul.f32 %v8492, 1.442695
    %v8514 = vpow.pop %v8513
    %v8515 = vmul.f32 %v8493, 1.442695
    %v8516 = vpow.pop %v8515
    %v8517 = vmul.f32 %v8494, 1.442695
    %v8518 = vpow.pop %v8517
    %v8519 = vadd.f32 %v8496, 1.0
    %v8520 = vadd.f32 %v8498, 1.0
    %v8521 = vadd.f32 %v8500, 1.0
    %v8522 = vadd.f32 %v8502, 1.0
    %v8523 = vadd.f32 %v8504, 1.0
    %v8524 = vadd.f32 %v8506, 1.0
    %v8525 = vadd.f32 %v8508, 1.0
    %v8526 = vadd.f32 %v8510, 1.0
    %v8527 = vadd.f32 %v8512, 1.0
    %v8528 = vadd.f32 %v8514, 1.0
    %v8529 = vadd.f32 %v8516, 1.0
    %v8530 = vadd.f32 %v8518, 1.0
    %v8531 = vrcp.pop %v8519
    %v8532 = vmul.f32 1.0, %v8531
    %v8533 = vrcp.pop %v8520
    %v8534 = vmul.f32 1.0, %v8533
    %v8535 = vrcp.pop %v8521
    %v8536 = vmul.f32 1.0, %v8535
    %v8537 = vrcp.pop %v8522
    %v8538 = vmul.f32 1.0, %v8537
    %v8539 = vrcp.pop %v8523
    %v8540 = vmul.f32 1.0, %v8539
    %v8541 = vrcp.pop %v8524
    %v8542 = vmul.f32 1.0, %v8541
    %v8543 = vrcp.pop %v8525
    %v8544 = vmul.f32 1.0, %v8543
    %v8545 = vrcp.pop %v8526
    %v8546 = vmul.f32 1.0, %v8545
    %v8547 = vrcp.pop %v8527
    %v8548 = vmul.f32 1.0, %v8547
    %v8549 = vrcp.pop %v8528
    %v8550 = vmul.f32 1.0, %v8549
    %v8551 = vrcp.pop %v8529
    %v8552 = vmul.f32 1.0, %v8551
    %v8553 = vrcp.pop %v8530
    %v8554 = vmul.f32 1.0, %v8553
    %v8555 = vld [vmem:[#allocation18] sm:$0x3f]
    %v8557 = vlaneseq
    %v8558 = vshrl.u32 %v8557, 7
    %v8559 = vsub.s32 0, %v8558
    %v8560 = vrot.slane %v8555, %v8559
    %v8561 = vlaneseq
    %v8562 = vshrl.u32 %v8561, 7
    %v8563 = vsub.s32 1, %v8562
    %v8564 = vrot.slane %v8555, %v8563
    %v8565 = vlaneseq
    %v8566 = vshrl.u32 %v8565, 7
    %v8567 = vsub.s32 2, %v8566
    %v8568 = vrot.slane %v8555, %v8567
    %v8569 = vlaneseq
    %v8570 = vshrl.u32 %v8569, 7
    %v8571 = vsub.s32 3, %v8570
    %v8572 = vrot.slane %v8555, %v8571
    %v8573 = vlaneseq
    %v8574 = vshrl.u32 %v8573, 7
    %v8575 = vsub.s32 4, %v8574
    %v8576 = vrot.slane %v8555, %v8575
    %v8577 = vlaneseq
    %v8578 = vshrl.u32 %v8577, 7
    %v8579 = vsub.s32 5, %v8578
    %v8580 = vrot.slane %v8555, %v8579
    %v8587 = vmul.f32 %v8532, %v8560
    %v8588 = vmul.f32 %v8534, %v8564
    %v8589 = vmul.f32 %v8536, %v8568
    %v8590 = vmul.f32 %v8538, %v8572
    %v8591 = vmul.f32 %v8540, %v8576
    %v8592 = vmul.f32 %v8542, %v8580
    %v8593 = vmul.f32 %v8544, %v8560
    %v8594 = vmul.f32 %v8546, %v8564
    %v8595 = vmul.f32 %v8548, %v8568
    %v8596 = vmul.f32 %v8550, %v8572
    %v8597 = vmul.f32 %v8552, %v8576
    %v8598 = vmul.f32 %v8554, %v8580
    %v8599 = vadd.f32 %v8587, %v8588
    %v8600 = vadd.f32 %v8599, %v8589
    %v8601 = vadd.f32 %v8600, %v8590
    %v8602 = vadd.f32 %v8601, %v8591
    %v8603 = vadd.f32 %v8602, %v8592
    %8604 = vadd.xlane.f32.xlu0 %v8603
    %v8605 = vpop.xlane.xlu0 %8604
    %v8606 = vadd.f32 %v8593, %v8594
    %v8607 = vadd.f32 %v8606, %v8595
    %v8608 = vadd.f32 %v8607, %v8596
    %v8609 = vadd.f32 %v8608, %v8597
    %v8610 = vadd.f32 %v8609, %v8598
    %8611 = vadd.xlane.f32.xlu0 %v8610
    %v8612 = vpop.xlane.xlu0 %8611
    %v8613 = vrot.slane %v8605, 4
    %v8614 = vmax.f32 %v8605, %v8613
    %v8615 = vrot.slane %v8614, 2
    %v8616 = vmax.f32 %v8614, %v8615
    %v8617 = vrot.slane %v8616, 1
    %v8618 = vmax.f32 %v8616, %v8617
    %v8619 = vrot.slane %v8612, 4
    %v8620 = vmax.f32 %v8612, %v8619
    %v8621 = vrot.slane %v8620, 2
    %v8622 = vmax.f32 %v8620, %v8621
    %v8623 = vrot.slane %v8622, 1
    %v8624 = vmax.f32 %v8622, %v8623
    %v8625 = vsub.f32 %v8605, %v8618
    %v8626 = vsub.f32 %v8612, %v8624
    %v8627 = vmul.f32 %v8625, 1.442695
    %v8628 = vpow.pop %v8627
    %v8629 = vmul.f32 %v8626, 1.442695
    %v8630 = vpow.pop %v8629
    %v8631 = vrot.slane %v8628, 4
    %v8632 = vadd.f32 %v8628, %v8631
    %v8633 = vrot.slane %v8632, 2
    %v8634 = vadd.f32 %v8632, %v8633
    %v8635 = vrot.slane %v8634, 1
    %v8636 = vadd.f32 %v8634, %v8635
    %v8637 = vrot.slane %v8630, 4
    %v8638 = vadd.f32 %v8630, %v8637
    %v8639 = vrot.slane %v8638, 2
    %v8640 = vadd.f32 %v8638, %v8639
    %v8641 = vrot.slane %v8640, 1
    %v8642 = vadd.f32 %v8640, %v8641
    %v8643 = vrcp.pop %v8636
    %v8644 = vmul.f32 %v8628, %v8643
    %v8645 = vrcp.pop %v8642
    %v8646 = vmul.f32 %v8630, %v8645
    %v8647 = vmul.f32 %v8644, %v7754
    %v8648 = vmul.f32 %v8644, %v7755
    %v8649 = vmul.f32 %v8644, %v7756
    %v8650 = vmul.f32 %v8644, %v7757
    %v8651 = vmul.f32 %v8644, %v7758
    %v8652 = vmul.f32 %v8644, %v7759
    %v8653 = vmul.f32 %v8646, %v7760
    %v8654 = vmul.f32 %v8646, %v7761
    %v8655 = vmul.f32 %v8646, %v7762
    %v8656 = vmul.f32 %v8646, %v7763
    %v8657 = vmul.f32 %v8646, %v7764
    %v8658 = vmul.f32 %v8646, %v7765
    %v8659 = vrot.slane %v8647, 4
    %v8660 = vadd.f32 %v8647, %v8659
    %v8661 = vrot.slane %v8660, 2
    %v8662 = vadd.f32 %v8660, %v8661
    %v8663 = vrot.slane %v8662, 1
    %v8664 = vadd.f32 %v8662, %v8663
    %v8665 = vrot.slane %v8648, 4
    %v8666 = vadd.f32 %v8648, %v8665
    %v8667 = vrot.slane %v8666, 2
    %v8668 = vadd.f32 %v8666, %v8667
    %v8669 = vrot.slane %v8668, 1
    %v8670 = vadd.f32 %v8668, %v8669
    %v8671 = vrot.slane %v8649, 4
    %v8672 = vadd.f32 %v8649, %v8671
    %v8673 = vrot.slane %v8672, 2
    %v8674 = vadd.f32 %v8672, %v8673
    %v8675 = vrot.slane %v8674, 1
    %v8676 = vadd.f32 %v8674, %v8675
    %v8677 = vrot.slane %v8650, 4
    %v8678 = vadd.f32 %v8650, %v8677
    %v8679 = vrot.slane %v8678, 2
    %v8680 = vadd.f32 %v8678, %v8679
    %v8681 = vrot.slane %v8680, 1
    %v8682 = vadd.f32 %v8680, %v8681
    %v8683 = vrot.slane %v8651, 4
    %v8684 = vadd.f32 %v8651, %v8683
    %v8685 = vrot.slane %v8684, 2
    %v8686 = vadd.f32 %v8684, %v8685
    %v8687 = vrot.slane %v8686, 1
    %v8688 = vadd.f32 %v8686, %v8687
    %v8689 = vrot.slane %v8652, 4
    %v8690 = vadd.f32 %v8652, %v8689
    %v8691 = vrot.slane %v8690, 2
    %v8692 = vadd.f32 %v8690, %v8691
    %v8693 = vrot.slane %v8692, 1
    %v8694 = vadd.f32 %v8692, %v8693
    %v8695 = vrot.slane %v8653, 4
    %v8696 = vadd.f32 %v8653, %v8695
    %v8697 = vrot.slane %v8696, 2
    %v8698 = vadd.f32 %v8696, %v8697
    %v8699 = vrot.slane %v8698, 1
    %v8700 = vadd.f32 %v8698, %v8699
    %v8701 = vrot.slane %v8654, 4
    %v8702 = vadd.f32 %v8654, %v8701
    %v8703 = vrot.slane %v8702, 2
    %v8704 = vadd.f32 %v8702, %v8703
    %v8705 = vrot.slane %v8704, 1
    %v8706 = vadd.f32 %v8704, %v8705
    %v8707 = vrot.slane %v8655, 4
    %v8708 = vadd.f32 %v8655, %v8707
    %v8709 = vrot.slane %v8708, 2
    %v8710 = vadd.f32 %v8708, %v8709
    %v8711 = vrot.slane %v8710, 1
    %v8712 = vadd.f32 %v8710, %v8711
    %v8713 = vrot.slane %v8656, 4
    %v8714 = vadd.f32 %v8656, %v8713
    %v8715 = vrot.slane %v8714, 2
    %v8716 = vadd.f32 %v8714, %v8715
    %v8717 = vrot.slane %v8716, 1
    %v8718 = vadd.f32 %v8716, %v8717
    %v8719 = vrot.slane %v8657, 4
    %v8720 = vadd.f32 %v8657, %v8719
    %v8721 = vrot.slane %v8720, 2
    %v8722 = vadd.f32 %v8720, %v8721
    %v8723 = vrot.slane %v8722, 1
    %v8724 = vadd.f32 %v8722, %v8723
    %v8725 = vrot.slane %v8658, 4
    %v8726 = vadd.f32 %v8658, %v8725
    %v8727 = vrot.slane %v8726, 2
    %v8728 = vadd.f32 %v8726, %v8727
    %v8729 = vrot.slane %v8728, 1
    %v8730 = vadd.f32 %v8728, %v8729
    %v8731 = vld [vmem:[#allocation19] sm:$0x3f]
    %v8733 = vlaneseq
    %v8734 = vshrl.u32 %v8733, 7
    %v8735 = vsub.s32 0, %v8734
    %v8736 = vrot.slane %v8731, %v8735
    %v8737 = vlaneseq
    %v8738 = vshrl.u32 %v8737, 7
    %v8739 = vsub.s32 1, %v8738
    %v8740 = vrot.slane %v8731, %v8739
    %v8741 = vlaneseq
    %v8742 = vshrl.u32 %v8741, 7
    %v8743 = vsub.s32 2, %v8742
    %v8744 = vrot.slane %v8731, %v8743
    %v8745 = vlaneseq
    %v8746 = vshrl.u32 %v8745, 7
    %v8747 = vsub.s32 3, %v8746
    %v8748 = vrot.slane %v8731, %v8747
    %v8749 = vlaneseq
    %v8750 = vshrl.u32 %v8749, 7
    %v8751 = vsub.s32 4, %v8750
    %v8752 = vrot.slane %v8731, %v8751
    %v8753 = vlaneseq
    %v8754 = vshrl.u32 %v8753, 7
    %v8755 = vsub.s32 5, %v8754
    %v8756 = vrot.slane %v8731, %v8755
    %v8763 = vmul.f32 %v8664, %v8736
    %v8764 = vmul.f32 %v8670, %v8740
    %v8765 = vmul.f32 %v8676, %v8744
    %v8766 = vmul.f32 %v8682, %v8748
    %v8767 = vmul.f32 %v8688, %v8752
    %v8768 = vmul.f32 %v8694, %v8756
    %v8769 = vmul.f32 %v8700, %v8736
    %v8770 = vmul.f32 %v8706, %v8740
    %v8771 = vmul.f32 %v8712, %v8744
    %v8772 = vmul.f32 %v8718, %v8748
    %v8773 = vmul.f32 %v8724, %v8752
    %v8774 = vmul.f32 %v8730, %v8756
    %vm8775 = vcmask 1040384
    %v8776 = vsel %vm8775, %v8763, 0.0
    %v8777 = vsel %vm8775, %v8764, 0.0
    %v8778 = vadd.f32 %v8776, %v8777
    %v8779 = vsel %vm8775, %v8765, 0.0
    %v8780 = vadd.f32 %v8778, %v8779
    %v8781 = vsel %vm8775, %v8766, 0.0
    %v8782 = vadd.f32 %v8780, %v8781
    %v8783 = vsel %vm8775, %v8767, 0.0
    %v8784 = vadd.f32 %v8782, %v8783
    %v8785 = vsel %vm8775, %v8768, 0.0
    %v8786 = vadd.f32 %v8784, %v8785
    %8787 = vadd.xlane.f32.xlu0 %v8786
    %v8788 = vpop.xlane.xlu0 %8787
    %v8789 = vsel %vm8775, %v8769, 0.0
    %v8790 = vsel %vm8775, %v8770, 0.0
    %v8791 = vadd.f32 %v8789, %v8790
    %v8792 = vsel %vm8775, %v8771, 0.0
    %v8793 = vadd.f32 %v8791, %v8792
    %v8794 = vsel %vm8775, %v8772, 0.0
    %v8795 = vadd.f32 %v8793, %v8794
    %v8796 = vsel %vm8775, %v8773, 0.0
    %v8797 = vadd.f32 %v8795, %v8796
    %v8798 = vsel %vm8775, %v8774, 0.0
    %v8799 = vadd.f32 %v8797, %v8798
    %8800 = vadd.xlane.f32.xlu0 %v8799
    %v8801 = vpop.xlane.xlu0 %8800
    %vm8802 = vcmask 0
    %8803 = vst.msk [vmem:[%s13] sm:$0x1] %vm8802, %v8788
    %8804 = vst.msk [vmem:[%s13 + $0x1] sm:$0x1] %vm8802, %v8801
    // Predicated region
    $region86: #{dpam_forward.1} parent=1 // pred_check
      _
    $region87: #{dpam_forward.1} parent=1 // pred_check_branch
      %8806 = sbr.rel (0) target = $region89
    $region88: #{dpam_forward.1} parent=1 // pred_region
      _
    $region89: #{dpam_forward.1} parent=1 // pred_fallthru
      _
    // Predicated region
    $region90: #{dpam_forward.1} parent=1 // pred_check
      _
    $region91: #{dpam_forward.1} parent=1 // pred_check_branch
      %8808 = sbr.rel (0) target = $region93
    $region92: #{dpam_forward.1} parent=1 // pred_region
      _
    $region93: #{dpam_forward.1} parent=1 // pred_fallthru
      _
    %8809 = vsyncpa [#allocation6], 1
    %8810 = vsyncpa [#allocation8], 1
    %8811 = vsyncpa [#allocation11], 1
    %8812 = vsyncpa [#allocation14], 1
    %8813 = vsyncpa [#allocation17], 1
    %8814 = vsyncpa [#allocation20], 1
  %8815 = vsyncmov [#allocation4]
  %s8816 = vpop.sfrf %8815
  %p8817 = scmp.eq.s32.totalorder %s8816, 0
  %p8818 = pneg %p8817
  %8820 = shalt.err (%p8818)
  %s8821 = scalar_lea.sflag [#allocation4], 1
  %8822 = vsyncmov %s8821
  %s8823 = vpop.sfrf %8822
  %p8824 = scmp.eq.s32.totalorder %s8823, 0
  %p8825 = pneg %p8824
  %8827 = shalt.err (%p8825)

</llo_original>
